<compile_context>
chip_gen: v7x
topology: tpu7x:2x2x1
jax: 0.10.0
libtpu: 0.0.40
codegen_flags: <defaults>
</compile_context>

<pallas_src>
import functools

import jax
import jax.numpy as jnp
from jax.experimental import pallas as pl
from jax.experimental.pallas import tpu as pltpu


def _cpn_noisey_kernel(din_ref, w_ref, i_ref, b_ref, fcw_ref, fcb_ref, noise_ref,
                       readout_ref, state_ref,
                       hist_ref,                      # VMEM scratch (TC, B, N)
                       *, tc, n_white, out_dim):
    c = pl.program_id(0)

    @pl.when(c == 0)
    def _():
        # prev_output = activation(zeros); tanh(0) == 0.
        state_ref[...] = jnp.zeros_like(state_ref)

    w = w_ref[...]          # (B, N, N)      resident weights
    wi = i_ref[...]         # (B, N, in_dim)
    bias = b_ref[...]       # (B, N)

    prev0 = state_ref[...]  # (B, N) hidden state carried across chunks

    def step(k, prev):
        din = din_ref[k]                                        # (B, in_dim)
        # x = W @ prev + I @ din + b  -- VPU multiply + lane reduce (no MXU,
        # no concat on the serial dependency chain).
        x = (jnp.sum(w * prev[:, None, :], axis=-1)
             + jnp.sum(wi * din[:, None, :], axis=-1)
             + bias)
        # TODO(synk): activation_func_t is inherited from the wrapped CPN
        # (PReLU/Tanh/...); tanh assumed here.
        rnn = jnp.tanh(x)                                       # (B, N)
        hist_ref[k] = rnn                                       # stash for readout
        return rnn

    prev_final = jax.lax.fori_loop(0, tc, step, prev0, unroll=True)
    # Carried state lives in the output block (constant index_map -> resident);
    # last chunk's write is the final rnn state returned to HBM.
    state_ref[...] = prev_final

    # ---- Readout for the whole chunk, off the recurrence critical path ----
    rnn_hist = hist_ref[...]                                    # (TC, B, N)
    ro = (jnp.sum(fcw_ref[...][None, :, :, :] * rnn_hist[:, :, None, :], axis=-1)
          + fcb_ref[...][None, :, :])                           # (TC, B, out_dim)
    ro = ro.reshape(tc, -1)                                     # (TC, B*out_dim) lane-dense

    # First int(B * white_noise_pct) batch rows are OVERWRITTEN with white
    # noise every timestep (matches `readout[:noisey_batch_size, :] = noise`).
    lane = jax.lax.broadcasted_iota(jnp.int32, ro.shape, 1)
    ro = jnp.where(lane < n_white * out_dim, noise_ref[...], ro)

    readout_ref[...] = ro                                       # one store per chunk


def cpn_noisey_rollout(din_seq, W, I, b, fc_w, fc_b, white_noise_seq, n_white,
                       time_chunk=8):
    T, B, in_dim = din_seq.shape
    N = W.shape[1]
    out_dim = fc_w.shape[1]

    # Pick the largest chunk <= time_chunk that divides T (remainder handling).
    tc = min(time_chunk, T)
    while T % tc:
        tc -= 1

    # Lane-dense output / noise layout: (T, B*out_dim).
    noise_flat = white_noise_seq.reshape(T, B * out_dim)

    kernel = functools.partial(_cpn_noisey_kernel, tc=tc, n_white=int(n_white),
                               out_dim=out_dim)

    grid_spec = pltpu.PrefetchScalarGridSpec(
        num_scalar_prefetch=0,
        grid=(T // tc,),
        in_specs=[
            # streamed per chunk
            pl.BlockSpec((tc, B, in_dim), lambda c: (c, 0, 0)),        # din chunk
            # weights: constant index_map -> DMA'd once, resident in VMEM
            pl.BlockSpec((B, N, N), lambda c: (0, 0, 0)),              # W
            pl.BlockSpec((B, N, in_dim), lambda c: (0, 0, 0)),         # I
            pl.BlockSpec((B, N), lambda c: (0, 0)),                    # b
            pl.BlockSpec((B, out_dim, N), lambda c: (0, 0, 0)),        # fc_w
            pl.BlockSpec((B, out_dim), lambda c: (0, 0)),              # fc_b
            pl.BlockSpec((tc, B * out_dim), lambda c: (c, 0)),         # white noise chunk
        ],
        out_specs=(
            pl.BlockSpec((tc, B * out_dim), lambda c: (c, 0)),         # readout chunk
            pl.BlockSpec((B, N), lambda c: (0, 0)),                    # carried rnn state
        ),
        scratch_shapes=[pltpu.VMEM((tc, B, N), jnp.float32)],          # per-chunk rnn history
    )

    readout_flat, rnn_final = pl.pallas_call(
        kernel,
        out_shape=(jax.ShapeDtypeStruct((T, B * out_dim), jnp.float32),
                   jax.ShapeDtypeStruct((B, N), jnp.float32)),
        grid_spec=grid_spec,
        compiler_params=pltpu.CompilerParams(
            dimension_semantics=("arbitrary",),          # time axis is recurrent
            vmem_limit_bytes=32 * 1024 * 1024),
    )(din_seq, W, I, b, fc_w, fc_b, noise_flat)
    return readout_flat.reshape(T, B, out_dim), rnn_final


def _reference(din_seq, W, I, b, fc_w, fc_b, white_noise_seq, n_white):
    T, B, _ = din_seq.shape
    N = W.shape[1]
    prev = jnp.tanh(jnp.zeros((B, N), jnp.float32))
    outs = []
    for t in range(T):
        x = (jnp.einsum('bnm,bm->bn', W, prev)
             + jnp.einsum('bni,bi->bn', I, din_seq[t]) + b)
        rnn = jnp.tanh(x)
        ro = jnp.einsum('bon,bn->bo', fc_w, rnn) + fc_b
        ro = ro.at[:n_white].set(white_noise_seq[t, :n_white])
        outs.append(ro)
        prev = rnn
    return jnp.stack(outs), prev


if __name__ == "__main__":
    # Small shapes consistent with forward(): din (B, in_dim), rolled T steps.
    B, N, in_dim, out_dim, T = 8, 32, 4, 4, 16
    noisey_pct, noise_var = 0.9, 0.3
    white_noise_pct, white_noise_var = 0.2, 2.0
    noisey_cnt = int(B * noisey_pct)          # 7
    n_white = int(B * white_noise_pct)        # 1

    key = jax.random.PRNGKey(0)
    ks = jax.random.split(key, 12)

    # Base (shared) CPN parameters, replicated per-sample like setup().
    W0 = jax.random.normal(ks[0], (1, N, N), jnp.float32) / jnp.sqrt(N)
    I0 = jax.random.normal(ks[1], (1, N, in_dim), jnp.float32) / jnp.sqrt(in_dim)
    b0 = 0.1 * jax.random.normal(ks[2], (N,), jnp.float32)
    fcw0 = jax.random.normal(ks[3], (out_dim, N), jnp.float32) / jnp.sqrt(N)
    fcb0 = 0.1 * jax.random.normal(ks[4], (out_dim,), jnp.float32)

    def add_param_noise(base, k, shape):
        return base.at[:noisey_cnt].add(
            noise_var * (jax.random.uniform(k, (noisey_cnt,) + shape) - 0.5))

    W = add_param_noise(jnp.tile(W0, (B, 1, 1)), ks[5], (N, N))
    I = add_param_noise(jnp.tile(I0, (B, 1, 1)), ks[6], (N, in_dim))
    b = add_param_noise(jnp.tile(b0[None, :], (B, 1)), ks[7], (N,))
    fc_w = add_param_noise(jnp.tile(fcw0[None, :, :], (B, 1, 1)), ks[8], (out_dim, N))
    fc_b = add_param_noise(jnp.tile(fcb0[None, :], (B, 1)), ks[9], (out_dim,))

    # Driving inputs for T steps and per-step white noise (sampled host-side,
    # matching torch.rand in forward(); passed in for determinism).
    din_seq = jax.random.normal(ks[10], (T, B, in_dim), jnp.float32)
    white_noise_seq = (white_noise_var
                       * (jax.random.uniform(ks[11], (T, B, out_dim)) - 0.5)
                       ).astype(jnp.float32)

    readout_seq, rnn_final = cpn_noisey_rollout(
        din_seq, W, I, b, fc_w, fc_b, white_noise_seq, n_white, time_chunk=8)
    jax.block_until_ready((readout_seq, rnn_final))

    ref_ro, ref_rnn = _reference(
        din_seq, W, I, b, fc_w, fc_b, white_noise_seq, n_white)
    assert readout_seq.shape == (T, B, out_dim) and rnn_final.shape == (B, N)
    assert jnp.allclose(readout_seq, ref_ro, atol=1e-4, rtol=1e-4)
    assert jnp.allclose(rnn_final, ref_rnn, atol=1e-4, rtol=1e-4)

    print("KERNEL_OK")
</pallas_src>

<mosaic_0001>
module attributes {stable_mosaic.version = 11 : i64} {
  func.func @_cpn_noisey_kernel(%arg0: i32, %arg1: memref<8x8x4xf32, #tpu.memory_space<vmem>>, %arg2: memref<8x32x32xf32, #tpu.memory_space<vmem>>, %arg3: memref<8x32x4xf32, #tpu.memory_space<vmem>>, %arg4: memref<8x32xf32, #tpu.memory_space<vmem>>, %arg5: memref<8x4x32xf32, #tpu.memory_space<vmem>>, %arg6: memref<8x4xf32, #tpu.memory_space<vmem>>, %arg7: memref<8x32xf32, #tpu.memory_space<vmem>>, %arg8: memref<8x32xf32, #tpu.memory_space<vmem>>, %arg9: memref<8x32xf32, #tpu.memory_space<vmem>>, %arg10: memref<8x8x32xf32, #tpu.memory_space<vmem>>) attributes {dimension_semantics = [#tpu.dimension_semantics<arbitrary>], iteration_bounds = array<i64: 2>, scalar_prefetch = 0 : i64, scratch_operands = 1 : i64, tpu.core_type = #tpu.core_type<tc>, window_params = [{transform_indices = @transform_0, window_bounds = array<i64: 8, 8, 4>}, {pipeline_mode = #tpu.pipeline_mode<synchronous>, transform_indices = @transform_1, window_bounds = array<i64: 8, 32, 32>}, {pipeline_mode = #tpu.pipeline_mode<synchronous>, transform_indices = @transform_2, window_bounds = array<i64: 8, 32, 4>}, {pipeline_mode = #tpu.pipeline_mode<synchronous>, transform_indices = @transform_3, window_bounds = array<i64: 8, 32>}, {pipeline_mode = #tpu.pipeline_mode<synchronous>, transform_indices = @transform_4, window_bounds = array<i64: 8, 4, 32>}, {pipeline_mode = #tpu.pipeline_mode<synchronous>, transform_indices = @transform_5, window_bounds = array<i64: 8, 4>}, {transform_indices = @transform_6, window_bounds = array<i64: 8, 32>}, {transform_indices = @transform_7, window_bounds = array<i64: 8, 32>}, {pipeline_mode = #tpu.pipeline_mode<synchronous>, transform_indices = @transform_8, window_bounds = array<i64: 8, 32>}]} {
    %c0_i32 = arith.constant 0 : i32
    %0 = arith.cmpi eq, %arg0, %c0_i32 : i32
    %1 = arith.extui %0 : i1 to i32
    %c0_i32_0 = arith.constant 0 : i32
    %2 = arith.cmpi ne, %1, %c0_i32_0 : i32
    scf.if %2 {
      %cst_74 = arith.constant 0.000000e+00 : f32
      %171 = vector.broadcast %cst_74 : f32 to vector<8x32xf32>
      %c0_75 = arith.constant 0 : index
      %c0_76 = arith.constant 0 : index
      %172 = vector.load %arg9[%c0_75, %c0_76] : memref<8x32xf32, #tpu.memory_space<vmem>>, vector<8x32xf32>
      tpu.vector_store %arg9[%c0_75, %c0_76], %171 {strides = array<i32>} : memref<8x32xf32, #tpu.memory_space<vmem>>, vector<8x32xf32>,
    } else {
    }
    %c0 = arith.constant 0 : index
    %c0_1 = arith.constant 0 : index
    %c0_2 = arith.constant 0 : index
    %3 = vector.load %arg2[%c0, %c0_1, %c0_2] : memref<8x32x32xf32, #tpu.memory_space<vmem>>, vector<8x32x32xf32>
    %c0_3 = arith.constant 0 : index
    %c0_4 = arith.constant 0 : index
    %c0_5 = arith.constant 0 : index
    %4 = vector.load %arg3[%c0_3, %c0_4, %c0_5] : memref<8x32x4xf32, #tpu.memory_space<vmem>>, vector<8x32x4xf32>
    %c0_6 = arith.constant 0 : index
    %c0_7 = arith.constant 0 : index
    %5 = vector.load %arg4[%c0_6, %c0_7] : memref<8x32xf32, #tpu.memory_space<vmem>>, vector<8x32xf32>
    %c0_8 = arith.constant 0 : index
    %c0_9 = arith.constant 0 : index
    %6 = vector.load %arg9[%c0_8, %c0_9] : memref<8x32xf32, #tpu.memory_space<vmem>>, vector<8x32xf32>
    %c0_i32_10 = arith.constant 0 : i32
    %7 = arith.index_cast %c0_i32_10 : i32 to index
    %c0_11 = arith.constant 0 : index
    %c0_12 = arith.constant 0 : index
    %8 = vector.load %arg1[%7, %c0_11, %c0_12] : memref<8x8x4xf32, #tpu.memory_space<vmem>>, vector<1x8x4xf32>
    %9 = vector.shape_cast %8 : vector<1x8x4xf32> to vector<8x4xf32>
    %10 = vector.shape_cast %6 : vector<8x32xf32> to vector<8x1x32xf32>
    %11 = vector.broadcast %10 : vector<8x1x32xf32> to vector<8x32x32xf32>
    %12 = arith.mulf %3, %11 : vector<8x32x32xf32>
    %cst = arith.constant dense<0.000000e+00> : vector<8x32xf32>
    %13 = vector.multi_reduction <add>, %12, %cst [2] : vector<8x32x32xf32> to vector<8x32xf32>
    %14 = vector.shape_cast %9 : vector<8x4xf32> to vector<8x1x4xf32>
    %15 = vector.broadcast %14 : vector<8x1x4xf32> to vector<8x32x4xf32>
    %16 = arith.mulf %4, %15 : vector<8x32x4xf32>
    %cst_13 = arith.constant dense<0.000000e+00> : vector<8x32xf32>
    %17 = vector.multi_reduction <add>, %16, %cst_13 [2] : vector<8x32x4xf32> to vector<8x32xf32>
    %18 = arith.addf %13, %17 : vector<8x32xf32>
    %19 = arith.addf %18, %5 : vector<8x32xf32>
    %20 = math.tanh %19 : vector<8x32xf32>
    %21 = arith.index_cast %c0_i32_10 : i32 to index
    %c0_14 = arith.constant 0 : index
    %c0_15 = arith.constant 0 : index
    %22 = vector.load %arg10[%21, %c0_14, %c0_15] : memref<8x8x32xf32, #tpu.memory_space<vmem>>, vector<1x8x32xf32>
    %23 = vector.shape_cast %22 : vector<1x8x32xf32> to vector<8x32xf32>
    %24 = vector.shape_cast %20 : vector<8x32xf32> to vector<1x8x32xf32>
    tpu.vector_store %arg10[%21, %c0_14, %c0_15], %24 {strides = array<i32>} : memref<8x8x32xf32, #tpu.memory_space<vmem>>, vector<1x8x32xf32>,
    %c1_i32 = arith.constant 1 : i32
    %25 = arith.index_cast %c1_i32 : i32 to index
    %c0_16 = arith.constant 0 : index
    %c0_17 = arith.constant 0 : index
    %26 = vector.load %arg1[%25, %c0_16, %c0_17] : memref<8x8x4xf32, #tpu.memory_space<vmem>>, vector<1x8x4xf32>
    %27 = vector.shape_cast %26 : vector<1x8x4xf32> to vector<8x4xf32>
    %28 = vector.shape_cast %20 : vector<8x32xf32> to vector<8x1x32xf32>
    %29 = vector.broadcast %28 : vector<8x1x32xf32> to vector<8x32x32xf32>
    %30 = arith.mulf %3, %29 : vector<8x32x32xf32>
    %cst_18 = arith.constant dense<0.000000e+00> : vector<8x32xf32>
    %31 = vector.multi_reduction <add>, %30, %cst_18 [2] : vector<8x32x32xf32> to vector<8x32xf32>
    %32 = vector.shape_cast %27 : vector<8x4xf32> to vector<8x1x4xf32>
    %33 = vector.broadcast %32 : vector<8x1x4xf32> to vector<8x32x4xf32>
    %34 = arith.mulf %4, %33 : vector<8x32x4xf32>
    %cst_19 = arith.constant dense<0.000000e+00> : vector<8x32xf32>
    %35 = vector.multi_reduction <add>, %34, %cst_19 [2] : vector<8x32x4xf32> to vector<8x32xf32>
    %36 = arith.addf %31, %35 : vector<8x32xf32>
    %37 = arith.addf %36, %5 : vector<8x32xf32>
    %38 = math.tanh %37 : vector<8x32xf32>
    %39 = arith.index_cast %c1_i32 : i32 to index
    %c0_20 = arith.constant 0 : index
    %c0_21 = arith.constant 0 : index
    %40 = vector.load %arg10[%39, %c0_20, %c0_21] : memref<8x8x32xf32, #tpu.memory_space<vmem>>, vector<1x8x32xf32>
    %41 = vector.shape_cast %40 : vector<1x8x32xf32> to vector<8x32xf32>
    %42 = vector.shape_cast %38 : vector<8x32xf32> to vector<1x8x32xf32>
    tpu.vector_store %arg10[%39, %c0_20, %c0_21], %42 {strides = array<i32>} : memref<8x8x32xf32, #tpu.memory_space<vmem>>, vector<1x8x32xf32>,
    %c2_i32 = arith.constant 2 : i32
    %43 = arith.index_cast %c2_i32 : i32 to index
    %c0_22 = arith.constant 0 : index
    %c0_23 = arith.constant 0 : index
    %44 = vector.load %arg1[%43, %c0_22, %c0_23] : memref<8x8x4xf32, #tpu.memory_space<vmem>>, vector<1x8x4xf32>
    %45 = vector.shape_cast %44 : vector<1x8x4xf32> to vector<8x4xf32>
    %46 = vector.shape_cast %38 : vector<8x32xf32> to vector<8x1x32xf32>
    %47 = vector.broadcast %46 : vector<8x1x32xf32> to vector<8x32x32xf32>
    %48 = arith.mulf %3, %47 : vector<8x32x32xf32>
    %cst_24 = arith.constant dense<0.000000e+00> : vector<8x32xf32>
    %49 = vector.multi_reduction <add>, %48, %cst_24 [2] : vector<8x32x32xf32> to vector<8x32xf32>
    %50 = vector.shape_cast %45 : vector<8x4xf32> to vector<8x1x4xf32>
    %51 = vector.broadcast %50 : vector<8x1x4xf32> to vector<8x32x4xf32>
    %52 = arith.mulf %4, %51 : vector<8x32x4xf32>
    %cst_25 = arith.constant dense<0.000000e+00> : vector<8x32xf32>
    %53 = vector.multi_reduction <add>, %52, %cst_25 [2] : vector<8x32x4xf32> to vector<8x32xf32>
    %54 = arith.addf %49, %53 : vector<8x32xf32>
    %55 = arith.addf %54, %5 : vector<8x32xf32>
    %56 = math.tanh %55 : vector<8x32xf32>
    %57 = arith.index_cast %c2_i32 : i32 to index
    %c0_26 = arith.constant 0 : index
    %c0_27 = arith.constant 0 : index
    %58 = vector.load %arg10[%57, %c0_26, %c0_27] : memref<8x8x32xf32, #tpu.memory_space<vmem>>, vector<1x8x32xf32>
    %59 = vector.shape_cast %58 : vector<1x8x32xf32> to vector<8x32xf32>
    %60 = vector.shape_cast %56 : vector<8x32xf32> to vector<1x8x32xf32>
    tpu.vector_store %arg10[%57, %c0_26, %c0_27], %60 {strides = array<i32>} : memref<8x8x32xf32, #tpu.memory_space<vmem>>, vector<1x8x32xf32>,
    %c3_i32 = arith.constant 3 : i32
    %61 = arith.index_cast %c3_i32 : i32 to index
    %c0_28 = arith.constant 0 : index
    %c0_29 = arith.constant 0 : index
    %62 = vector.load %arg1[%61, %c0_28, %c0_29] : memref<8x8x4xf32, #tpu.memory_space<vmem>>, vector<1x8x4xf32>
    %63 = vector.shape_cast %62 : vector<1x8x4xf32> to vector<8x4xf32>
    %64 = vector.shape_cast %56 : vector<8x32xf32> to vector<8x1x32xf32>
    %65 = vector.broadcast %64 : vector<8x1x32xf32> to vector<8x32x32xf32>
    %66 = arith.mulf %3, %65 : vector<8x32x32xf32>
    %cst_30 = arith.constant dense<0.000000e+00> : vector<8x32xf32>
    %67 = vector.multi_reduction <add>, %66, %cst_30 [2] : vector<8x32x32xf32> to vector<8x32xf32>
    %68 = vector.shape_cast %63 : vector<8x4xf32> to vector<8x1x4xf32>
    %69 = vector.broadcast %68 : vector<8x1x4xf32> to vector<8x32x4xf32>
    %70 = arith.mulf %4, %69 : vector<8x32x4xf32>
    %cst_31 = arith.constant dense<0.000000e+00> : vector<8x32xf32>
    %71 = vector.multi_reduction <add>, %70, %cst_31 [2] : vector<8x32x4xf32> to vector<8x32xf32>
    %72 = arith.addf %67, %71 : vector<8x32xf32>
    %73 = arith.addf %72, %5 : vector<8x32xf32>
    %74 = math.tanh %73 : vector<8x32xf32>
    %75 = arith.index_cast %c3_i32 : i32 to index
    %c0_32 = arith.constant 0 : index
    %c0_33 = arith.constant 0 : index
    %76 = vector.load %arg10[%75, %c0_32, %c0_33] : memref<8x8x32xf32, #tpu.memory_space<vmem>>, vector<1x8x32xf32>
    %77 = vector.shape_cast %76 : vector<1x8x32xf32> to vector<8x32xf32>
    %78 = vector.shape_cast %74 : vector<8x32xf32> to vector<1x8x32xf32>
    tpu.vector_store %arg10[%75, %c0_32, %c0_33], %78 {strides = array<i32>} : memref<8x8x32xf32, #tpu.memory_space<vmem>>, vector<1x8x32xf32>,
    %c4_i32 = arith.constant 4 : i32
    %79 = arith.index_cast %c4_i32 : i32 to index
    %c0_34 = arith.constant 0 : index
    %c0_35 = arith.constant 0 : index
    %80 = vector.load %arg1[%79, %c0_34, %c0_35] : memref<8x8x4xf32, #tpu.memory_space<vmem>>, vector<1x8x4xf32>
    %81 = vector.shape_cast %80 : vector<1x8x4xf32> to vector<8x4xf32>
    %82 = vector.shape_cast %74 : vector<8x32xf32> to vector<8x1x32xf32>
    %83 = vector.broadcast %82 : vector<8x1x32xf32> to vector<8x32x32xf32>
    %84 = arith.mulf %3, %83 : vector<8x32x32xf32>
    %cst_36 = arith.constant dense<0.000000e+00> : vector<8x32xf32>
    %85 = vector.multi_reduction <add>, %84, %cst_36 [2] : vector<8x32x32xf32> to vector<8x32xf32>
    %86 = vector.shape_cast %81 : vector<8x4xf32> to vector<8x1x4xf32>
    %87 = vector.broadcast %86 : vector<8x1x4xf32> to vector<8x32x4xf32>
    %88 = arith.mulf %4, %87 : vector<8x32x4xf32>
    %cst_37 = arith.constant dense<0.000000e+00> : vector<8x32xf32>
    %89 = vector.multi_reduction <add>, %88, %cst_37 [2] : vector<8x32x4xf32> to vector<8x32xf32>
    %90 = arith.addf %85, %89 : vector<8x32xf32>
    %91 = arith.addf %90, %5 : vector<8x32xf32>
    %92 = math.tanh %91 : vector<8x32xf32>
    %93 = arith.index_cast %c4_i32 : i32 to index
    %c0_38 = arith.constant 0 : index
    %c0_39 = arith.constant 0 : index
    %94 = vector.load %arg10[%93, %c0_38, %c0_39] : memref<8x8x32xf32, #tpu.memory_space<vmem>>, vector<1x8x32xf32>
    %95 = vector.shape_cast %94 : vector<1x8x32xf32> to vector<8x32xf32>
    %96 = vector.shape_cast %92 : vector<8x32xf32> to vector<1x8x32xf32>
    tpu.vector_store %arg10[%93, %c0_38, %c0_39], %96 {strides = array<i32>} : memref<8x8x32xf32, #tpu.memory_space<vmem>>, vector<1x8x32xf32>,
    %c5_i32 = arith.constant 5 : i32
    %97 = arith.index_cast %c5_i32 : i32 to index
    %c0_40 = arith.constant 0 : index
    %c0_41 = arith.constant 0 : index
    %98 = vector.load %arg1[%97, %c0_40, %c0_41] : memref<8x8x4xf32, #tpu.memory_space<vmem>>, vector<1x8x4xf32>
    %99 = vector.shape_cast %98 : vector<1x8x4xf32> to vector<8x4xf32>
    %100 = vector.shape_cast %92 : vector<8x32xf32> to vector<8x1x32xf32>
    %101 = vector.broadcast %100 : vector<8x1x32xf32> to vector<8x32x32xf32>
    %102 = arith.mulf %3, %101 : vector<8x32x32xf32>
    %cst_42 = arith.constant dense<0.000000e+00> : vector<8x32xf32>
    %103 = vector.multi_reduction <add>, %102, %cst_42 [2] : vector<8x32x32xf32> to vector<8x32xf32>
    %104 = vector.shape_cast %99 : vector<8x4xf32> to vector<8x1x4xf32>
    %105 = vector.broadcast %104 : vector<8x1x4xf32> to vector<8x32x4xf32>
    %106 = arith.mulf %4, %105 : vector<8x32x4xf32>
    %cst_43 = arith.constant dense<0.000000e+00> : vector<8x32xf32>
    %107 = vector.multi_reduction <add>, %106, %cst_43 [2] : vector<8x32x4xf32> to vector<8x32xf32>
    %108 = arith.addf %103, %107 : vector<8x32xf32>
    %109 = arith.addf %108, %5 : vector<8x32xf32>
    %110 = math.tanh %109 : vector<8x32xf32>
    %111 = arith.index_cast %c5_i32 : i32 to index
    %c0_44 = arith.constant 0 : index
    %c0_45 = arith.constant 0 : index
    %112 = vector.load %arg10[%111, %c0_44, %c0_45] : memref<8x8x32xf32, #tpu.memory_space<vmem>>, vector<1x8x32xf32>
    %113 = vector.shape_cast %112 : vector<1x8x32xf32> to vector<8x32xf32>
    %114 = vector.shape_cast %110 : vector<8x32xf32> to vector<1x8x32xf32>
    tpu.vector_store %arg10[%111, %c0_44, %c0_45], %114 {strides = array<i32>} : memref<8x8x32xf32, #tpu.memory_space<vmem>>, vector<1x8x32xf32>,
    %c6_i32 = arith.constant 6 : i32
    %115 = arith.index_cast %c6_i32 : i32 to index
    %c0_46 = arith.constant 0 : index
    %c0_47 = arith.constant 0 : index
    %116 = vector.load %arg1[%115, %c0_46, %c0_47] : memref<8x8x4xf32, #tpu.memory_space<vmem>>, vector<1x8x4xf32>
    %117 = vector.shape_cast %116 : vector<1x8x4xf32> to vector<8x4xf32>
    %118 = vector.shape_cast %110 : vector<8x32xf32> to vector<8x1x32xf32>
    %119 = vector.broadcast %118 : vector<8x1x32xf32> to vector<8x32x32xf32>
    %120 = arith.mulf %3, %119 : vector<8x32x32xf32>
    %cst_48 = arith.constant dense<0.000000e+00> : vector<8x32xf32>
    %121 = vector.multi_reduction <add>, %120, %cst_48 [2] : vector<8x32x32xf32> to vector<8x32xf32>
    %122 = vector.shape_cast %117 : vector<8x4xf32> to vector<8x1x4xf32>
    %123 = vector.broadcast %122 : vector<8x1x4xf32> to vector<8x32x4xf32>
    %124 = arith.mulf %4, %123 : vector<8x32x4xf32>
    %cst_49 = arith.constant dense<0.000000e+00> : vector<8x32xf32>
    %125 = vector.multi_reduction <add>, %124, %cst_49 [2] : vector<8x32x4xf32> to vector<8x32xf32>
    %126 = arith.addf %121, %125 : vector<8x32xf32>
    %127 = arith.addf %126, %5 : vector<8x32xf32>
    %128 = math.tanh %127 : vector<8x32xf32>
    %129 = arith.index_cast %c6_i32 : i32 to index
    %c0_50 = arith.constant 0 : index
    %c0_51 = arith.constant 0 : index
    %130 = vector.load %arg10[%129, %c0_50, %c0_51] : memref<8x8x32xf32, #tpu.memory_space<vmem>>, vector<1x8x32xf32>
    %131 = vector.shape_cast %130 : vector<1x8x32xf32> to vector<8x32xf32>
    %132 = vector.shape_cast %128 : vector<8x32xf32> to vector<1x8x32xf32>
    tpu.vector_store %arg10[%129, %c0_50, %c0_51], %132 {strides = array<i32>} : memref<8x8x32xf32, #tpu.memory_space<vmem>>, vector<1x8x32xf32>,
    %c7_i32 = arith.constant 7 : i32
    %133 = arith.index_cast %c7_i32 : i32 to index
    %c0_52 = arith.constant 0 : index
    %c0_53 = arith.constant 0 : index
    %134 = vector.load %arg1[%133, %c0_52, %c0_53] : memref<8x8x4xf32, #tpu.memory_space<vmem>>, vector<1x8x4xf32>
    %135 = vector.shape_cast %134 : vector<1x8x4xf32> to vector<8x4xf32>
    %136 = vector.shape_cast %128 : vector<8x32xf32> to vector<8x1x32xf32>
    %137 = vector.broadcast %136 : vector<8x1x32xf32> to vector<8x32x32xf32>
    %138 = arith.mulf %3, %137 : vector<8x32x32xf32>
    %cst_54 = arith.constant dense<0.000000e+00> : vector<8x32xf32>
    %139 = vector.multi_reduction <add>, %138, %cst_54 [2] : vector<8x32x32xf32> to vector<8x32xf32>
    %140 = vector.shape_cast %135 : vector<8x4xf32> to vector<8x1x4xf32>
    %141 = vector.broadcast %140 : vector<8x1x4xf32> to vector<8x32x4xf32>
    %142 = arith.mulf %4, %141 : vector<8x32x4xf32>
    %cst_55 = arith.constant dense<0.000000e+00> : vector<8x32xf32>
    %143 = vector.multi_reduction <add>, %142, %cst_55 [2] : vector<8x32x4xf32> to vector<8x32xf32>
    %144 = arith.addf %139, %143 : vector<8x32xf32>
    %145 = arith.addf %144, %5 : vector<8x32xf32>
    %146 = math.tanh %145 : vector<8x32xf32>
    %147 = arith.index_cast %c7_i32 : i32 to index
    %c0_56 = arith.constant 0 : index
    %c0_57 = arith.constant 0 : index
    %148 = vector.load %arg10[%147, %c0_56, %c0_57] : memref<8x8x32xf32, #tpu.memory_space<vmem>>, vector<1x8x32xf32>
    %149 = vector.shape_cast %148 : vector<1x8x32xf32> to vector<8x32xf32>
    %150 = vector.shape_cast %146 : vector<8x32xf32> to vector<1x8x32xf32>
    tpu.vector_store %arg10[%147, %c0_56, %c0_57], %150 {strides = array<i32>} : memref<8x8x32xf32, #tpu.memory_space<vmem>>, vector<1x8x32xf32>,
    %c8_i32 = arith.constant 8 : i32
    %c0_58 = arith.constant 0 : index
    %c0_59 = arith.constant 0 : index
    %151 = vector.load %arg9[%c0_58, %c0_59] : memref<8x32xf32, #tpu.memory_space<vmem>>, vector<8x32xf32>
    tpu.vector_store %arg9[%c0_58, %c0_59], %146 {strides = array<i32>} : memref<8x32xf32, #tpu.memory_space<vmem>>, vector<8x32xf32>,
    %c0_60 = arith.constant 0 : index
    %c0_61 = arith.constant 0 : index
    %c0_62 = arith.constant 0 : index
    %152 = vector.load %arg10[%c0_60, %c0_61, %c0_62] : memref<8x8x32xf32, #tpu.memory_space<vmem>>, vector<8x8x32xf32>
    %c0_63 = arith.constant 0 : index
    %c0_64 = arith.constant 0 : index
    %c0_65 = arith.constant 0 : index
    %153 = vector.load %arg5[%c0_63, %c0_64, %c0_65] : memref<8x4x32xf32, #tpu.memory_space<vmem>>, vector<8x4x32xf32>
    %154 = vector.shape_cast %153 : vector<8x4x32xf32> to vector<1x8x4x32xf32>
    %155 = vector.shape_cast %152 : vector<8x8x32xf32> to vector<8x8x1x32xf32>
    %156 = vector.broadcast %154 : vector<1x8x4x32xf32> to vector<8x8x4x32xf32>
    %157 = vector.broadcast %155 : vector<8x8x1x32xf32> to vector<8x8x4x32xf32>
    %158 = arith.mulf %156, %157 : vector<8x8x4x32xf32>
    %cst_66 = arith.constant dense<0.000000e+00> : vector<8x8x4xf32>
    %159 = vector.multi_reduction <add>, %158, %cst_66 [3] : vector<8x8x4x32xf32> to vector<8x8x4xf32>
    %c0_67 = arith.constant 0 : index
    %c0_68 = arith.constant 0 : index
    %160 = vector.load %arg6[%c0_67, %c0_68] : memref<8x4xf32, #tpu.memory_space<vmem>>, vector<8x4xf32>
    %161 = vector.shape_cast %160 : vector<8x4xf32> to vector<1x8x4xf32>
    %162 = vector.broadcast %161 : vector<1x8x4xf32> to vector<8x8x4xf32>
    %163 = arith.addf %159, %162 : vector<8x8x4xf32>
    %164 = vector.shape_cast %163 : vector<8x8x4xf32> to vector<8x32xf32>
    %165 = tpu.iota {dimensions = array<i32: 1>} : vector<8x32xi32>
    %c4_i32_69 = arith.constant 4 : i32
    %166 = vector.broadcast %c4_i32_69 : i32 to vector<8x32xi32>
    %167 = arith.cmpi slt, %165, %166 : vector<8x32xi32>
    %c0_70 = arith.constant 0 : index
    %c0_71 = arith.constant 0 : index
    %168 = vector.load %arg7[%c0_70, %c0_71] : memref<8x32xf32, #tpu.memory_space<vmem>>, vector<8x32xf32>
    %169 = arith.select %167, %168, %164 : vector<8x32xi1>, vector<8x32xf32>
    %c0_72 = arith.constant 0 : index
    %c0_73 = arith.constant 0 : index
    %170 = vector.load %arg8[%c0_72, %c0_73] : memref<8x32xf32, #tpu.memory_space<vmem>>, vector<8x32xf32>
    tpu.vector_store %arg8[%c0_72, %c0_73], %169 {strides = array<i32>} : memref<8x32xf32, #tpu.memory_space<vmem>>, vector<8x32xf32>,
    return
  }
  func.func @transform_0(%arg0: i32) -> (i32, i32, i32) {
    %c0_i32 = arith.constant 0 : i32
    %c0_i32_0 = arith.constant 0 : i32
    %c0_i32_1 = arith.constant 0 : i32
    return %arg0, %c0_i32, %c0_i32_0 : i32, i32, i32
  }
  func.func @transform_1(%arg0: i32) -> (i32, i32, i32) {
    %c0_i32 = arith.constant 0 : i32
    %c0_i32_0 = arith.constant 0 : i32
    %c0_i32_1 = arith.constant 0 : i32
    %c0_i32_2 = arith.constant 0 : i32
    return %c0_i32, %c0_i32_0, %c0_i32_1 : i32, i32, i32
  }
  func.func @transform_2(%arg0: i32) -> (i32, i32, i32) {
    %c0_i32 = arith.constant 0 : i32
    %c0_i32_0 = arith.constant 0 : i32
    %c0_i32_1 = arith.constant 0 : i32
    %c0_i32_2 = arith.constant 0 : i32
    return %c0_i32, %c0_i32_0, %c0_i32_1 : i32, i32, i32
  }
  func.func @transform_3(%arg0: i32) -> (i32, i32) {
    %c0_i32 = arith.constant 0 : i32
    %c0_i32_0 = arith.constant 0 : i32
    %c0_i32_1 = arith.constant 0 : i32
    return %c0_i32, %c0_i32_0 : i32, i32
  }
  func.func @transform_4(%arg0: i32) -> (i32, i32, i32) {
    %c0_i32 = arith.constant 0 : i32
    %c0_i32_0 = arith.constant 0 : i32
    %c0_i32_1 = arith.constant 0 : i32
    %c0_i32_2 = arith.constant 0 : i32
    return %c0_i32, %c0_i32_0, %c0_i32_1 : i32, i32, i32
  }
  func.func @transform_5(%arg0: i32) -> (i32, i32) {
    %c0_i32 = arith.constant 0 : i32
    %c0_i32_0 = arith.constant 0 : i32
    %c0_i32_1 = arith.constant 0 : i32
    return %c0_i32, %c0_i32_0 : i32, i32
  }
  func.func @transform_6(%arg0: i32) -> (i32, i32) {
    %c0_i32 = arith.constant 0 : i32
    %c0_i32_0 = arith.constant 0 : i32
    return %arg0, %c0_i32 : i32, i32
  }
  func.func @transform_7(%arg0: i32) -> (i32, i32) {
    %c0_i32 = arith.constant 0 : i32
    %c0_i32_0 = arith.constant 0 : i32
    return %arg0, %c0_i32 : i32, i32
  }
  func.func @transform_8(%arg0: i32) -> (i32, i32) {
    %c0_i32 = arith.constant 0 : i32
    %c0_i32_0 = arith.constant 0 : i32
    %c0_i32_1 = arith.constant 0 : i32
    return %c0_i32, %c0_i32_0 : i32, i32
  }
}

</mosaic_0001>

<llo_original>
// kernel: tpu_custom_call.1
$region0: #{tpu_custom_call.1}
  #allocation0 [shape = 'u32[]', space=smem, size = 0x4, offset = 0x4, fixed_abs, tag = 'smem constant byte address 0x4 - core index']
  #allocation1 [shape = 'u32[144,128]{1,0:T(1,128)}', space=vmem, size = 0x12000, scoped, tag = 'internal scratch']
  #allocation2 [shape = 'f32[8,8,32]{2,1,0:T(8,128)}', space=vmem, size = 0x8000, scoped, tag = 'scratch operand']
  %s0 = inlined_call_operand.vmem [shape: f32[16,8,4], index: 0, kind: input, shape index: {}]
  %s1 = inlined_call_operand.vmem [shape: f32[8,32,32], index: 1, kind: input, shape index: {}]
  %s2 = inlined_call_operand.vmem [shape: f32[8,32,4], index: 2, kind: input, shape index: {}]
  %s3 = inlined_call_operand.vmem [shape: f32[8,32], index: 3, kind: input, shape index: {}]
  %s4 = inlined_call_operand.vmem [shape: f32[8,4,32], index: 4, kind: input, shape index: {}]
  %s5 = inlined_call_operand.vmem [shape: f32[8,4], index: 5, kind: input, shape index: {}]
  %s6 = inlined_call_operand.vmem [shape: f32[16,32], index: 6, kind: input, shape index: {}]
  %s7 = inlined_call_operand.hbm [shape: f32[16,32], index: 7, kind: output, shape index: {0}]
  %s8 = inlined_call_operand.hbm [shape: f32[8,32], index: 8, kind: output, shape index: {1}]
  %9 = xla_tuple %s7, %s8
  %s10 = sld [smem:[#allocation0]]
  $region73: #{tpu_custom_call.1} parent=0
    _
  %s12 = ssub.s32 1, %s10
  %s13 = scalar_select 0, %s12, %s10
  $region1: #{tpu_custom_call.1} parent=0
    #allocation3 [shape = 'u8[8192]{0}', space=vmem, size = 0x2000, scoped, tag = 'output window, operand 0']
    #allocation4 [shape = 's32[2]{0}', space=sflag, size = 0x8, scoped, tag = 'scoped memory for tpu_custom_call.1']
    #allocation5 [shape = 'u8[4096]{0}', space=vmem, size = 0x1000, scoped, tag = 'output window, operand 1, single buffered']
    #allocation6 [shape = 's32[1]{0}', space=sflag, size = 0x4, scoped, tag = 'scoped memory for tpu_custom_call.1']
    %14 = vsyncpa [#allocation4], 0
    %s15 = scalar_lea.sflag [#allocation4], 1
    %16 = vsyncpa %s15, 0
    %17 = vsyncpa [#allocation6], 0
    loop: start=0, step=1, limit=4
    $region2: #{tpu_custom_call.1} parent=1 // loop_pre_header
      _
    $region3: #{tpu_custom_call.1} parent=1 // loop_header
      %s19 = sphi 0, %s23
      %p20 = scmp.ge.s32.totalorder %s19, 4
      %s29 = sphi 0, %s31
      %s32 = sphi 0, %s29
      %s33 = sphi 0, %s32
      %s49 = sphi 0, %s33
      %s53 = sphi 0, %s53
      %s55 = sphi 0, %s53
      %s56 = sphi 0, %s55
      %s70 = sphi 0, %s56
      %s74 = sphi 0, %s74
      %s76 = sphi 0, %s74
      %s77 = sphi 0, %s76
      %s91 = sphi 0, %s77
      %s95 = sphi 0, %s95
      %s97 = sphi 0, %s95
      %s98 = sphi 0, %s97
      %s112 = sphi 0, %s98
      %s116 = sphi 0, %s116
      %s118 = sphi 0, %s116
      %s119 = sphi 0, %s118
      %s133 = sphi 0, %s119
      %s137 = sphi 0, %s137
      %s139 = sphi 0, %s137
      %s140 = sphi 0, %s139
      %s154 = sphi 0, %s140
      %s160 = sphi 0, %s162
      %s163 = sphi 0, %s160
      %s164 = sphi 0, %s163
      %s180 = sphi 0, %s164
      %s186 = sphi 0, %s188
      %s189 = sphi 0, %s186
      %s190 = sphi 0, %s189
      %s206 = sphi 0, %s190
      %s210 = sphi 0, %s210
      %s212 = sphi 0, %s210
      %s213 = sphi 0, %s212
      %s227 = sphi 0, %s213
    $region4: #{tpu_custom_call.1} parent=1 // loop_header_branch
      %22 = sbr.rel (%p20) target = $region8
    $region5: #{tpu_custom_call.1} parent=1 // loop_body
      %s24 = ssub.s32 %s19, 1
      %s25 = ssub.s32 %s19, 2
      %s26 = sadd.s32 %s19, 1
      %s27 = ssub.s32 %s19, %s26
      %p28 = scmp.eq.s32.totalorder %s27, 0
      %s30 = sadd.s32 %s29, 1
      %s31 = scalar_select %p28, %s29, %s30
      %p34 = pneg %p28
      %p35 = scmp.eq.s32.totalorder %s19, 1
      %p36 = por %p34, %p35
      %p37 = scmp.ne.s32.totalorder %s29, %s32
      %p38 = scmp.eq.s32.totalorder %s19, 0
      %p39 = por %p37, %p38
      %p40 = scmp.ne.s32.totalorder %s29, %s32
      %p41 = scmp.eq.s32.totalorder %s24, 1
      %p42 = por %p40, %p41
      %p43 = scmp.ne.s32.totalorder %s32, %s33
      %p44 = scmp.eq.s32.totalorder %s24, 0
      %p45 = por %p43, %p44
      %p46 = scmp.ne.s32.totalorder %s32, %s33
      %p47 = scmp.eq.s32.totalorder %s25, 1
      %p48 = por %p46, %p47
      %p50 = scmp.ne.s32.totalorder %s33, %s49
      %p51 = scmp.eq.s32.totalorder %s25, 0
      %p52 = por %p50, %p51
      %s54 = sadd.s32 %s53, 1
      %p57 = scmp.eq.s32.totalorder %s19, 1
      %p58 = scmp.ne.s32.totalorder %s53, %s55
      %p59 = scmp.eq.s32.totalorder %s19, 0
      %p60 = por %p58, %p59
      %p61 = scmp.ne.s32.totalorder %s53, %s55
      %p62 = scmp.eq.s32.totalorder %s24, 1
      %p63 = por %p61, %p62
      %p64 = scmp.ne.s32.totalorder %s55, %s56
      %p65 = scmp.eq.s32.totalorder %s24, 0
      %p66 = por %p64, %p65
      %p67 = scmp.ne.s32.totalorder %s55, %s56
      %p68 = scmp.eq.s32.totalorder %s25, 1
      %p69 = por %p67, %p68
      %p71 = scmp.ne.s32.totalorder %s56, %s70
      %p72 = scmp.eq.s32.totalorder %s25, 0
      %p73 = por %p71, %p72
      %s75 = sadd.s32 %s74, 1
      %p78 = scmp.eq.s32.totalorder %s19, 1
      %p79 = scmp.ne.s32.totalorder %s74, %s76
      %p80 = scmp.eq.s32.totalorder %s19, 0
      %p81 = por %p79, %p80
      %p82 = scmp.ne.s32.totalorder %s74, %s76
      %p83 = scmp.eq.s32.totalorder %s24, 1
      %p84 = por %p82, %p83
      %p85 = scmp.ne.s32.totalorder %s76, %s77
      %p86 = scmp.eq.s32.totalorder %s24, 0
      %p87 = por %p85, %p86
      %p88 = scmp.ne.s32.totalorder %s76, %s77
      %p89 = scmp.eq.s32.totalorder %s25, 1
      %p90 = por %p88, %p89
      %p92 = scmp.ne.s32.totalorder %s77, %s91
      %p93 = scmp.eq.s32.totalorder %s25, 0
      %p94 = por %p92, %p93
      %s96 = sadd.s32 %s95, 1
      %p99 = scmp.eq.s32.totalorder %s19, 1
      %p100 = scmp.ne.s32.totalorder %s95, %s97
      %p101 = scmp.eq.s32.totalorder %s19, 0
      %p102 = por %p100, %p101
      %p103 = scmp.ne.s32.totalorder %s95, %s97
      %p104 = scmp.eq.s32.totalorder %s24, 1
      %p105 = por %p103, %p104
      %p106 = scmp.ne.s32.totalorder %s97, %s98
      %p107 = scmp.eq.s32.totalorder %s24, 0
      %p108 = por %p106, %p107
      %p109 = scmp.ne.s32.totalorder %s97, %s98
      %p110 = scmp.eq.s32.totalorder %s25, 1
      %p111 = por %p109, %p110
      %p113 = scmp.ne.s32.totalorder %s98, %s112
      %p114 = scmp.eq.s32.totalorder %s25, 0
      %p115 = por %p113, %p114
      %s117 = sadd.s32 %s116, 1
      %p120 = scmp.eq.s32.totalorder %s19, 1
      %p121 = scmp.ne.s32.totalorder %s116, %s118
      %p122 = scmp.eq.s32.totalorder %s19, 0
      %p123 = por %p121, %p122
      %p124 = scmp.ne.s32.totalorder %s116, %s118
      %p125 = scmp.eq.s32.totalorder %s24, 1
      %p126 = por %p124, %p125
      %p127 = scmp.ne.s32.totalorder %s118, %s119
      %p128 = scmp.eq.s32.totalorder %s24, 0
      %p129 = por %p127, %p128
      %p130 = scmp.ne.s32.totalorder %s118, %s119
      %p131 = scmp.eq.s32.totalorder %s25, 1
      %p132 = por %p130, %p131
      %p134 = scmp.ne.s32.totalorder %s119, %s133
      %p135 = scmp.eq.s32.totalorder %s25, 0
      %p136 = por %p134, %p135
      %s138 = sadd.s32 %s137, 1
      %p141 = scmp.eq.s32.totalorder %s19, 1
      %p142 = scmp.ne.s32.totalorder %s137, %s139
      %p143 = scmp.eq.s32.totalorder %s19, 0
      %p144 = por %p142, %p143
      %p145 = scmp.ne.s32.totalorder %s137, %s139
      %p146 = scmp.eq.s32.totalorder %s24, 1
      %p147 = por %p145, %p146
      %p148 = scmp.ne.s32.totalorder %s139, %s140
      %p149 = scmp.eq.s32.totalorder %s24, 0
      %p150 = por %p148, %p149
      %p151 = scmp.ne.s32.totalorder %s139, %s140
      %p152 = scmp.eq.s32.totalorder %s25, 1
      %p153 = por %p151, %p152
      %p155 = scmp.ne.s32.totalorder %s140, %s154
      %p156 = scmp.eq.s32.totalorder %s25, 0
      %p157 = por %p155, %p156
      %s158 = ssub.s32 %s19, %s26
      %p159 = scmp.eq.s32.totalorder %s158, 0
      %s161 = sadd.s32 %s160, 1
      %s162 = scalar_select %p159, %s160, %s161
      %p165 = pneg %p159
      %p166 = scmp.eq.s32.totalorder %s19, 1
      %p167 = por %p165, %p166
      %p168 = scmp.ne.s32.totalorder %s160, %s163
      %p169 = scmp.eq.s32.totalorder %s19, 0
      %p170 = por %p168, %p169
      %p171 = scmp.ne.s32.totalorder %s160, %s163
      %p172 = scmp.eq.s32.totalorder %s24, 1
      %p173 = por %p171, %p172
      %p174 = scmp.ne.s32.totalorder %s163, %s164
      %p175 = scmp.eq.s32.totalorder %s24, 0
      %p176 = por %p174, %p175
      %p177 = scmp.ne.s32.totalorder %s163, %s164
      %p178 = scmp.eq.s32.totalorder %s25, 1
      %p179 = por %p177, %p178
      %p181 = scmp.ne.s32.totalorder %s164, %s180
      %p182 = scmp.eq.s32.totalorder %s25, 0
      %p183 = por %p181, %p182
      %s184 = ssub.s32 %s19, %s26
      %p185 = scmp.eq.s32.totalorder %s184, 0
      %s187 = sadd.s32 %s186, 1
      %s188 = scalar_select %p185, %s186, %s187
      %p191 = pneg %p185
      %p192 = scmp.eq.s32.totalorder %s19, 1
      %p193 = por %p191, %p192
      %p194 = scmp.ne.s32.totalorder %s186, %s189
      %p195 = scmp.eq.s32.totalorder %s19, 0
      %p196 = por %p194, %p195
      %p197 = scmp.ne.s32.totalorder %s186, %s189
      %p198 = scmp.eq.s32.totalorder %s24, 1
      %p199 = por %p197, %p198
      %p200 = scmp.ne.s32.totalorder %s189, %s190
      %p201 = scmp.eq.s32.totalorder %s24, 0
      %p202 = por %p200, %p201
      %p203 = scmp.ne.s32.totalorder %s189, %s190
      %p204 = scmp.eq.s32.totalorder %s25, 1
      %p205 = por %p203, %p204
      %p207 = scmp.ne.s32.totalorder %s190, %s206
      %p208 = scmp.eq.s32.totalorder %s25, 0
      %p209 = por %p207, %p208
      %s211 = sadd.s32 %s210, 1
      %p214 = scmp.eq.s32.totalorder %s19, 1
      %p215 = scmp.ne.s32.totalorder %s210, %s212
      %p216 = scmp.eq.s32.totalorder %s19, 0
      %p217 = por %p215, %p216
      %p218 = scmp.ne.s32.totalorder %s210, %s212
      %p219 = scmp.eq.s32.totalorder %s24, 1
      %p220 = por %p218, %p219
      %p221 = scmp.ne.s32.totalorder %s212, %s213
      %p222 = scmp.eq.s32.totalorder %s24, 0
      %p223 = por %p221, %p222
      %p224 = scmp.ne.s32.totalorder %s212, %s213
      %p225 = scmp.eq.s32.totalorder %s25, 1
      %p226 = por %p224, %p225
      %p228 = scmp.ne.s32.totalorder %s213, %s227
      %p229 = scmp.eq.s32.totalorder %s25, 0
      %p230 = por %p228, %p229
      %p231 = scmp.le.s32.totalorder 1, %s19
      %p232 = scmp.lt.s32.totalorder %s19, 3
      %p233 = pnand %p231, %p232
      %p234 = pneg %p233
      // Predicated region
      $region9: #{tpu_custom_call.1} parent=5 // pred_check
        _
      $region10: #{tpu_custom_call.1} parent=5 // pred_check_branch
        %236 = sbr.rel (%p233) target = $region12
      $region11: #{tpu_custom_call.1} parent=5 // pred_region
        %s237 = ssub.s32 %s19, 1
        // Predicated region
        $region13: #{tpu_custom_call.1} parent=11 // pred_check
          %p238 = pneg %p66
        $region14: #{tpu_custom_call.1} parent=11 // pred_check_branch
          %240 = sbr.rel (%p238) target = $region16
        $region15: #{tpu_custom_call.1} parent=11 // pred_region
          _
        $region16: #{tpu_custom_call.1} parent=11 // pred_fallthru
          _
        // Predicated region
        $region17: #{tpu_custom_call.1} parent=11 // pred_check
          %p241 = pneg %p87
        $region18: #{tpu_custom_call.1} parent=11 // pred_check_branch
          %243 = sbr.rel (%p241) target = $region20
        $region19: #{tpu_custom_call.1} parent=11 // pred_region
          _
        $region20: #{tpu_custom_call.1} parent=11 // pred_fallthru
          _
        // Predicated region
        $region21: #{tpu_custom_call.1} parent=11 // pred_check
          %p244 = pneg %p108
        $region22: #{tpu_custom_call.1} parent=11 // pred_check_branch
          %246 = sbr.rel (%p244) target = $region24
        $region23: #{tpu_custom_call.1} parent=11 // pred_region
          _
        $region24: #{tpu_custom_call.1} parent=11 // pred_fallthru
          _
        // Predicated region
        $region25: #{tpu_custom_call.1} parent=11 // pred_check
          %p247 = pneg %p129
        $region26: #{tpu_custom_call.1} parent=11 // pred_check_branch
          %249 = sbr.rel (%p247) target = $region28
        $region27: #{tpu_custom_call.1} parent=11 // pred_region
          _
        $region28: #{tpu_custom_call.1} parent=11 // pred_fallthru
          _
        // Predicated region
        $region29: #{tpu_custom_call.1} parent=11 // pred_check
          %p250 = pneg %p150
        $region30: #{tpu_custom_call.1} parent=11 // pred_check_branch
          %252 = sbr.rel (%p250) target = $region32
        $region31: #{tpu_custom_call.1} parent=11 // pred_region
          _
        $region32: #{tpu_custom_call.1} parent=11 // pred_fallthru
          _
      $region12: #{tpu_custom_call.1} parent=5 // pred_fallthru
        _
      %p253 = scmp.lt.s32.totalorder %s19, 2
      // Predicated region
      $region33: #{tpu_custom_call.1} parent=5 // pred_check
        %p254 = pneg %p253
      $region34: #{tpu_custom_call.1} parent=5 // pred_check_branch
        %256 = sbr.rel (%p254) target = $region36
      $region35: #{tpu_custom_call.1} parent=5 // pred_region
        // Predicated region
        $region37: #{tpu_custom_call.1} parent=35 // pred_check
          %p257 = pneg %p39
        $region38: #{tpu_custom_call.1} parent=35 // pred_check_branch
          %259 = sbr.rel (%p257) target = $region40
        $region39: #{tpu_custom_call.1} parent=35 // pred_region
          %s260 = smul.u32 8, %s19
          %p261 = scmp.lt.s32.totalorder %s260, 15
          %s262 = scalar_select %p261, %s260, 15
          %s263 = smul.addr %s262, 8
          %s264 = scalar_lea.vmem %s0, %s263
          %s265 = smul.u32 8, %s19
        $region40: #{tpu_custom_call.1} parent=35 // pred_fallthru
          _
        // Predicated region
        $region41: #{tpu_custom_call.1} parent=35 // pred_check
          %p266 = pneg %p170
        $region42: #{tpu_custom_call.1} parent=35 // pred_check_branch
          %268 = sbr.rel (%p266) target = $region44
        $region43: #{tpu_custom_call.1} parent=35 // pred_region
          %p269 = scmp.lt.s32.totalorder %s19, 1
          %s270 = scalar_select %p269, %s19, 1
          %s271 = smul.addr %s270, 8
          %s272 = scalar_lea.vmem %s6, %s271
        $region44: #{tpu_custom_call.1} parent=35 // pred_fallthru
          _
      $region36: #{tpu_custom_call.1} parent=5 // pred_fallthru
        _
      %p273 = scmp.le.s32.totalorder 1, %s19
      %p274 = scmp.lt.s32.totalorder %s19, 3
      %p275 = pnand %p273, %p274
      %p276 = pneg %p275
      // Predicated region
      $region45: #{tpu_custom_call.1} parent=5 // pred_check
        _
      $region46: #{tpu_custom_call.1} parent=5 // pred_check_branch
        %278 = sbr.rel (%p275) target = $region48
      $region47: #{tpu_custom_call.1} parent=5 // pred_region
        %s279 = ssub.s32 %s19, 1
        %s280 = smul.u32 8, %s24
        %p281 = scmp.lt.s32.totalorder %s280, 15
        %s282 = scalar_select %p281, %s280, 15
        %s283 = smul.addr %s282, 8
        %s284 = scalar_lea.vmem %s0, %s283
        %p285 = pneg %p45
        %p286 = pneg %p42
        %p287 = pneg %p66
        %p288 = pneg %p63
        %p289 = pneg %p87
        %p290 = pneg %p84
        %p291 = pneg %p108
        %p292 = pneg %p105
        %p293 = pneg %p129
        %p294 = pneg %p126
        %p295 = pneg %p150
        %p296 = pneg %p147
        %p297 = scmp.lt.s32.totalorder %s24, 1
        %s298 = scalar_select %p297, %s24, 1
        %s299 = smul.addr %s298, 8
        %s300 = scalar_lea.vmem %s6, %s299
        %p301 = pneg %p176
        %p302 = pneg %p173
        %p303 = pneg %p202
        %p304 = pneg %p199
        %s305 = sand.u32 %s189, 1
        %s306 = scalar_lea.sflag [#allocation4], %s305
        %s307 = sand.u32 %s189, 1
        %s308 = smul.addr %s307, 8
        %s309 = scalar_lea.vmem [#allocation3], %s308
        %p310 = pneg %p223
        %p311 = pneg %p220
        %s312 = smul.u32 8, %s24
        %p313 = scmp.lt.s32.totalorder %s312, 15
        %s314 = scalar_select %p313, %s312, 15
        %s315 = smul.addr %s314, 8
        %s316 = scalar_lea.vmem %s0, %s315
        %s317 = smul.u32 8, %s24
        %p318 = scmp.lt.s32.totalorder %s24, 1
        %s319 = scalar_select %p318, %s24, 1
        %s320 = smul.addr %s319, 8
        %s321 = scalar_lea.vmem %s6, %s320
        %p322 = scmp.eq.s32.totalorder %s24, 0
        // Predicated region
        $region49: #{tpu_custom_call.1} parent=47 // pred_check
          %p323 = pneg %p322
        $region50: #{tpu_custom_call.1} parent=47 // pred_check_branch
          %325 = sbr.rel (%p323) target = $region52
        $region51: #{tpu_custom_call.1} parent=47 // pred_region
          %vm326 = vcmask 261120
          %327 = vst.msk [vmem:[#allocation5] sm:$0xff] %vm326, 0.0
        $region52: #{tpu_custom_call.1} parent=47 // pred_fallthru
          _
        %v328 = vld [vmem:[%s1] sm:$0xff]
        %v329 = vld [vmem:[%s1 + $0x8] sm:$0xff]
        %v330 = vld [vmem:[%s1 + $0x10] sm:$0xff]
        %v331 = vld [vmem:[%s1 + $0x18] sm:$0xff]
        %v332 = vld [vmem:[%s1 + $0x20] sm:$0xff]
        %v333 = vld [vmem:[%s1 + $0x28] sm:$0xff]
        %v334 = vld [vmem:[%s1 + $0x30] sm:$0xff]
        %v335 = vld [vmem:[%s1 + $0x38] sm:$0xff]
        %v336 = vld [vmem:[%s1 + $0x40] sm:$0xff]
        %v337 = vld [vmem:[%s1 + $0x48] sm:$0xff]
        %v338 = vld [vmem:[%s1 + $0x50] sm:$0xff]
        %v339 = vld [vmem:[%s1 + $0x58] sm:$0xff]
        %v340 = vld [vmem:[%s1 + $0x60] sm:$0xff]
        %v341 = vld [vmem:[%s1 + $0x68] sm:$0xff]
        %v342 = vld [vmem:[%s1 + $0x70] sm:$0xff]
        %v343 = vld [vmem:[%s1 + $0x78] sm:$0xff]
        %v344 = vld [vmem:[%s1 + $0x80] sm:$0xff]
        %v345 = vld [vmem:[%s1 + $0x88] sm:$0xff]
        %v346 = vld [vmem:[%s1 + $0x90] sm:$0xff]
        %v347 = vld [vmem:[%s1 + $0x98] sm:$0xff]
        %v348 = vld [vmem:[%s1 + $0xa0] sm:$0xff]
        %v349 = vld [vmem:[%s1 + $0xa8] sm:$0xff]
        %v350 = vld [vmem:[%s1 + $0xb0] sm:$0xff]
        %v351 = vld [vmem:[%s1 + $0xb8] sm:$0xff]
        %v352 = vld [vmem:[%s1 + $0xc0] sm:$0xff]
        %v353 = vld [vmem:[%s1 + $0xc8] sm:$0xff]
        %v354 = vld [vmem:[%s1 + $0xd0] sm:$0xff]
        %v355 = vld [vmem:[%s1 + $0xd8] sm:$0xff]
        %v356 = vld [vmem:[%s1 + $0xe0] sm:$0xff]
        %v357 = vld [vmem:[%s1 + $0xe8] sm:$0xff]
        %v358 = vld [vmem:[%s1 + $0xf0] sm:$0xff]
        %v359 = vld [vmem:[%s1 + $0xf8] sm:$0xff]
        %v360 = vld [vmem:[%s2] sm:$0xff]
        %v361 = vld [vmem:[%s2 + $0x8] sm:$0xff]
        %v362 = vld [vmem:[%s2 + $0x10] sm:$0xff]
        %v363 = vld [vmem:[%s2 + $0x18] sm:$0xff]
        %v364 = vld [vmem:[%s2 + $0x20] sm:$0xff]
        %v365 = vld [vmem:[%s2 + $0x28] sm:$0xff]
        %v366 = vld [vmem:[%s2 + $0x30] sm:$0xff]
        %v367 = vld [vmem:[%s2 + $0x38] sm:$0xff]
        %v368 = vld [vmem:[%s2 + $0x40] sm:$0xff]
        %v369 = vld [vmem:[%s2 + $0x48] sm:$0xff]
        %v370 = vld [vmem:[%s2 + $0x50] sm:$0xff]
        %v371 = vld [vmem:[%s2 + $0x58] sm:$0xff]
        %v372 = vld [vmem:[%s2 + $0x60] sm:$0xff]
        %v373 = vld [vmem:[%s2 + $0x68] sm:$0xff]
        %v374 = vld [vmem:[%s2 + $0x70] sm:$0xff]
        %v375 = vld [vmem:[%s2 + $0x78] sm:$0xff]
        %v376 = vld [vmem:[%s2 + $0x80] sm:$0xff]
        %v377 = vld [vmem:[%s2 + $0x88] sm:$0xff]
        %v378 = vld [vmem:[%s2 + $0x90] sm:$0xff]
        %v379 = vld [vmem:[%s2 + $0x98] sm:$0xff]
        %v380 = vld [vmem:[%s2 + $0xa0] sm:$0xff]
        %v381 = vld [vmem:[%s2 + $0xa8] sm:$0xff]
        %v382 = vld [vmem:[%s2 + $0xb0] sm:$0xff]
        %v383 = vld [vmem:[%s2 + $0xb8] sm:$0xff]
        %v384 = vld [vmem:[%s2 + $0xc0] sm:$0xff]
        %v385 = vld [vmem:[%s2 + $0xc8] sm:$0xff]
        %v386 = vld [vmem:[%s2 + $0xd0] sm:$0xff]
        %v387 = vld [vmem:[%s2 + $0xd8] sm:$0xff]
        %v388 = vld [vmem:[%s2 + $0xe0] sm:$0xff]
        %v389 = vld [vmem:[%s2 + $0xe8] sm:$0xff]
        %v390 = vld [vmem:[%s2 + $0xf0] sm:$0xff]
        %v391 = vld [vmem:[%s2 + $0xf8] sm:$0xff]
        %v392 = vld [vmem:[%s3] sm:$0xff]
        %v393 = vld [vmem:[#allocation5] sm:$0xff]
        %v394 = vld [vmem:[%s316] sm:$0xff]
        %v396 = vcombine.high %v393, %v393
        %v398 = vunpack.c.l.s4 1966171168
        %v399 = vunpack.c.0.s8 %v398
        %v400 = vlaneseq
        %v401 = vshrl.u32 %v400, 7
        %v402 = vsub.s32 %v399, %v401
        %v403 = vrot.slane %v393, %v402
        %v405 = vunpack.c.l.s4 1966171168
        %v406 = vunpack.c.0.s8 %v405
        %v407 = vlaneseq
        %v408 = vshrl.u32 %v407, 7
        %v409 = vsub.s32 %v406, %v408
        %v410 = vrot.slane %v396, %v409
        %v411 = vcombine.high %v403, %v403
        %v412 = vcombine.high %v410, %v410
        %v414 = vunpack.c.l.s4 1966171168
        %v415 = vunpack.c.0.s8 %v414
        %v416 = vlaneseq
        %v417 = vshrl.u32 %v416, 7
        %v418 = vsub.s32 %v415, %v417
        %v419 = vrot.slane %v403, %v418
        %v421 = vunpack.c.l.s4 1966171168
        %v422 = vunpack.c.0.s8 %v421
        %v423 = vlaneseq
        %v424 = vshrl.u32 %v423, 7
        %v425 = vsub.s32 %v422, %v424
        %v426 = vrot.slane %v410, %v425
        %v428 = vunpack.c.l.s4 1966171168
        %v429 = vunpack.c.0.s8 %v428
        %v430 = vlaneseq
        %v431 = vshrl.u32 %v430, 7
        %v432 = vsub.s32 %v429, %v431
        %v433 = vrot.slane %v411, %v432
        %v435 = vunpack.c.l.s4 1966171168
        %v436 = vunpack.c.0.s8 %v435
        %v437 = vlaneseq
        %v438 = vshrl.u32 %v437, 7
        %v439 = vsub.s32 %v436, %v438
        %v440 = vrot.slane %v412, %v439
        %v441 = vcombine.high %v419, %v419
        %v442 = vcombine.high %v426, %v426
        %v443 = vcombine.high %v433, %v433
        %v444 = vcombine.high %v440, %v440
        %v445 = vlaneseq
        %v446 = vshrl.u32 %v445, 7
        %v447 = vsub.s32 0, %v446
        %v448 = vrot.slane %v419, %v447
        %v449 = vlaneseq
        %v450 = vshrl.u32 %v449, 7
        %v451 = vsub.s32 0, %v450
        %v452 = vrot.slane %v433, %v451
        %v453 = vlaneseq
        %v454 = vshrl.u32 %v453, 7
        %v455 = vsub.s32 0, %v454
        %v456 = vrot.slane %v441, %v455
        %v457 = vlaneseq
        %v458 = vshrl.u32 %v457, 7
        %v459 = vsub.s32 0, %v458
        %v460 = vrot.slane %v443, %v459
        %v461 = vlaneseq
        %v462 = vshrl.u32 %v461, 7
        %v463 = vsub.s32 0, %v462
        %v464 = vrot.slane %v426, %v463
        %v465 = vlaneseq
        %v466 = vshrl.u32 %v465, 7
        %v467 = vsub.s32 0, %v466
        %v468 = vrot.slane %v440, %v467
        %v469 = vlaneseq
        %v470 = vshrl.u32 %v469, 7
        %v471 = vsub.s32 0, %v470
        %v472 = vrot.slane %v442, %v471
        %v473 = vlaneseq
        %v474 = vshrl.u32 %v473, 7
        %v475 = vsub.s32 0, %v474
        %v476 = vrot.slane %v444, %v475
        %v485 = vmul.f32 %v328, %v448
        %v486 = vmul.f32 %v329, %v448
        %v487 = vmul.f32 %v330, %v448
        %v488 = vmul.f32 %v331, %v448
        %v489 = vmul.f32 %v332, %v452
        %v490 = vmul.f32 %v333, %v452
        %v491 = vmul.f32 %v334, %v452
        %v492 = vmul.f32 %v335, %v452
        %v493 = vmul.f32 %v336, %v456
        %v494 = vmul.f32 %v337, %v456
        %v495 = vmul.f32 %v338, %v456
        %v496 = vmul.f32 %v339, %v456
        %v497 = vmul.f32 %v340, %v460
        %v498 = vmul.f32 %v341, %v460
        %v499 = vmul.f32 %v342, %v460
        %v500 = vmul.f32 %v343, %v460
        %v501 = vmul.f32 %v344, %v464
        %v502 = vmul.f32 %v345, %v464
        %v503 = vmul.f32 %v346, %v464
        %v504 = vmul.f32 %v347, %v464
        %v505 = vmul.f32 %v348, %v468
        %v506 = vmul.f32 %v349, %v468
        %v507 = vmul.f32 %v350, %v468
        %v508 = vmul.f32 %v351, %v468
        %v509 = vmul.f32 %v352, %v472
        %v510 = vmul.f32 %v353, %v472
        %v511 = vmul.f32 %v354, %v472
        %v512 = vmul.f32 %v355, %v472
        %v513 = vmul.f32 %v356, %v476
        %v514 = vmul.f32 %v357, %v476
        %v515 = vmul.f32 %v358, %v476
        %v516 = vmul.f32 %v359, %v476
        %vm517 = vcmask 261120
        %v518 = vsel %vm517, %v485, 0.0
        %519 = vadd.xlane.f32.xlu0 %v518
        %v520 = vpop.xlane.xlu0 %519
        %v521 = vsel %vm517, %v486, 0.0
        %522 = vadd.xlane.f32.xlu0 %v521
        %v523 = vpop.xlane.xlu0 %522
        %v524 = vsel %vm517, %v487, 0.0
        %525 = vadd.xlane.f32.xlu0 %v524
        %v526 = vpop.xlane.xlu0 %525
        %v527 = vsel %vm517, %v488, 0.0
        %528 = vadd.xlane.f32.xlu0 %v527
        %v529 = vpop.xlane.xlu0 %528
        %v530 = vsel %vm517, %v489, 0.0
        %531 = vadd.xlane.f32.xlu0 %v530
        %v532 = vpop.xlane.xlu0 %531
        %v533 = vsel %vm517, %v490, 0.0
        %534 = vadd.xlane.f32.xlu0 %v533
        %v535 = vpop.xlane.xlu0 %534
        %v536 = vsel %vm517, %v491, 0.0
        %537 = vadd.xlane.f32.xlu0 %v536
        %v538 = vpop.xlane.xlu0 %537
        %v539 = vsel %vm517, %v492, 0.0
        %540 = vadd.xlane.f32.xlu0 %v539
        %v541 = vpop.xlane.xlu0 %540
        %v542 = vsel %vm517, %v493, 0.0
        %543 = vadd.xlane.f32.xlu0 %v542
        %v544 = vpop.xlane.xlu0 %543
        %v545 = vsel %vm517, %v494, 0.0
        %546 = vadd.xlane.f32.xlu0 %v545
        %v547 = vpop.xlane.xlu0 %546
        %v548 = vsel %vm517, %v495, 0.0
        %549 = vadd.xlane.f32.xlu0 %v548
        %v550 = vpop.xlane.xlu0 %549
        %v551 = vsel %vm517, %v496, 0.0
        %552 = vadd.xlane.f32.xlu0 %v551
        %v553 = vpop.xlane.xlu0 %552
        %v554 = vsel %vm517, %v497, 0.0
        %555 = vadd.xlane.f32.xlu0 %v554
        %v556 = vpop.xlane.xlu0 %555
        %v557 = vsel %vm517, %v498, 0.0
        %558 = vadd.xlane.f32.xlu0 %v557
        %v559 = vpop.xlane.xlu0 %558
        %v560 = vsel %vm517, %v499, 0.0
        %561 = vadd.xlane.f32.xlu0 %v560
        %v562 = vpop.xlane.xlu0 %561
        %v563 = vsel %vm517, %v500, 0.0
        %564 = vadd.xlane.f32.xlu0 %v563
        %v565 = vpop.xlane.xlu0 %564
        %v566 = vsel %vm517, %v501, 0.0
        %567 = vadd.xlane.f32.xlu0 %v566
        %v568 = vpop.xlane.xlu0 %567
        %v569 = vsel %vm517, %v502, 0.0
        %570 = vadd.xlane.f32.xlu0 %v569
        %v571 = vpop.xlane.xlu0 %570
        %v572 = vsel %vm517, %v503, 0.0
        %573 = vadd.xlane.f32.xlu0 %v572
        %v574 = vpop.xlane.xlu0 %573
        %v575 = vsel %vm517, %v504, 0.0
        %576 = vadd.xlane.f32.xlu0 %v575
        %v577 = vpop.xlane.xlu0 %576
        %v578 = vsel %vm517, %v505, 0.0
        %579 = vadd.xlane.f32.xlu0 %v578
        %v580 = vpop.xlane.xlu0 %579
        %v581 = vsel %vm517, %v506, 0.0
        %582 = vadd.xlane.f32.xlu0 %v581
        %v583 = vpop.xlane.xlu0 %582
        %v584 = vsel %vm517, %v507, 0.0
        %585 = vadd.xlane.f32.xlu0 %v584
        %v586 = vpop.xlane.xlu0 %585
        %v587 = vsel %vm517, %v508, 0.0
        %588 = vadd.xlane.f32.xlu0 %v587
        %v589 = vpop.xlane.xlu0 %588
        %v590 = vsel %vm517, %v509, 0.0
        %591 = vadd.xlane.f32.xlu0 %v590
        %v592 = vpop.xlane.xlu0 %591
        %v593 = vsel %vm517, %v510, 0.0
        %594 = vadd.xlane.f32.xlu0 %v593
        %v595 = vpop.xlane.xlu0 %594
        %v596 = vsel %vm517, %v511, 0.0
        %597 = vadd.xlane.f32.xlu0 %v596
        %v598 = vpop.xlane.xlu0 %597
        %v599 = vsel %vm517, %v512, 0.0
        %600 = vadd.xlane.f32.xlu0 %v599
        %v601 = vpop.xlane.xlu0 %600
        %v602 = vsel %vm517, %v513, 0.0
        %603 = vadd.xlane.f32.xlu0 %v602
        %v604 = vpop.xlane.xlu0 %603
        %v605 = vsel %vm517, %v514, 0.0
        %606 = vadd.xlane.f32.xlu0 %v605
        %v607 = vpop.xlane.xlu0 %606
        %v608 = vsel %vm517, %v515, 0.0
        %609 = vadd.xlane.f32.xlu0 %v608
        %v610 = vpop.xlane.xlu0 %609
        %v611 = vsel %vm517, %v516, 0.0
        %612 = vadd.xlane.f32.xlu0 %v611
        %v613 = vpop.xlane.xlu0 %612
        %v615 = vcombine.high %v394, %v394
        %v617 = vunpack.c.l.s4 1966171168
        %v618 = vunpack.c.0.s8 %v617
        %v619 = vlaneseq
        %v620 = vshrl.u32 %v619, 7
        %v621 = vsub.s32 %v618, %v620
        %v622 = vrot.slane %v394, %v621
        %v624 = vunpack.c.l.s4 1966171168
        %v625 = vunpack.c.0.s8 %v624
        %v626 = vlaneseq
        %v627 = vshrl.u32 %v626, 7
        %v628 = vsub.s32 %v625, %v627
        %v629 = vrot.slane %v615, %v628
        %v630 = vcombine.high %v622, %v622
        %v631 = vcombine.high %v629, %v629
        %v633 = vunpack.c.l.s4 1966171168
        %v634 = vunpack.c.0.s8 %v633
        %v635 = vlaneseq
        %v636 = vshrl.u32 %v635, 7
        %v637 = vsub.s32 %v634, %v636
        %v638 = vrot.slane %v622, %v637
        %v640 = vunpack.c.l.s4 1966171168
        %v641 = vunpack.c.0.s8 %v640
        %v642 = vlaneseq
        %v643 = vshrl.u32 %v642, 7
        %v644 = vsub.s32 %v641, %v643
        %v645 = vrot.slane %v629, %v644
        %v647 = vunpack.c.l.s4 1966171168
        %v648 = vunpack.c.0.s8 %v647
        %v649 = vlaneseq
        %v650 = vshrl.u32 %v649, 7
        %v651 = vsub.s32 %v648, %v650
        %v652 = vrot.slane %v630, %v651
        %v654 = vunpack.c.l.s4 1966171168
        %v655 = vunpack.c.0.s8 %v654
        %v656 = vlaneseq
        %v657 = vshrl.u32 %v656, 7
        %v658 = vsub.s32 %v655, %v657
        %v659 = vrot.slane %v631, %v658
        %v660 = vcombine.high %v638, %v638
        %v661 = vcombine.high %v645, %v645
        %v662 = vcombine.high %v652, %v652
        %v663 = vcombine.high %v659, %v659
        %v664 = vlaneseq
        %v665 = vshrl.u32 %v664, 7
        %v666 = vsub.s32 0, %v665
        %v667 = vrot.slane %v638, %v666
        %v668 = vlaneseq
        %v669 = vshrl.u32 %v668, 7
        %v670 = vsub.s32 0, %v669
        %v671 = vrot.slane %v652, %v670
        %v672 = vlaneseq
        %v673 = vshrl.u32 %v672, 7
        %v674 = vsub.s32 0, %v673
        %v675 = vrot.slane %v660, %v674
        %v676 = vlaneseq
        %v677 = vshrl.u32 %v676, 7
        %v678 = vsub.s32 0, %v677
        %v679 = vrot.slane %v662, %v678
        %v680 = vlaneseq
        %v681 = vshrl.u32 %v680, 7
        %v682 = vsub.s32 0, %v681
        %v683 = vrot.slane %v645, %v682
        %v684 = vlaneseq
        %v685 = vshrl.u32 %v684, 7
        %v686 = vsub.s32 0, %v685
        %v687 = vrot.slane %v659, %v686
        %v688 = vlaneseq
        %v689 = vshrl.u32 %v688, 7
        %v690 = vsub.s32 0, %v689
        %v691 = vrot.slane %v661, %v690
        %v692 = vlaneseq
        %v693 = vshrl.u32 %v692, 7
        %v694 = vsub.s32 0, %v693
        %v695 = vrot.slane %v663, %v694
        %v704 = vmul.f32 %v360, %v667
        %v705 = vmul.f32 %v361, %v667
        %v706 = vmul.f32 %v362, %v667
        %v707 = vmul.f32 %v363, %v667
        %v708 = vmul.f32 %v364, %v671
        %v709 = vmul.f32 %v365, %v671
        %v710 = vmul.f32 %v366, %v671
        %v711 = vmul.f32 %v367, %v671
        %v712 = vmul.f32 %v368, %v675
        %v713 = vmul.f32 %v369, %v675
        %v714 = vmul.f32 %v370, %v675
        %v715 = vmul.f32 %v371, %v675
        %v716 = vmul.f32 %v372, %v679
        %v717 = vmul.f32 %v373, %v679
        %v718 = vmul.f32 %v374, %v679
        %v719 = vmul.f32 %v375, %v679
        %v720 = vmul.f32 %v376, %v683
        %v721 = vmul.f32 %v377, %v683
        %v722 = vmul.f32 %v378, %v683
        %v723 = vmul.f32 %v379, %v683
        %v724 = vmul.f32 %v380, %v687
        %v725 = vmul.f32 %v381, %v687
        %v726 = vmul.f32 %v382, %v687
        %v727 = vmul.f32 %v383, %v687
        %v728 = vmul.f32 %v384, %v691
        %v729 = vmul.f32 %v385, %v691
        %v730 = vmul.f32 %v386, %v691
        %v731 = vmul.f32 %v387, %v691
        %v732 = vmul.f32 %v388, %v695
        %v733 = vmul.f32 %v389, %v695
        %v734 = vmul.f32 %v390, %v695
        %v735 = vmul.f32 %v391, %v695
        %vm736 = vcmask 31744
        %v737 = vsel %vm736, %v704, 0.0
        %738 = vadd.xlane.f32.xlu0 %v737
        %v739 = vpop.xlane.xlu0 %738
        %v740 = vsel %vm736, %v705, 0.0
        %741 = vadd.xlane.f32.xlu0 %v740
        %v742 = vpop.xlane.xlu0 %741
        %v743 = vsel %vm736, %v706, 0.0
        %744 = vadd.xlane.f32.xlu0 %v743
        %v745 = vpop.xlane.xlu0 %744
        %v746 = vsel %vm736, %v707, 0.0
        %747 = vadd.xlane.f32.xlu0 %v746
        %v748 = vpop.xlane.xlu0 %747
        %v749 = vsel %vm736, %v708, 0.0
        %750 = vadd.xlane.f32.xlu0 %v749
        %v751 = vpop.xlane.xlu0 %750
        %v752 = vsel %vm736, %v709, 0.0
        %753 = vadd.xlane.f32.xlu0 %v752
        %v754 = vpop.xlane.xlu0 %753
        %v755 = vsel %vm736, %v710, 0.0
        %756 = vadd.xlane.f32.xlu0 %v755
        %v757 = vpop.xlane.xlu0 %756
        %v758 = vsel %vm736, %v711, 0.0
        %759 = vadd.xlane.f32.xlu0 %v758
        %v760 = vpop.xlane.xlu0 %759
        %v761 = vsel %vm736, %v712, 0.0
        %762 = vadd.xlane.f32.xlu0 %v761
        %v763 = vpop.xlane.xlu0 %762
        %v764 = vsel %vm736, %v713, 0.0
        %765 = vadd.xlane.f32.xlu0 %v764
        %v766 = vpop.xlane.xlu0 %765
        %v767 = vsel %vm736, %v714, 0.0
        %768 = vadd.xlane.f32.xlu0 %v767
        %v769 = vpop.xlane.xlu0 %768
        %v770 = vsel %vm736, %v715, 0.0
        %771 = vadd.xlane.f32.xlu0 %v770
        %v772 = vpop.xlane.xlu0 %771
        %v773 = vsel %vm736, %v716, 0.0
        %774 = vadd.xlane.f32.xlu0 %v773
        %v775 = vpop.xlane.xlu0 %774
        %v776 = vsel %vm736, %v717, 0.0
        %777 = vadd.xlane.f32.xlu0 %v776
        %v778 = vpop.xlane.xlu0 %777
        %v779 = vsel %vm736, %v718, 0.0
        %780 = vadd.xlane.f32.xlu0 %v779
        %v781 = vpop.xlane.xlu0 %780
        %v782 = vsel %vm736, %v719, 0.0
        %783 = vadd.xlane.f32.xlu0 %v782
        %v784 = vpop.xlane.xlu0 %783
        %v785 = vsel %vm736, %v720, 0.0
        %786 = vadd.xlane.f32.xlu0 %v785
        %v787 = vpop.xlane.xlu0 %786
        %v788 = vsel %vm736, %v721, 0.0
        %789 = vadd.xlane.f32.xlu0 %v788
        %v790 = vpop.xlane.xlu0 %789
        %v791 = vsel %vm736, %v722, 0.0
        %792 = vadd.xlane.f32.xlu0 %v791
        %v793 = vpop.xlane.xlu0 %792
        %v794 = vsel %vm736, %v723, 0.0
        %795 = vadd.xlane.f32.xlu0 %v794
        %v796 = vpop.xlane.xlu0 %795
        %v797 = vsel %vm736, %v724, 0.0
        %798 = vadd.xlane.f32.xlu0 %v797
        %v799 = vpop.xlane.xlu0 %798
        %v800 = vsel %vm736, %v725, 0.0
        %801 = vadd.xlane.f32.xlu0 %v800
        %v802 = vpop.xlane.xlu0 %801
        %v803 = vsel %vm736, %v726, 0.0
        %804 = vadd.xlane.f32.xlu0 %v803
        %v805 = vpop.xlane.xlu0 %804
        %v806 = vsel %vm736, %v727, 0.0
        %807 = vadd.xlane.f32.xlu0 %v806
        %v808 = vpop.xlane.xlu0 %807
        %v809 = vsel %vm736, %v728, 0.0
        %810 = vadd.xlane.f32.xlu0 %v809
        %v811 = vpop.xlane.xlu0 %810
        %v812 = vsel %vm736, %v729, 0.0
        %813 = vadd.xlane.f32.xlu0 %v812
        %v814 = vpop.xlane.xlu0 %813
        %v815 = vsel %vm736, %v730, 0.0
        %816 = vadd.xlane.f32.xlu0 %v815
        %v817 = vpop.xlane.xlu0 %816
        %v818 = vsel %vm736, %v731, 0.0
        %819 = vadd.xlane.f32.xlu0 %v818
        %v820 = vpop.xlane.xlu0 %819
        %v821 = vsel %vm736, %v732, 0.0
        %822 = vadd.xlane.f32.xlu0 %v821
        %v823 = vpop.xlane.xlu0 %822
        %v824 = vsel %vm736, %v733, 0.0
        %825 = vadd.xlane.f32.xlu0 %v824
        %v826 = vpop.xlane.xlu0 %825
        %v827 = vsel %vm736, %v734, 0.0
        %828 = vadd.xlane.f32.xlu0 %v827
        %v829 = vpop.xlane.xlu0 %828
        %v830 = vsel %vm736, %v735, 0.0
        %831 = vadd.xlane.f32.xlu0 %v830
        %v832 = vpop.xlane.xlu0 %831
        %v833 = vadd.f32 %v520, %v739
        %v834 = vadd.f32 %v523, %v742
        %v835 = vadd.f32 %v526, %v745
        %v836 = vadd.f32 %v529, %v748
        %v837 = vadd.f32 %v532, %v751
        %v838 = vadd.f32 %v535, %v754
        %v839 = vadd.f32 %v538, %v757
        %v840 = vadd.f32 %v541, %v760
        %v841 = vadd.f32 %v544, %v763
        %v842 = vadd.f32 %v547, %v766
        %v843 = vadd.f32 %v550, %v769
        %v844 = vadd.f32 %v553, %v772
        %v845 = vadd.f32 %v556, %v775
        %v846 = vadd.f32 %v559, %v778
        %v847 = vadd.f32 %v562, %v781
        %v848 = vadd.f32 %v565, %v784
        %v849 = vadd.f32 %v568, %v787
        %v850 = vadd.f32 %v571, %v790
        %v851 = vadd.f32 %v574, %v793
        %v852 = vadd.f32 %v577, %v796
        %v853 = vadd.f32 %v580, %v799
        %v854 = vadd.f32 %v583, %v802
        %v855 = vadd.f32 %v586, %v805
        %v856 = vadd.f32 %v589, %v808
        %v857 = vadd.f32 %v592, %v811
        %v858 = vadd.f32 %v595, %v814
        %v859 = vadd.f32 %v598, %v817
        %v860 = vadd.f32 %v601, %v820
        %v861 = vadd.f32 %v604, %v823
        %v862 = vadd.f32 %v607, %v826
        %v863 = vadd.f32 %v610, %v829
        %v864 = vadd.f32 %v613, %v832
        %v866 = vlaneseq
        %v867 = vshrl.u32 %v866, 7
        %v868 = vsub.s32 0, %v867
        %v869 = vrot.slane %v392, %v868
        %871 = vbcast.lane.b32.xlu0 %v869, 256
        %v872 = vpop.permute.xlu0 %871
        %s874 = sor.u32 256, 8
        %875 = vbcast.lane.b32.xlu0 %v869, %s874
        %v876 = vpop.permute.xlu0 %875
        %s878 = sor.u32 256, 16
        %879 = vbcast.lane.b32.xlu0 %v869, %s878
        %v880 = vpop.permute.xlu0 %879
        %s882 = sor.u32 256, 24
        %883 = vbcast.lane.b32.xlu0 %v869, %s882
        %v884 = vpop.permute.xlu0 %883
        %v885 = vlaneseq
        %v886 = vshrl.u32 %v885, 7
        %v887 = vsub.s32 1, %v886
        %v888 = vrot.slane %v392, %v887
        %890 = vbcast.lane.b32.xlu0 %v888, 256
        %v891 = vpop.permute.xlu0 %890
        %s893 = sor.u32 256, 8
        %894 = vbcast.lane.b32.xlu0 %v888, %s893
        %v895 = vpop.permute.xlu0 %894
        %s897 = sor.u32 256, 16
        %898 = vbcast.lane.b32.xlu0 %v888, %s897
        %v899 = vpop.permute.xlu0 %898
        %s901 = sor.u32 256, 24
        %902 = vbcast.lane.b32.xlu0 %v888, %s901
        %v903 = vpop.permute.xlu0 %902
        %v904 = vlaneseq
        %v905 = vshrl.u32 %v904, 7
        %v906 = vsub.s32 2, %v905
        %v907 = vrot.slane %v392, %v906
        %909 = vbcast.lane.b32.xlu0 %v907, 256
        %v910 = vpop.permute.xlu0 %909
        %s912 = sor.u32 256, 8
        %913 = vbcast.lane.b32.xlu0 %v907, %s912
        %v914 = vpop.permute.xlu0 %913
        %s916 = sor.u32 256, 16
        %917 = vbcast.lane.b32.xlu0 %v907, %s916
        %v918 = vpop.permute.xlu0 %917
        %s920 = sor.u32 256, 24
        %921 = vbcast.lane.b32.xlu0 %v907, %s920
        %v922 = vpop.permute.xlu0 %921
        %v923 = vlaneseq
        %v924 = vshrl.u32 %v923, 7
        %v925 = vsub.s32 3, %v924
        %v926 = vrot.slane %v392, %v925
        %928 = vbcast.lane.b32.xlu0 %v926, 256
        %v929 = vpop.permute.xlu0 %928
        %s931 = sor.u32 256, 8
        %932 = vbcast.lane.b32.xlu0 %v926, %s931
        %v933 = vpop.permute.xlu0 %932
        %s935 = sor.u32 256, 16
        %936 = vbcast.lane.b32.xlu0 %v926, %s935
        %v937 = vpop.permute.xlu0 %936
        %s939 = sor.u32 256, 24
        %940 = vbcast.lane.b32.xlu0 %v926, %s939
        %v941 = vpop.permute.xlu0 %940
        %v942 = vlaneseq
        %v943 = vshrl.u32 %v942, 7
        %v944 = vsub.s32 4, %v943
        %v945 = vrot.slane %v392, %v944
        %947 = vbcast.lane.b32.xlu0 %v945, 256
        %v948 = vpop.permute.xlu0 %947
        %s950 = sor.u32 256, 8
        %951 = vbcast.lane.b32.xlu0 %v945, %s950
        %v952 = vpop.permute.xlu0 %951
        %s954 = sor.u32 256, 16
        %955 = vbcast.lane.b32.xlu0 %v945, %s954
        %v956 = vpop.permute.xlu0 %955
        %s958 = sor.u32 256, 24
        %959 = vbcast.lane.b32.xlu0 %v945, %s958
        %v960 = vpop.permute.xlu0 %959
        %v961 = vlaneseq
        %v962 = vshrl.u32 %v961, 7
        %v963 = vsub.s32 5, %v962
        %v964 = vrot.slane %v392, %v963
        %966 = vbcast.lane.b32.xlu0 %v964, 256
        %v967 = vpop.permute.xlu0 %966
        %s969 = sor.u32 256, 8
        %970 = vbcast.lane.b32.xlu0 %v964, %s969
        %v971 = vpop.permute.xlu0 %970
        %s973 = sor.u32 256, 16
        %974 = vbcast.lane.b32.xlu0 %v964, %s973
        %v975 = vpop.permute.xlu0 %974
        %s977 = sor.u32 256, 24
        %978 = vbcast.lane.b32.xlu0 %v964, %s977
        %v979 = vpop.permute.xlu0 %978
        %v980 = vlaneseq
        %v981 = vshrl.u32 %v980, 7
        %v982 = vsub.s32 6, %v981
        %v983 = vrot.slane %v392, %v982
        %985 = vbcast.lane.b32.xlu0 %v983, 256
        %v986 = vpop.permute.xlu0 %985
        %s988 = sor.u32 256, 8
        %989 = vbcast.lane.b32.xlu0 %v983, %s988
        %v990 = vpop.permute.xlu0 %989
        %s992 = sor.u32 256, 16
        %993 = vbcast.lane.b32.xlu0 %v983, %s992
        %v994 = vpop.permute.xlu0 %993
        %s996 = sor.u32 256, 24
        %997 = vbcast.lane.b32.xlu0 %v983, %s996
        %v998 = vpop.permute.xlu0 %997
        %v999 = vlaneseq
        %v1000 = vshrl.u32 %v999, 7
        %v1001 = vsub.s32 7, %v1000
        %v1002 = vrot.slane %v392, %v1001
        %1004 = vbcast.lane.b32.xlu0 %v1002, 256
        %v1005 = vpop.permute.xlu0 %1004
        %s1007 = sor.u32 256, 8
        %1008 = vbcast.lane.b32.xlu0 %v1002, %s1007
        %v1009 = vpop.permute.xlu0 %1008
        %s1011 = sor.u32 256, 16
        %1012 = vbcast.lane.b32.xlu0 %v1002, %s1011
        %v1013 = vpop.permute.xlu0 %1012
        %s1015 = sor.u32 256, 24
        %1016 = vbcast.lane.b32.xlu0 %v1002, %s1015
        %v1017 = vpop.permute.xlu0 %1016
        %v1050 = vadd.f32 %v833, %v872
        %v1051 = vadd.f32 %v834, %v876
        %v1052 = vadd.f32 %v835, %v880
        %v1053 = vadd.f32 %v836, %v884
        %v1054 = vadd.f32 %v837, %v891
        %v1055 = vadd.f32 %v838, %v895
        %v1056 = vadd.f32 %v839, %v899
        %v1057 = vadd.f32 %v840, %v903
        %v1058 = vadd.f32 %v841, %v910
        %v1059 = vadd.f32 %v842, %v914
        %v1060 = vadd.f32 %v843, %v918
        %v1061 = vadd.f32 %v844, %v922
        %v1062 = vadd.f32 %v845, %v929
        %v1063 = vadd.f32 %v846, %v933
        %v1064 = vadd.f32 %v847, %v937
        %v1065 = vadd.f32 %v848, %v941
        %v1066 = vadd.f32 %v849, %v948
        %v1067 = vadd.f32 %v850, %v952
        %v1068 = vadd.f32 %v851, %v956
        %v1069 = vadd.f32 %v852, %v960
        %v1070 = vadd.f32 %v853, %v967
        %v1071 = vadd.f32 %v854, %v971
        %v1072 = vadd.f32 %v855, %v975
        %v1073 = vadd.f32 %v856, %v979
        %v1074 = vadd.f32 %v857, %v986
        %v1075 = vadd.f32 %v858, %v990
        %v1076 = vadd.f32 %v859, %v994
        %v1077 = vadd.f32 %v860, %v998
        %v1078 = vadd.f32 %v861, %v1005
        %v1079 = vadd.f32 %v862, %v1009
        %v1080 = vadd.f32 %v863, %v1013
        %v1081 = vadd.f32 %v864, %v1017
        %v1082 = vtanh.pop %v1050
        %v1083 = vtanh.pop %v1051
        %v1084 = vtanh.pop %v1052
        %v1085 = vtanh.pop %v1053
        %v1086 = vtanh.pop %v1054
        %v1087 = vtanh.pop %v1055
        %v1088 = vtanh.pop %v1056
        %v1089 = vtanh.pop %v1057
        %v1090 = vtanh.pop %v1058
        %v1091 = vtanh.pop %v1059
        %v1092 = vtanh.pop %v1060
        %v1093 = vtanh.pop %v1061
        %v1094 = vtanh.pop %v1062
        %v1095 = vtanh.pop %v1063
        %v1096 = vtanh.pop %v1064
        %v1097 = vtanh.pop %v1065
        %v1098 = vtanh.pop %v1066
        %v1099 = vtanh.pop %v1067
        %v1100 = vtanh.pop %v1068
        %v1101 = vtanh.pop %v1069
        %v1102 = vtanh.pop %v1070
        %v1103 = vtanh.pop %v1071
        %v1104 = vtanh.pop %v1072
        %v1105 = vtanh.pop %v1073
        %v1106 = vtanh.pop %v1074
        %v1107 = vtanh.pop %v1075
        %v1108 = vtanh.pop %v1076
        %v1109 = vtanh.pop %v1077
        %v1110 = vtanh.pop %v1078
        %v1111 = vtanh.pop %v1079
        %v1112 = vtanh.pop %v1080
        %v1113 = vtanh.pop %v1081
        %1146 = vset.pattern.permute.xlu0 0
        %1147 = vperm.xlu0 %1146, %v1082
        %v1148 = vpop.permute.xlu0 %1147
        %1149 = vset.pattern.permute.xlu0 0
        %1150 = vperm.xlu0 %1149, %v1083
        %v1151 = vpop.permute.xlu0 %1150
        %1152 = vset.pattern.permute.xlu0 0
        %1153 = vperm.xlu0 %1152, %v1084
        %v1154 = vpop.permute.xlu0 %1153
        %1155 = vset.pattern.permute.xlu0 0
        %1156 = vperm.xlu0 %1155, %v1085
        %v1157 = vpop.permute.xlu0 %1156
        %1158 = vset.pattern.permute.xlu0 0
        %1159 = vperm.xlu0 %1158, %v1086
        %v1160 = vpop.permute.xlu0 %1159
        %1161 = vset.pattern.permute.xlu0 0
        %1162 = vperm.xlu0 %1161, %v1087
        %v1163 = vpop.permute.xlu0 %1162
        %1164 = vset.pattern.permute.xlu0 0
        %1165 = vperm.xlu0 %1164, %v1088
        %v1166 = vpop.permute.xlu0 %1165
        %1167 = vset.pattern.permute.xlu0 0
        %1168 = vperm.xlu0 %1167, %v1089
        %v1169 = vpop.permute.xlu0 %1168
        %1170 = vset.pattern.permute.xlu0 0
        %1171 = vperm.xlu0 %1170, %v1090
        %v1172 = vpop.permute.xlu0 %1171
        %1173 = vset.pattern.permute.xlu0 0
        %1174 = vperm.xlu0 %1173, %v1091
        %v1175 = vpop.permute.xlu0 %1174
        %1176 = vset.pattern.permute.xlu0 0
        %1177 = vperm.xlu0 %1176, %v1092
        %v1178 = vpop.permute.xlu0 %1177
        %1179 = vset.pattern.permute.xlu0 0
        %1180 = vperm.xlu0 %1179, %v1093
        %v1181 = vpop.permute.xlu0 %1180
        %1182 = vset.pattern.permute.xlu0 0
        %1183 = vperm.xlu0 %1182, %v1094
        %v1184 = vpop.permute.xlu0 %1183
        %1185 = vset.pattern.permute.xlu0 0
        %1186 = vperm.xlu0 %1185, %v1095
        %v1187 = vpop.permute.xlu0 %1186
        %1188 = vset.pattern.permute.xlu0 0
        %1189 = vperm.xlu0 %1188, %v1096
        %v1190 = vpop.permute.xlu0 %1189
        %1191 = vset.pattern.permute.xlu0 0
        %1192 = vperm.xlu0 %1191, %v1097
        %v1193 = vpop.permute.xlu0 %1192
        %1194 = vset.pattern.permute.xlu0 0
        %1195 = vperm.xlu0 %1194, %v1098
        %v1196 = vpop.permute.xlu0 %1195
        %1197 = vset.pattern.permute.xlu0 0
        %1198 = vperm.xlu0 %1197, %v1099
        %v1199 = vpop.permute.xlu0 %1198
        %1200 = vset.pattern.permute.xlu0 0
        %1201 = vperm.xlu0 %1200, %v1100
        %v1202 = vpop.permute.xlu0 %1201
        %1203 = vset.pattern.permute.xlu0 0
        %1204 = vperm.xlu0 %1203, %v1101
        %v1205 = vpop.permute.xlu0 %1204
        %1206 = vset.pattern.permute.xlu0 0
        %1207 = vperm.xlu0 %1206, %v1102
        %v1208 = vpop.permute.xlu0 %1207
        %1209 = vset.pattern.permute.xlu0 0
        %1210 = vperm.xlu0 %1209, %v1103
        %v1211 = vpop.permute.xlu0 %1210
        %1212 = vset.pattern.permute.xlu0 0
        %1213 = vperm.xlu0 %1212, %v1104
        %v1214 = vpop.permute.xlu0 %1213
        %1215 = vset.pattern.permute.xlu0 0
        %1216 = vperm.xlu0 %1215, %v1105
        %v1217 = vpop.permute.xlu0 %1216
        %1218 = vset.pattern.permute.xlu0 0
        %1219 = vperm.xlu0 %1218, %v1106
        %v1220 = vpop.permute.xlu0 %1219
        %1221 = vset.pattern.permute.xlu0 0
        %1222 = vperm.xlu0 %1221, %v1107
        %v1223 = vpop.permute.xlu0 %1222
        %1224 = vset.pattern.permute.xlu0 0
        %1225 = vperm.xlu0 %1224, %v1108
        %v1226 = vpop.permute.xlu0 %1225
        %1227 = vset.pattern.permute.xlu0 0
        %1228 = vperm.xlu0 %1227, %v1109
        %v1229 = vpop.permute.xlu0 %1228
        %1230 = vset.pattern.permute.xlu0 0
        %1231 = vperm.xlu0 %1230, %v1110
        %v1232 = vpop.permute.xlu0 %1231
        %1233 = vset.pattern.permute.xlu0 0
        %1234 = vperm.xlu0 %1233, %v1111
        %v1235 = vpop.permute.xlu0 %1234
        %1236 = vset.pattern.permute.xlu0 0
        %1237 = vperm.xlu0 %1236, %v1112
        %v1238 = vpop.permute.xlu0 %1237
        %1239 = vset.pattern.permute.xlu0 0
        %1240 = vperm.xlu0 %1239, %v1113
        %v1241 = vpop.permute.xlu0 %1240
        %v1242 = vlaneseq
        %v1243 = vand.u32 %v1242, 127
        %v1244 = vlaneseq
        %v1245 = vshrl.u32 %v1244, 7
        %v1246 = vsub.s32 %v1243, %v1245
        %v1247 = vrot.slane %v1148, %v1246
        %v1248 = vadd.s32 %v1243, 4294967288
        %v1249 = vlaneseq
        %v1250 = vshrl.u32 %v1249, 7
        %v1251 = vsub.s32 %v1248, %v1250
        %v1252 = vrot.slane %v1151, %v1251
        %vm1253 = vcmask 130112
        %v1254 = vsel %vm1253, %v1252, %v1247
        %v1255 = vadd.s32 %v1243, 4294967280
        %v1256 = vlaneseq
        %v1257 = vshrl.u32 %v1256, 7
        %v1258 = vsub.s32 %v1255, %v1257
        %v1259 = vrot.slane %v1154, %v1258
        %vm1260 = vcmask 195712
        %v1261 = vsel %vm1260, %v1259, %v1254
        %v1262 = vadd.s32 %v1243, 4294967272
        %v1263 = vlaneseq
        %v1264 = vshrl.u32 %v1263, 7
        %v1265 = vsub.s32 %v1262, %v1264
        %v1266 = vrot.slane %v1157, %v1265
        %vm1267 = vcmask 261312
        %v1268 = vsel %vm1267, %v1266, %v1261
        %v1269 = vlaneseq
        %v1270 = vshrl.u32 %v1269, 7
        %v1271 = vsub.s32 %v1243, %v1270
        %v1272 = vrot.slane %v1160, %v1271
        %v1273 = vlaneseq
        %v1274 = vshrl.u32 %v1273, 7
        %v1275 = vsub.s32 %v1248, %v1274
        %v1276 = vrot.slane %v1163, %v1275
        %v1277 = vsel %vm1253, %v1276, %v1272
        %v1278 = vlaneseq
        %v1279 = vshrl.u32 %v1278, 7
        %v1280 = vsub.s32 %v1255, %v1279
        %v1281 = vrot.slane %v1166, %v1280
        %v1282 = vsel %vm1260, %v1281, %v1277
        %v1283 = vlaneseq
        %v1284 = vshrl.u32 %v1283, 7
        %v1285 = vsub.s32 %v1262, %v1284
        %v1286 = vrot.slane %v1169, %v1285
        %v1287 = vsel %vm1267, %v1286, %v1282
        %v1288 = vlaneseq
        %v1289 = vshrl.u32 %v1288, 7
        %v1290 = vsub.s32 %v1243, %v1289
        %v1291 = vrot.slane %v1172, %v1290
        %v1292 = vlaneseq
        %v1293 = vshrl.u32 %v1292, 7
        %v1294 = vsub.s32 %v1248, %v1293
        %v1295 = vrot.slane %v1175, %v1294
        %v1296 = vsel %vm1253, %v1295, %v1291
        %v1297 = vlaneseq
        %v1298 = vshrl.u32 %v1297, 7
        %v1299 = vsub.s32 %v1255, %v1298
        %v1300 = vrot.slane %v1178, %v1299
        %v1301 = vsel %vm1260, %v1300, %v1296
        %v1302 = vlaneseq
        %v1303 = vshrl.u32 %v1302, 7
        %v1304 = vsub.s32 %v1262, %v1303
        %v1305 = vrot.slane %v1181, %v1304
        %v1306 = vsel %vm1267, %v1305, %v1301
        %v1307 = vlaneseq
        %v1308 = vshrl.u32 %v1307, 7
        %v1309 = vsub.s32 %v1243, %v1308
        %v1310 = vrot.slane %v1184, %v1309
        %v1311 = vlaneseq
        %v1312 = vshrl.u32 %v1311, 7
        %v1313 = vsub.s32 %v1248, %v1312
        %v1314 = vrot.slane %v1187, %v1313
        %v1315 = vsel %vm1253, %v1314, %v1310
        %v1316 = vlaneseq
        %v1317 = vshrl.u32 %v1316, 7
        %v1318 = vsub.s32 %v1255, %v1317
        %v1319 = vrot.slane %v1190, %v1318
        %v1320 = vsel %vm1260, %v1319, %v1315
        %v1321 = vlaneseq
        %v1322 = vshrl.u32 %v1321, 7
        %v1323 = vsub.s32 %v1262, %v1322
        %v1324 = vrot.slane %v1193, %v1323
        %v1325 = vsel %vm1267, %v1324, %v1320
        %v1326 = vlaneseq
        %v1327 = vshrl.u32 %v1326, 7
        %v1328 = vsub.s32 %v1243, %v1327
        %v1329 = vrot.slane %v1196, %v1328
        %v1330 = vlaneseq
        %v1331 = vshrl.u32 %v1330, 7
        %v1332 = vsub.s32 %v1248, %v1331
        %v1333 = vrot.slane %v1199, %v1332
        %v1334 = vsel %vm1253, %v1333, %v1329
        %v1335 = vlaneseq
        %v1336 = vshrl.u32 %v1335, 7
        %v1337 = vsub.s32 %v1255, %v1336
        %v1338 = vrot.slane %v1202, %v1337
        %v1339 = vsel %vm1260, %v1338, %v1334
        %v1340 = vlaneseq
        %v1341 = vshrl.u32 %v1340, 7
        %v1342 = vsub.s32 %v1262, %v1341
        %v1343 = vrot.slane %v1205, %v1342
        %v1344 = vsel %vm1267, %v1343, %v1339
        %v1345 = vlaneseq
        %v1346 = vshrl.u32 %v1345, 7
        %v1347 = vsub.s32 %v1243, %v1346
        %v1348 = vrot.slane %v1208, %v1347
        %v1349 = vlaneseq
        %v1350 = vshrl.u32 %v1349, 7
        %v1351 = vsub.s32 %v1248, %v1350
        %v1352 = vrot.slane %v1211, %v1351
        %v1353 = vsel %vm1253, %v1352, %v1348
        %v1354 = vlaneseq
        %v1355 = vshrl.u32 %v1354, 7
        %v1356 = vsub.s32 %v1255, %v1355
        %v1357 = vrot.slane %v1214, %v1356
        %v1358 = vsel %vm1260, %v1357, %v1353
        %v1359 = vlaneseq
        %v1360 = vshrl.u32 %v1359, 7
        %v1361 = vsub.s32 %v1262, %v1360
        %v1362 = vrot.slane %v1217, %v1361
        %v1363 = vsel %vm1267, %v1362, %v1358
        %v1364 = vlaneseq
        %v1365 = vshrl.u32 %v1364, 7
        %v1366 = vsub.s32 %v1243, %v1365
        %v1367 = vrot.slane %v1220, %v1366
        %v1368 = vlaneseq
        %v1369 = vshrl.u32 %v1368, 7
        %v1370 = vsub.s32 %v1248, %v1369
        %v1371 = vrot.slane %v1223, %v1370
        %v1372 = vsel %vm1253, %v1371, %v1367
        %v1373 = vlaneseq
        %v1374 = vshrl.u32 %v1373, 7
        %v1375 = vsub.s32 %v1255, %v1374
        %v1376 = vrot.slane %v1226, %v1375
        %v1377 = vsel %vm1260, %v1376, %v1372
        %v1378 = vlaneseq
        %v1379 = vshrl.u32 %v1378, 7
        %v1380 = vsub.s32 %v1262, %v1379
        %v1381 = vrot.slane %v1229, %v1380
        %v1382 = vsel %vm1267, %v1381, %v1377
        %v1383 = vlaneseq
        %v1384 = vshrl.u32 %v1383, 7
        %v1385 = vsub.s32 %v1243, %v1384
        %v1386 = vrot.slane %v1232, %v1385
        %v1387 = vlaneseq
        %v1388 = vshrl.u32 %v1387, 7
        %v1389 = vsub.s32 %v1248, %v1388
        %v1390 = vrot.slane %v1235, %v1389
        %v1391 = vsel %vm1253, %v1390, %v1386
        %v1392 = vlaneseq
        %v1393 = vshrl.u32 %v1392, 7
        %v1394 = vsub.s32 %v1255, %v1393
        %v1395 = vrot.slane %v1238, %v1394
        %v1396 = vsel %vm1260, %v1395, %v1391
        %v1397 = vlaneseq
        %v1398 = vshrl.u32 %v1397, 7
        %v1399 = vsub.s32 %v1262, %v1398
        %v1400 = vrot.slane %v1241, %v1399
        %v1401 = vsel %vm1267, %v1400, %v1396
        %vm1402 = vcmask 1041409
        %v1403 = vsel %vm1402, %v1287, %v1268
        %vm1404 = vcmask 1042434
        %v1405 = vsel %vm1404, %v1306, %v1403
        %vm1406 = vcmask 1043459
        %v1407 = vsel %vm1406, %v1325, %v1405
        %vm1408 = vcmask 1044484
        %v1409 = vsel %vm1408, %v1344, %v1407
        %vm1410 = vcmask 1045509
        %v1411 = vsel %vm1410, %v1363, %v1409
        %vm1412 = vcmask 1046534
        %v1413 = vsel %vm1412, %v1382, %v1411
        %vm1414 = vcmask 1047559
        %v1415 = vsel %vm1414, %v1401, %v1413
        %1417 = vst.msk [vmem:[#allocation2] sm:$0xff] %vm517, %v1415
        %s1418 = scalar_lea.vmem %s316, 8
        %v1419 = vld [vmem:[%s1418] sm:$0xff]
        %v1420 = vsel %vm1404, %v1268, %v1268
        %v1421 = vsel %vm1406, %v1268, %v1420
        %v1422 = vsel %vm1408, %v1268, %v1421
        %v1423 = vsel %vm1410, %v1268, %v1422
        %v1424 = vsel %vm1412, %v1268, %v1423
        %v1425 = vsel %vm1414, %v1268, %v1424
        %v1426 = vsel %vm1404, %v1287, %v1287
        %v1427 = vsel %vm1406, %v1287, %v1426
        %v1428 = vsel %vm1408, %v1287, %v1427
        %v1429 = vsel %vm1410, %v1287, %v1428
        %v1430 = vsel %vm1412, %v1287, %v1429
        %v1431 = vsel %vm1414, %v1287, %v1430
        %v1432 = vsel %vm1404, %v1306, %v1306
        %v1433 = vsel %vm1406, %v1306, %v1432
        %v1434 = vsel %vm1408, %v1306, %v1433
        %v1435 = vsel %vm1410, %v1306, %v1434
        %v1436 = vsel %vm1412, %v1306, %v1435
        %v1437 = vsel %vm1414, %v1306, %v1436
        %v1438 = vsel %vm1404, %v1325, %v1325
        %v1439 = vsel %vm1406, %v1325, %v1438
        %v1440 = vsel %vm1408, %v1325, %v1439
        %v1441 = vsel %vm1410, %v1325, %v1440
        %v1442 = vsel %vm1412, %v1325, %v1441
        %v1443 = vsel %vm1414, %v1325, %v1442
        %v1444 = vsel %vm1404, %v1344, %v1344
        %v1445 = vsel %vm1406, %v1344, %v1444
        %v1446 = vsel %vm1408, %v1344, %v1445
        %v1447 = vsel %vm1410, %v1344, %v1446
        %v1448 = vsel %vm1412, %v1344, %v1447
        %v1449 = vsel %vm1414, %v1344, %v1448
        %v1450 = vsel %vm1404, %v1363, %v1363
        %v1451 = vsel %vm1406, %v1363, %v1450
        %v1452 = vsel %vm1408, %v1363, %v1451
        %v1453 = vsel %vm1410, %v1363, %v1452
        %v1454 = vsel %vm1412, %v1363, %v1453
        %v1455 = vsel %vm1414, %v1363, %v1454
        %v1456 = vsel %vm1404, %v1382, %v1382
        %v1457 = vsel %vm1406, %v1382, %v1456
        %v1458 = vsel %vm1408, %v1382, %v1457
        %v1459 = vsel %vm1410, %v1382, %v1458
        %v1460 = vsel %vm1412, %v1382, %v1459
        %v1461 = vsel %vm1414, %v1382, %v1460
        %v1462 = vsel %vm1404, %v1401, %v1401
        %v1463 = vsel %vm1406, %v1401, %v1462
        %v1464 = vsel %vm1408, %v1401, %v1463
        %v1465 = vsel %vm1410, %v1401, %v1464
        %v1466 = vsel %vm1412, %v1401, %v1465
        %v1467 = vsel %vm1414, %v1401, %v1466
        %v1476 = vmul.f32 %v328, %v1425
        %v1477 = vmul.f32 %v329, %v1425
        %v1478 = vmul.f32 %v330, %v1425
        %v1479 = vmul.f32 %v331, %v1425
        %v1480 = vmul.f32 %v332, %v1431
        %v1481 = vmul.f32 %v333, %v1431
        %v1482 = vmul.f32 %v334, %v1431
        %v1483 = vmul.f32 %v335, %v1431
        %v1484 = vmul.f32 %v336, %v1437
        %v1485 = vmul.f32 %v337, %v1437
        %v1486 = vmul.f32 %v338, %v1437
        %v1487 = vmul.f32 %v339, %v1437
        %v1488 = vmul.f32 %v340, %v1443
        %v1489 = vmul.f32 %v341, %v1443
        %v1490 = vmul.f32 %v342, %v1443
        %v1491 = vmul.f32 %v343, %v1443
        %v1492 = vmul.f32 %v344, %v1449
        %v1493 = vmul.f32 %v345, %v1449
        %v1494 = vmul.f32 %v346, %v1449
        %v1495 = vmul.f32 %v347, %v1449
        %v1496 = vmul.f32 %v348, %v1455
        %v1497 = vmul.f32 %v349, %v1455
        %v1498 = vmul.f32 %v350, %v1455
        %v1499 = vmul.f32 %v351, %v1455
        %v1500 = vmul.f32 %v352, %v1461
        %v1501 = vmul.f32 %v353, %v1461
        %v1502 = vmul.f32 %v354, %v1461
        %v1503 = vmul.f32 %v355, %v1461
        %v1504 = vmul.f32 %v356, %v1467
        %v1505 = vmul.f32 %v357, %v1467
        %v1506 = vmul.f32 %v358, %v1467
        %v1507 = vmul.f32 %v359, %v1467
        %v1508 = vsel %vm517, %v1476, 0.0
        %1509 = vadd.xlane.f32.xlu0 %v1508
        %v1510 = vpop.xlane.xlu0 %1509
        %v1511 = vsel %vm517, %v1477, 0.0
        %1512 = vadd.xlane.f32.xlu0 %v1511
        %v1513 = vpop.xlane.xlu0 %1512
        %v1514 = vsel %vm517, %v1478, 0.0
        %1515 = vadd.xlane.f32.xlu0 %v1514
        %v1516 = vpop.xlane.xlu0 %1515
        %v1517 = vsel %vm517, %v1479, 0.0
        %1518 = vadd.xlane.f32.xlu0 %v1517
        %v1519 = vpop.xlane.xlu0 %1518
        %v1520 = vsel %vm517, %v1480, 0.0
        %1521 = vadd.xlane.f32.xlu0 %v1520
        %v1522 = vpop.xlane.xlu0 %1521
        %v1523 = vsel %vm517, %v1481, 0.0
        %1524 = vadd.xlane.f32.xlu0 %v1523
        %v1525 = vpop.xlane.xlu0 %1524
        %v1526 = vsel %vm517, %v1482, 0.0
        %1527 = vadd.xlane.f32.xlu0 %v1526
        %v1528 = vpop.xlane.xlu0 %1527
        %v1529 = vsel %vm517, %v1483, 0.0
        %1530 = vadd.xlane.f32.xlu0 %v1529
        %v1531 = vpop.xlane.xlu0 %1530
        %v1532 = vsel %vm517, %v1484, 0.0
        %1533 = vadd.xlane.f32.xlu0 %v1532
        %v1534 = vpop.xlane.xlu0 %1533
        %v1535 = vsel %vm517, %v1485, 0.0
        %1536 = vadd.xlane.f32.xlu0 %v1535
        %v1537 = vpop.xlane.xlu0 %1536
        %v1538 = vsel %vm517, %v1486, 0.0
        %1539 = vadd.xlane.f32.xlu0 %v1538
        %v1540 = vpop.xlane.xlu0 %1539
        %v1541 = vsel %vm517, %v1487, 0.0
        %1542 = vadd.xlane.f32.xlu0 %v1541
        %v1543 = vpop.xlane.xlu0 %1542
        %v1544 = vsel %vm517, %v1488, 0.0
        %1545 = vadd.xlane.f32.xlu0 %v1544
        %v1546 = vpop.xlane.xlu0 %1545
        %v1547 = vsel %vm517, %v1489, 0.0
        %1548 = vadd.xlane.f32.xlu0 %v1547
        %v1549 = vpop.xlane.xlu0 %1548
        %v1550 = vsel %vm517, %v1490, 0.0
        %1551 = vadd.xlane.f32.xlu0 %v1550
        %v1552 = vpop.xlane.xlu0 %1551
        %v1553 = vsel %vm517, %v1491, 0.0
        %1554 = vadd.xlane.f32.xlu0 %v1553
        %v1555 = vpop.xlane.xlu0 %1554
        %v1556 = vsel %vm517, %v1492, 0.0
        %1557 = vadd.xlane.f32.xlu0 %v1556
        %v1558 = vpop.xlane.xlu0 %1557
        %v1559 = vsel %vm517, %v1493, 0.0
        %1560 = vadd.xlane.f32.xlu0 %v1559
        %v1561 = vpop.xlane.xlu0 %1560
        %v1562 = vsel %vm517, %v1494, 0.0
        %1563 = vadd.xlane.f32.xlu0 %v1562
        %v1564 = vpop.xlane.xlu0 %1563
        %v1565 = vsel %vm517, %v1495, 0.0
        %1566 = vadd.xlane.f32.xlu0 %v1565
        %v1567 = vpop.xlane.xlu0 %1566
        %v1568 = vsel %vm517, %v1496, 0.0
        %1569 = vadd.xlane.f32.xlu0 %v1568
        %v1570 = vpop.xlane.xlu0 %1569
        %v1571 = vsel %vm517, %v1497, 0.0
        %1572 = vadd.xlane.f32.xlu0 %v1571
        %v1573 = vpop.xlane.xlu0 %1572
        %v1574 = vsel %vm517, %v1498, 0.0
        %1575 = vadd.xlane.f32.xlu0 %v1574
        %v1576 = vpop.xlane.xlu0 %1575
        %v1577 = vsel %vm517, %v1499, 0.0
        %1578 = vadd.xlane.f32.xlu0 %v1577
        %v1579 = vpop.xlane.xlu0 %1578
        %v1580 = vsel %vm517, %v1500, 0.0
        %1581 = vadd.xlane.f32.xlu0 %v1580
        %v1582 = vpop.xlane.xlu0 %1581
        %v1583 = vsel %vm517, %v1501, 0.0
        %1584 = vadd.xlane.f32.xlu0 %v1583
        %v1585 = vpop.xlane.xlu0 %1584
        %v1586 = vsel %vm517, %v1502, 0.0
        %1587 = vadd.xlane.f32.xlu0 %v1586
        %v1588 = vpop.xlane.xlu0 %1587
        %v1589 = vsel %vm517, %v1503, 0.0
        %1590 = vadd.xlane.f32.xlu0 %v1589
        %v1591 = vpop.xlane.xlu0 %1590
        %v1592 = vsel %vm517, %v1504, 0.0
        %1593 = vadd.xlane.f32.xlu0 %v1592
        %v1594 = vpop.xlane.xlu0 %1593
        %v1595 = vsel %vm517, %v1505, 0.0
        %1596 = vadd.xlane.f32.xlu0 %v1595
        %v1597 = vpop.xlane.xlu0 %1596
        %v1598 = vsel %vm517, %v1506, 0.0
        %1599 = vadd.xlane.f32.xlu0 %v1598
        %v1600 = vpop.xlane.xlu0 %1599
        %v1601 = vsel %vm517, %v1507, 0.0
        %1602 = vadd.xlane.f32.xlu0 %v1601
        %v1603 = vpop.xlane.xlu0 %1602
        %v1605 = vcombine.high %v1419, %v1419
        %v1607 = vunpack.c.l.s4 1966171168
        %v1608 = vunpack.c.0.s8 %v1607
        %v1609 = vlaneseq
        %v1610 = vshrl.u32 %v1609, 7
        %v1611 = vsub.s32 %v1608, %v1610
        %v1612 = vrot.slane %v1419, %v1611
        %v1614 = vunpack.c.l.s4 1966171168
        %v1615 = vunpack.c.0.s8 %v1614
        %v1616 = vlaneseq
        %v1617 = vshrl.u32 %v1616, 7
        %v1618 = vsub.s32 %v1615, %v1617
        %v1619 = vrot.slane %v1605, %v1618
        %v1620 = vcombine.high %v1612, %v1612
        %v1621 = vcombine.high %v1619, %v1619
        %v1623 = vunpack.c.l.s4 1966171168
        %v1624 = vunpack.c.0.s8 %v1623
        %v1625 = vlaneseq
        %v1626 = vshrl.u32 %v1625, 7
        %v1627 = vsub.s32 %v1624, %v1626
        %v1628 = vrot.slane %v1612, %v1627
        %v1630 = vunpack.c.l.s4 1966171168
        %v1631 = vunpack.c.0.s8 %v1630
        %v1632 = vlaneseq
        %v1633 = vshrl.u32 %v1632, 7
        %v1634 = vsub.s32 %v1631, %v1633
        %v1635 = vrot.slane %v1619, %v1634
        %v1637 = vunpack.c.l.s4 1966171168
        %v1638 = vunpack.c.0.s8 %v1637
        %v1639 = vlaneseq
        %v1640 = vshrl.u32 %v1639, 7
        %v1641 = vsub.s32 %v1638, %v1640
        %v1642 = vrot.slane %v1620, %v1641
        %v1644 = vunpack.c.l.s4 1966171168
        %v1645 = vunpack.c.0.s8 %v1644
        %v1646 = vlaneseq
        %v1647 = vshrl.u32 %v1646, 7
        %v1648 = vsub.s32 %v1645, %v1647
        %v1649 = vrot.slane %v1621, %v1648
        %v1650 = vcombine.high %v1628, %v1628
        %v1651 = vcombine.high %v1635, %v1635
        %v1652 = vcombine.high %v1642, %v1642
        %v1653 = vcombine.high %v1649, %v1649
        %v1654 = vlaneseq
        %v1655 = vshrl.u32 %v1654, 7
        %v1656 = vsub.s32 0, %v1655
        %v1657 = vrot.slane %v1628, %v1656
        %v1658 = vlaneseq
        %v1659 = vshrl.u32 %v1658, 7
        %v1660 = vsub.s32 0, %v1659
        %v1661 = vrot.slane %v1642, %v1660
        %v1662 = vlaneseq
        %v1663 = vshrl.u32 %v1662, 7
        %v1664 = vsub.s32 0, %v1663
        %v1665 = vrot.slane %v1650, %v1664
        %v1666 = vlaneseq
        %v1667 = vshrl.u32 %v1666, 7
        %v1668 = vsub.s32 0, %v1667
        %v1669 = vrot.slane %v1652, %v1668
        %v1670 = vlaneseq
        %v1671 = vshrl.u32 %v1670, 7
        %v1672 = vsub.s32 0, %v1671
        %v1673 = vrot.slane %v1635, %v1672
        %v1674 = vlaneseq
        %v1675 = vshrl.u32 %v1674, 7
        %v1676 = vsub.s32 0, %v1675
        %v1677 = vrot.slane %v1649, %v1676
        %v1678 = vlaneseq
        %v1679 = vshrl.u32 %v1678, 7
        %v1680 = vsub.s32 0, %v1679
        %v1681 = vrot.slane %v1651, %v1680
        %v1682 = vlaneseq
        %v1683 = vshrl.u32 %v1682, 7
        %v1684 = vsub.s32 0, %v1683
        %v1685 = vrot.slane %v1653, %v1684
        %v1694 = vmul.f32 %v360, %v1657
        %v1695 = vmul.f32 %v361, %v1657
        %v1696 = vmul.f32 %v362, %v1657
        %v1697 = vmul.f32 %v363, %v1657
        %v1698 = vmul.f32 %v364, %v1661
        %v1699 = vmul.f32 %v365, %v1661
        %v1700 = vmul.f32 %v366, %v1661
        %v1701 = vmul.f32 %v367, %v1661
        %v1702 = vmul.f32 %v368, %v1665
        %v1703 = vmul.f32 %v369, %v1665
        %v1704 = vmul.f32 %v370, %v1665
        %v1705 = vmul.f32 %v371, %v1665
        %v1706 = vmul.f32 %v372, %v1669
        %v1707 = vmul.f32 %v373, %v1669
        %v1708 = vmul.f32 %v374, %v1669
        %v1709 = vmul.f32 %v375, %v1669
        %v1710 = vmul.f32 %v376, %v1673
        %v1711 = vmul.f32 %v377, %v1673
        %v1712 = vmul.f32 %v378, %v1673
        %v1713 = vmul.f32 %v379, %v1673
        %v1714 = vmul.f32 %v380, %v1677
        %v1715 = vmul.f32 %v381, %v1677
        %v1716 = vmul.f32 %v382, %v1677
        %v1717 = vmul.f32 %v383, %v1677
        %v1718 = vmul.f32 %v384, %v1681
        %v1719 = vmul.f32 %v385, %v1681
        %v1720 = vmul.f32 %v386, %v1681
        %v1721 = vmul.f32 %v387, %v1681
        %v1722 = vmul.f32 %v388, %v1685
        %v1723 = vmul.f32 %v389, %v1685
        %v1724 = vmul.f32 %v390, %v1685
        %v1725 = vmul.f32 %v391, %v1685
        %v1726 = vsel %vm736, %v1694, 0.0
        %1727 = vadd.xlane.f32.xlu0 %v1726
        %v1728 = vpop.xlane.xlu0 %1727
        %v1729 = vsel %vm736, %v1695, 0.0
        %1730 = vadd.xlane.f32.xlu0 %v1729
        %v1731 = vpop.xlane.xlu0 %1730
        %v1732 = vsel %vm736, %v1696, 0.0
        %1733 = vadd.xlane.f32.xlu0 %v1732
        %v1734 = vpop.xlane.xlu0 %1733
        %v1735 = vsel %vm736, %v1697, 0.0
        %1736 = vadd.xlane.f32.xlu0 %v1735
        %v1737 = vpop.xlane.xlu0 %1736
        %v1738 = vsel %vm736, %v1698, 0.0
        %1739 = vadd.xlane.f32.xlu0 %v1738
        %v1740 = vpop.xlane.xlu0 %1739
        %v1741 = vsel %vm736, %v1699, 0.0
        %1742 = vadd.xlane.f32.xlu0 %v1741
        %v1743 = vpop.xlane.xlu0 %1742
        %v1744 = vsel %vm736, %v1700, 0.0
        %1745 = vadd.xlane.f32.xlu0 %v1744
        %v1746 = vpop.xlane.xlu0 %1745
        %v1747 = vsel %vm736, %v1701, 0.0
        %1748 = vadd.xlane.f32.xlu0 %v1747
        %v1749 = vpop.xlane.xlu0 %1748
        %v1750 = vsel %vm736, %v1702, 0.0
        %1751 = vadd.xlane.f32.xlu0 %v1750
        %v1752 = vpop.xlane.xlu0 %1751
        %v1753 = vsel %vm736, %v1703, 0.0
        %1754 = vadd.xlane.f32.xlu0 %v1753
        %v1755 = vpop.xlane.xlu0 %1754
        %v1756 = vsel %vm736, %v1704, 0.0
        %1757 = vadd.xlane.f32.xlu0 %v1756
        %v1758 = vpop.xlane.xlu0 %1757
        %v1759 = vsel %vm736, %v1705, 0.0
        %1760 = vadd.xlane.f32.xlu0 %v1759
        %v1761 = vpop.xlane.xlu0 %1760
        %v1762 = vsel %vm736, %v1706, 0.0
        %1763 = vadd.xlane.f32.xlu0 %v1762
        %v1764 = vpop.xlane.xlu0 %1763
        %v1765 = vsel %vm736, %v1707, 0.0
        %1766 = vadd.xlane.f32.xlu0 %v1765
        %v1767 = vpop.xlane.xlu0 %1766
        %v1768 = vsel %vm736, %v1708, 0.0
        %1769 = vadd.xlane.f32.xlu0 %v1768
        %v1770 = vpop.xlane.xlu0 %1769
        %v1771 = vsel %vm736, %v1709, 0.0
        %1772 = vadd.xlane.f32.xlu0 %v1771
        %v1773 = vpop.xlane.xlu0 %1772
        %v1774 = vsel %vm736, %v1710, 0.0
        %1775 = vadd.xlane.f32.xlu0 %v1774
        %v1776 = vpop.xlane.xlu0 %1775
        %v1777 = vsel %vm736, %v1711, 0.0
        %1778 = vadd.xlane.f32.xlu0 %v1777
        %v1779 = vpop.xlane.xlu0 %1778
        %v1780 = vsel %vm736, %v1712, 0.0
        %1781 = vadd.xlane.f32.xlu0 %v1780
        %v1782 = vpop.xlane.xlu0 %1781
        %v1783 = vsel %vm736, %v1713, 0.0
        %1784 = vadd.xlane.f32.xlu0 %v1783
        %v1785 = vpop.xlane.xlu0 %1784
        %v1786 = vsel %vm736, %v1714, 0.0
        %1787 = vadd.xlane.f32.xlu0 %v1786
        %v1788 = vpop.xlane.xlu0 %1787
        %v1789 = vsel %vm736, %v1715, 0.0
        %1790 = vadd.xlane.f32.xlu0 %v1789
        %v1791 = vpop.xlane.xlu0 %1790
        %v1792 = vsel %vm736, %v1716, 0.0
        %1793 = vadd.xlane.f32.xlu0 %v1792
        %v1794 = vpop.xlane.xlu0 %1793
        %v1795 = vsel %vm736, %v1717, 0.0
        %1796 = vadd.xlane.f32.xlu0 %v1795
        %v1797 = vpop.xlane.xlu0 %1796
        %v1798 = vsel %vm736, %v1718, 0.0
        %1799 = vadd.xlane.f32.xlu0 %v1798
        %v1800 = vpop.xlane.xlu0 %1799
        %v1801 = vsel %vm736, %v1719, 0.0
        %1802 = vadd.xlane.f32.xlu0 %v1801
        %v1803 = vpop.xlane.xlu0 %1802
        %v1804 = vsel %vm736, %v1720, 0.0
        %1805 = vadd.xlane.f32.xlu0 %v1804
        %v1806 = vpop.xlane.xlu0 %1805
        %v1807 = vsel %vm736, %v1721, 0.0
        %1808 = vadd.xlane.f32.xlu0 %v1807
        %v1809 = vpop.xlane.xlu0 %1808
        %v1810 = vsel %vm736, %v1722, 0.0
        %1811 = vadd.xlane.f32.xlu0 %v1810
        %v1812 = vpop.xlane.xlu0 %1811
        %v1813 = vsel %vm736, %v1723, 0.0
        %1814 = vadd.xlane.f32.xlu0 %v1813
        %v1815 = vpop.xlane.xlu0 %1814
        %v1816 = vsel %vm736, %v1724, 0.0
        %1817 = vadd.xlane.f32.xlu0 %v1816
        %v1818 = vpop.xlane.xlu0 %1817
        %v1819 = vsel %vm736, %v1725, 0.0
        %1820 = vadd.xlane.f32.xlu0 %v1819
        %v1821 = vpop.xlane.xlu0 %1820
        %v1822 = vadd.f32 %v1510, %v1728
        %v1823 = vadd.f32 %v1513, %v1731
        %v1824 = vadd.f32 %v1516, %v1734
        %v1825 = vadd.f32 %v1519, %v1737
        %v1826 = vadd.f32 %v1522, %v1740
        %v1827 = vadd.f32 %v1525, %v1743
        %v1828 = vadd.f32 %v1528, %v1746
        %v1829 = vadd.f32 %v1531, %v1749
        %v1830 = vadd.f32 %v1534, %v1752
        %v1831 = vadd.f32 %v1537, %v1755
        %v1832 = vadd.f32 %v1540, %v1758
        %v1833 = vadd.f32 %v1543, %v1761
        %v1834 = vadd.f32 %v1546, %v1764
        %v1835 = vadd.f32 %v1549, %v1767
        %v1836 = vadd.f32 %v1552, %v1770
        %v1837 = vadd.f32 %v1555, %v1773
        %v1838 = vadd.f32 %v1558, %v1776
        %v1839 = vadd.f32 %v1561, %v1779
        %v1840 = vadd.f32 %v1564, %v1782
        %v1841 = vadd.f32 %v1567, %v1785
        %v1842 = vadd.f32 %v1570, %v1788
        %v1843 = vadd.f32 %v1573, %v1791
        %v1844 = vadd.f32 %v1576, %v1794
        %v1845 = vadd.f32 %v1579, %v1797
        %v1846 = vadd.f32 %v1582, %v1800
        %v1847 = vadd.f32 %v1585, %v1803
        %v1848 = vadd.f32 %v1588, %v1806
        %v1849 = vadd.f32 %v1591, %v1809
        %v1850 = vadd.f32 %v1594, %v1812
        %v1851 = vadd.f32 %v1597, %v1815
        %v1852 = vadd.f32 %v1600, %v1818
        %v1853 = vadd.f32 %v1603, %v1821
        %v1854 = vadd.f32 %v1822, %v872
        %v1855 = vadd.f32 %v1823, %v876
        %v1856 = vadd.f32 %v1824, %v880
        %v1857 = vadd.f32 %v1825, %v884
        %v1858 = vadd.f32 %v1826, %v891
        %v1859 = vadd.f32 %v1827, %v895
        %v1860 = vadd.f32 %v1828, %v899
        %v1861 = vadd.f32 %v1829, %v903
        %v1862 = vadd.f32 %v1830, %v910
        %v1863 = vadd.f32 %v1831, %v914
        %v1864 = vadd.f32 %v1832, %v918
        %v1865 = vadd.f32 %v1833, %v922
        %v1866 = vadd.f32 %v1834, %v929
        %v1867 = vadd.f32 %v1835, %v933
        %v1868 = vadd.f32 %v1836, %v937
        %v1869 = vadd.f32 %v1837, %v941
        %v1870 = vadd.f32 %v1838, %v948
        %v1871 = vadd.f32 %v1839, %v952
        %v1872 = vadd.f32 %v1840, %v956
        %v1873 = vadd.f32 %v1841, %v960
        %v1874 = vadd.f32 %v1842, %v967
        %v1875 = vadd.f32 %v1843, %v971
        %v1876 = vadd.f32 %v1844, %v975
        %v1877 = vadd.f32 %v1845, %v979
        %v1878 = vadd.f32 %v1846, %v986
        %v1879 = vadd.f32 %v1847, %v990
        %v1880 = vadd.f32 %v1848, %v994
        %v1881 = vadd.f32 %v1849, %v998
        %v1882 = vadd.f32 %v1850, %v1005
        %v1883 = vadd.f32 %v1851, %v1009
        %v1884 = vadd.f32 %v1852, %v1013
        %v1885 = vadd.f32 %v1853, %v1017
        %v1886 = vtanh.pop %v1854
        %v1887 = vtanh.pop %v1855
        %v1888 = vtanh.pop %v1856
        %v1889 = vtanh.pop %v1857
        %v1890 = vtanh.pop %v1858
        %v1891 = vtanh.pop %v1859
        %v1892 = vtanh.pop %v1860
        %v1893 = vtanh.pop %v1861
        %v1894 = vtanh.pop %v1862
        %v1895 = vtanh.pop %v1863
        %v1896 = vtanh.pop %v1864
        %v1897 = vtanh.pop %v1865
        %v1898 = vtanh.pop %v1866
        %v1899 = vtanh.pop %v1867
        %v1900 = vtanh.pop %v1868
        %v1901 = vtanh.pop %v1869
        %v1902 = vtanh.pop %v1870
        %v1903 = vtanh.pop %v1871
        %v1904 = vtanh.pop %v1872
        %v1905 = vtanh.pop %v1873
        %v1906 = vtanh.pop %v1874
        %v1907 = vtanh.pop %v1875
        %v1908 = vtanh.pop %v1876
        %v1909 = vtanh.pop %v1877
        %v1910 = vtanh.pop %v1878
        %v1911 = vtanh.pop %v1879
        %v1912 = vtanh.pop %v1880
        %v1913 = vtanh.pop %v1881
        %v1914 = vtanh.pop %v1882
        %v1915 = vtanh.pop %v1883
        %v1916 = vtanh.pop %v1884
        %v1917 = vtanh.pop %v1885
        %1950 = vset.pattern.permute.xlu0 0
        %1951 = vperm.xlu0 %1950, %v1886
        %v1952 = vpop.permute.xlu0 %1951
        %1953 = vset.pattern.permute.xlu0 0
        %1954 = vperm.xlu0 %1953, %v1887
        %v1955 = vpop.permute.xlu0 %1954
        %1956 = vset.pattern.permute.xlu0 0
        %1957 = vperm.xlu0 %1956, %v1888
        %v1958 = vpop.permute.xlu0 %1957
        %1959 = vset.pattern.permute.xlu0 0
        %1960 = vperm.xlu0 %1959, %v1889
        %v1961 = vpop.permute.xlu0 %1960
        %1962 = vset.pattern.permute.xlu0 0
        %1963 = vperm.xlu0 %1962, %v1890
        %v1964 = vpop.permute.xlu0 %1963
        %1965 = vset.pattern.permute.xlu0 0
        %1966 = vperm.xlu0 %1965, %v1891
        %v1967 = vpop.permute.xlu0 %1966
        %1968 = vset.pattern.permute.xlu0 0
        %1969 = vperm.xlu0 %1968, %v1892
        %v1970 = vpop.permute.xlu0 %1969
        %1971 = vset.pattern.permute.xlu0 0
        %1972 = vperm.xlu0 %1971, %v1893
        %v1973 = vpop.permute.xlu0 %1972
        %1974 = vset.pattern.permute.xlu0 0
        %1975 = vperm.xlu0 %1974, %v1894
        %v1976 = vpop.permute.xlu0 %1975
        %1977 = vset.pattern.permute.xlu0 0
        %1978 = vperm.xlu0 %1977, %v1895
        %v1979 = vpop.permute.xlu0 %1978
        %1980 = vset.pattern.permute.xlu0 0
        %1981 = vperm.xlu0 %1980, %v1896
        %v1982 = vpop.permute.xlu0 %1981
        %1983 = vset.pattern.permute.xlu0 0
        %1984 = vperm.xlu0 %1983, %v1897
        %v1985 = vpop.permute.xlu0 %1984
        %1986 = vset.pattern.permute.xlu0 0
        %1987 = vperm.xlu0 %1986, %v1898
        %v1988 = vpop.permute.xlu0 %1987
        %1989 = vset.pattern.permute.xlu0 0
        %1990 = vperm.xlu0 %1989, %v1899
        %v1991 = vpop.permute.xlu0 %1990
        %1992 = vset.pattern.permute.xlu0 0
        %1993 = vperm.xlu0 %1992, %v1900
        %v1994 = vpop.permute.xlu0 %1993
        %1995 = vset.pattern.permute.xlu0 0
        %1996 = vperm.xlu0 %1995, %v1901
        %v1997 = vpop.permute.xlu0 %1996
        %1998 = vset.pattern.permute.xlu0 0
        %1999 = vperm.xlu0 %1998, %v1902
        %v2000 = vpop.permute.xlu0 %1999
        %2001 = vset.pattern.permute.xlu0 0
        %2002 = vperm.xlu0 %2001, %v1903
        %v2003 = vpop.permute.xlu0 %2002
        %2004 = vset.pattern.permute.xlu0 0
        %2005 = vperm.xlu0 %2004, %v1904
        %v2006 = vpop.permute.xlu0 %2005
        %2007 = vset.pattern.permute.xlu0 0
        %2008 = vperm.xlu0 %2007, %v1905
        %v2009 = vpop.permute.xlu0 %2008
        %2010 = vset.pattern.permute.xlu0 0
        %2011 = vperm.xlu0 %2010, %v1906
        %v2012 = vpop.permute.xlu0 %2011
        %2013 = vset.pattern.permute.xlu0 0
        %2014 = vperm.xlu0 %2013, %v1907
        %v2015 = vpop.permute.xlu0 %2014
        %2016 = vset.pattern.permute.xlu0 0
        %2017 = vperm.xlu0 %2016, %v1908
        %v2018 = vpop.permute.xlu0 %2017
        %2019 = vset.pattern.permute.xlu0 0
        %2020 = vperm.xlu0 %2019, %v1909
        %v2021 = vpop.permute.xlu0 %2020
        %2022 = vset.pattern.permute.xlu0 0
        %2023 = vperm.xlu0 %2022, %v1910
        %v2024 = vpop.permute.xlu0 %2023
        %2025 = vset.pattern.permute.xlu0 0
        %2026 = vperm.xlu0 %2025, %v1911
        %v2027 = vpop.permute.xlu0 %2026
        %2028 = vset.pattern.permute.xlu0 0
        %2029 = vperm.xlu0 %2028, %v1912
        %v2030 = vpop.permute.xlu0 %2029
        %2031 = vset.pattern.permute.xlu0 0
        %2032 = vperm.xlu0 %2031, %v1913
        %v2033 = vpop.permute.xlu0 %2032
        %2034 = vset.pattern.permute.xlu0 0
        %2035 = vperm.xlu0 %2034, %v1914
        %v2036 = vpop.permute.xlu0 %2035
        %2037 = vset.pattern.permute.xlu0 0
        %2038 = vperm.xlu0 %2037, %v1915
        %v2039 = vpop.permute.xlu0 %2038
        %2040 = vset.pattern.permute.xlu0 0
        %2041 = vperm.xlu0 %2040, %v1916
        %v2042 = vpop.permute.xlu0 %2041
        %2043 = vset.pattern.permute.xlu0 0
        %2044 = vperm.xlu0 %2043, %v1917
        %v2045 = vpop.permute.xlu0 %2044
        %v2046 = vlaneseq
        %v2047 = vshrl.u32 %v2046, 7
        %v2048 = vsub.s32 %v1243, %v2047
        %v2049 = vrot.slane %v1952, %v2048
        %v2050 = vlaneseq
        %v2051 = vshrl.u32 %v2050, 7
        %v2052 = vsub.s32 %v1248, %v2051
        %v2053 = vrot.slane %v1955, %v2052
        %v2054 = vsel %vm1253, %v2053, %v2049
        %v2055 = vlaneseq
        %v2056 = vshrl.u32 %v2055, 7
        %v2057 = vsub.s32 %v1255, %v2056
        %v2058 = vrot.slane %v1958, %v2057
        %v2059 = vsel %vm1260, %v2058, %v2054
        %v2060 = vlaneseq
        %v2061 = vshrl.u32 %v2060, 7
        %v2062 = vsub.s32 %v1262, %v2061
        %v2063 = vrot.slane %v1961, %v2062
        %v2064 = vsel %vm1267, %v2063, %v2059
        %v2065 = vlaneseq
        %v2066 = vshrl.u32 %v2065, 7
        %v2067 = vsub.s32 %v1243, %v2066
        %v2068 = vrot.slane %v1964, %v2067
        %v2069 = vlaneseq
        %v2070 = vshrl.u32 %v2069, 7
        %v2071 = vsub.s32 %v1248, %v2070
        %v2072 = vrot.slane %v1967, %v2071
        %v2073 = vsel %vm1253, %v2072, %v2068
        %v2074 = vlaneseq
        %v2075 = vshrl.u32 %v2074, 7
        %v2076 = vsub.s32 %v1255, %v2075
        %v2077 = vrot.slane %v1970, %v2076
        %v2078 = vsel %vm1260, %v2077, %v2073
        %v2079 = vlaneseq
        %v2080 = vshrl.u32 %v2079, 7
        %v2081 = vsub.s32 %v1262, %v2080
        %v2082 = vrot.slane %v1973, %v2081
        %v2083 = vsel %vm1267, %v2082, %v2078
        %v2084 = vlaneseq
        %v2085 = vshrl.u32 %v2084, 7
        %v2086 = vsub.s32 %v1243, %v2085
        %v2087 = vrot.slane %v1976, %v2086
        %v2088 = vlaneseq
        %v2089 = vshrl.u32 %v2088, 7
        %v2090 = vsub.s32 %v1248, %v2089
        %v2091 = vrot.slane %v1979, %v2090
        %v2092 = vsel %vm1253, %v2091, %v2087
        %v2093 = vlaneseq
        %v2094 = vshrl.u32 %v2093, 7
        %v2095 = vsub.s32 %v1255, %v2094
        %v2096 = vrot.slane %v1982, %v2095
        %v2097 = vsel %vm1260, %v2096, %v2092
        %v2098 = vlaneseq
        %v2099 = vshrl.u32 %v2098, 7
        %v2100 = vsub.s32 %v1262, %v2099
        %v2101 = vrot.slane %v1985, %v2100
        %v2102 = vsel %vm1267, %v2101, %v2097
        %v2103 = vlaneseq
        %v2104 = vshrl.u32 %v2103, 7
        %v2105 = vsub.s32 %v1243, %v2104
        %v2106 = vrot.slane %v1988, %v2105
        %v2107 = vlaneseq
        %v2108 = vshrl.u32 %v2107, 7
        %v2109 = vsub.s32 %v1248, %v2108
        %v2110 = vrot.slane %v1991, %v2109
        %v2111 = vsel %vm1253, %v2110, %v2106
        %v2112 = vlaneseq
        %v2113 = vshrl.u32 %v2112, 7
        %v2114 = vsub.s32 %v1255, %v2113
        %v2115 = vrot.slane %v1994, %v2114
        %v2116 = vsel %vm1260, %v2115, %v2111
        %v2117 = vlaneseq
        %v2118 = vshrl.u32 %v2117, 7
        %v2119 = vsub.s32 %v1262, %v2118
        %v2120 = vrot.slane %v1997, %v2119
        %v2121 = vsel %vm1267, %v2120, %v2116
        %v2122 = vlaneseq
        %v2123 = vshrl.u32 %v2122, 7
        %v2124 = vsub.s32 %v1243, %v2123
        %v2125 = vrot.slane %v2000, %v2124
        %v2126 = vlaneseq
        %v2127 = vshrl.u32 %v2126, 7
        %v2128 = vsub.s32 %v1248, %v2127
        %v2129 = vrot.slane %v2003, %v2128
        %v2130 = vsel %vm1253, %v2129, %v2125
        %v2131 = vlaneseq
        %v2132 = vshrl.u32 %v2131, 7
        %v2133 = vsub.s32 %v1255, %v2132
        %v2134 = vrot.slane %v2006, %v2133
        %v2135 = vsel %vm1260, %v2134, %v2130
        %v2136 = vlaneseq
        %v2137 = vshrl.u32 %v2136, 7
        %v2138 = vsub.s32 %v1262, %v2137
        %v2139 = vrot.slane %v2009, %v2138
        %v2140 = vsel %vm1267, %v2139, %v2135
        %v2141 = vlaneseq
        %v2142 = vshrl.u32 %v2141, 7
        %v2143 = vsub.s32 %v1243, %v2142
        %v2144 = vrot.slane %v2012, %v2143
        %v2145 = vlaneseq
        %v2146 = vshrl.u32 %v2145, 7
        %v2147 = vsub.s32 %v1248, %v2146
        %v2148 = vrot.slane %v2015, %v2147
        %v2149 = vsel %vm1253, %v2148, %v2144
        %v2150 = vlaneseq
        %v2151 = vshrl.u32 %v2150, 7
        %v2152 = vsub.s32 %v1255, %v2151
        %v2153 = vrot.slane %v2018, %v2152
        %v2154 = vsel %vm1260, %v2153, %v2149
        %v2155 = vlaneseq
        %v2156 = vshrl.u32 %v2155, 7
        %v2157 = vsub.s32 %v1262, %v2156
        %v2158 = vrot.slane %v2021, %v2157
        %v2159 = vsel %vm1267, %v2158, %v2154
        %v2160 = vlaneseq
        %v2161 = vshrl.u32 %v2160, 7
        %v2162 = vsub.s32 %v1243, %v2161
        %v2163 = vrot.slane %v2024, %v2162
        %v2164 = vlaneseq
        %v2165 = vshrl.u32 %v2164, 7
        %v2166 = vsub.s32 %v1248, %v2165
        %v2167 = vrot.slane %v2027, %v2166
        %v2168 = vsel %vm1253, %v2167, %v2163
        %v2169 = vlaneseq
        %v2170 = vshrl.u32 %v2169, 7
        %v2171 = vsub.s32 %v1255, %v2170
        %v2172 = vrot.slane %v2030, %v2171
        %v2173 = vsel %vm1260, %v2172, %v2168
        %v2174 = vlaneseq
        %v2175 = vshrl.u32 %v2174, 7
        %v2176 = vsub.s32 %v1262, %v2175
        %v2177 = vrot.slane %v2033, %v2176
        %v2178 = vsel %vm1267, %v2177, %v2173
        %v2179 = vlaneseq
        %v2180 = vshrl.u32 %v2179, 7
        %v2181 = vsub.s32 %v1243, %v2180
        %v2182 = vrot.slane %v2036, %v2181
        %v2183 = vlaneseq
        %v2184 = vshrl.u32 %v2183, 7
        %v2185 = vsub.s32 %v1248, %v2184
        %v2186 = vrot.slane %v2039, %v2185
        %v2187 = vsel %vm1253, %v2186, %v2182
        %v2188 = vlaneseq
        %v2189 = vshrl.u32 %v2188, 7
        %v2190 = vsub.s32 %v1255, %v2189
        %v2191 = vrot.slane %v2042, %v2190
        %v2192 = vsel %vm1260, %v2191, %v2187
        %v2193 = vlaneseq
        %v2194 = vshrl.u32 %v2193, 7
        %v2195 = vsub.s32 %v1262, %v2194
        %v2196 = vrot.slane %v2045, %v2195
        %v2197 = vsel %vm1267, %v2196, %v2192
        %v2198 = vsel %vm1402, %v2083, %v2064
        %v2199 = vsel %vm1404, %v2102, %v2198
        %v2200 = vsel %vm1406, %v2121, %v2199
        %v2201 = vsel %vm1408, %v2140, %v2200
        %v2202 = vsel %vm1410, %v2159, %v2201
        %v2203 = vsel %vm1412, %v2178, %v2202
        %v2204 = vsel %vm1414, %v2197, %v2203
        %s2206 = scalar_lea.vmem [#allocation2], 8
        %2207 = vst.msk [vmem:[%s2206] sm:$0xff] %vm517, %v2204
        %s2208 = scalar_lea.vmem %s316, 16
        %v2209 = vld [vmem:[%s2208] sm:$0xff]
        %v2210 = vsel %vm1404, %v2064, %v2064
        %v2211 = vsel %vm1406, %v2064, %v2210
        %v2212 = vsel %vm1408, %v2064, %v2211
        %v2213 = vsel %vm1410, %v2064, %v2212
        %v2214 = vsel %vm1412, %v2064, %v2213
        %v2215 = vsel %vm1414, %v2064, %v2214
        %v2216 = vsel %vm1404, %v2083, %v2083
        %v2217 = vsel %vm1406, %v2083, %v2216
        %v2218 = vsel %vm1408, %v2083, %v2217
        %v2219 = vsel %vm1410, %v2083, %v2218
        %v2220 = vsel %vm1412, %v2083, %v2219
        %v2221 = vsel %vm1414, %v2083, %v2220
        %v2222 = vsel %vm1404, %v2102, %v2102
        %v2223 = vsel %vm1406, %v2102, %v2222
        %v2224 = vsel %vm1408, %v2102, %v2223
        %v2225 = vsel %vm1410, %v2102, %v2224
        %v2226 = vsel %vm1412, %v2102, %v2225
        %v2227 = vsel %vm1414, %v2102, %v2226
        %v2228 = vsel %vm1404, %v2121, %v2121
        %v2229 = vsel %vm1406, %v2121, %v2228
        %v2230 = vsel %vm1408, %v2121, %v2229
        %v2231 = vsel %vm1410, %v2121, %v2230
        %v2232 = vsel %vm1412, %v2121, %v2231
        %v2233 = vsel %vm1414, %v2121, %v2232
        %v2234 = vsel %vm1404, %v2140, %v2140
        %v2235 = vsel %vm1406, %v2140, %v2234
        %v2236 = vsel %vm1408, %v2140, %v2235
        %v2237 = vsel %vm1410, %v2140, %v2236
        %v2238 = vsel %vm1412, %v2140, %v2237
        %v2239 = vsel %vm1414, %v2140, %v2238
        %v2240 = vsel %vm1404, %v2159, %v2159
        %v2241 = vsel %vm1406, %v2159, %v2240
        %v2242 = vsel %vm1408, %v2159, %v2241
        %v2243 = vsel %vm1410, %v2159, %v2242
        %v2244 = vsel %vm1412, %v2159, %v2243
        %v2245 = vsel %vm1414, %v2159, %v2244
        %v2246 = vsel %vm1404, %v2178, %v2178
        %v2247 = vsel %vm1406, %v2178, %v2246
        %v2248 = vsel %vm1408, %v2178, %v2247
        %v2249 = vsel %vm1410, %v2178, %v2248
        %v2250 = vsel %vm1412, %v2178, %v2249
        %v2251 = vsel %vm1414, %v2178, %v2250
        %v2252 = vsel %vm1404, %v2197, %v2197
        %v2253 = vsel %vm1406, %v2197, %v2252
        %v2254 = vsel %vm1408, %v2197, %v2253
        %v2255 = vsel %vm1410, %v2197, %v2254
        %v2256 = vsel %vm1412, %v2197, %v2255
        %v2257 = vsel %vm1414, %v2197, %v2256
        %v2266 = vmul.f32 %v328, %v2215
        %v2267 = vmul.f32 %v329, %v2215
        %v2268 = vmul.f32 %v330, %v2215
        %v2269 = vmul.f32 %v331, %v2215
        %v2270 = vmul.f32 %v332, %v2221
        %v2271 = vmul.f32 %v333, %v2221
        %v2272 = vmul.f32 %v334, %v2221
        %v2273 = vmul.f32 %v335, %v2221
        %v2274 = vmul.f32 %v336, %v2227
        %v2275 = vmul.f32 %v337, %v2227
        %v2276 = vmul.f32 %v338, %v2227
        %v2277 = vmul.f32 %v339, %v2227
        %v2278 = vmul.f32 %v340, %v2233
        %v2279 = vmul.f32 %v341, %v2233
        %v2280 = vmul.f32 %v342, %v2233
        %v2281 = vmul.f32 %v343, %v2233
        %v2282 = vmul.f32 %v344, %v2239
        %v2283 = vmul.f32 %v345, %v2239
        %v2284 = vmul.f32 %v346, %v2239
        %v2285 = vmul.f32 %v347, %v2239
        %v2286 = vmul.f32 %v348, %v2245
        %v2287 = vmul.f32 %v349, %v2245
        %v2288 = vmul.f32 %v350, %v2245
        %v2289 = vmul.f32 %v351, %v2245
        %v2290 = vmul.f32 %v352, %v2251
        %v2291 = vmul.f32 %v353, %v2251
        %v2292 = vmul.f32 %v354, %v2251
        %v2293 = vmul.f32 %v355, %v2251
        %v2294 = vmul.f32 %v356, %v2257
        %v2295 = vmul.f32 %v357, %v2257
        %v2296 = vmul.f32 %v358, %v2257
        %v2297 = vmul.f32 %v359, %v2257
        %v2298 = vsel %vm517, %v2266, 0.0
        %2299 = vadd.xlane.f32.xlu0 %v2298
        %v2300 = vpop.xlane.xlu0 %2299
        %v2301 = vsel %vm517, %v2267, 0.0
        %2302 = vadd.xlane.f32.xlu0 %v2301
        %v2303 = vpop.xlane.xlu0 %2302
        %v2304 = vsel %vm517, %v2268, 0.0
        %2305 = vadd.xlane.f32.xlu0 %v2304
        %v2306 = vpop.xlane.xlu0 %2305
        %v2307 = vsel %vm517, %v2269, 0.0
        %2308 = vadd.xlane.f32.xlu0 %v2307
        %v2309 = vpop.xlane.xlu0 %2308
        %v2310 = vsel %vm517, %v2270, 0.0
        %2311 = vadd.xlane.f32.xlu0 %v2310
        %v2312 = vpop.xlane.xlu0 %2311
        %v2313 = vsel %vm517, %v2271, 0.0
        %2314 = vadd.xlane.f32.xlu0 %v2313
        %v2315 = vpop.xlane.xlu0 %2314
        %v2316 = vsel %vm517, %v2272, 0.0
        %2317 = vadd.xlane.f32.xlu0 %v2316
        %v2318 = vpop.xlane.xlu0 %2317
        %v2319 = vsel %vm517, %v2273, 0.0
        %2320 = vadd.xlane.f32.xlu0 %v2319
        %v2321 = vpop.xlane.xlu0 %2320
        %v2322 = vsel %vm517, %v2274, 0.0
        %2323 = vadd.xlane.f32.xlu0 %v2322
        %v2324 = vpop.xlane.xlu0 %2323
        %v2325 = vsel %vm517, %v2275, 0.0
        %2326 = vadd.xlane.f32.xlu0 %v2325
        %v2327 = vpop.xlane.xlu0 %2326
        %v2328 = vsel %vm517, %v2276, 0.0
        %2329 = vadd.xlane.f32.xlu0 %v2328
        %v2330 = vpop.xlane.xlu0 %2329
        %v2331 = vsel %vm517, %v2277, 0.0
        %2332 = vadd.xlane.f32.xlu0 %v2331
        %v2333 = vpop.xlane.xlu0 %2332
        %v2334 = vsel %vm517, %v2278, 0.0
        %2335 = vadd.xlane.f32.xlu0 %v2334
        %v2336 = vpop.xlane.xlu0 %2335
        %v2337 = vsel %vm517, %v2279, 0.0
        %2338 = vadd.xlane.f32.xlu0 %v2337
        %v2339 = vpop.xlane.xlu0 %2338
        %v2340 = vsel %vm517, %v2280, 0.0
        %2341 = vadd.xlane.f32.xlu0 %v2340
        %v2342 = vpop.xlane.xlu0 %2341
        %v2343 = vsel %vm517, %v2281, 0.0
        %2344 = vadd.xlane.f32.xlu0 %v2343
        %v2345 = vpop.xlane.xlu0 %2344
        %v2346 = vsel %vm517, %v2282, 0.0
        %2347 = vadd.xlane.f32.xlu0 %v2346
        %v2348 = vpop.xlane.xlu0 %2347
        %v2349 = vsel %vm517, %v2283, 0.0
        %2350 = vadd.xlane.f32.xlu0 %v2349
        %v2351 = vpop.xlane.xlu0 %2350
        %v2352 = vsel %vm517, %v2284, 0.0
        %2353 = vadd.xlane.f32.xlu0 %v2352
        %v2354 = vpop.xlane.xlu0 %2353
        %v2355 = vsel %vm517, %v2285, 0.0
        %2356 = vadd.xlane.f32.xlu0 %v2355
        %v2357 = vpop.xlane.xlu0 %2356
        %v2358 = vsel %vm517, %v2286, 0.0
        %2359 = vadd.xlane.f32.xlu0 %v2358
        %v2360 = vpop.xlane.xlu0 %2359
        %v2361 = vsel %vm517, %v2287, 0.0
        %2362 = vadd.xlane.f32.xlu0 %v2361
        %v2363 = vpop.xlane.xlu0 %2362
        %v2364 = vsel %vm517, %v2288, 0.0
        %2365 = vadd.xlane.f32.xlu0 %v2364
        %v2366 = vpop.xlane.xlu0 %2365
        %v2367 = vsel %vm517, %v2289, 0.0
        %2368 = vadd.xlane.f32.xlu0 %v2367
        %v2369 = vpop.xlane.xlu0 %2368
        %v2370 = vsel %vm517, %v2290, 0.0
        %2371 = vadd.xlane.f32.xlu0 %v2370
        %v2372 = vpop.xlane.xlu0 %2371
        %v2373 = vsel %vm517, %v2291, 0.0
        %2374 = vadd.xlane.f32.xlu0 %v2373
        %v2375 = vpop.xlane.xlu0 %2374
        %v2376 = vsel %vm517, %v2292, 0.0
        %2377 = vadd.xlane.f32.xlu0 %v2376
        %v2378 = vpop.xlane.xlu0 %2377
        %v2379 = vsel %vm517, %v2293, 0.0
        %2380 = vadd.xlane.f32.xlu0 %v2379
        %v2381 = vpop.xlane.xlu0 %2380
        %v2382 = vsel %vm517, %v2294, 0.0
        %2383 = vadd.xlane.f32.xlu0 %v2382
        %v2384 = vpop.xlane.xlu0 %2383
        %v2385 = vsel %vm517, %v2295, 0.0
        %2386 = vadd.xlane.f32.xlu0 %v2385
        %v2387 = vpop.xlane.xlu0 %2386
        %v2388 = vsel %vm517, %v2296, 0.0
        %2389 = vadd.xlane.f32.xlu0 %v2388
        %v2390 = vpop.xlane.xlu0 %2389
        %v2391 = vsel %vm517, %v2297, 0.0
        %2392 = vadd.xlane.f32.xlu0 %v2391
        %v2393 = vpop.xlane.xlu0 %2392
        %v2395 = vcombine.high %v2209, %v2209
        %v2397 = vunpack.c.l.s4 1966171168
        %v2398 = vunpack.c.0.s8 %v2397
        %v2399 = vlaneseq
        %v2400 = vshrl.u32 %v2399, 7
        %v2401 = vsub.s32 %v2398, %v2400
        %v2402 = vrot.slane %v2209, %v2401
        %v2404 = vunpack.c.l.s4 1966171168
        %v2405 = vunpack.c.0.s8 %v2404
        %v2406 = vlaneseq
        %v2407 = vshrl.u32 %v2406, 7
        %v2408 = vsub.s32 %v2405, %v2407
        %v2409 = vrot.slane %v2395, %v2408
        %v2410 = vcombine.high %v2402, %v2402
        %v2411 = vcombine.high %v2409, %v2409
        %v2413 = vunpack.c.l.s4 1966171168
        %v2414 = vunpack.c.0.s8 %v2413
        %v2415 = vlaneseq
        %v2416 = vshrl.u32 %v2415, 7
        %v2417 = vsub.s32 %v2414, %v2416
        %v2418 = vrot.slane %v2402, %v2417
        %v2420 = vunpack.c.l.s4 1966171168
        %v2421 = vunpack.c.0.s8 %v2420
        %v2422 = vlaneseq
        %v2423 = vshrl.u32 %v2422, 7
        %v2424 = vsub.s32 %v2421, %v2423
        %v2425 = vrot.slane %v2409, %v2424
        %v2427 = vunpack.c.l.s4 1966171168
        %v2428 = vunpack.c.0.s8 %v2427
        %v2429 = vlaneseq
        %v2430 = vshrl.u32 %v2429, 7
        %v2431 = vsub.s32 %v2428, %v2430
        %v2432 = vrot.slane %v2410, %v2431
        %v2434 = vunpack.c.l.s4 1966171168
        %v2435 = vunpack.c.0.s8 %v2434
        %v2436 = vlaneseq
        %v2437 = vshrl.u32 %v2436, 7
        %v2438 = vsub.s32 %v2435, %v2437
        %v2439 = vrot.slane %v2411, %v2438
        %v2440 = vcombine.high %v2418, %v2418
        %v2441 = vcombine.high %v2425, %v2425
        %v2442 = vcombine.high %v2432, %v2432
        %v2443 = vcombine.high %v2439, %v2439
        %v2444 = vlaneseq
        %v2445 = vshrl.u32 %v2444, 7
        %v2446 = vsub.s32 0, %v2445
        %v2447 = vrot.slane %v2418, %v2446
        %v2448 = vlaneseq
        %v2449 = vshrl.u32 %v2448, 7
        %v2450 = vsub.s32 0, %v2449
        %v2451 = vrot.slane %v2432, %v2450
        %v2452 = vlaneseq
        %v2453 = vshrl.u32 %v2452, 7
        %v2454 = vsub.s32 0, %v2453
        %v2455 = vrot.slane %v2440, %v2454
        %v2456 = vlaneseq
        %v2457 = vshrl.u32 %v2456, 7
        %v2458 = vsub.s32 0, %v2457
        %v2459 = vrot.slane %v2442, %v2458
        %v2460 = vlaneseq
        %v2461 = vshrl.u32 %v2460, 7
        %v2462 = vsub.s32 0, %v2461
        %v2463 = vrot.slane %v2425, %v2462
        %v2464 = vlaneseq
        %v2465 = vshrl.u32 %v2464, 7
        %v2466 = vsub.s32 0, %v2465
        %v2467 = vrot.slane %v2439, %v2466
        %v2468 = vlaneseq
        %v2469 = vshrl.u32 %v2468, 7
        %v2470 = vsub.s32 0, %v2469
        %v2471 = vrot.slane %v2441, %v2470
        %v2472 = vlaneseq
        %v2473 = vshrl.u32 %v2472, 7
        %v2474 = vsub.s32 0, %v2473
        %v2475 = vrot.slane %v2443, %v2474
        %v2484 = vmul.f32 %v360, %v2447
        %v2485 = vmul.f32 %v361, %v2447
        %v2486 = vmul.f32 %v362, %v2447
        %v2487 = vmul.f32 %v363, %v2447
        %v2488 = vmul.f32 %v364, %v2451
        %v2489 = vmul.f32 %v365, %v2451
        %v2490 = vmul.f32 %v366, %v2451
        %v2491 = vmul.f32 %v367, %v2451
        %v2492 = vmul.f32 %v368, %v2455
        %v2493 = vmul.f32 %v369, %v2455
        %v2494 = vmul.f32 %v370, %v2455
        %v2495 = vmul.f32 %v371, %v2455
        %v2496 = vmul.f32 %v372, %v2459
        %v2497 = vmul.f32 %v373, %v2459
        %v2498 = vmul.f32 %v374, %v2459
        %v2499 = vmul.f32 %v375, %v2459
        %v2500 = vmul.f32 %v376, %v2463
        %v2501 = vmul.f32 %v377, %v2463
        %v2502 = vmul.f32 %v378, %v2463
        %v2503 = vmul.f32 %v379, %v2463
        %v2504 = vmul.f32 %v380, %v2467
        %v2505 = vmul.f32 %v381, %v2467
        %v2506 = vmul.f32 %v382, %v2467
        %v2507 = vmul.f32 %v383, %v2467
        %v2508 = vmul.f32 %v384, %v2471
        %v2509 = vmul.f32 %v385, %v2471
        %v2510 = vmul.f32 %v386, %v2471
        %v2511 = vmul.f32 %v387, %v2471
        %v2512 = vmul.f32 %v388, %v2475
        %v2513 = vmul.f32 %v389, %v2475
        %v2514 = vmul.f32 %v390, %v2475
        %v2515 = vmul.f32 %v391, %v2475
        %v2516 = vsel %vm736, %v2484, 0.0
        %2517 = vadd.xlane.f32.xlu0 %v2516
        %v2518 = vpop.xlane.xlu0 %2517
        %v2519 = vsel %vm736, %v2485, 0.0
        %2520 = vadd.xlane.f32.xlu0 %v2519
        %v2521 = vpop.xlane.xlu0 %2520
        %v2522 = vsel %vm736, %v2486, 0.0
        %2523 = vadd.xlane.f32.xlu0 %v2522
        %v2524 = vpop.xlane.xlu0 %2523
        %v2525 = vsel %vm736, %v2487, 0.0
        %2526 = vadd.xlane.f32.xlu0 %v2525
        %v2527 = vpop.xlane.xlu0 %2526
        %v2528 = vsel %vm736, %v2488, 0.0
        %2529 = vadd.xlane.f32.xlu0 %v2528
        %v2530 = vpop.xlane.xlu0 %2529
        %v2531 = vsel %vm736, %v2489, 0.0
        %2532 = vadd.xlane.f32.xlu0 %v2531
        %v2533 = vpop.xlane.xlu0 %2532
        %v2534 = vsel %vm736, %v2490, 0.0
        %2535 = vadd.xlane.f32.xlu0 %v2534
        %v2536 = vpop.xlane.xlu0 %2535
        %v2537 = vsel %vm736, %v2491, 0.0
        %2538 = vadd.xlane.f32.xlu0 %v2537
        %v2539 = vpop.xlane.xlu0 %2538
        %v2540 = vsel %vm736, %v2492, 0.0
        %2541 = vadd.xlane.f32.xlu0 %v2540
        %v2542 = vpop.xlane.xlu0 %2541
        %v2543 = vsel %vm736, %v2493, 0.0
        %2544 = vadd.xlane.f32.xlu0 %v2543
        %v2545 = vpop.xlane.xlu0 %2544
        %v2546 = vsel %vm736, %v2494, 0.0
        %2547 = vadd.xlane.f32.xlu0 %v2546
        %v2548 = vpop.xlane.xlu0 %2547
        %v2549 = vsel %vm736, %v2495, 0.0
        %2550 = vadd.xlane.f32.xlu0 %v2549
        %v2551 = vpop.xlane.xlu0 %2550
        %v2552 = vsel %vm736, %v2496, 0.0
        %2553 = vadd.xlane.f32.xlu0 %v2552
        %v2554 = vpop.xlane.xlu0 %2553
        %v2555 = vsel %vm736, %v2497, 0.0
        %2556 = vadd.xlane.f32.xlu0 %v2555
        %v2557 = vpop.xlane.xlu0 %2556
        %v2558 = vsel %vm736, %v2498, 0.0
        %2559 = vadd.xlane.f32.xlu0 %v2558
        %v2560 = vpop.xlane.xlu0 %2559
        %v2561 = vsel %vm736, %v2499, 0.0
        %2562 = vadd.xlane.f32.xlu0 %v2561
        %v2563 = vpop.xlane.xlu0 %2562
        %v2564 = vsel %vm736, %v2500, 0.0
        %2565 = vadd.xlane.f32.xlu0 %v2564
        %v2566 = vpop.xlane.xlu0 %2565
        %v2567 = vsel %vm736, %v2501, 0.0
        %2568 = vadd.xlane.f32.xlu0 %v2567
        %v2569 = vpop.xlane.xlu0 %2568
        %v2570 = vsel %vm736, %v2502, 0.0
        %2571 = vadd.xlane.f32.xlu0 %v2570
        %v2572 = vpop.xlane.xlu0 %2571
        %v2573 = vsel %vm736, %v2503, 0.0
        %2574 = vadd.xlane.f32.xlu0 %v2573
        %v2575 = vpop.xlane.xlu0 %2574
        %v2576 = vsel %vm736, %v2504, 0.0
        %2577 = vadd.xlane.f32.xlu0 %v2576
        %v2578 = vpop.xlane.xlu0 %2577
        %v2579 = vsel %vm736, %v2505, 0.0
        %2580 = vadd.xlane.f32.xlu0 %v2579
        %v2581 = vpop.xlane.xlu0 %2580
        %v2582 = vsel %vm736, %v2506, 0.0
        %2583 = vadd.xlane.f32.xlu0 %v2582
        %v2584 = vpop.xlane.xlu0 %2583
        %v2585 = vsel %vm736, %v2507, 0.0
        %2586 = vadd.xlane.f32.xlu0 %v2585
        %v2587 = vpop.xlane.xlu0 %2586
        %v2588 = vsel %vm736, %v2508, 0.0
        %2589 = vadd.xlane.f32.xlu0 %v2588
        %v2590 = vpop.xlane.xlu0 %2589
        %v2591 = vsel %vm736, %v2509, 0.0
        %2592 = vadd.xlane.f32.xlu0 %v2591
        %v2593 = vpop.xlane.xlu0 %2592
        %v2594 = vsel %vm736, %v2510, 0.0
        %2595 = vadd.xlane.f32.xlu0 %v2594
        %v2596 = vpop.xlane.xlu0 %2595
        %v2597 = vsel %vm736, %v2511, 0.0
        %2598 = vadd.xlane.f32.xlu0 %v2597
        %v2599 = vpop.xlane.xlu0 %2598
        %v2600 = vsel %vm736, %v2512, 0.0
        %2601 = vadd.xlane.f32.xlu0 %v2600
        %v2602 = vpop.xlane.xlu0 %2601
        %v2603 = vsel %vm736, %v2513, 0.0
        %2604 = vadd.xlane.f32.xlu0 %v2603
        %v2605 = vpop.xlane.xlu0 %2604
        %v2606 = vsel %vm736, %v2514, 0.0
        %2607 = vadd.xlane.f32.xlu0 %v2606
        %v2608 = vpop.xlane.xlu0 %2607
        %v2609 = vsel %vm736, %v2515, 0.0
        %2610 = vadd.xlane.f32.xlu0 %v2609
        %v2611 = vpop.xlane.xlu0 %2610
        %v2612 = vadd.f32 %v2300, %v2518
        %v2613 = vadd.f32 %v2303, %v2521
        %v2614 = vadd.f32 %v2306, %v2524
        %v2615 = vadd.f32 %v2309, %v2527
        %v2616 = vadd.f32 %v2312, %v2530
        %v2617 = vadd.f32 %v2315, %v2533
        %v2618 = vadd.f32 %v2318, %v2536
        %v2619 = vadd.f32 %v2321, %v2539
        %v2620 = vadd.f32 %v2324, %v2542
        %v2621 = vadd.f32 %v2327, %v2545
        %v2622 = vadd.f32 %v2330, %v2548
        %v2623 = vadd.f32 %v2333, %v2551
        %v2624 = vadd.f32 %v2336, %v2554
        %v2625 = vadd.f32 %v2339, %v2557
        %v2626 = vadd.f32 %v2342, %v2560
        %v2627 = vadd.f32 %v2345, %v2563
        %v2628 = vadd.f32 %v2348, %v2566
        %v2629 = vadd.f32 %v2351, %v2569
        %v2630 = vadd.f32 %v2354, %v2572
        %v2631 = vadd.f32 %v2357, %v2575
        %v2632 = vadd.f32 %v2360, %v2578
        %v2633 = vadd.f32 %v2363, %v2581
        %v2634 = vadd.f32 %v2366, %v2584
        %v2635 = vadd.f32 %v2369, %v2587
        %v2636 = vadd.f32 %v2372, %v2590
        %v2637 = vadd.f32 %v2375, %v2593
        %v2638 = vadd.f32 %v2378, %v2596
        %v2639 = vadd.f32 %v2381, %v2599
        %v2640 = vadd.f32 %v2384, %v2602
        %v2641 = vadd.f32 %v2387, %v2605
        %v2642 = vadd.f32 %v2390, %v2608
        %v2643 = vadd.f32 %v2393, %v2611
        %v2644 = vadd.f32 %v2612, %v872
        %v2645 = vadd.f32 %v2613, %v876
        %v2646 = vadd.f32 %v2614, %v880
        %v2647 = vadd.f32 %v2615, %v884
        %v2648 = vadd.f32 %v2616, %v891
        %v2649 = vadd.f32 %v2617, %v895
        %v2650 = vadd.f32 %v2618, %v899
        %v2651 = vadd.f32 %v2619, %v903
        %v2652 = vadd.f32 %v2620, %v910
        %v2653 = vadd.f32 %v2621, %v914
        %v2654 = vadd.f32 %v2622, %v918
        %v2655 = vadd.f32 %v2623, %v922
        %v2656 = vadd.f32 %v2624, %v929
        %v2657 = vadd.f32 %v2625, %v933
        %v2658 = vadd.f32 %v2626, %v937
        %v2659 = vadd.f32 %v2627, %v941
        %v2660 = vadd.f32 %v2628, %v948
        %v2661 = vadd.f32 %v2629, %v952
        %v2662 = vadd.f32 %v2630, %v956
        %v2663 = vadd.f32 %v2631, %v960
        %v2664 = vadd.f32 %v2632, %v967
        %v2665 = vadd.f32 %v2633, %v971
        %v2666 = vadd.f32 %v2634, %v975
        %v2667 = vadd.f32 %v2635, %v979
        %v2668 = vadd.f32 %v2636, %v986
        %v2669 = vadd.f32 %v2637, %v990
        %v2670 = vadd.f32 %v2638, %v994
        %v2671 = vadd.f32 %v2639, %v998
        %v2672 = vadd.f32 %v2640, %v1005
        %v2673 = vadd.f32 %v2641, %v1009
        %v2674 = vadd.f32 %v2642, %v1013
        %v2675 = vadd.f32 %v2643, %v1017
        %v2676 = vtanh.pop %v2644
        %v2677 = vtanh.pop %v2645
        %v2678 = vtanh.pop %v2646
        %v2679 = vtanh.pop %v2647
        %v2680 = vtanh.pop %v2648
        %v2681 = vtanh.pop %v2649
        %v2682 = vtanh.pop %v2650
        %v2683 = vtanh.pop %v2651
        %v2684 = vtanh.pop %v2652
        %v2685 = vtanh.pop %v2653
        %v2686 = vtanh.pop %v2654
        %v2687 = vtanh.pop %v2655
        %v2688 = vtanh.pop %v2656
        %v2689 = vtanh.pop %v2657
        %v2690 = vtanh.pop %v2658
        %v2691 = vtanh.pop %v2659
        %v2692 = vtanh.pop %v2660
        %v2693 = vtanh.pop %v2661
        %v2694 = vtanh.pop %v2662
        %v2695 = vtanh.pop %v2663
        %v2696 = vtanh.pop %v2664
        %v2697 = vtanh.pop %v2665
        %v2698 = vtanh.pop %v2666
        %v2699 = vtanh.pop %v2667
        %v2700 = vtanh.pop %v2668
        %v2701 = vtanh.pop %v2669
        %v2702 = vtanh.pop %v2670
        %v2703 = vtanh.pop %v2671
        %v2704 = vtanh.pop %v2672
        %v2705 = vtanh.pop %v2673
        %v2706 = vtanh.pop %v2674
        %v2707 = vtanh.pop %v2675
        %2740 = vset.pattern.permute.xlu0 0
        %2741 = vperm.xlu0 %2740, %v2676
        %v2742 = vpop.permute.xlu0 %2741
        %2743 = vset.pattern.permute.xlu0 0
        %2744 = vperm.xlu0 %2743, %v2677
        %v2745 = vpop.permute.xlu0 %2744
        %2746 = vset.pattern.permute.xlu0 0
        %2747 = vperm.xlu0 %2746, %v2678
        %v2748 = vpop.permute.xlu0 %2747
        %2749 = vset.pattern.permute.xlu0 0
        %2750 = vperm.xlu0 %2749, %v2679
        %v2751 = vpop.permute.xlu0 %2750
        %2752 = vset.pattern.permute.xlu0 0
        %2753 = vperm.xlu0 %2752, %v2680
        %v2754 = vpop.permute.xlu0 %2753
        %2755 = vset.pattern.permute.xlu0 0
        %2756 = vperm.xlu0 %2755, %v2681
        %v2757 = vpop.permute.xlu0 %2756
        %2758 = vset.pattern.permute.xlu0 0
        %2759 = vperm.xlu0 %2758, %v2682
        %v2760 = vpop.permute.xlu0 %2759
        %2761 = vset.pattern.permute.xlu0 0
        %2762 = vperm.xlu0 %2761, %v2683
        %v2763 = vpop.permute.xlu0 %2762
        %2764 = vset.pattern.permute.xlu0 0
        %2765 = vperm.xlu0 %2764, %v2684
        %v2766 = vpop.permute.xlu0 %2765
        %2767 = vset.pattern.permute.xlu0 0
        %2768 = vperm.xlu0 %2767, %v2685
        %v2769 = vpop.permute.xlu0 %2768
        %2770 = vset.pattern.permute.xlu0 0
        %2771 = vperm.xlu0 %2770, %v2686
        %v2772 = vpop.permute.xlu0 %2771
        %2773 = vset.pattern.permute.xlu0 0
        %2774 = vperm.xlu0 %2773, %v2687
        %v2775 = vpop.permute.xlu0 %2774
        %2776 = vset.pattern.permute.xlu0 0
        %2777 = vperm.xlu0 %2776, %v2688
        %v2778 = vpop.permute.xlu0 %2777
        %2779 = vset.pattern.permute.xlu0 0
        %2780 = vperm.xlu0 %2779, %v2689
        %v2781 = vpop.permute.xlu0 %2780
        %2782 = vset.pattern.permute.xlu0 0
        %2783 = vperm.xlu0 %2782, %v2690
        %v2784 = vpop.permute.xlu0 %2783
        %2785 = vset.pattern.permute.xlu0 0
        %2786 = vperm.xlu0 %2785, %v2691
        %v2787 = vpop.permute.xlu0 %2786
        %2788 = vset.pattern.permute.xlu0 0
        %2789 = vperm.xlu0 %2788, %v2692
        %v2790 = vpop.permute.xlu0 %2789
        %2791 = vset.pattern.permute.xlu0 0
        %2792 = vperm.xlu0 %2791, %v2693
        %v2793 = vpop.permute.xlu0 %2792
        %2794 = vset.pattern.permute.xlu0 0
        %2795 = vperm.xlu0 %2794, %v2694
        %v2796 = vpop.permute.xlu0 %2795
        %2797 = vset.pattern.permute.xlu0 0
        %2798 = vperm.xlu0 %2797, %v2695
        %v2799 = vpop.permute.xlu0 %2798
        %2800 = vset.pattern.permute.xlu0 0
        %2801 = vperm.xlu0 %2800, %v2696
        %v2802 = vpop.permute.xlu0 %2801
        %2803 = vset.pattern.permute.xlu0 0
        %2804 = vperm.xlu0 %2803, %v2697
        %v2805 = vpop.permute.xlu0 %2804
        %2806 = vset.pattern.permute.xlu0 0
        %2807 = vperm.xlu0 %2806, %v2698
        %v2808 = vpop.permute.xlu0 %2807
        %2809 = vset.pattern.permute.xlu0 0
        %2810 = vperm.xlu0 %2809, %v2699
        %v2811 = vpop.permute.xlu0 %2810
        %2812 = vset.pattern.permute.xlu0 0
        %2813 = vperm.xlu0 %2812, %v2700
        %v2814 = vpop.permute.xlu0 %2813
        %2815 = vset.pattern.permute.xlu0 0
        %2816 = vperm.xlu0 %2815, %v2701
        %v2817 = vpop.permute.xlu0 %2816
        %2818 = vset.pattern.permute.xlu0 0
        %2819 = vperm.xlu0 %2818, %v2702
        %v2820 = vpop.permute.xlu0 %2819
        %2821 = vset.pattern.permute.xlu0 0
        %2822 = vperm.xlu0 %2821, %v2703
        %v2823 = vpop.permute.xlu0 %2822
        %2824 = vset.pattern.permute.xlu0 0
        %2825 = vperm.xlu0 %2824, %v2704
        %v2826 = vpop.permute.xlu0 %2825
        %2827 = vset.pattern.permute.xlu0 0
        %2828 = vperm.xlu0 %2827, %v2705
        %v2829 = vpop.permute.xlu0 %2828
        %2830 = vset.pattern.permute.xlu0 0
        %2831 = vperm.xlu0 %2830, %v2706
        %v2832 = vpop.permute.xlu0 %2831
        %2833 = vset.pattern.permute.xlu0 0
        %2834 = vperm.xlu0 %2833, %v2707
        %v2835 = vpop.permute.xlu0 %2834
        %v2836 = vlaneseq
        %v2837 = vshrl.u32 %v2836, 7
        %v2838 = vsub.s32 %v1243, %v2837
        %v2839 = vrot.slane %v2742, %v2838
        %v2840 = vlaneseq
        %v2841 = vshrl.u32 %v2840, 7
        %v2842 = vsub.s32 %v1248, %v2841
        %v2843 = vrot.slane %v2745, %v2842
        %v2844 = vsel %vm1253, %v2843, %v2839
        %v2845 = vlaneseq
        %v2846 = vshrl.u32 %v2845, 7
        %v2847 = vsub.s32 %v1255, %v2846
        %v2848 = vrot.slane %v2748, %v2847
        %v2849 = vsel %vm1260, %v2848, %v2844
        %v2850 = vlaneseq
        %v2851 = vshrl.u32 %v2850, 7
        %v2852 = vsub.s32 %v1262, %v2851
        %v2853 = vrot.slane %v2751, %v2852
        %v2854 = vsel %vm1267, %v2853, %v2849
        %v2855 = vlaneseq
        %v2856 = vshrl.u32 %v2855, 7
        %v2857 = vsub.s32 %v1243, %v2856
        %v2858 = vrot.slane %v2754, %v2857
        %v2859 = vlaneseq
        %v2860 = vshrl.u32 %v2859, 7
        %v2861 = vsub.s32 %v1248, %v2860
        %v2862 = vrot.slane %v2757, %v2861
        %v2863 = vsel %vm1253, %v2862, %v2858
        %v2864 = vlaneseq
        %v2865 = vshrl.u32 %v2864, 7
        %v2866 = vsub.s32 %v1255, %v2865
        %v2867 = vrot.slane %v2760, %v2866
        %v2868 = vsel %vm1260, %v2867, %v2863
        %v2869 = vlaneseq
        %v2870 = vshrl.u32 %v2869, 7
        %v2871 = vsub.s32 %v1262, %v2870
        %v2872 = vrot.slane %v2763, %v2871
        %v2873 = vsel %vm1267, %v2872, %v2868
        %v2874 = vlaneseq
        %v2875 = vshrl.u32 %v2874, 7
        %v2876 = vsub.s32 %v1243, %v2875
        %v2877 = vrot.slane %v2766, %v2876
        %v2878 = vlaneseq
        %v2879 = vshrl.u32 %v2878, 7
        %v2880 = vsub.s32 %v1248, %v2879
        %v2881 = vrot.slane %v2769, %v2880
        %v2882 = vsel %vm1253, %v2881, %v2877
        %v2883 = vlaneseq
        %v2884 = vshrl.u32 %v2883, 7
        %v2885 = vsub.s32 %v1255, %v2884
        %v2886 = vrot.slane %v2772, %v2885
        %v2887 = vsel %vm1260, %v2886, %v2882
        %v2888 = vlaneseq
        %v2889 = vshrl.u32 %v2888, 7
        %v2890 = vsub.s32 %v1262, %v2889
        %v2891 = vrot.slane %v2775, %v2890
        %v2892 = vsel %vm1267, %v2891, %v2887
        %v2893 = vlaneseq
        %v2894 = vshrl.u32 %v2893, 7
        %v2895 = vsub.s32 %v1243, %v2894
        %v2896 = vrot.slane %v2778, %v2895
        %v2897 = vlaneseq
        %v2898 = vshrl.u32 %v2897, 7
        %v2899 = vsub.s32 %v1248, %v2898
        %v2900 = vrot.slane %v2781, %v2899
        %v2901 = vsel %vm1253, %v2900, %v2896
        %v2902 = vlaneseq
        %v2903 = vshrl.u32 %v2902, 7
        %v2904 = vsub.s32 %v1255, %v2903
        %v2905 = vrot.slane %v2784, %v2904
        %v2906 = vsel %vm1260, %v2905, %v2901
        %v2907 = vlaneseq
        %v2908 = vshrl.u32 %v2907, 7
        %v2909 = vsub.s32 %v1262, %v2908
        %v2910 = vrot.slane %v2787, %v2909
        %v2911 = vsel %vm1267, %v2910, %v2906
        %v2912 = vlaneseq
        %v2913 = vshrl.u32 %v2912, 7
        %v2914 = vsub.s32 %v1243, %v2913
        %v2915 = vrot.slane %v2790, %v2914
        %v2916 = vlaneseq
        %v2917 = vshrl.u32 %v2916, 7
        %v2918 = vsub.s32 %v1248, %v2917
        %v2919 = vrot.slane %v2793, %v2918
        %v2920 = vsel %vm1253, %v2919, %v2915
        %v2921 = vlaneseq
        %v2922 = vshrl.u32 %v2921, 7
        %v2923 = vsub.s32 %v1255, %v2922
        %v2924 = vrot.slane %v2796, %v2923
        %v2925 = vsel %vm1260, %v2924, %v2920
        %v2926 = vlaneseq
        %v2927 = vshrl.u32 %v2926, 7
        %v2928 = vsub.s32 %v1262, %v2927
        %v2929 = vrot.slane %v2799, %v2928
        %v2930 = vsel %vm1267, %v2929, %v2925
        %v2931 = vlaneseq
        %v2932 = vshrl.u32 %v2931, 7
        %v2933 = vsub.s32 %v1243, %v2932
        %v2934 = vrot.slane %v2802, %v2933
        %v2935 = vlaneseq
        %v2936 = vshrl.u32 %v2935, 7
        %v2937 = vsub.s32 %v1248, %v2936
        %v2938 = vrot.slane %v2805, %v2937
        %v2939 = vsel %vm1253, %v2938, %v2934
        %v2940 = vlaneseq
        %v2941 = vshrl.u32 %v2940, 7
        %v2942 = vsub.s32 %v1255, %v2941
        %v2943 = vrot.slane %v2808, %v2942
        %v2944 = vsel %vm1260, %v2943, %v2939
        %v2945 = vlaneseq
        %v2946 = vshrl.u32 %v2945, 7
        %v2947 = vsub.s32 %v1262, %v2946
        %v2948 = vrot.slane %v2811, %v2947
        %v2949 = vsel %vm1267, %v2948, %v2944
        %v2950 = vlaneseq
        %v2951 = vshrl.u32 %v2950, 7
        %v2952 = vsub.s32 %v1243, %v2951
        %v2953 = vrot.slane %v2814, %v2952
        %v2954 = vlaneseq
        %v2955 = vshrl.u32 %v2954, 7
        %v2956 = vsub.s32 %v1248, %v2955
        %v2957 = vrot.slane %v2817, %v2956
        %v2958 = vsel %vm1253, %v2957, %v2953
        %v2959 = vlaneseq
        %v2960 = vshrl.u32 %v2959, 7
        %v2961 = vsub.s32 %v1255, %v2960
        %v2962 = vrot.slane %v2820, %v2961
        %v2963 = vsel %vm1260, %v2962, %v2958
        %v2964 = vlaneseq
        %v2965 = vshrl.u32 %v2964, 7
        %v2966 = vsub.s32 %v1262, %v2965
        %v2967 = vrot.slane %v2823, %v2966
        %v2968 = vsel %vm1267, %v2967, %v2963
        %v2969 = vlaneseq
        %v2970 = vshrl.u32 %v2969, 7
        %v2971 = vsub.s32 %v1243, %v2970
        %v2972 = vrot.slane %v2826, %v2971
        %v2973 = vlaneseq
        %v2974 = vshrl.u32 %v2973, 7
        %v2975 = vsub.s32 %v1248, %v2974
        %v2976 = vrot.slane %v2829, %v2975
        %v2977 = vsel %vm1253, %v2976, %v2972
        %v2978 = vlaneseq
        %v2979 = vshrl.u32 %v2978, 7
        %v2980 = vsub.s32 %v1255, %v2979
        %v2981 = vrot.slane %v2832, %v2980
        %v2982 = vsel %vm1260, %v2981, %v2977
        %v2983 = vlaneseq
        %v2984 = vshrl.u32 %v2983, 7
        %v2985 = vsub.s32 %v1262, %v2984
        %v2986 = vrot.slane %v2835, %v2985
        %v2987 = vsel %vm1267, %v2986, %v2982
        %v2988 = vsel %vm1402, %v2873, %v2854
        %v2989 = vsel %vm1404, %v2892, %v2988
        %v2990 = vsel %vm1406, %v2911, %v2989
        %v2991 = vsel %vm1408, %v2930, %v2990
        %v2992 = vsel %vm1410, %v2949, %v2991
        %v2993 = vsel %vm1412, %v2968, %v2992
        %v2994 = vsel %vm1414, %v2987, %v2993
        %s2996 = scalar_lea.vmem [#allocation2], 16
        %2997 = vst.msk [vmem:[%s2996] sm:$0xff] %vm517, %v2994
        %s2998 = scalar_lea.vmem %s316, 24
        %v2999 = vld [vmem:[%s2998] sm:$0xff]
        %v3000 = vsel %vm1404, %v2854, %v2854
        %v3001 = vsel %vm1406, %v2854, %v3000
        %v3002 = vsel %vm1408, %v2854, %v3001
        %v3003 = vsel %vm1410, %v2854, %v3002
        %v3004 = vsel %vm1412, %v2854, %v3003
        %v3005 = vsel %vm1414, %v2854, %v3004
        %v3006 = vsel %vm1404, %v2873, %v2873
        %v3007 = vsel %vm1406, %v2873, %v3006
        %v3008 = vsel %vm1408, %v2873, %v3007
        %v3009 = vsel %vm1410, %v2873, %v3008
        %v3010 = vsel %vm1412, %v2873, %v3009
        %v3011 = vsel %vm1414, %v2873, %v3010
        %v3012 = vsel %vm1404, %v2892, %v2892
        %v3013 = vsel %vm1406, %v2892, %v3012
        %v3014 = vsel %vm1408, %v2892, %v3013
        %v3015 = vsel %vm1410, %v2892, %v3014
        %v3016 = vsel %vm1412, %v2892, %v3015
        %v3017 = vsel %vm1414, %v2892, %v3016
        %v3018 = vsel %vm1404, %v2911, %v2911
        %v3019 = vsel %vm1406, %v2911, %v3018
        %v3020 = vsel %vm1408, %v2911, %v3019
        %v3021 = vsel %vm1410, %v2911, %v3020
        %v3022 = vsel %vm1412, %v2911, %v3021
        %v3023 = vsel %vm1414, %v2911, %v3022
        %v3024 = vsel %vm1404, %v2930, %v2930
        %v3025 = vsel %vm1406, %v2930, %v3024
        %v3026 = vsel %vm1408, %v2930, %v3025
        %v3027 = vsel %vm1410, %v2930, %v3026
        %v3028 = vsel %vm1412, %v2930, %v3027
        %v3029 = vsel %vm1414, %v2930, %v3028
        %v3030 = vsel %vm1404, %v2949, %v2949
        %v3031 = vsel %vm1406, %v2949, %v3030
        %v3032 = vsel %vm1408, %v2949, %v3031
        %v3033 = vsel %vm1410, %v2949, %v3032
        %v3034 = vsel %vm1412, %v2949, %v3033
        %v3035 = vsel %vm1414, %v2949, %v3034
        %v3036 = vsel %vm1404, %v2968, %v2968
        %v3037 = vsel %vm1406, %v2968, %v3036
        %v3038 = vsel %vm1408, %v2968, %v3037
        %v3039 = vsel %vm1410, %v2968, %v3038
        %v3040 = vsel %vm1412, %v2968, %v3039
        %v3041 = vsel %vm1414, %v2968, %v3040
        %v3042 = vsel %vm1404, %v2987, %v2987
        %v3043 = vsel %vm1406, %v2987, %v3042
        %v3044 = vsel %vm1408, %v2987, %v3043
        %v3045 = vsel %vm1410, %v2987, %v3044
        %v3046 = vsel %vm1412, %v2987, %v3045
        %v3047 = vsel %vm1414, %v2987, %v3046
        %v3056 = vmul.f32 %v328, %v3005
        %v3057 = vmul.f32 %v329, %v3005
        %v3058 = vmul.f32 %v330, %v3005
        %v3059 = vmul.f32 %v331, %v3005
        %v3060 = vmul.f32 %v332, %v3011
        %v3061 = vmul.f32 %v333, %v3011
        %v3062 = vmul.f32 %v334, %v3011
        %v3063 = vmul.f32 %v335, %v3011
        %v3064 = vmul.f32 %v336, %v3017
        %v3065 = vmul.f32 %v337, %v3017
        %v3066 = vmul.f32 %v338, %v3017
        %v3067 = vmul.f32 %v339, %v3017
        %v3068 = vmul.f32 %v340, %v3023
        %v3069 = vmul.f32 %v341, %v3023
        %v3070 = vmul.f32 %v342, %v3023
        %v3071 = vmul.f32 %v343, %v3023
        %v3072 = vmul.f32 %v344, %v3029
        %v3073 = vmul.f32 %v345, %v3029
        %v3074 = vmul.f32 %v346, %v3029
        %v3075 = vmul.f32 %v347, %v3029
        %v3076 = vmul.f32 %v348, %v3035
        %v3077 = vmul.f32 %v349, %v3035
        %v3078 = vmul.f32 %v350, %v3035
        %v3079 = vmul.f32 %v351, %v3035
        %v3080 = vmul.f32 %v352, %v3041
        %v3081 = vmul.f32 %v353, %v3041
        %v3082 = vmul.f32 %v354, %v3041
        %v3083 = vmul.f32 %v355, %v3041
        %v3084 = vmul.f32 %v356, %v3047
        %v3085 = vmul.f32 %v357, %v3047
        %v3086 = vmul.f32 %v358, %v3047
        %v3087 = vmul.f32 %v359, %v3047
        %v3088 = vsel %vm517, %v3056, 0.0
        %3089 = vadd.xlane.f32.xlu0 %v3088
        %v3090 = vpop.xlane.xlu0 %3089
        %v3091 = vsel %vm517, %v3057, 0.0
        %3092 = vadd.xlane.f32.xlu0 %v3091
        %v3093 = vpop.xlane.xlu0 %3092
        %v3094 = vsel %vm517, %v3058, 0.0
        %3095 = vadd.xlane.f32.xlu0 %v3094
        %v3096 = vpop.xlane.xlu0 %3095
        %v3097 = vsel %vm517, %v3059, 0.0
        %3098 = vadd.xlane.f32.xlu0 %v3097
        %v3099 = vpop.xlane.xlu0 %3098
        %v3100 = vsel %vm517, %v3060, 0.0
        %3101 = vadd.xlane.f32.xlu0 %v3100
        %v3102 = vpop.xlane.xlu0 %3101
        %v3103 = vsel %vm517, %v3061, 0.0
        %3104 = vadd.xlane.f32.xlu0 %v3103
        %v3105 = vpop.xlane.xlu0 %3104
        %v3106 = vsel %vm517, %v3062, 0.0
        %3107 = vadd.xlane.f32.xlu0 %v3106
        %v3108 = vpop.xlane.xlu0 %3107
        %v3109 = vsel %vm517, %v3063, 0.0
        %3110 = vadd.xlane.f32.xlu0 %v3109
        %v3111 = vpop.xlane.xlu0 %3110
        %v3112 = vsel %vm517, %v3064, 0.0
        %3113 = vadd.xlane.f32.xlu0 %v3112
        %v3114 = vpop.xlane.xlu0 %3113
        %v3115 = vsel %vm517, %v3065, 0.0
        %3116 = vadd.xlane.f32.xlu0 %v3115
        %v3117 = vpop.xlane.xlu0 %3116
        %v3118 = vsel %vm517, %v3066, 0.0
        %3119 = vadd.xlane.f32.xlu0 %v3118
        %v3120 = vpop.xlane.xlu0 %3119
        %v3121 = vsel %vm517, %v3067, 0.0
        %3122 = vadd.xlane.f32.xlu0 %v3121
        %v3123 = vpop.xlane.xlu0 %3122
        %v3124 = vsel %vm517, %v3068, 0.0
        %3125 = vadd.xlane.f32.xlu0 %v3124
        %v3126 = vpop.xlane.xlu0 %3125
        %v3127 = vsel %vm517, %v3069, 0.0
        %3128 = vadd.xlane.f32.xlu0 %v3127
        %v3129 = vpop.xlane.xlu0 %3128
        %v3130 = vsel %vm517, %v3070, 0.0
        %3131 = vadd.xlane.f32.xlu0 %v3130
        %v3132 = vpop.xlane.xlu0 %3131
        %v3133 = vsel %vm517, %v3071, 0.0
        %3134 = vadd.xlane.f32.xlu0 %v3133
        %v3135 = vpop.xlane.xlu0 %3134
        %v3136 = vsel %vm517, %v3072, 0.0
        %3137 = vadd.xlane.f32.xlu0 %v3136
        %v3138 = vpop.xlane.xlu0 %3137
        %v3139 = vsel %vm517, %v3073, 0.0
        %3140 = vadd.xlane.f32.xlu0 %v3139
        %v3141 = vpop.xlane.xlu0 %3140
        %v3142 = vsel %vm517, %v3074, 0.0
        %3143 = vadd.xlane.f32.xlu0 %v3142
        %v3144 = vpop.xlane.xlu0 %3143
        %v3145 = vsel %vm517, %v3075, 0.0
        %3146 = vadd.xlane.f32.xlu0 %v3145
        %v3147 = vpop.xlane.xlu0 %3146
        %v3148 = vsel %vm517, %v3076, 0.0
        %3149 = vadd.xlane.f32.xlu0 %v3148
        %v3150 = vpop.xlane.xlu0 %3149
        %v3151 = vsel %vm517, %v3077, 0.0
        %3152 = vadd.xlane.f32.xlu0 %v3151
        %v3153 = vpop.xlane.xlu0 %3152
        %v3154 = vsel %vm517, %v3078, 0.0
        %3155 = vadd.xlane.f32.xlu0 %v3154
        %v3156 = vpop.xlane.xlu0 %3155
        %v3157 = vsel %vm517, %v3079, 0.0
        %3158 = vadd.xlane.f32.xlu0 %v3157
        %v3159 = vpop.xlane.xlu0 %3158
        %v3160 = vsel %vm517, %v3080, 0.0
        %3161 = vadd.xlane.f32.xlu0 %v3160
        %v3162 = vpop.xlane.xlu0 %3161
        %v3163 = vsel %vm517, %v3081, 0.0
        %3164 = vadd.xlane.f32.xlu0 %v3163
        %v3165 = vpop.xlane.xlu0 %3164
        %v3166 = vsel %vm517, %v3082, 0.0
        %3167 = vadd.xlane.f32.xlu0 %v3166
        %v3168 = vpop.xlane.xlu0 %3167
        %v3169 = vsel %vm517, %v3083, 0.0
        %3170 = vadd.xlane.f32.xlu0 %v3169
        %v3171 = vpop.xlane.xlu0 %3170
        %v3172 = vsel %vm517, %v3084, 0.0
        %3173 = vadd.xlane.f32.xlu0 %v3172
        %v3174 = vpop.xlane.xlu0 %3173
        %v3175 = vsel %vm517, %v3085, 0.0
        %3176 = vadd.xlane.f32.xlu0 %v3175
        %v3177 = vpop.xlane.xlu0 %3176
        %v3178 = vsel %vm517, %v3086, 0.0
        %3179 = vadd.xlane.f32.xlu0 %v3178
        %v3180 = vpop.xlane.xlu0 %3179
        %v3181 = vsel %vm517, %v3087, 0.0
        %3182 = vadd.xlane.f32.xlu0 %v3181
        %v3183 = vpop.xlane.xlu0 %3182
        %v3185 = vcombine.high %v2999, %v2999
        %v3187 = vunpack.c.l.s4 1966171168
        %v3188 = vunpack.c.0.s8 %v3187
        %v3189 = vlaneseq
        %v3190 = vshrl.u32 %v3189, 7
        %v3191 = vsub.s32 %v3188, %v3190
        %v3192 = vrot.slane %v2999, %v3191
        %v3194 = vunpack.c.l.s4 1966171168
        %v3195 = vunpack.c.0.s8 %v3194
        %v3196 = vlaneseq
        %v3197 = vshrl.u32 %v3196, 7
        %v3198 = vsub.s32 %v3195, %v3197
        %v3199 = vrot.slane %v3185, %v3198
        %v3200 = vcombine.high %v3192, %v3192
        %v3201 = vcombine.high %v3199, %v3199
        %v3203 = vunpack.c.l.s4 1966171168
        %v3204 = vunpack.c.0.s8 %v3203
        %v3205 = vlaneseq
        %v3206 = vshrl.u32 %v3205, 7
        %v3207 = vsub.s32 %v3204, %v3206
        %v3208 = vrot.slane %v3192, %v3207
        %v3210 = vunpack.c.l.s4 1966171168
        %v3211 = vunpack.c.0.s8 %v3210
        %v3212 = vlaneseq
        %v3213 = vshrl.u32 %v3212, 7
        %v3214 = vsub.s32 %v3211, %v3213
        %v3215 = vrot.slane %v3199, %v3214
        %v3217 = vunpack.c.l.s4 1966171168
        %v3218 = vunpack.c.0.s8 %v3217
        %v3219 = vlaneseq
        %v3220 = vshrl.u32 %v3219, 7
        %v3221 = vsub.s32 %v3218, %v3220
        %v3222 = vrot.slane %v3200, %v3221
        %v3224 = vunpack.c.l.s4 1966171168
        %v3225 = vunpack.c.0.s8 %v3224
        %v3226 = vlaneseq
        %v3227 = vshrl.u32 %v3226, 7
        %v3228 = vsub.s32 %v3225, %v3227
        %v3229 = vrot.slane %v3201, %v3228
        %v3230 = vcombine.high %v3208, %v3208
        %v3231 = vcombine.high %v3215, %v3215
        %v3232 = vcombine.high %v3222, %v3222
        %v3233 = vcombine.high %v3229, %v3229
        %v3234 = vlaneseq
        %v3235 = vshrl.u32 %v3234, 7
        %v3236 = vsub.s32 0, %v3235
        %v3237 = vrot.slane %v3208, %v3236
        %v3238 = vlaneseq
        %v3239 = vshrl.u32 %v3238, 7
        %v3240 = vsub.s32 0, %v3239
        %v3241 = vrot.slane %v3222, %v3240
        %v3242 = vlaneseq
        %v3243 = vshrl.u32 %v3242, 7
        %v3244 = vsub.s32 0, %v3243
        %v3245 = vrot.slane %v3230, %v3244
        %v3246 = vlaneseq
        %v3247 = vshrl.u32 %v3246, 7
        %v3248 = vsub.s32 0, %v3247
        %v3249 = vrot.slane %v3232, %v3248
        %v3250 = vlaneseq
        %v3251 = vshrl.u32 %v3250, 7
        %v3252 = vsub.s32 0, %v3251
        %v3253 = vrot.slane %v3215, %v3252
        %v3254 = vlaneseq
        %v3255 = vshrl.u32 %v3254, 7
        %v3256 = vsub.s32 0, %v3255
        %v3257 = vrot.slane %v3229, %v3256
        %v3258 = vlaneseq
        %v3259 = vshrl.u32 %v3258, 7
        %v3260 = vsub.s32 0, %v3259
        %v3261 = vrot.slane %v3231, %v3260
        %v3262 = vlaneseq
        %v3263 = vshrl.u32 %v3262, 7
        %v3264 = vsub.s32 0, %v3263
        %v3265 = vrot.slane %v3233, %v3264
        %v3274 = vmul.f32 %v360, %v3237
        %v3275 = vmul.f32 %v361, %v3237
        %v3276 = vmul.f32 %v362, %v3237
        %v3277 = vmul.f32 %v363, %v3237
        %v3278 = vmul.f32 %v364, %v3241
        %v3279 = vmul.f32 %v365, %v3241
        %v3280 = vmul.f32 %v366, %v3241
        %v3281 = vmul.f32 %v367, %v3241
        %v3282 = vmul.f32 %v368, %v3245
        %v3283 = vmul.f32 %v369, %v3245
        %v3284 = vmul.f32 %v370, %v3245
        %v3285 = vmul.f32 %v371, %v3245
        %v3286 = vmul.f32 %v372, %v3249
        %v3287 = vmul.f32 %v373, %v3249
        %v3288 = vmul.f32 %v374, %v3249
        %v3289 = vmul.f32 %v375, %v3249
        %v3290 = vmul.f32 %v376, %v3253
        %v3291 = vmul.f32 %v377, %v3253
        %v3292 = vmul.f32 %v378, %v3253
        %v3293 = vmul.f32 %v379, %v3253
        %v3294 = vmul.f32 %v380, %v3257
        %v3295 = vmul.f32 %v381, %v3257
        %v3296 = vmul.f32 %v382, %v3257
        %v3297 = vmul.f32 %v383, %v3257
        %v3298 = vmul.f32 %v384, %v3261
        %v3299 = vmul.f32 %v385, %v3261
        %v3300 = vmul.f32 %v386, %v3261
        %v3301 = vmul.f32 %v387, %v3261
        %v3302 = vmul.f32 %v388, %v3265
        %v3303 = vmul.f32 %v389, %v3265
        %v3304 = vmul.f32 %v390, %v3265
        %v3305 = vmul.f32 %v391, %v3265
        %v3306 = vsel %vm736, %v3274, 0.0
        %3307 = vadd.xlane.f32.xlu0 %v3306
        %v3308 = vpop.xlane.xlu0 %3307
        %v3309 = vsel %vm736, %v3275, 0.0
        %3310 = vadd.xlane.f32.xlu0 %v3309
        %v3311 = vpop.xlane.xlu0 %3310
        %v3312 = vsel %vm736, %v3276, 0.0
        %3313 = vadd.xlane.f32.xlu0 %v3312
        %v3314 = vpop.xlane.xlu0 %3313
        %v3315 = vsel %vm736, %v3277, 0.0
        %3316 = vadd.xlane.f32.xlu0 %v3315
        %v3317 = vpop.xlane.xlu0 %3316
        %v3318 = vsel %vm736, %v3278, 0.0
        %3319 = vadd.xlane.f32.xlu0 %v3318
        %v3320 = vpop.xlane.xlu0 %3319
        %v3321 = vsel %vm736, %v3279, 0.0
        %3322 = vadd.xlane.f32.xlu0 %v3321
        %v3323 = vpop.xlane.xlu0 %3322
        %v3324 = vsel %vm736, %v3280, 0.0
        %3325 = vadd.xlane.f32.xlu0 %v3324
        %v3326 = vpop.xlane.xlu0 %3325
        %v3327 = vsel %vm736, %v3281, 0.0
        %3328 = vadd.xlane.f32.xlu0 %v3327
        %v3329 = vpop.xlane.xlu0 %3328
        %v3330 = vsel %vm736, %v3282, 0.0
        %3331 = vadd.xlane.f32.xlu0 %v3330
        %v3332 = vpop.xlane.xlu0 %3331
        %v3333 = vsel %vm736, %v3283, 0.0
        %3334 = vadd.xlane.f32.xlu0 %v3333
        %v3335 = vpop.xlane.xlu0 %3334
        %v3336 = vsel %vm736, %v3284, 0.0
        %3337 = vadd.xlane.f32.xlu0 %v3336
        %v3338 = vpop.xlane.xlu0 %3337
        %v3339 = vsel %vm736, %v3285, 0.0
        %3340 = vadd.xlane.f32.xlu0 %v3339
        %v3341 = vpop.xlane.xlu0 %3340
        %v3342 = vsel %vm736, %v3286, 0.0
        %3343 = vadd.xlane.f32.xlu0 %v3342
        %v3344 = vpop.xlane.xlu0 %3343
        %v3345 = vsel %vm736, %v3287, 0.0
        %3346 = vadd.xlane.f32.xlu0 %v3345
        %v3347 = vpop.xlane.xlu0 %3346
        %v3348 = vsel %vm736, %v3288, 0.0
        %3349 = vadd.xlane.f32.xlu0 %v3348
        %v3350 = vpop.xlane.xlu0 %3349
        %v3351 = vsel %vm736, %v3289, 0.0
        %3352 = vadd.xlane.f32.xlu0 %v3351
        %v3353 = vpop.xlane.xlu0 %3352
        %v3354 = vsel %vm736, %v3290, 0.0
        %3355 = vadd.xlane.f32.xlu0 %v3354
        %v3356 = vpop.xlane.xlu0 %3355
        %v3357 = vsel %vm736, %v3291, 0.0
        %3358 = vadd.xlane.f32.xlu0 %v3357
        %v3359 = vpop.xlane.xlu0 %3358
        %v3360 = vsel %vm736, %v3292, 0.0
        %3361 = vadd.xlane.f32.xlu0 %v3360
        %v3362 = vpop.xlane.xlu0 %3361
        %v3363 = vsel %vm736, %v3293, 0.0
        %3364 = vadd.xlane.f32.xlu0 %v3363
        %v3365 = vpop.xlane.xlu0 %3364
        %v3366 = vsel %vm736, %v3294, 0.0
        %3367 = vadd.xlane.f32.xlu0 %v3366
        %v3368 = vpop.xlane.xlu0 %3367
        %v3369 = vsel %vm736, %v3295, 0.0
        %3370 = vadd.xlane.f32.xlu0 %v3369
        %v3371 = vpop.xlane.xlu0 %3370
        %v3372 = vsel %vm736, %v3296, 0.0
        %3373 = vadd.xlane.f32.xlu0 %v3372
        %v3374 = vpop.xlane.xlu0 %3373
        %v3375 = vsel %vm736, %v3297, 0.0
        %3376 = vadd.xlane.f32.xlu0 %v3375
        %v3377 = vpop.xlane.xlu0 %3376
        %v3378 = vsel %vm736, %v3298, 0.0
        %3379 = vadd.xlane.f32.xlu0 %v3378
        %v3380 = vpop.xlane.xlu0 %3379
        %v3381 = vsel %vm736, %v3299, 0.0
        %3382 = vadd.xlane.f32.xlu0 %v3381
        %v3383 = vpop.xlane.xlu0 %3382
        %v3384 = vsel %vm736, %v3300, 0.0
        %3385 = vadd.xlane.f32.xlu0 %v3384
        %v3386 = vpop.xlane.xlu0 %3385
        %v3387 = vsel %vm736, %v3301, 0.0
        %3388 = vadd.xlane.f32.xlu0 %v3387
        %v3389 = vpop.xlane.xlu0 %3388
        %v3390 = vsel %vm736, %v3302, 0.0
        %3391 = vadd.xlane.f32.xlu0 %v3390
        %v3392 = vpop.xlane.xlu0 %3391
        %v3393 = vsel %vm736, %v3303, 0.0
        %3394 = vadd.xlane.f32.xlu0 %v3393
        %v3395 = vpop.xlane.xlu0 %3394
        %v3396 = vsel %vm736, %v3304, 0.0
        %3397 = vadd.xlane.f32.xlu0 %v3396
        %v3398 = vpop.xlane.xlu0 %3397
        %v3399 = vsel %vm736, %v3305, 0.0
        %3400 = vadd.xlane.f32.xlu0 %v3399
        %v3401 = vpop.xlane.xlu0 %3400
        %v3402 = vadd.f32 %v3090, %v3308
        %v3403 = vadd.f32 %v3093, %v3311
        %v3404 = vadd.f32 %v3096, %v3314
        %v3405 = vadd.f32 %v3099, %v3317
        %v3406 = vadd.f32 %v3102, %v3320
        %v3407 = vadd.f32 %v3105, %v3323
        %v3408 = vadd.f32 %v3108, %v3326
        %v3409 = vadd.f32 %v3111, %v3329
        %v3410 = vadd.f32 %v3114, %v3332
        %v3411 = vadd.f32 %v3117, %v3335
        %v3412 = vadd.f32 %v3120, %v3338
        %v3413 = vadd.f32 %v3123, %v3341
        %v3414 = vadd.f32 %v3126, %v3344
        %v3415 = vadd.f32 %v3129, %v3347
        %v3416 = vadd.f32 %v3132, %v3350
        %v3417 = vadd.f32 %v3135, %v3353
        %v3418 = vadd.f32 %v3138, %v3356
        %v3419 = vadd.f32 %v3141, %v3359
        %v3420 = vadd.f32 %v3144, %v3362
        %v3421 = vadd.f32 %v3147, %v3365
        %v3422 = vadd.f32 %v3150, %v3368
        %v3423 = vadd.f32 %v3153, %v3371
        %v3424 = vadd.f32 %v3156, %v3374
        %v3425 = vadd.f32 %v3159, %v3377
        %v3426 = vadd.f32 %v3162, %v3380
        %v3427 = vadd.f32 %v3165, %v3383
        %v3428 = vadd.f32 %v3168, %v3386
        %v3429 = vadd.f32 %v3171, %v3389
        %v3430 = vadd.f32 %v3174, %v3392
        %v3431 = vadd.f32 %v3177, %v3395
        %v3432 = vadd.f32 %v3180, %v3398
        %v3433 = vadd.f32 %v3183, %v3401
        %v3434 = vadd.f32 %v3402, %v872
        %v3435 = vadd.f32 %v3403, %v876
        %v3436 = vadd.f32 %v3404, %v880
        %v3437 = vadd.f32 %v3405, %v884
        %v3438 = vadd.f32 %v3406, %v891
        %v3439 = vadd.f32 %v3407, %v895
        %v3440 = vadd.f32 %v3408, %v899
        %v3441 = vadd.f32 %v3409, %v903
        %v3442 = vadd.f32 %v3410, %v910
        %v3443 = vadd.f32 %v3411, %v914
        %v3444 = vadd.f32 %v3412, %v918
        %v3445 = vadd.f32 %v3413, %v922
        %v3446 = vadd.f32 %v3414, %v929
        %v3447 = vadd.f32 %v3415, %v933
        %v3448 = vadd.f32 %v3416, %v937
        %v3449 = vadd.f32 %v3417, %v941
        %v3450 = vadd.f32 %v3418, %v948
        %v3451 = vadd.f32 %v3419, %v952
        %v3452 = vadd.f32 %v3420, %v956
        %v3453 = vadd.f32 %v3421, %v960
        %v3454 = vadd.f32 %v3422, %v967
        %v3455 = vadd.f32 %v3423, %v971
        %v3456 = vadd.f32 %v3424, %v975
        %v3457 = vadd.f32 %v3425, %v979
        %v3458 = vadd.f32 %v3426, %v986
        %v3459 = vadd.f32 %v3427, %v990
        %v3460 = vadd.f32 %v3428, %v994
        %v3461 = vadd.f32 %v3429, %v998
        %v3462 = vadd.f32 %v3430, %v1005
        %v3463 = vadd.f32 %v3431, %v1009
        %v3464 = vadd.f32 %v3432, %v1013
        %v3465 = vadd.f32 %v3433, %v1017
        %v3466 = vtanh.pop %v3434
        %v3467 = vtanh.pop %v3435
        %v3468 = vtanh.pop %v3436
        %v3469 = vtanh.pop %v3437
        %v3470 = vtanh.pop %v3438
        %v3471 = vtanh.pop %v3439
        %v3472 = vtanh.pop %v3440
        %v3473 = vtanh.pop %v3441
        %v3474 = vtanh.pop %v3442
        %v3475 = vtanh.pop %v3443
        %v3476 = vtanh.pop %v3444
        %v3477 = vtanh.pop %v3445
        %v3478 = vtanh.pop %v3446
        %v3479 = vtanh.pop %v3447
        %v3480 = vtanh.pop %v3448
        %v3481 = vtanh.pop %v3449
        %v3482 = vtanh.pop %v3450
        %v3483 = vtanh.pop %v3451
        %v3484 = vtanh.pop %v3452
        %v3485 = vtanh.pop %v3453
        %v3486 = vtanh.pop %v3454
        %v3487 = vtanh.pop %v3455
        %v3488 = vtanh.pop %v3456
        %v3489 = vtanh.pop %v3457
        %v3490 = vtanh.pop %v3458
        %v3491 = vtanh.pop %v3459
        %v3492 = vtanh.pop %v3460
        %v3493 = vtanh.pop %v3461
        %v3494 = vtanh.pop %v3462
        %v3495 = vtanh.pop %v3463
        %v3496 = vtanh.pop %v3464
        %v3497 = vtanh.pop %v3465
        %3530 = vset.pattern.permute.xlu0 0
        %3531 = vperm.xlu0 %3530, %v3466
        %v3532 = vpop.permute.xlu0 %3531
        %3533 = vset.pattern.permute.xlu0 0
        %3534 = vperm.xlu0 %3533, %v3467
        %v3535 = vpop.permute.xlu0 %3534
        %3536 = vset.pattern.permute.xlu0 0
        %3537 = vperm.xlu0 %3536, %v3468
        %v3538 = vpop.permute.xlu0 %3537
        %3539 = vset.pattern.permute.xlu0 0
        %3540 = vperm.xlu0 %3539, %v3469
        %v3541 = vpop.permute.xlu0 %3540
        %3542 = vset.pattern.permute.xlu0 0
        %3543 = vperm.xlu0 %3542, %v3470
        %v3544 = vpop.permute.xlu0 %3543
        %3545 = vset.pattern.permute.xlu0 0
        %3546 = vperm.xlu0 %3545, %v3471
        %v3547 = vpop.permute.xlu0 %3546
        %3548 = vset.pattern.permute.xlu0 0
        %3549 = vperm.xlu0 %3548, %v3472
        %v3550 = vpop.permute.xlu0 %3549
        %3551 = vset.pattern.permute.xlu0 0
        %3552 = vperm.xlu0 %3551, %v3473
        %v3553 = vpop.permute.xlu0 %3552
        %3554 = vset.pattern.permute.xlu0 0
        %3555 = vperm.xlu0 %3554, %v3474
        %v3556 = vpop.permute.xlu0 %3555
        %3557 = vset.pattern.permute.xlu0 0
        %3558 = vperm.xlu0 %3557, %v3475
        %v3559 = vpop.permute.xlu0 %3558
        %3560 = vset.pattern.permute.xlu0 0
        %3561 = vperm.xlu0 %3560, %v3476
        %v3562 = vpop.permute.xlu0 %3561
        %3563 = vset.pattern.permute.xlu0 0
        %3564 = vperm.xlu0 %3563, %v3477
        %v3565 = vpop.permute.xlu0 %3564
        %3566 = vset.pattern.permute.xlu0 0
        %3567 = vperm.xlu0 %3566, %v3478
        %v3568 = vpop.permute.xlu0 %3567
        %3569 = vset.pattern.permute.xlu0 0
        %3570 = vperm.xlu0 %3569, %v3479
        %v3571 = vpop.permute.xlu0 %3570
        %3572 = vset.pattern.permute.xlu0 0
        %3573 = vperm.xlu0 %3572, %v3480
        %v3574 = vpop.permute.xlu0 %3573
        %3575 = vset.pattern.permute.xlu0 0
        %3576 = vperm.xlu0 %3575, %v3481
        %v3577 = vpop.permute.xlu0 %3576
        %3578 = vset.pattern.permute.xlu0 0
        %3579 = vperm.xlu0 %3578, %v3482
        %v3580 = vpop.permute.xlu0 %3579
        %3581 = vset.pattern.permute.xlu0 0
        %3582 = vperm.xlu0 %3581, %v3483
        %v3583 = vpop.permute.xlu0 %3582
        %3584 = vset.pattern.permute.xlu0 0
        %3585 = vperm.xlu0 %3584, %v3484
        %v3586 = vpop.permute.xlu0 %3585
        %3587 = vset.pattern.permute.xlu0 0
        %3588 = vperm.xlu0 %3587, %v3485
        %v3589 = vpop.permute.xlu0 %3588
        %3590 = vset.pattern.permute.xlu0 0
        %3591 = vperm.xlu0 %3590, %v3486
        %v3592 = vpop.permute.xlu0 %3591
        %3593 = vset.pattern.permute.xlu0 0
        %3594 = vperm.xlu0 %3593, %v3487
        %v3595 = vpop.permute.xlu0 %3594
        %3596 = vset.pattern.permute.xlu0 0
        %3597 = vperm.xlu0 %3596, %v3488
        %v3598 = vpop.permute.xlu0 %3597
        %3599 = vset.pattern.permute.xlu0 0
        %3600 = vperm.xlu0 %3599, %v3489
        %v3601 = vpop.permute.xlu0 %3600
        %3602 = vset.pattern.permute.xlu0 0
        %3603 = vperm.xlu0 %3602, %v3490
        %v3604 = vpop.permute.xlu0 %3603
        %3605 = vset.pattern.permute.xlu0 0
        %3606 = vperm.xlu0 %3605, %v3491
        %v3607 = vpop.permute.xlu0 %3606
        %3608 = vset.pattern.permute.xlu0 0
        %3609 = vperm.xlu0 %3608, %v3492
        %v3610 = vpop.permute.xlu0 %3609
        %3611 = vset.pattern.permute.xlu0 0
        %3612 = vperm.xlu0 %3611, %v3493
        %v3613 = vpop.permute.xlu0 %3612
        %3614 = vset.pattern.permute.xlu0 0
        %3615 = vperm.xlu0 %3614, %v3494
        %v3616 = vpop.permute.xlu0 %3615
        %3617 = vset.pattern.permute.xlu0 0
        %3618 = vperm.xlu0 %3617, %v3495
        %v3619 = vpop.permute.xlu0 %3618
        %3620 = vset.pattern.permute.xlu0 0
        %3621 = vperm.xlu0 %3620, %v3496
        %v3622 = vpop.permute.xlu0 %3621
        %3623 = vset.pattern.permute.xlu0 0
        %3624 = vperm.xlu0 %3623, %v3497
        %v3625 = vpop.permute.xlu0 %3624
        %v3626 = vlaneseq
        %v3627 = vshrl.u32 %v3626, 7
        %v3628 = vsub.s32 %v1243, %v3627
        %v3629 = vrot.slane %v3532, %v3628
        %v3630 = vlaneseq
        %v3631 = vshrl.u32 %v3630, 7
        %v3632 = vsub.s32 %v1248, %v3631
        %v3633 = vrot.slane %v3535, %v3632
        %v3634 = vsel %vm1253, %v3633, %v3629
        %v3635 = vlaneseq
        %v3636 = vshrl.u32 %v3635, 7
        %v3637 = vsub.s32 %v1255, %v3636
        %v3638 = vrot.slane %v3538, %v3637
        %v3639 = vsel %vm1260, %v3638, %v3634
        %v3640 = vlaneseq
        %v3641 = vshrl.u32 %v3640, 7
        %v3642 = vsub.s32 %v1262, %v3641
        %v3643 = vrot.slane %v3541, %v3642
        %v3644 = vsel %vm1267, %v3643, %v3639
        %v3645 = vlaneseq
        %v3646 = vshrl.u32 %v3645, 7
        %v3647 = vsub.s32 %v1243, %v3646
        %v3648 = vrot.slane %v3544, %v3647
        %v3649 = vlaneseq
        %v3650 = vshrl.u32 %v3649, 7
        %v3651 = vsub.s32 %v1248, %v3650
        %v3652 = vrot.slane %v3547, %v3651
        %v3653 = vsel %vm1253, %v3652, %v3648
        %v3654 = vlaneseq
        %v3655 = vshrl.u32 %v3654, 7
        %v3656 = vsub.s32 %v1255, %v3655
        %v3657 = vrot.slane %v3550, %v3656
        %v3658 = vsel %vm1260, %v3657, %v3653
        %v3659 = vlaneseq
        %v3660 = vshrl.u32 %v3659, 7
        %v3661 = vsub.s32 %v1262, %v3660
        %v3662 = vrot.slane %v3553, %v3661
        %v3663 = vsel %vm1267, %v3662, %v3658
        %v3664 = vlaneseq
        %v3665 = vshrl.u32 %v3664, 7
        %v3666 = vsub.s32 %v1243, %v3665
        %v3667 = vrot.slane %v3556, %v3666
        %v3668 = vlaneseq
        %v3669 = vshrl.u32 %v3668, 7
        %v3670 = vsub.s32 %v1248, %v3669
        %v3671 = vrot.slane %v3559, %v3670
        %v3672 = vsel %vm1253, %v3671, %v3667
        %v3673 = vlaneseq
        %v3674 = vshrl.u32 %v3673, 7
        %v3675 = vsub.s32 %v1255, %v3674
        %v3676 = vrot.slane %v3562, %v3675
        %v3677 = vsel %vm1260, %v3676, %v3672
        %v3678 = vlaneseq
        %v3679 = vshrl.u32 %v3678, 7
        %v3680 = vsub.s32 %v1262, %v3679
        %v3681 = vrot.slane %v3565, %v3680
        %v3682 = vsel %vm1267, %v3681, %v3677
        %v3683 = vlaneseq
        %v3684 = vshrl.u32 %v3683, 7
        %v3685 = vsub.s32 %v1243, %v3684
        %v3686 = vrot.slane %v3568, %v3685
        %v3687 = vlaneseq
        %v3688 = vshrl.u32 %v3687, 7
        %v3689 = vsub.s32 %v1248, %v3688
        %v3690 = vrot.slane %v3571, %v3689
        %v3691 = vsel %vm1253, %v3690, %v3686
        %v3692 = vlaneseq
        %v3693 = vshrl.u32 %v3692, 7
        %v3694 = vsub.s32 %v1255, %v3693
        %v3695 = vrot.slane %v3574, %v3694
        %v3696 = vsel %vm1260, %v3695, %v3691
        %v3697 = vlaneseq
        %v3698 = vshrl.u32 %v3697, 7
        %v3699 = vsub.s32 %v1262, %v3698
        %v3700 = vrot.slane %v3577, %v3699
        %v3701 = vsel %vm1267, %v3700, %v3696
        %v3702 = vlaneseq
        %v3703 = vshrl.u32 %v3702, 7
        %v3704 = vsub.s32 %v1243, %v3703
        %v3705 = vrot.slane %v3580, %v3704
        %v3706 = vlaneseq
        %v3707 = vshrl.u32 %v3706, 7
        %v3708 = vsub.s32 %v1248, %v3707
        %v3709 = vrot.slane %v3583, %v3708
        %v3710 = vsel %vm1253, %v3709, %v3705
        %v3711 = vlaneseq
        %v3712 = vshrl.u32 %v3711, 7
        %v3713 = vsub.s32 %v1255, %v3712
        %v3714 = vrot.slane %v3586, %v3713
        %v3715 = vsel %vm1260, %v3714, %v3710
        %v3716 = vlaneseq
        %v3717 = vshrl.u32 %v3716, 7
        %v3718 = vsub.s32 %v1262, %v3717
        %v3719 = vrot.slane %v3589, %v3718
        %v3720 = vsel %vm1267, %v3719, %v3715
        %v3721 = vlaneseq
        %v3722 = vshrl.u32 %v3721, 7
        %v3723 = vsub.s32 %v1243, %v3722
        %v3724 = vrot.slane %v3592, %v3723
        %v3725 = vlaneseq
        %v3726 = vshrl.u32 %v3725, 7
        %v3727 = vsub.s32 %v1248, %v3726
        %v3728 = vrot.slane %v3595, %v3727
        %v3729 = vsel %vm1253, %v3728, %v3724
        %v3730 = vlaneseq
        %v3731 = vshrl.u32 %v3730, 7
        %v3732 = vsub.s32 %v1255, %v3731
        %v3733 = vrot.slane %v3598, %v3732
        %v3734 = vsel %vm1260, %v3733, %v3729
        %v3735 = vlaneseq
        %v3736 = vshrl.u32 %v3735, 7
        %v3737 = vsub.s32 %v1262, %v3736
        %v3738 = vrot.slane %v3601, %v3737
        %v3739 = vsel %vm1267, %v3738, %v3734
        %v3740 = vlaneseq
        %v3741 = vshrl.u32 %v3740, 7
        %v3742 = vsub.s32 %v1243, %v3741
        %v3743 = vrot.slane %v3604, %v3742
        %v3744 = vlaneseq
        %v3745 = vshrl.u32 %v3744, 7
        %v3746 = vsub.s32 %v1248, %v3745
        %v3747 = vrot.slane %v3607, %v3746
        %v3748 = vsel %vm1253, %v3747, %v3743
        %v3749 = vlaneseq
        %v3750 = vshrl.u32 %v3749, 7
        %v3751 = vsub.s32 %v1255, %v3750
        %v3752 = vrot.slane %v3610, %v3751
        %v3753 = vsel %vm1260, %v3752, %v3748
        %v3754 = vlaneseq
        %v3755 = vshrl.u32 %v3754, 7
        %v3756 = vsub.s32 %v1262, %v3755
        %v3757 = vrot.slane %v3613, %v3756
        %v3758 = vsel %vm1267, %v3757, %v3753
        %v3759 = vlaneseq
        %v3760 = vshrl.u32 %v3759, 7
        %v3761 = vsub.s32 %v1243, %v3760
        %v3762 = vrot.slane %v3616, %v3761
        %v3763 = vlaneseq
        %v3764 = vshrl.u32 %v3763, 7
        %v3765 = vsub.s32 %v1248, %v3764
        %v3766 = vrot.slane %v3619, %v3765
        %v3767 = vsel %vm1253, %v3766, %v3762
        %v3768 = vlaneseq
        %v3769 = vshrl.u32 %v3768, 7
        %v3770 = vsub.s32 %v1255, %v3769
        %v3771 = vrot.slane %v3622, %v3770
        %v3772 = vsel %vm1260, %v3771, %v3767
        %v3773 = vlaneseq
        %v3774 = vshrl.u32 %v3773, 7
        %v3775 = vsub.s32 %v1262, %v3774
        %v3776 = vrot.slane %v3625, %v3775
        %v3777 = vsel %vm1267, %v3776, %v3772
        %v3778 = vsel %vm1402, %v3663, %v3644
        %v3779 = vsel %vm1404, %v3682, %v3778
        %v3780 = vsel %vm1406, %v3701, %v3779
        %v3781 = vsel %vm1408, %v3720, %v3780
        %v3782 = vsel %vm1410, %v3739, %v3781
        %v3783 = vsel %vm1412, %v3758, %v3782
        %v3784 = vsel %vm1414, %v3777, %v3783
        %s3786 = scalar_lea.vmem [#allocation2], 24
        %3787 = vst.msk [vmem:[%s3786] sm:$0xff] %vm517, %v3784
        %s3788 = scalar_lea.vmem %s316, 32
        %v3789 = vld [vmem:[%s3788] sm:$0xff]
        %v3790 = vsel %vm1404, %v3644, %v3644
        %v3791 = vsel %vm1406, %v3644, %v3790
        %v3792 = vsel %vm1408, %v3644, %v3791
        %v3793 = vsel %vm1410, %v3644, %v3792
        %v3794 = vsel %vm1412, %v3644, %v3793
        %v3795 = vsel %vm1414, %v3644, %v3794
        %v3796 = vsel %vm1404, %v3663, %v3663
        %v3797 = vsel %vm1406, %v3663, %v3796
        %v3798 = vsel %vm1408, %v3663, %v3797
        %v3799 = vsel %vm1410, %v3663, %v3798
        %v3800 = vsel %vm1412, %v3663, %v3799
        %v3801 = vsel %vm1414, %v3663, %v3800
        %v3802 = vsel %vm1404, %v3682, %v3682
        %v3803 = vsel %vm1406, %v3682, %v3802
        %v3804 = vsel %vm1408, %v3682, %v3803
        %v3805 = vsel %vm1410, %v3682, %v3804
        %v3806 = vsel %vm1412, %v3682, %v3805
        %v3807 = vsel %vm1414, %v3682, %v3806
        %v3808 = vsel %vm1404, %v3701, %v3701
        %v3809 = vsel %vm1406, %v3701, %v3808
        %v3810 = vsel %vm1408, %v3701, %v3809
        %v3811 = vsel %vm1410, %v3701, %v3810
        %v3812 = vsel %vm1412, %v3701, %v3811
        %v3813 = vsel %vm1414, %v3701, %v3812
        %v3814 = vsel %vm1404, %v3720, %v3720
        %v3815 = vsel %vm1406, %v3720, %v3814
        %v3816 = vsel %vm1408, %v3720, %v3815
        %v3817 = vsel %vm1410, %v3720, %v3816
        %v3818 = vsel %vm1412, %v3720, %v3817
        %v3819 = vsel %vm1414, %v3720, %v3818
        %v3820 = vsel %vm1404, %v3739, %v3739
        %v3821 = vsel %vm1406, %v3739, %v3820
        %v3822 = vsel %vm1408, %v3739, %v3821
        %v3823 = vsel %vm1410, %v3739, %v3822
        %v3824 = vsel %vm1412, %v3739, %v3823
        %v3825 = vsel %vm1414, %v3739, %v3824
        %v3826 = vsel %vm1404, %v3758, %v3758
        %v3827 = vsel %vm1406, %v3758, %v3826
        %v3828 = vsel %vm1408, %v3758, %v3827
        %v3829 = vsel %vm1410, %v3758, %v3828
        %v3830 = vsel %vm1412, %v3758, %v3829
        %v3831 = vsel %vm1414, %v3758, %v3830
        %v3832 = vsel %vm1404, %v3777, %v3777
        %v3833 = vsel %vm1406, %v3777, %v3832
        %v3834 = vsel %vm1408, %v3777, %v3833
        %v3835 = vsel %vm1410, %v3777, %v3834
        %v3836 = vsel %vm1412, %v3777, %v3835
        %v3837 = vsel %vm1414, %v3777, %v3836
        %v3846 = vmul.f32 %v328, %v3795
        %v3847 = vmul.f32 %v329, %v3795
        %v3848 = vmul.f32 %v330, %v3795
        %v3849 = vmul.f32 %v331, %v3795
        %v3850 = vmul.f32 %v332, %v3801
        %v3851 = vmul.f32 %v333, %v3801
        %v3852 = vmul.f32 %v334, %v3801
        %v3853 = vmul.f32 %v335, %v3801
        %v3854 = vmul.f32 %v336, %v3807
        %v3855 = vmul.f32 %v337, %v3807
        %v3856 = vmul.f32 %v338, %v3807
        %v3857 = vmul.f32 %v339, %v3807
        %v3858 = vmul.f32 %v340, %v3813
        %v3859 = vmul.f32 %v341, %v3813
        %v3860 = vmul.f32 %v342, %v3813
        %v3861 = vmul.f32 %v343, %v3813
        %v3862 = vmul.f32 %v344, %v3819
        %v3863 = vmul.f32 %v345, %v3819
        %v3864 = vmul.f32 %v346, %v3819
        %v3865 = vmul.f32 %v347, %v3819
        %v3866 = vmul.f32 %v348, %v3825
        %v3867 = vmul.f32 %v349, %v3825
        %v3868 = vmul.f32 %v350, %v3825
        %v3869 = vmul.f32 %v351, %v3825
        %v3870 = vmul.f32 %v352, %v3831
        %v3871 = vmul.f32 %v353, %v3831
        %v3872 = vmul.f32 %v354, %v3831
        %v3873 = vmul.f32 %v355, %v3831
        %v3874 = vmul.f32 %v356, %v3837
        %v3875 = vmul.f32 %v357, %v3837
        %v3876 = vmul.f32 %v358, %v3837
        %v3877 = vmul.f32 %v359, %v3837
        %v3878 = vsel %vm517, %v3846, 0.0
        %3879 = vadd.xlane.f32.xlu0 %v3878
        %v3880 = vpop.xlane.xlu0 %3879
        %v3881 = vsel %vm517, %v3847, 0.0
        %3882 = vadd.xlane.f32.xlu0 %v3881
        %v3883 = vpop.xlane.xlu0 %3882
        %v3884 = vsel %vm517, %v3848, 0.0
        %3885 = vadd.xlane.f32.xlu0 %v3884
        %v3886 = vpop.xlane.xlu0 %3885
        %v3887 = vsel %vm517, %v3849, 0.0
        %3888 = vadd.xlane.f32.xlu0 %v3887
        %v3889 = vpop.xlane.xlu0 %3888
        %v3890 = vsel %vm517, %v3850, 0.0
        %3891 = vadd.xlane.f32.xlu0 %v3890
        %v3892 = vpop.xlane.xlu0 %3891
        %v3893 = vsel %vm517, %v3851, 0.0
        %3894 = vadd.xlane.f32.xlu0 %v3893
        %v3895 = vpop.xlane.xlu0 %3894
        %v3896 = vsel %vm517, %v3852, 0.0
        %3897 = vadd.xlane.f32.xlu0 %v3896
        %v3898 = vpop.xlane.xlu0 %3897
        %v3899 = vsel %vm517, %v3853, 0.0
        %3900 = vadd.xlane.f32.xlu0 %v3899
        %v3901 = vpop.xlane.xlu0 %3900
        %v3902 = vsel %vm517, %v3854, 0.0
        %3903 = vadd.xlane.f32.xlu0 %v3902
        %v3904 = vpop.xlane.xlu0 %3903
        %v3905 = vsel %vm517, %v3855, 0.0
        %3906 = vadd.xlane.f32.xlu0 %v3905
        %v3907 = vpop.xlane.xlu0 %3906
        %v3908 = vsel %vm517, %v3856, 0.0
        %3909 = vadd.xlane.f32.xlu0 %v3908
        %v3910 = vpop.xlane.xlu0 %3909
        %v3911 = vsel %vm517, %v3857, 0.0
        %3912 = vadd.xlane.f32.xlu0 %v3911
        %v3913 = vpop.xlane.xlu0 %3912
        %v3914 = vsel %vm517, %v3858, 0.0
        %3915 = vadd.xlane.f32.xlu0 %v3914
        %v3916 = vpop.xlane.xlu0 %3915
        %v3917 = vsel %vm517, %v3859, 0.0
        %3918 = vadd.xlane.f32.xlu0 %v3917
        %v3919 = vpop.xlane.xlu0 %3918
        %v3920 = vsel %vm517, %v3860, 0.0
        %3921 = vadd.xlane.f32.xlu0 %v3920
        %v3922 = vpop.xlane.xlu0 %3921
        %v3923 = vsel %vm517, %v3861, 0.0
        %3924 = vadd.xlane.f32.xlu0 %v3923
        %v3925 = vpop.xlane.xlu0 %3924
        %v3926 = vsel %vm517, %v3862, 0.0
        %3927 = vadd.xlane.f32.xlu0 %v3926
        %v3928 = vpop.xlane.xlu0 %3927
        %v3929 = vsel %vm517, %v3863, 0.0
        %3930 = vadd.xlane.f32.xlu0 %v3929
        %v3931 = vpop.xlane.xlu0 %3930
        %v3932 = vsel %vm517, %v3864, 0.0
        %3933 = vadd.xlane.f32.xlu0 %v3932
        %v3934 = vpop.xlane.xlu0 %3933
        %v3935 = vsel %vm517, %v3865, 0.0
        %3936 = vadd.xlane.f32.xlu0 %v3935
        %v3937 = vpop.xlane.xlu0 %3936
        %v3938 = vsel %vm517, %v3866, 0.0
        %3939 = vadd.xlane.f32.xlu0 %v3938
        %v3940 = vpop.xlane.xlu0 %3939
        %v3941 = vsel %vm517, %v3867, 0.0
        %3942 = vadd.xlane.f32.xlu0 %v3941
        %v3943 = vpop.xlane.xlu0 %3942
        %v3944 = vsel %vm517, %v3868, 0.0
        %3945 = vadd.xlane.f32.xlu0 %v3944
        %v3946 = vpop.xlane.xlu0 %3945
        %v3947 = vsel %vm517, %v3869, 0.0
        %3948 = vadd.xlane.f32.xlu0 %v3947
        %v3949 = vpop.xlane.xlu0 %3948
        %v3950 = vsel %vm517, %v3870, 0.0
        %3951 = vadd.xlane.f32.xlu0 %v3950
        %v3952 = vpop.xlane.xlu0 %3951
        %v3953 = vsel %vm517, %v3871, 0.0
        %3954 = vadd.xlane.f32.xlu0 %v3953
        %v3955 = vpop.xlane.xlu0 %3954
        %v3956 = vsel %vm517, %v3872, 0.0
        %3957 = vadd.xlane.f32.xlu0 %v3956
        %v3958 = vpop.xlane.xlu0 %3957
        %v3959 = vsel %vm517, %v3873, 0.0
        %3960 = vadd.xlane.f32.xlu0 %v3959
        %v3961 = vpop.xlane.xlu0 %3960
        %v3962 = vsel %vm517, %v3874, 0.0
        %3963 = vadd.xlane.f32.xlu0 %v3962
        %v3964 = vpop.xlane.xlu0 %3963
        %v3965 = vsel %vm517, %v3875, 0.0
        %3966 = vadd.xlane.f32.xlu0 %v3965
        %v3967 = vpop.xlane.xlu0 %3966
        %v3968 = vsel %vm517, %v3876, 0.0
        %3969 = vadd.xlane.f32.xlu0 %v3968
        %v3970 = vpop.xlane.xlu0 %3969
        %v3971 = vsel %vm517, %v3877, 0.0
        %3972 = vadd.xlane.f32.xlu0 %v3971
        %v3973 = vpop.xlane.xlu0 %3972
        %v3975 = vcombine.high %v3789, %v3789
        %v3977 = vunpack.c.l.s4 1966171168
        %v3978 = vunpack.c.0.s8 %v3977
        %v3979 = vlaneseq
        %v3980 = vshrl.u32 %v3979, 7
        %v3981 = vsub.s32 %v3978, %v3980
        %v3982 = vrot.slane %v3789, %v3981
        %v3984 = vunpack.c.l.s4 1966171168
        %v3985 = vunpack.c.0.s8 %v3984
        %v3986 = vlaneseq
        %v3987 = vshrl.u32 %v3986, 7
        %v3988 = vsub.s32 %v3985, %v3987
        %v3989 = vrot.slane %v3975, %v3988
        %v3990 = vcombine.high %v3982, %v3982
        %v3991 = vcombine.high %v3989, %v3989
        %v3993 = vunpack.c.l.s4 1966171168
        %v3994 = vunpack.c.0.s8 %v3993
        %v3995 = vlaneseq
        %v3996 = vshrl.u32 %v3995, 7
        %v3997 = vsub.s32 %v3994, %v3996
        %v3998 = vrot.slane %v3982, %v3997
        %v4000 = vunpack.c.l.s4 1966171168
        %v4001 = vunpack.c.0.s8 %v4000
        %v4002 = vlaneseq
        %v4003 = vshrl.u32 %v4002, 7
        %v4004 = vsub.s32 %v4001, %v4003
        %v4005 = vrot.slane %v3989, %v4004
        %v4007 = vunpack.c.l.s4 1966171168
        %v4008 = vunpack.c.0.s8 %v4007
        %v4009 = vlaneseq
        %v4010 = vshrl.u32 %v4009, 7
        %v4011 = vsub.s32 %v4008, %v4010
        %v4012 = vrot.slane %v3990, %v4011
        %v4014 = vunpack.c.l.s4 1966171168
        %v4015 = vunpack.c.0.s8 %v4014
        %v4016 = vlaneseq
        %v4017 = vshrl.u32 %v4016, 7
        %v4018 = vsub.s32 %v4015, %v4017
        %v4019 = vrot.slane %v3991, %v4018
        %v4020 = vcombine.high %v3998, %v3998
        %v4021 = vcombine.high %v4005, %v4005
        %v4022 = vcombine.high %v4012, %v4012
        %v4023 = vcombine.high %v4019, %v4019
        %v4024 = vlaneseq
        %v4025 = vshrl.u32 %v4024, 7
        %v4026 = vsub.s32 0, %v4025
        %v4027 = vrot.slane %v3998, %v4026
        %v4028 = vlaneseq
        %v4029 = vshrl.u32 %v4028, 7
        %v4030 = vsub.s32 0, %v4029
        %v4031 = vrot.slane %v4012, %v4030
        %v4032 = vlaneseq
        %v4033 = vshrl.u32 %v4032, 7
        %v4034 = vsub.s32 0, %v4033
        %v4035 = vrot.slane %v4020, %v4034
        %v4036 = vlaneseq
        %v4037 = vshrl.u32 %v4036, 7
        %v4038 = vsub.s32 0, %v4037
        %v4039 = vrot.slane %v4022, %v4038
        %v4040 = vlaneseq
        %v4041 = vshrl.u32 %v4040, 7
        %v4042 = vsub.s32 0, %v4041
        %v4043 = vrot.slane %v4005, %v4042
        %v4044 = vlaneseq
        %v4045 = vshrl.u32 %v4044, 7
        %v4046 = vsub.s32 0, %v4045
        %v4047 = vrot.slane %v4019, %v4046
        %v4048 = vlaneseq
        %v4049 = vshrl.u32 %v4048, 7
        %v4050 = vsub.s32 0, %v4049
        %v4051 = vrot.slane %v4021, %v4050
        %v4052 = vlaneseq
        %v4053 = vshrl.u32 %v4052, 7
        %v4054 = vsub.s32 0, %v4053
        %v4055 = vrot.slane %v4023, %v4054
        %v4064 = vmul.f32 %v360, %v4027
        %v4065 = vmul.f32 %v361, %v4027
        %v4066 = vmul.f32 %v362, %v4027
        %v4067 = vmul.f32 %v363, %v4027
        %v4068 = vmul.f32 %v364, %v4031
        %v4069 = vmul.f32 %v365, %v4031
        %v4070 = vmul.f32 %v366, %v4031
        %v4071 = vmul.f32 %v367, %v4031
        %v4072 = vmul.f32 %v368, %v4035
        %v4073 = vmul.f32 %v369, %v4035
        %v4074 = vmul.f32 %v370, %v4035
        %v4075 = vmul.f32 %v371, %v4035
        %v4076 = vmul.f32 %v372, %v4039
        %v4077 = vmul.f32 %v373, %v4039
        %v4078 = vmul.f32 %v374, %v4039
        %v4079 = vmul.f32 %v375, %v4039
        %v4080 = vmul.f32 %v376, %v4043
        %v4081 = vmul.f32 %v377, %v4043
        %v4082 = vmul.f32 %v378, %v4043
        %v4083 = vmul.f32 %v379, %v4043
        %v4084 = vmul.f32 %v380, %v4047
        %v4085 = vmul.f32 %v381, %v4047
        %v4086 = vmul.f32 %v382, %v4047
        %v4087 = vmul.f32 %v383, %v4047
        %v4088 = vmul.f32 %v384, %v4051
        %v4089 = vmul.f32 %v385, %v4051
        %v4090 = vmul.f32 %v386, %v4051
        %v4091 = vmul.f32 %v387, %v4051
        %v4092 = vmul.f32 %v388, %v4055
        %v4093 = vmul.f32 %v389, %v4055
        %v4094 = vmul.f32 %v390, %v4055
        %v4095 = vmul.f32 %v391, %v4055
        %v4096 = vsel %vm736, %v4064, 0.0
        %4097 = vadd.xlane.f32.xlu0 %v4096
        %v4098 = vpop.xlane.xlu0 %4097
        %v4099 = vsel %vm736, %v4065, 0.0
        %4100 = vadd.xlane.f32.xlu0 %v4099
        %v4101 = vpop.xlane.xlu0 %4100
        %v4102 = vsel %vm736, %v4066, 0.0
        %4103 = vadd.xlane.f32.xlu0 %v4102
        %v4104 = vpop.xlane.xlu0 %4103
        %v4105 = vsel %vm736, %v4067, 0.0
        %4106 = vadd.xlane.f32.xlu0 %v4105
        %v4107 = vpop.xlane.xlu0 %4106
        %v4108 = vsel %vm736, %v4068, 0.0
        %4109 = vadd.xlane.f32.xlu0 %v4108
        %v4110 = vpop.xlane.xlu0 %4109
        %v4111 = vsel %vm736, %v4069, 0.0
        %4112 = vadd.xlane.f32.xlu0 %v4111
        %v4113 = vpop.xlane.xlu0 %4112
        %v4114 = vsel %vm736, %v4070, 0.0
        %4115 = vadd.xlane.f32.xlu0 %v4114
        %v4116 = vpop.xlane.xlu0 %4115
        %v4117 = vsel %vm736, %v4071, 0.0
        %4118 = vadd.xlane.f32.xlu0 %v4117
        %v4119 = vpop.xlane.xlu0 %4118
        %v4120 = vsel %vm736, %v4072, 0.0
        %4121 = vadd.xlane.f32.xlu0 %v4120
        %v4122 = vpop.xlane.xlu0 %4121
        %v4123 = vsel %vm736, %v4073, 0.0
        %4124 = vadd.xlane.f32.xlu0 %v4123
        %v4125 = vpop.xlane.xlu0 %4124
        %v4126 = vsel %vm736, %v4074, 0.0
        %4127 = vadd.xlane.f32.xlu0 %v4126
        %v4128 = vpop.xlane.xlu0 %4127
        %v4129 = vsel %vm736, %v4075, 0.0
        %4130 = vadd.xlane.f32.xlu0 %v4129
        %v4131 = vpop.xlane.xlu0 %4130
        %v4132 = vsel %vm736, %v4076, 0.0
        %4133 = vadd.xlane.f32.xlu0 %v4132
        %v4134 = vpop.xlane.xlu0 %4133
        %v4135 = vsel %vm736, %v4077, 0.0
        %4136 = vadd.xlane.f32.xlu0 %v4135
        %v4137 = vpop.xlane.xlu0 %4136
        %v4138 = vsel %vm736, %v4078, 0.0
        %4139 = vadd.xlane.f32.xlu0 %v4138
        %v4140 = vpop.xlane.xlu0 %4139
        %v4141 = vsel %vm736, %v4079, 0.0
        %4142 = vadd.xlane.f32.xlu0 %v4141
        %v4143 = vpop.xlane.xlu0 %4142
        %v4144 = vsel %vm736, %v4080, 0.0
        %4145 = vadd.xlane.f32.xlu0 %v4144
        %v4146 = vpop.xlane.xlu0 %4145
        %v4147 = vsel %vm736, %v4081, 0.0
        %4148 = vadd.xlane.f32.xlu0 %v4147
        %v4149 = vpop.xlane.xlu0 %4148
        %v4150 = vsel %vm736, %v4082, 0.0
        %4151 = vadd.xlane.f32.xlu0 %v4150
        %v4152 = vpop.xlane.xlu0 %4151
        %v4153 = vsel %vm736, %v4083, 0.0
        %4154 = vadd.xlane.f32.xlu0 %v4153
        %v4155 = vpop.xlane.xlu0 %4154
        %v4156 = vsel %vm736, %v4084, 0.0
        %4157 = vadd.xlane.f32.xlu0 %v4156
        %v4158 = vpop.xlane.xlu0 %4157
        %v4159 = vsel %vm736, %v4085, 0.0
        %4160 = vadd.xlane.f32.xlu0 %v4159
        %v4161 = vpop.xlane.xlu0 %4160
        %v4162 = vsel %vm736, %v4086, 0.0
        %4163 = vadd.xlane.f32.xlu0 %v4162
        %v4164 = vpop.xlane.xlu0 %4163
        %v4165 = vsel %vm736, %v4087, 0.0
        %4166 = vadd.xlane.f32.xlu0 %v4165
        %v4167 = vpop.xlane.xlu0 %4166
        %v4168 = vsel %vm736, %v4088, 0.0
        %4169 = vadd.xlane.f32.xlu0 %v4168
        %v4170 = vpop.xlane.xlu0 %4169
        %v4171 = vsel %vm736, %v4089, 0.0
        %4172 = vadd.xlane.f32.xlu0 %v4171
        %v4173 = vpop.xlane.xlu0 %4172
        %v4174 = vsel %vm736, %v4090, 0.0
        %4175 = vadd.xlane.f32.xlu0 %v4174
        %v4176 = vpop.xlane.xlu0 %4175
        %v4177 = vsel %vm736, %v4091, 0.0
        %4178 = vadd.xlane.f32.xlu0 %v4177
        %v4179 = vpop.xlane.xlu0 %4178
        %v4180 = vsel %vm736, %v4092, 0.0
        %4181 = vadd.xlane.f32.xlu0 %v4180
        %v4182 = vpop.xlane.xlu0 %4181
        %v4183 = vsel %vm736, %v4093, 0.0
        %4184 = vadd.xlane.f32.xlu0 %v4183
        %v4185 = vpop.xlane.xlu0 %4184
        %v4186 = vsel %vm736, %v4094, 0.0
        %4187 = vadd.xlane.f32.xlu0 %v4186
        %v4188 = vpop.xlane.xlu0 %4187
        %v4189 = vsel %vm736, %v4095, 0.0
        %4190 = vadd.xlane.f32.xlu0 %v4189
        %v4191 = vpop.xlane.xlu0 %4190
        %v4192 = vadd.f32 %v3880, %v4098
        %v4193 = vadd.f32 %v3883, %v4101
        %v4194 = vadd.f32 %v3886, %v4104
        %v4195 = vadd.f32 %v3889, %v4107
        %v4196 = vadd.f32 %v3892, %v4110
        %v4197 = vadd.f32 %v3895, %v4113
        %v4198 = vadd.f32 %v3898, %v4116
        %v4199 = vadd.f32 %v3901, %v4119
        %v4200 = vadd.f32 %v3904, %v4122
        %v4201 = vadd.f32 %v3907, %v4125
        %v4202 = vadd.f32 %v3910, %v4128
        %v4203 = vadd.f32 %v3913, %v4131
        %v4204 = vadd.f32 %v3916, %v4134
        %v4205 = vadd.f32 %v3919, %v4137
        %v4206 = vadd.f32 %v3922, %v4140
        %v4207 = vadd.f32 %v3925, %v4143
        %v4208 = vadd.f32 %v3928, %v4146
        %v4209 = vadd.f32 %v3931, %v4149
        %v4210 = vadd.f32 %v3934, %v4152
        %v4211 = vadd.f32 %v3937, %v4155
        %v4212 = vadd.f32 %v3940, %v4158
        %v4213 = vadd.f32 %v3943, %v4161
        %v4214 = vadd.f32 %v3946, %v4164
        %v4215 = vadd.f32 %v3949, %v4167
        %v4216 = vadd.f32 %v3952, %v4170
        %v4217 = vadd.f32 %v3955, %v4173
        %v4218 = vadd.f32 %v3958, %v4176
        %v4219 = vadd.f32 %v3961, %v4179
        %v4220 = vadd.f32 %v3964, %v4182
        %v4221 = vadd.f32 %v3967, %v4185
        %v4222 = vadd.f32 %v3970, %v4188
        %v4223 = vadd.f32 %v3973, %v4191
        %v4224 = vadd.f32 %v4192, %v872
        %v4225 = vadd.f32 %v4193, %v876
        %v4226 = vadd.f32 %v4194, %v880
        %v4227 = vadd.f32 %v4195, %v884
        %v4228 = vadd.f32 %v4196, %v891
        %v4229 = vadd.f32 %v4197, %v895
        %v4230 = vadd.f32 %v4198, %v899
        %v4231 = vadd.f32 %v4199, %v903
        %v4232 = vadd.f32 %v4200, %v910
        %v4233 = vadd.f32 %v4201, %v914
        %v4234 = vadd.f32 %v4202, %v918
        %v4235 = vadd.f32 %v4203, %v922
        %v4236 = vadd.f32 %v4204, %v929
        %v4237 = vadd.f32 %v4205, %v933
        %v4238 = vadd.f32 %v4206, %v937
        %v4239 = vadd.f32 %v4207, %v941
        %v4240 = vadd.f32 %v4208, %v948
        %v4241 = vadd.f32 %v4209, %v952
        %v4242 = vadd.f32 %v4210, %v956
        %v4243 = vadd.f32 %v4211, %v960
        %v4244 = vadd.f32 %v4212, %v967
        %v4245 = vadd.f32 %v4213, %v971
        %v4246 = vadd.f32 %v4214, %v975
        %v4247 = vadd.f32 %v4215, %v979
        %v4248 = vadd.f32 %v4216, %v986
        %v4249 = vadd.f32 %v4217, %v990
        %v4250 = vadd.f32 %v4218, %v994
        %v4251 = vadd.f32 %v4219, %v998
        %v4252 = vadd.f32 %v4220, %v1005
        %v4253 = vadd.f32 %v4221, %v1009
        %v4254 = vadd.f32 %v4222, %v1013
        %v4255 = vadd.f32 %v4223, %v1017
        %v4256 = vtanh.pop %v4224
        %v4257 = vtanh.pop %v4225
        %v4258 = vtanh.pop %v4226
        %v4259 = vtanh.pop %v4227
        %v4260 = vtanh.pop %v4228
        %v4261 = vtanh.pop %v4229
        %v4262 = vtanh.pop %v4230
        %v4263 = vtanh.pop %v4231
        %v4264 = vtanh.pop %v4232
        %v4265 = vtanh.pop %v4233
        %v4266 = vtanh.pop %v4234
        %v4267 = vtanh.pop %v4235
        %v4268 = vtanh.pop %v4236
        %v4269 = vtanh.pop %v4237
        %v4270 = vtanh.pop %v4238
        %v4271 = vtanh.pop %v4239
        %v4272 = vtanh.pop %v4240
        %v4273 = vtanh.pop %v4241
        %v4274 = vtanh.pop %v4242
        %v4275 = vtanh.pop %v4243
        %v4276 = vtanh.pop %v4244
        %v4277 = vtanh.pop %v4245
        %v4278 = vtanh.pop %v4246
        %v4279 = vtanh.pop %v4247
        %v4280 = vtanh.pop %v4248
        %v4281 = vtanh.pop %v4249
        %v4282 = vtanh.pop %v4250
        %v4283 = vtanh.pop %v4251
        %v4284 = vtanh.pop %v4252
        %v4285 = vtanh.pop %v4253
        %v4286 = vtanh.pop %v4254
        %v4287 = vtanh.pop %v4255
        %4320 = vset.pattern.permute.xlu0 0
        %4321 = vperm.xlu0 %4320, %v4256
        %v4322 = vpop.permute.xlu0 %4321
        %4323 = vset.pattern.permute.xlu0 0
        %4324 = vperm.xlu0 %4323, %v4257
        %v4325 = vpop.permute.xlu0 %4324
        %4326 = vset.pattern.permute.xlu0 0
        %4327 = vperm.xlu0 %4326, %v4258
        %v4328 = vpop.permute.xlu0 %4327
        %4329 = vset.pattern.permute.xlu0 0
        %4330 = vperm.xlu0 %4329, %v4259
        %v4331 = vpop.permute.xlu0 %4330
        %4332 = vset.pattern.permute.xlu0 0
        %4333 = vperm.xlu0 %4332, %v4260
        %v4334 = vpop.permute.xlu0 %4333
        %4335 = vset.pattern.permute.xlu0 0
        %4336 = vperm.xlu0 %4335, %v4261
        %v4337 = vpop.permute.xlu0 %4336
        %4338 = vset.pattern.permute.xlu0 0
        %4339 = vperm.xlu0 %4338, %v4262
        %v4340 = vpop.permute.xlu0 %4339
        %4341 = vset.pattern.permute.xlu0 0
        %4342 = vperm.xlu0 %4341, %v4263
        %v4343 = vpop.permute.xlu0 %4342
        %4344 = vset.pattern.permute.xlu0 0
        %4345 = vperm.xlu0 %4344, %v4264
        %v4346 = vpop.permute.xlu0 %4345
        %4347 = vset.pattern.permute.xlu0 0
        %4348 = vperm.xlu0 %4347, %v4265
        %v4349 = vpop.permute.xlu0 %4348
        %4350 = vset.pattern.permute.xlu0 0
        %4351 = vperm.xlu0 %4350, %v4266
        %v4352 = vpop.permute.xlu0 %4351
        %4353 = vset.pattern.permute.xlu0 0
        %4354 = vperm.xlu0 %4353, %v4267
        %v4355 = vpop.permute.xlu0 %4354
        %4356 = vset.pattern.permute.xlu0 0
        %4357 = vperm.xlu0 %4356, %v4268
        %v4358 = vpop.permute.xlu0 %4357
        %4359 = vset.pattern.permute.xlu0 0
        %4360 = vperm.xlu0 %4359, %v4269
        %v4361 = vpop.permute.xlu0 %4360
        %4362 = vset.pattern.permute.xlu0 0
        %4363 = vperm.xlu0 %4362, %v4270
        %v4364 = vpop.permute.xlu0 %4363
        %4365 = vset.pattern.permute.xlu0 0
        %4366 = vperm.xlu0 %4365, %v4271
        %v4367 = vpop.permute.xlu0 %4366
        %4368 = vset.pattern.permute.xlu0 0
        %4369 = vperm.xlu0 %4368, %v4272
        %v4370 = vpop.permute.xlu0 %4369
        %4371 = vset.pattern.permute.xlu0 0
        %4372 = vperm.xlu0 %4371, %v4273
        %v4373 = vpop.permute.xlu0 %4372
        %4374 = vset.pattern.permute.xlu0 0
        %4375 = vperm.xlu0 %4374, %v4274
        %v4376 = vpop.permute.xlu0 %4375
        %4377 = vset.pattern.permute.xlu0 0
        %4378 = vperm.xlu0 %4377, %v4275
        %v4379 = vpop.permute.xlu0 %4378
        %4380 = vset.pattern.permute.xlu0 0
        %4381 = vperm.xlu0 %4380, %v4276
        %v4382 = vpop.permute.xlu0 %4381
        %4383 = vset.pattern.permute.xlu0 0
        %4384 = vperm.xlu0 %4383, %v4277
        %v4385 = vpop.permute.xlu0 %4384
        %4386 = vset.pattern.permute.xlu0 0
        %4387 = vperm.xlu0 %4386, %v4278
        %v4388 = vpop.permute.xlu0 %4387
        %4389 = vset.pattern.permute.xlu0 0
        %4390 = vperm.xlu0 %4389, %v4279
        %v4391 = vpop.permute.xlu0 %4390
        %4392 = vset.pattern.permute.xlu0 0
        %4393 = vperm.xlu0 %4392, %v4280
        %v4394 = vpop.permute.xlu0 %4393
        %4395 = vset.pattern.permute.xlu0 0
        %4396 = vperm.xlu0 %4395, %v4281
        %v4397 = vpop.permute.xlu0 %4396
        %4398 = vset.pattern.permute.xlu0 0
        %4399 = vperm.xlu0 %4398, %v4282
        %v4400 = vpop.permute.xlu0 %4399
        %4401 = vset.pattern.permute.xlu0 0
        %4402 = vperm.xlu0 %4401, %v4283
        %v4403 = vpop.permute.xlu0 %4402
        %4404 = vset.pattern.permute.xlu0 0
        %4405 = vperm.xlu0 %4404, %v4284
        %v4406 = vpop.permute.xlu0 %4405
        %4407 = vset.pattern.permute.xlu0 0
        %4408 = vperm.xlu0 %4407, %v4285
        %v4409 = vpop.permute.xlu0 %4408
        %4410 = vset.pattern.permute.xlu0 0
        %4411 = vperm.xlu0 %4410, %v4286
        %v4412 = vpop.permute.xlu0 %4411
        %4413 = vset.pattern.permute.xlu0 0
        %4414 = vperm.xlu0 %4413, %v4287
        %v4415 = vpop.permute.xlu0 %4414
        %v4416 = vlaneseq
        %v4417 = vshrl.u32 %v4416, 7
        %v4418 = vsub.s32 %v1243, %v4417
        %v4419 = vrot.slane %v4322, %v4418
        %v4420 = vlaneseq
        %v4421 = vshrl.u32 %v4420, 7
        %v4422 = vsub.s32 %v1248, %v4421
        %v4423 = vrot.slane %v4325, %v4422
        %v4424 = vsel %vm1253, %v4423, %v4419
        %v4425 = vlaneseq
        %v4426 = vshrl.u32 %v4425, 7
        %v4427 = vsub.s32 %v1255, %v4426
        %v4428 = vrot.slane %v4328, %v4427
        %v4429 = vsel %vm1260, %v4428, %v4424
        %v4430 = vlaneseq
        %v4431 = vshrl.u32 %v4430, 7
        %v4432 = vsub.s32 %v1262, %v4431
        %v4433 = vrot.slane %v4331, %v4432
        %v4434 = vsel %vm1267, %v4433, %v4429
        %v4435 = vlaneseq
        %v4436 = vshrl.u32 %v4435, 7
        %v4437 = vsub.s32 %v1243, %v4436
        %v4438 = vrot.slane %v4334, %v4437
        %v4439 = vlaneseq
        %v4440 = vshrl.u32 %v4439, 7
        %v4441 = vsub.s32 %v1248, %v4440
        %v4442 = vrot.slane %v4337, %v4441
        %v4443 = vsel %vm1253, %v4442, %v4438
        %v4444 = vlaneseq
        %v4445 = vshrl.u32 %v4444, 7
        %v4446 = vsub.s32 %v1255, %v4445
        %v4447 = vrot.slane %v4340, %v4446
        %v4448 = vsel %vm1260, %v4447, %v4443
        %v4449 = vlaneseq
        %v4450 = vshrl.u32 %v4449, 7
        %v4451 = vsub.s32 %v1262, %v4450
        %v4452 = vrot.slane %v4343, %v4451
        %v4453 = vsel %vm1267, %v4452, %v4448
        %v4454 = vlaneseq
        %v4455 = vshrl.u32 %v4454, 7
        %v4456 = vsub.s32 %v1243, %v4455
        %v4457 = vrot.slane %v4346, %v4456
        %v4458 = vlaneseq
        %v4459 = vshrl.u32 %v4458, 7
        %v4460 = vsub.s32 %v1248, %v4459
        %v4461 = vrot.slane %v4349, %v4460
        %v4462 = vsel %vm1253, %v4461, %v4457
        %v4463 = vlaneseq
        %v4464 = vshrl.u32 %v4463, 7
        %v4465 = vsub.s32 %v1255, %v4464
        %v4466 = vrot.slane %v4352, %v4465
        %v4467 = vsel %vm1260, %v4466, %v4462
        %v4468 = vlaneseq
        %v4469 = vshrl.u32 %v4468, 7
        %v4470 = vsub.s32 %v1262, %v4469
        %v4471 = vrot.slane %v4355, %v4470
        %v4472 = vsel %vm1267, %v4471, %v4467
        %v4473 = vlaneseq
        %v4474 = vshrl.u32 %v4473, 7
        %v4475 = vsub.s32 %v1243, %v4474
        %v4476 = vrot.slane %v4358, %v4475
        %v4477 = vlaneseq
        %v4478 = vshrl.u32 %v4477, 7
        %v4479 = vsub.s32 %v1248, %v4478
        %v4480 = vrot.slane %v4361, %v4479
        %v4481 = vsel %vm1253, %v4480, %v4476
        %v4482 = vlaneseq
        %v4483 = vshrl.u32 %v4482, 7
        %v4484 = vsub.s32 %v1255, %v4483
        %v4485 = vrot.slane %v4364, %v4484
        %v4486 = vsel %vm1260, %v4485, %v4481
        %v4487 = vlaneseq
        %v4488 = vshrl.u32 %v4487, 7
        %v4489 = vsub.s32 %v1262, %v4488
        %v4490 = vrot.slane %v4367, %v4489
        %v4491 = vsel %vm1267, %v4490, %v4486
        %v4492 = vlaneseq
        %v4493 = vshrl.u32 %v4492, 7
        %v4494 = vsub.s32 %v1243, %v4493
        %v4495 = vrot.slane %v4370, %v4494
        %v4496 = vlaneseq
        %v4497 = vshrl.u32 %v4496, 7
        %v4498 = vsub.s32 %v1248, %v4497
        %v4499 = vrot.slane %v4373, %v4498
        %v4500 = vsel %vm1253, %v4499, %v4495
        %v4501 = vlaneseq
        %v4502 = vshrl.u32 %v4501, 7
        %v4503 = vsub.s32 %v1255, %v4502
        %v4504 = vrot.slane %v4376, %v4503
        %v4505 = vsel %vm1260, %v4504, %v4500
        %v4506 = vlaneseq
        %v4507 = vshrl.u32 %v4506, 7
        %v4508 = vsub.s32 %v1262, %v4507
        %v4509 = vrot.slane %v4379, %v4508
        %v4510 = vsel %vm1267, %v4509, %v4505
        %v4511 = vlaneseq
        %v4512 = vshrl.u32 %v4511, 7
        %v4513 = vsub.s32 %v1243, %v4512
        %v4514 = vrot.slane %v4382, %v4513
        %v4515 = vlaneseq
        %v4516 = vshrl.u32 %v4515, 7
        %v4517 = vsub.s32 %v1248, %v4516
        %v4518 = vrot.slane %v4385, %v4517
        %v4519 = vsel %vm1253, %v4518, %v4514
        %v4520 = vlaneseq
        %v4521 = vshrl.u32 %v4520, 7
        %v4522 = vsub.s32 %v1255, %v4521
        %v4523 = vrot.slane %v4388, %v4522
        %v4524 = vsel %vm1260, %v4523, %v4519
        %v4525 = vlaneseq
        %v4526 = vshrl.u32 %v4525, 7
        %v4527 = vsub.s32 %v1262, %v4526
        %v4528 = vrot.slane %v4391, %v4527
        %v4529 = vsel %vm1267, %v4528, %v4524
        %v4530 = vlaneseq
        %v4531 = vshrl.u32 %v4530, 7
        %v4532 = vsub.s32 %v1243, %v4531
        %v4533 = vrot.slane %v4394, %v4532
        %v4534 = vlaneseq
        %v4535 = vshrl.u32 %v4534, 7
        %v4536 = vsub.s32 %v1248, %v4535
        %v4537 = vrot.slane %v4397, %v4536
        %v4538 = vsel %vm1253, %v4537, %v4533
        %v4539 = vlaneseq
        %v4540 = vshrl.u32 %v4539, 7
        %v4541 = vsub.s32 %v1255, %v4540
        %v4542 = vrot.slane %v4400, %v4541
        %v4543 = vsel %vm1260, %v4542, %v4538
        %v4544 = vlaneseq
        %v4545 = vshrl.u32 %v4544, 7
        %v4546 = vsub.s32 %v1262, %v4545
        %v4547 = vrot.slane %v4403, %v4546
        %v4548 = vsel %vm1267, %v4547, %v4543
        %v4549 = vlaneseq
        %v4550 = vshrl.u32 %v4549, 7
        %v4551 = vsub.s32 %v1243, %v4550
        %v4552 = vrot.slane %v4406, %v4551
        %v4553 = vlaneseq
        %v4554 = vshrl.u32 %v4553, 7
        %v4555 = vsub.s32 %v1248, %v4554
        %v4556 = vrot.slane %v4409, %v4555
        %v4557 = vsel %vm1253, %v4556, %v4552
        %v4558 = vlaneseq
        %v4559 = vshrl.u32 %v4558, 7
        %v4560 = vsub.s32 %v1255, %v4559
        %v4561 = vrot.slane %v4412, %v4560
        %v4562 = vsel %vm1260, %v4561, %v4557
        %v4563 = vlaneseq
        %v4564 = vshrl.u32 %v4563, 7
        %v4565 = vsub.s32 %v1262, %v4564
        %v4566 = vrot.slane %v4415, %v4565
        %v4567 = vsel %vm1267, %v4566, %v4562
        %v4568 = vsel %vm1402, %v4453, %v4434
        %v4569 = vsel %vm1404, %v4472, %v4568
        %v4570 = vsel %vm1406, %v4491, %v4569
        %v4571 = vsel %vm1408, %v4510, %v4570
        %v4572 = vsel %vm1410, %v4529, %v4571
        %v4573 = vsel %vm1412, %v4548, %v4572
        %v4574 = vsel %vm1414, %v4567, %v4573
        %s4576 = scalar_lea.vmem [#allocation2], 32
        %4577 = vst.msk [vmem:[%s4576] sm:$0xff] %vm517, %v4574
        %s4578 = scalar_lea.vmem %s316, 40
        %v4579 = vld [vmem:[%s4578] sm:$0xff]
        %v4580 = vsel %vm1404, %v4434, %v4434
        %v4581 = vsel %vm1406, %v4434, %v4580
        %v4582 = vsel %vm1408, %v4434, %v4581
        %v4583 = vsel %vm1410, %v4434, %v4582
        %v4584 = vsel %vm1412, %v4434, %v4583
        %v4585 = vsel %vm1414, %v4434, %v4584
        %v4586 = vsel %vm1404, %v4453, %v4453
        %v4587 = vsel %vm1406, %v4453, %v4586
        %v4588 = vsel %vm1408, %v4453, %v4587
        %v4589 = vsel %vm1410, %v4453, %v4588
        %v4590 = vsel %vm1412, %v4453, %v4589
        %v4591 = vsel %vm1414, %v4453, %v4590
        %v4592 = vsel %vm1404, %v4472, %v4472
        %v4593 = vsel %vm1406, %v4472, %v4592
        %v4594 = vsel %vm1408, %v4472, %v4593
        %v4595 = vsel %vm1410, %v4472, %v4594
        %v4596 = vsel %vm1412, %v4472, %v4595
        %v4597 = vsel %vm1414, %v4472, %v4596
        %v4598 = vsel %vm1404, %v4491, %v4491
        %v4599 = vsel %vm1406, %v4491, %v4598
        %v4600 = vsel %vm1408, %v4491, %v4599
        %v4601 = vsel %vm1410, %v4491, %v4600
        %v4602 = vsel %vm1412, %v4491, %v4601
        %v4603 = vsel %vm1414, %v4491, %v4602
        %v4604 = vsel %vm1404, %v4510, %v4510
        %v4605 = vsel %vm1406, %v4510, %v4604
        %v4606 = vsel %vm1408, %v4510, %v4605
        %v4607 = vsel %vm1410, %v4510, %v4606
        %v4608 = vsel %vm1412, %v4510, %v4607
        %v4609 = vsel %vm1414, %v4510, %v4608
        %v4610 = vsel %vm1404, %v4529, %v4529
        %v4611 = vsel %vm1406, %v4529, %v4610
        %v4612 = vsel %vm1408, %v4529, %v4611
        %v4613 = vsel %vm1410, %v4529, %v4612
        %v4614 = vsel %vm1412, %v4529, %v4613
        %v4615 = vsel %vm1414, %v4529, %v4614
        %v4616 = vsel %vm1404, %v4548, %v4548
        %v4617 = vsel %vm1406, %v4548, %v4616
        %v4618 = vsel %vm1408, %v4548, %v4617
        %v4619 = vsel %vm1410, %v4548, %v4618
        %v4620 = vsel %vm1412, %v4548, %v4619
        %v4621 = vsel %vm1414, %v4548, %v4620
        %v4622 = vsel %vm1404, %v4567, %v4567
        %v4623 = vsel %vm1406, %v4567, %v4622
        %v4624 = vsel %vm1408, %v4567, %v4623
        %v4625 = vsel %vm1410, %v4567, %v4624
        %v4626 = vsel %vm1412, %v4567, %v4625
        %v4627 = vsel %vm1414, %v4567, %v4626
        %v4636 = vmul.f32 %v328, %v4585
        %v4637 = vmul.f32 %v329, %v4585
        %v4638 = vmul.f32 %v330, %v4585
        %v4639 = vmul.f32 %v331, %v4585
        %v4640 = vmul.f32 %v332, %v4591
        %v4641 = vmul.f32 %v333, %v4591
        %v4642 = vmul.f32 %v334, %v4591
        %v4643 = vmul.f32 %v335, %v4591
        %v4644 = vmul.f32 %v336, %v4597
        %v4645 = vmul.f32 %v337, %v4597
        %v4646 = vmul.f32 %v338, %v4597
        %v4647 = vmul.f32 %v339, %v4597
        %v4648 = vmul.f32 %v340, %v4603
        %v4649 = vmul.f32 %v341, %v4603
        %v4650 = vmul.f32 %v342, %v4603
        %v4651 = vmul.f32 %v343, %v4603
        %v4652 = vmul.f32 %v344, %v4609
        %v4653 = vmul.f32 %v345, %v4609
        %v4654 = vmul.f32 %v346, %v4609
        %v4655 = vmul.f32 %v347, %v4609
        %v4656 = vmul.f32 %v348, %v4615
        %v4657 = vmul.f32 %v349, %v4615
        %v4658 = vmul.f32 %v350, %v4615
        %v4659 = vmul.f32 %v351, %v4615
        %v4660 = vmul.f32 %v352, %v4621
        %v4661 = vmul.f32 %v353, %v4621
        %v4662 = vmul.f32 %v354, %v4621
        %v4663 = vmul.f32 %v355, %v4621
        %v4664 = vmul.f32 %v356, %v4627
        %v4665 = vmul.f32 %v357, %v4627
        %v4666 = vmul.f32 %v358, %v4627
        %v4667 = vmul.f32 %v359, %v4627
        %v4668 = vsel %vm517, %v4636, 0.0
        %4669 = vadd.xlane.f32.xlu0 %v4668
        %v4670 = vpop.xlane.xlu0 %4669
        %v4671 = vsel %vm517, %v4637, 0.0
        %4672 = vadd.xlane.f32.xlu0 %v4671
        %v4673 = vpop.xlane.xlu0 %4672
        %v4674 = vsel %vm517, %v4638, 0.0
        %4675 = vadd.xlane.f32.xlu0 %v4674
        %v4676 = vpop.xlane.xlu0 %4675
        %v4677 = vsel %vm517, %v4639, 0.0
        %4678 = vadd.xlane.f32.xlu0 %v4677
        %v4679 = vpop.xlane.xlu0 %4678
        %v4680 = vsel %vm517, %v4640, 0.0
        %4681 = vadd.xlane.f32.xlu0 %v4680
        %v4682 = vpop.xlane.xlu0 %4681
        %v4683 = vsel %vm517, %v4641, 0.0
        %4684 = vadd.xlane.f32.xlu0 %v4683
        %v4685 = vpop.xlane.xlu0 %4684
        %v4686 = vsel %vm517, %v4642, 0.0
        %4687 = vadd.xlane.f32.xlu0 %v4686
        %v4688 = vpop.xlane.xlu0 %4687
        %v4689 = vsel %vm517, %v4643, 0.0
        %4690 = vadd.xlane.f32.xlu0 %v4689
        %v4691 = vpop.xlane.xlu0 %4690
        %v4692 = vsel %vm517, %v4644, 0.0
        %4693 = vadd.xlane.f32.xlu0 %v4692
        %v4694 = vpop.xlane.xlu0 %4693
        %v4695 = vsel %vm517, %v4645, 0.0
        %4696 = vadd.xlane.f32.xlu0 %v4695
        %v4697 = vpop.xlane.xlu0 %4696
        %v4698 = vsel %vm517, %v4646, 0.0
        %4699 = vadd.xlane.f32.xlu0 %v4698
        %v4700 = vpop.xlane.xlu0 %4699
        %v4701 = vsel %vm517, %v4647, 0.0
        %4702 = vadd.xlane.f32.xlu0 %v4701
        %v4703 = vpop.xlane.xlu0 %4702
        %v4704 = vsel %vm517, %v4648, 0.0
        %4705 = vadd.xlane.f32.xlu0 %v4704
        %v4706 = vpop.xlane.xlu0 %4705
        %v4707 = vsel %vm517, %v4649, 0.0
        %4708 = vadd.xlane.f32.xlu0 %v4707
        %v4709 = vpop.xlane.xlu0 %4708
        %v4710 = vsel %vm517, %v4650, 0.0
        %4711 = vadd.xlane.f32.xlu0 %v4710
        %v4712 = vpop.xlane.xlu0 %4711
        %v4713 = vsel %vm517, %v4651, 0.0
        %4714 = vadd.xlane.f32.xlu0 %v4713
        %v4715 = vpop.xlane.xlu0 %4714
        %v4716 = vsel %vm517, %v4652, 0.0
        %4717 = vadd.xlane.f32.xlu0 %v4716
        %v4718 = vpop.xlane.xlu0 %4717
        %v4719 = vsel %vm517, %v4653, 0.0
        %4720 = vadd.xlane.f32.xlu0 %v4719
        %v4721 = vpop.xlane.xlu0 %4720
        %v4722 = vsel %vm517, %v4654, 0.0
        %4723 = vadd.xlane.f32.xlu0 %v4722
        %v4724 = vpop.xlane.xlu0 %4723
        %v4725 = vsel %vm517, %v4655, 0.0
        %4726 = vadd.xlane.f32.xlu0 %v4725
        %v4727 = vpop.xlane.xlu0 %4726
        %v4728 = vsel %vm517, %v4656, 0.0
        %4729 = vadd.xlane.f32.xlu0 %v4728
        %v4730 = vpop.xlane.xlu0 %4729
        %v4731 = vsel %vm517, %v4657, 0.0
        %4732 = vadd.xlane.f32.xlu0 %v4731
        %v4733 = vpop.xlane.xlu0 %4732
        %v4734 = vsel %vm517, %v4658, 0.0
        %4735 = vadd.xlane.f32.xlu0 %v4734
        %v4736 = vpop.xlane.xlu0 %4735
        %v4737 = vsel %vm517, %v4659, 0.0
        %4738 = vadd.xlane.f32.xlu0 %v4737
        %v4739 = vpop.xlane.xlu0 %4738
        %v4740 = vsel %vm517, %v4660, 0.0
        %4741 = vadd.xlane.f32.xlu0 %v4740
        %v4742 = vpop.xlane.xlu0 %4741
        %v4743 = vsel %vm517, %v4661, 0.0
        %4744 = vadd.xlane.f32.xlu0 %v4743
        %v4745 = vpop.xlane.xlu0 %4744
        %v4746 = vsel %vm517, %v4662, 0.0
        %4747 = vadd.xlane.f32.xlu0 %v4746
        %v4748 = vpop.xlane.xlu0 %4747
        %v4749 = vsel %vm517, %v4663, 0.0
        %4750 = vadd.xlane.f32.xlu0 %v4749
        %v4751 = vpop.xlane.xlu0 %4750
        %v4752 = vsel %vm517, %v4664, 0.0
        %4753 = vadd.xlane.f32.xlu0 %v4752
        %v4754 = vpop.xlane.xlu0 %4753
        %v4755 = vsel %vm517, %v4665, 0.0
        %4756 = vadd.xlane.f32.xlu0 %v4755
        %v4757 = vpop.xlane.xlu0 %4756
        %v4758 = vsel %vm517, %v4666, 0.0
        %4759 = vadd.xlane.f32.xlu0 %v4758
        %v4760 = vpop.xlane.xlu0 %4759
        %v4761 = vsel %vm517, %v4667, 0.0
        %4762 = vadd.xlane.f32.xlu0 %v4761
        %v4763 = vpop.xlane.xlu0 %4762
        %v4765 = vcombine.high %v4579, %v4579
        %v4767 = vunpack.c.l.s4 1966171168
        %v4768 = vunpack.c.0.s8 %v4767
        %v4769 = vlaneseq
        %v4770 = vshrl.u32 %v4769, 7
        %v4771 = vsub.s32 %v4768, %v4770
        %v4772 = vrot.slane %v4579, %v4771
        %v4774 = vunpack.c.l.s4 1966171168
        %v4775 = vunpack.c.0.s8 %v4774
        %v4776 = vlaneseq
        %v4777 = vshrl.u32 %v4776, 7
        %v4778 = vsub.s32 %v4775, %v4777
        %v4779 = vrot.slane %v4765, %v4778
        %v4780 = vcombine.high %v4772, %v4772
        %v4781 = vcombine.high %v4779, %v4779
        %v4783 = vunpack.c.l.s4 1966171168
        %v4784 = vunpack.c.0.s8 %v4783
        %v4785 = vlaneseq
        %v4786 = vshrl.u32 %v4785, 7
        %v4787 = vsub.s32 %v4784, %v4786
        %v4788 = vrot.slane %v4772, %v4787
        %v4790 = vunpack.c.l.s4 1966171168
        %v4791 = vunpack.c.0.s8 %v4790
        %v4792 = vlaneseq
        %v4793 = vshrl.u32 %v4792, 7
        %v4794 = vsub.s32 %v4791, %v4793
        %v4795 = vrot.slane %v4779, %v4794
        %v4797 = vunpack.c.l.s4 1966171168
        %v4798 = vunpack.c.0.s8 %v4797
        %v4799 = vlaneseq
        %v4800 = vshrl.u32 %v4799, 7
        %v4801 = vsub.s32 %v4798, %v4800
        %v4802 = vrot.slane %v4780, %v4801
        %v4804 = vunpack.c.l.s4 1966171168
        %v4805 = vunpack.c.0.s8 %v4804
        %v4806 = vlaneseq
        %v4807 = vshrl.u32 %v4806, 7
        %v4808 = vsub.s32 %v4805, %v4807
        %v4809 = vrot.slane %v4781, %v4808
        %v4810 = vcombine.high %v4788, %v4788
        %v4811 = vcombine.high %v4795, %v4795
        %v4812 = vcombine.high %v4802, %v4802
        %v4813 = vcombine.high %v4809, %v4809
        %v4814 = vlaneseq
        %v4815 = vshrl.u32 %v4814, 7
        %v4816 = vsub.s32 0, %v4815
        %v4817 = vrot.slane %v4788, %v4816
        %v4818 = vlaneseq
        %v4819 = vshrl.u32 %v4818, 7
        %v4820 = vsub.s32 0, %v4819
        %v4821 = vrot.slane %v4802, %v4820
        %v4822 = vlaneseq
        %v4823 = vshrl.u32 %v4822, 7
        %v4824 = vsub.s32 0, %v4823
        %v4825 = vrot.slane %v4810, %v4824
        %v4826 = vlaneseq
        %v4827 = vshrl.u32 %v4826, 7
        %v4828 = vsub.s32 0, %v4827
        %v4829 = vrot.slane %v4812, %v4828
        %v4830 = vlaneseq
        %v4831 = vshrl.u32 %v4830, 7
        %v4832 = vsub.s32 0, %v4831
        %v4833 = vrot.slane %v4795, %v4832
        %v4834 = vlaneseq
        %v4835 = vshrl.u32 %v4834, 7
        %v4836 = vsub.s32 0, %v4835
        %v4837 = vrot.slane %v4809, %v4836
        %v4838 = vlaneseq
        %v4839 = vshrl.u32 %v4838, 7
        %v4840 = vsub.s32 0, %v4839
        %v4841 = vrot.slane %v4811, %v4840
        %v4842 = vlaneseq
        %v4843 = vshrl.u32 %v4842, 7
        %v4844 = vsub.s32 0, %v4843
        %v4845 = vrot.slane %v4813, %v4844
        %v4854 = vmul.f32 %v360, %v4817
        %v4855 = vmul.f32 %v361, %v4817
        %v4856 = vmul.f32 %v362, %v4817
        %v4857 = vmul.f32 %v363, %v4817
        %v4858 = vmul.f32 %v364, %v4821
        %v4859 = vmul.f32 %v365, %v4821
        %v4860 = vmul.f32 %v366, %v4821
        %v4861 = vmul.f32 %v367, %v4821
        %v4862 = vmul.f32 %v368, %v4825
        %v4863 = vmul.f32 %v369, %v4825
        %v4864 = vmul.f32 %v370, %v4825
        %v4865 = vmul.f32 %v371, %v4825
        %v4866 = vmul.f32 %v372, %v4829
        %v4867 = vmul.f32 %v373, %v4829
        %v4868 = vmul.f32 %v374, %v4829
        %v4869 = vmul.f32 %v375, %v4829
        %v4870 = vmul.f32 %v376, %v4833
        %v4871 = vmul.f32 %v377, %v4833
        %v4872 = vmul.f32 %v378, %v4833
        %v4873 = vmul.f32 %v379, %v4833
        %v4874 = vmul.f32 %v380, %v4837
        %v4875 = vmul.f32 %v381, %v4837
        %v4876 = vmul.f32 %v382, %v4837
        %v4877 = vmul.f32 %v383, %v4837
        %v4878 = vmul.f32 %v384, %v4841
        %v4879 = vmul.f32 %v385, %v4841
        %v4880 = vmul.f32 %v386, %v4841
        %v4881 = vmul.f32 %v387, %v4841
        %v4882 = vmul.f32 %v388, %v4845
        %v4883 = vmul.f32 %v389, %v4845
        %v4884 = vmul.f32 %v390, %v4845
        %v4885 = vmul.f32 %v391, %v4845
        %v4886 = vsel %vm736, %v4854, 0.0
        %4887 = vadd.xlane.f32.xlu0 %v4886
        %v4888 = vpop.xlane.xlu0 %4887
        %v4889 = vsel %vm736, %v4855, 0.0
        %4890 = vadd.xlane.f32.xlu0 %v4889
        %v4891 = vpop.xlane.xlu0 %4890
        %v4892 = vsel %vm736, %v4856, 0.0
        %4893 = vadd.xlane.f32.xlu0 %v4892
        %v4894 = vpop.xlane.xlu0 %4893
        %v4895 = vsel %vm736, %v4857, 0.0
        %4896 = vadd.xlane.f32.xlu0 %v4895
        %v4897 = vpop.xlane.xlu0 %4896
        %v4898 = vsel %vm736, %v4858, 0.0
        %4899 = vadd.xlane.f32.xlu0 %v4898
        %v4900 = vpop.xlane.xlu0 %4899
        %v4901 = vsel %vm736, %v4859, 0.0
        %4902 = vadd.xlane.f32.xlu0 %v4901
        %v4903 = vpop.xlane.xlu0 %4902
        %v4904 = vsel %vm736, %v4860, 0.0
        %4905 = vadd.xlane.f32.xlu0 %v4904
        %v4906 = vpop.xlane.xlu0 %4905
        %v4907 = vsel %vm736, %v4861, 0.0
        %4908 = vadd.xlane.f32.xlu0 %v4907
        %v4909 = vpop.xlane.xlu0 %4908
        %v4910 = vsel %vm736, %v4862, 0.0
        %4911 = vadd.xlane.f32.xlu0 %v4910
        %v4912 = vpop.xlane.xlu0 %4911
        %v4913 = vsel %vm736, %v4863, 0.0
        %4914 = vadd.xlane.f32.xlu0 %v4913
        %v4915 = vpop.xlane.xlu0 %4914
        %v4916 = vsel %vm736, %v4864, 0.0
        %4917 = vadd.xlane.f32.xlu0 %v4916
        %v4918 = vpop.xlane.xlu0 %4917
        %v4919 = vsel %vm736, %v4865, 0.0
        %4920 = vadd.xlane.f32.xlu0 %v4919
        %v4921 = vpop.xlane.xlu0 %4920
        %v4922 = vsel %vm736, %v4866, 0.0
        %4923 = vadd.xlane.f32.xlu0 %v4922
        %v4924 = vpop.xlane.xlu0 %4923
        %v4925 = vsel %vm736, %v4867, 0.0
        %4926 = vadd.xlane.f32.xlu0 %v4925
        %v4927 = vpop.xlane.xlu0 %4926
        %v4928 = vsel %vm736, %v4868, 0.0
        %4929 = vadd.xlane.f32.xlu0 %v4928
        %v4930 = vpop.xlane.xlu0 %4929
        %v4931 = vsel %vm736, %v4869, 0.0
        %4932 = vadd.xlane.f32.xlu0 %v4931
        %v4933 = vpop.xlane.xlu0 %4932
        %v4934 = vsel %vm736, %v4870, 0.0
        %4935 = vadd.xlane.f32.xlu0 %v4934
        %v4936 = vpop.xlane.xlu0 %4935
        %v4937 = vsel %vm736, %v4871, 0.0
        %4938 = vadd.xlane.f32.xlu0 %v4937
        %v4939 = vpop.xlane.xlu0 %4938
        %v4940 = vsel %vm736, %v4872, 0.0
        %4941 = vadd.xlane.f32.xlu0 %v4940
        %v4942 = vpop.xlane.xlu0 %4941
        %v4943 = vsel %vm736, %v4873, 0.0
        %4944 = vadd.xlane.f32.xlu0 %v4943
        %v4945 = vpop.xlane.xlu0 %4944
        %v4946 = vsel %vm736, %v4874, 0.0
        %4947 = vadd.xlane.f32.xlu0 %v4946
        %v4948 = vpop.xlane.xlu0 %4947
        %v4949 = vsel %vm736, %v4875, 0.0
        %4950 = vadd.xlane.f32.xlu0 %v4949
        %v4951 = vpop.xlane.xlu0 %4950
        %v4952 = vsel %vm736, %v4876, 0.0
        %4953 = vadd.xlane.f32.xlu0 %v4952
        %v4954 = vpop.xlane.xlu0 %4953
        %v4955 = vsel %vm736, %v4877, 0.0
        %4956 = vadd.xlane.f32.xlu0 %v4955
        %v4957 = vpop.xlane.xlu0 %4956
        %v4958 = vsel %vm736, %v4878, 0.0
        %4959 = vadd.xlane.f32.xlu0 %v4958
        %v4960 = vpop.xlane.xlu0 %4959
        %v4961 = vsel %vm736, %v4879, 0.0
        %4962 = vadd.xlane.f32.xlu0 %v4961
        %v4963 = vpop.xlane.xlu0 %4962
        %v4964 = vsel %vm736, %v4880, 0.0
        %4965 = vadd.xlane.f32.xlu0 %v4964
        %v4966 = vpop.xlane.xlu0 %4965
        %v4967 = vsel %vm736, %v4881, 0.0
        %4968 = vadd.xlane.f32.xlu0 %v4967
        %v4969 = vpop.xlane.xlu0 %4968
        %v4970 = vsel %vm736, %v4882, 0.0
        %4971 = vadd.xlane.f32.xlu0 %v4970
        %v4972 = vpop.xlane.xlu0 %4971
        %v4973 = vsel %vm736, %v4883, 0.0
        %4974 = vadd.xlane.f32.xlu0 %v4973
        %v4975 = vpop.xlane.xlu0 %4974
        %v4976 = vsel %vm736, %v4884, 0.0
        %4977 = vadd.xlane.f32.xlu0 %v4976
        %v4978 = vpop.xlane.xlu0 %4977
        %v4979 = vsel %vm736, %v4885, 0.0
        %4980 = vadd.xlane.f32.xlu0 %v4979
        %v4981 = vpop.xlane.xlu0 %4980
        %v4982 = vadd.f32 %v4670, %v4888
        %v4983 = vadd.f32 %v4673, %v4891
        %v4984 = vadd.f32 %v4676, %v4894
        %v4985 = vadd.f32 %v4679, %v4897
        %v4986 = vadd.f32 %v4682, %v4900
        %v4987 = vadd.f32 %v4685, %v4903
        %v4988 = vadd.f32 %v4688, %v4906
        %v4989 = vadd.f32 %v4691, %v4909
        %v4990 = vadd.f32 %v4694, %v4912
        %v4991 = vadd.f32 %v4697, %v4915
        %v4992 = vadd.f32 %v4700, %v4918
        %v4993 = vadd.f32 %v4703, %v4921
        %v4994 = vadd.f32 %v4706, %v4924
        %v4995 = vadd.f32 %v4709, %v4927
        %v4996 = vadd.f32 %v4712, %v4930
        %v4997 = vadd.f32 %v4715, %v4933
        %v4998 = vadd.f32 %v4718, %v4936
        %v4999 = vadd.f32 %v4721, %v4939
        %v5000 = vadd.f32 %v4724, %v4942
        %v5001 = vadd.f32 %v4727, %v4945
        %v5002 = vadd.f32 %v4730, %v4948
        %v5003 = vadd.f32 %v4733, %v4951
        %v5004 = vadd.f32 %v4736, %v4954
        %v5005 = vadd.f32 %v4739, %v4957
        %v5006 = vadd.f32 %v4742, %v4960
        %v5007 = vadd.f32 %v4745, %v4963
        %v5008 = vadd.f32 %v4748, %v4966
        %v5009 = vadd.f32 %v4751, %v4969
        %v5010 = vadd.f32 %v4754, %v4972
        %v5011 = vadd.f32 %v4757, %v4975
        %v5012 = vadd.f32 %v4760, %v4978
        %v5013 = vadd.f32 %v4763, %v4981
        %v5014 = vadd.f32 %v4982, %v872
        %v5015 = vadd.f32 %v4983, %v876
        %v5016 = vadd.f32 %v4984, %v880
        %v5017 = vadd.f32 %v4985, %v884
        %v5018 = vadd.f32 %v4986, %v891
        %v5019 = vadd.f32 %v4987, %v895
        %v5020 = vadd.f32 %v4988, %v899
        %v5021 = vadd.f32 %v4989, %v903
        %v5022 = vadd.f32 %v4990, %v910
        %v5023 = vadd.f32 %v4991, %v914
        %v5024 = vadd.f32 %v4992, %v918
        %v5025 = vadd.f32 %v4993, %v922
        %v5026 = vadd.f32 %v4994, %v929
        %v5027 = vadd.f32 %v4995, %v933
        %v5028 = vadd.f32 %v4996, %v937
        %v5029 = vadd.f32 %v4997, %v941
        %v5030 = vadd.f32 %v4998, %v948
        %v5031 = vadd.f32 %v4999, %v952
        %v5032 = vadd.f32 %v5000, %v956
        %v5033 = vadd.f32 %v5001, %v960
        %v5034 = vadd.f32 %v5002, %v967
        %v5035 = vadd.f32 %v5003, %v971
        %v5036 = vadd.f32 %v5004, %v975
        %v5037 = vadd.f32 %v5005, %v979
        %v5038 = vadd.f32 %v5006, %v986
        %v5039 = vadd.f32 %v5007, %v990
        %v5040 = vadd.f32 %v5008, %v994
        %v5041 = vadd.f32 %v5009, %v998
        %v5042 = vadd.f32 %v5010, %v1005
        %v5043 = vadd.f32 %v5011, %v1009
        %v5044 = vadd.f32 %v5012, %v1013
        %v5045 = vadd.f32 %v5013, %v1017
        %v5046 = vtanh.pop %v5014
        %v5047 = vtanh.pop %v5015
        %v5048 = vtanh.pop %v5016
        %v5049 = vtanh.pop %v5017
        %v5050 = vtanh.pop %v5018
        %v5051 = vtanh.pop %v5019
        %v5052 = vtanh.pop %v5020
        %v5053 = vtanh.pop %v5021
        %v5054 = vtanh.pop %v5022
        %v5055 = vtanh.pop %v5023
        %v5056 = vtanh.pop %v5024
        %v5057 = vtanh.pop %v5025
        %v5058 = vtanh.pop %v5026
        %v5059 = vtanh.pop %v5027
        %v5060 = vtanh.pop %v5028
        %v5061 = vtanh.pop %v5029
        %v5062 = vtanh.pop %v5030
        %v5063 = vtanh.pop %v5031
        %v5064 = vtanh.pop %v5032
        %v5065 = vtanh.pop %v5033
        %v5066 = vtanh.pop %v5034
        %v5067 = vtanh.pop %v5035
        %v5068 = vtanh.pop %v5036
        %v5069 = vtanh.pop %v5037
        %v5070 = vtanh.pop %v5038
        %v5071 = vtanh.pop %v5039
        %v5072 = vtanh.pop %v5040
        %v5073 = vtanh.pop %v5041
        %v5074 = vtanh.pop %v5042
        %v5075 = vtanh.pop %v5043
        %v5076 = vtanh.pop %v5044
        %v5077 = vtanh.pop %v5045
        %5110 = vset.pattern.permute.xlu0 0
        %5111 = vperm.xlu0 %5110, %v5046
        %v5112 = vpop.permute.xlu0 %5111
        %5113 = vset.pattern.permute.xlu0 0
        %5114 = vperm.xlu0 %5113, %v5047
        %v5115 = vpop.permute.xlu0 %5114
        %5116 = vset.pattern.permute.xlu0 0
        %5117 = vperm.xlu0 %5116, %v5048
        %v5118 = vpop.permute.xlu0 %5117
        %5119 = vset.pattern.permute.xlu0 0
        %5120 = vperm.xlu0 %5119, %v5049
        %v5121 = vpop.permute.xlu0 %5120
        %5122 = vset.pattern.permute.xlu0 0
        %5123 = vperm.xlu0 %5122, %v5050
        %v5124 = vpop.permute.xlu0 %5123
        %5125 = vset.pattern.permute.xlu0 0
        %5126 = vperm.xlu0 %5125, %v5051
        %v5127 = vpop.permute.xlu0 %5126
        %5128 = vset.pattern.permute.xlu0 0
        %5129 = vperm.xlu0 %5128, %v5052
        %v5130 = vpop.permute.xlu0 %5129
        %5131 = vset.pattern.permute.xlu0 0
        %5132 = vperm.xlu0 %5131, %v5053
        %v5133 = vpop.permute.xlu0 %5132
        %5134 = vset.pattern.permute.xlu0 0
        %5135 = vperm.xlu0 %5134, %v5054
        %v5136 = vpop.permute.xlu0 %5135
        %5137 = vset.pattern.permute.xlu0 0
        %5138 = vperm.xlu0 %5137, %v5055
        %v5139 = vpop.permute.xlu0 %5138
        %5140 = vset.pattern.permute.xlu0 0
        %5141 = vperm.xlu0 %5140, %v5056
        %v5142 = vpop.permute.xlu0 %5141
        %5143 = vset.pattern.permute.xlu0 0
        %5144 = vperm.xlu0 %5143, %v5057
        %v5145 = vpop.permute.xlu0 %5144
        %5146 = vset.pattern.permute.xlu0 0
        %5147 = vperm.xlu0 %5146, %v5058
        %v5148 = vpop.permute.xlu0 %5147
        %5149 = vset.pattern.permute.xlu0 0
        %5150 = vperm.xlu0 %5149, %v5059
        %v5151 = vpop.permute.xlu0 %5150
        %5152 = vset.pattern.permute.xlu0 0
        %5153 = vperm.xlu0 %5152, %v5060
        %v5154 = vpop.permute.xlu0 %5153
        %5155 = vset.pattern.permute.xlu0 0
        %5156 = vperm.xlu0 %5155, %v5061
        %v5157 = vpop.permute.xlu0 %5156
        %5158 = vset.pattern.permute.xlu0 0
        %5159 = vperm.xlu0 %5158, %v5062
        %v5160 = vpop.permute.xlu0 %5159
        %5161 = vset.pattern.permute.xlu0 0
        %5162 = vperm.xlu0 %5161, %v5063
        %v5163 = vpop.permute.xlu0 %5162
        %5164 = vset.pattern.permute.xlu0 0
        %5165 = vperm.xlu0 %5164, %v5064
        %v5166 = vpop.permute.xlu0 %5165
        %5167 = vset.pattern.permute.xlu0 0
        %5168 = vperm.xlu0 %5167, %v5065
        %v5169 = vpop.permute.xlu0 %5168
        %5170 = vset.pattern.permute.xlu0 0
        %5171 = vperm.xlu0 %5170, %v5066
        %v5172 = vpop.permute.xlu0 %5171
        %5173 = vset.pattern.permute.xlu0 0
        %5174 = vperm.xlu0 %5173, %v5067
        %v5175 = vpop.permute.xlu0 %5174
        %5176 = vset.pattern.permute.xlu0 0
        %5177 = vperm.xlu0 %5176, %v5068
        %v5178 = vpop.permute.xlu0 %5177
        %5179 = vset.pattern.permute.xlu0 0
        %5180 = vperm.xlu0 %5179, %v5069
        %v5181 = vpop.permute.xlu0 %5180
        %5182 = vset.pattern.permute.xlu0 0
        %5183 = vperm.xlu0 %5182, %v5070
        %v5184 = vpop.permute.xlu0 %5183
        %5185 = vset.pattern.permute.xlu0 0
        %5186 = vperm.xlu0 %5185, %v5071
        %v5187 = vpop.permute.xlu0 %5186
        %5188 = vset.pattern.permute.xlu0 0
        %5189 = vperm.xlu0 %5188, %v5072
        %v5190 = vpop.permute.xlu0 %5189
        %5191 = vset.pattern.permute.xlu0 0
        %5192 = vperm.xlu0 %5191, %v5073
        %v5193 = vpop.permute.xlu0 %5192
        %5194 = vset.pattern.permute.xlu0 0
        %5195 = vperm.xlu0 %5194, %v5074
        %v5196 = vpop.permute.xlu0 %5195
        %5197 = vset.pattern.permute.xlu0 0
        %5198 = vperm.xlu0 %5197, %v5075
        %v5199 = vpop.permute.xlu0 %5198
        %5200 = vset.pattern.permute.xlu0 0
        %5201 = vperm.xlu0 %5200, %v5076
        %v5202 = vpop.permute.xlu0 %5201
        %5203 = vset.pattern.permute.xlu0 0
        %5204 = vperm.xlu0 %5203, %v5077
        %v5205 = vpop.permute.xlu0 %5204
        %v5206 = vlaneseq
        %v5207 = vshrl.u32 %v5206, 7
        %v5208 = vsub.s32 %v1243, %v5207
        %v5209 = vrot.slane %v5112, %v5208
        %v5210 = vlaneseq
        %v5211 = vshrl.u32 %v5210, 7
        %v5212 = vsub.s32 %v1248, %v5211
        %v5213 = vrot.slane %v5115, %v5212
        %v5214 = vsel %vm1253, %v5213, %v5209
        %v5215 = vlaneseq
        %v5216 = vshrl.u32 %v5215, 7
        %v5217 = vsub.s32 %v1255, %v5216
        %v5218 = vrot.slane %v5118, %v5217
        %v5219 = vsel %vm1260, %v5218, %v5214
        %v5220 = vlaneseq
        %v5221 = vshrl.u32 %v5220, 7
        %v5222 = vsub.s32 %v1262, %v5221
        %v5223 = vrot.slane %v5121, %v5222
        %v5224 = vsel %vm1267, %v5223, %v5219
        %v5225 = vlaneseq
        %v5226 = vshrl.u32 %v5225, 7
        %v5227 = vsub.s32 %v1243, %v5226
        %v5228 = vrot.slane %v5124, %v5227
        %v5229 = vlaneseq
        %v5230 = vshrl.u32 %v5229, 7
        %v5231 = vsub.s32 %v1248, %v5230
        %v5232 = vrot.slane %v5127, %v5231
        %v5233 = vsel %vm1253, %v5232, %v5228
        %v5234 = vlaneseq
        %v5235 = vshrl.u32 %v5234, 7
        %v5236 = vsub.s32 %v1255, %v5235
        %v5237 = vrot.slane %v5130, %v5236
        %v5238 = vsel %vm1260, %v5237, %v5233
        %v5239 = vlaneseq
        %v5240 = vshrl.u32 %v5239, 7
        %v5241 = vsub.s32 %v1262, %v5240
        %v5242 = vrot.slane %v5133, %v5241
        %v5243 = vsel %vm1267, %v5242, %v5238
        %v5244 = vlaneseq
        %v5245 = vshrl.u32 %v5244, 7
        %v5246 = vsub.s32 %v1243, %v5245
        %v5247 = vrot.slane %v5136, %v5246
        %v5248 = vlaneseq
        %v5249 = vshrl.u32 %v5248, 7
        %v5250 = vsub.s32 %v1248, %v5249
        %v5251 = vrot.slane %v5139, %v5250
        %v5252 = vsel %vm1253, %v5251, %v5247
        %v5253 = vlaneseq
        %v5254 = vshrl.u32 %v5253, 7
        %v5255 = vsub.s32 %v1255, %v5254
        %v5256 = vrot.slane %v5142, %v5255
        %v5257 = vsel %vm1260, %v5256, %v5252
        %v5258 = vlaneseq
        %v5259 = vshrl.u32 %v5258, 7
        %v5260 = vsub.s32 %v1262, %v5259
        %v5261 = vrot.slane %v5145, %v5260
        %v5262 = vsel %vm1267, %v5261, %v5257
        %v5263 = vlaneseq
        %v5264 = vshrl.u32 %v5263, 7
        %v5265 = vsub.s32 %v1243, %v5264
        %v5266 = vrot.slane %v5148, %v5265
        %v5267 = vlaneseq
        %v5268 = vshrl.u32 %v5267, 7
        %v5269 = vsub.s32 %v1248, %v5268
        %v5270 = vrot.slane %v5151, %v5269
        %v5271 = vsel %vm1253, %v5270, %v5266
        %v5272 = vlaneseq
        %v5273 = vshrl.u32 %v5272, 7
        %v5274 = vsub.s32 %v1255, %v5273
        %v5275 = vrot.slane %v5154, %v5274
        %v5276 = vsel %vm1260, %v5275, %v5271
        %v5277 = vlaneseq
        %v5278 = vshrl.u32 %v5277, 7
        %v5279 = vsub.s32 %v1262, %v5278
        %v5280 = vrot.slane %v5157, %v5279
        %v5281 = vsel %vm1267, %v5280, %v5276
        %v5282 = vlaneseq
        %v5283 = vshrl.u32 %v5282, 7
        %v5284 = vsub.s32 %v1243, %v5283
        %v5285 = vrot.slane %v5160, %v5284
        %v5286 = vlaneseq
        %v5287 = vshrl.u32 %v5286, 7
        %v5288 = vsub.s32 %v1248, %v5287
        %v5289 = vrot.slane %v5163, %v5288
        %v5290 = vsel %vm1253, %v5289, %v5285
        %v5291 = vlaneseq
        %v5292 = vshrl.u32 %v5291, 7
        %v5293 = vsub.s32 %v1255, %v5292
        %v5294 = vrot.slane %v5166, %v5293
        %v5295 = vsel %vm1260, %v5294, %v5290
        %v5296 = vlaneseq
        %v5297 = vshrl.u32 %v5296, 7
        %v5298 = vsub.s32 %v1262, %v5297
        %v5299 = vrot.slane %v5169, %v5298
        %v5300 = vsel %vm1267, %v5299, %v5295
        %v5301 = vlaneseq
        %v5302 = vshrl.u32 %v5301, 7
        %v5303 = vsub.s32 %v1243, %v5302
        %v5304 = vrot.slane %v5172, %v5303
        %v5305 = vlaneseq
        %v5306 = vshrl.u32 %v5305, 7
        %v5307 = vsub.s32 %v1248, %v5306
        %v5308 = vrot.slane %v5175, %v5307
        %v5309 = vsel %vm1253, %v5308, %v5304
        %v5310 = vlaneseq
        %v5311 = vshrl.u32 %v5310, 7
        %v5312 = vsub.s32 %v1255, %v5311
        %v5313 = vrot.slane %v5178, %v5312
        %v5314 = vsel %vm1260, %v5313, %v5309
        %v5315 = vlaneseq
        %v5316 = vshrl.u32 %v5315, 7
        %v5317 = vsub.s32 %v1262, %v5316
        %v5318 = vrot.slane %v5181, %v5317
        %v5319 = vsel %vm1267, %v5318, %v5314
        %v5320 = vlaneseq
        %v5321 = vshrl.u32 %v5320, 7
        %v5322 = vsub.s32 %v1243, %v5321
        %v5323 = vrot.slane %v5184, %v5322
        %v5324 = vlaneseq
        %v5325 = vshrl.u32 %v5324, 7
        %v5326 = vsub.s32 %v1248, %v5325
        %v5327 = vrot.slane %v5187, %v5326
        %v5328 = vsel %vm1253, %v5327, %v5323
        %v5329 = vlaneseq
        %v5330 = vshrl.u32 %v5329, 7
        %v5331 = vsub.s32 %v1255, %v5330
        %v5332 = vrot.slane %v5190, %v5331
        %v5333 = vsel %vm1260, %v5332, %v5328
        %v5334 = vlaneseq
        %v5335 = vshrl.u32 %v5334, 7
        %v5336 = vsub.s32 %v1262, %v5335
        %v5337 = vrot.slane %v5193, %v5336
        %v5338 = vsel %vm1267, %v5337, %v5333
        %v5339 = vlaneseq
        %v5340 = vshrl.u32 %v5339, 7
        %v5341 = vsub.s32 %v1243, %v5340
        %v5342 = vrot.slane %v5196, %v5341
        %v5343 = vlaneseq
        %v5344 = vshrl.u32 %v5343, 7
        %v5345 = vsub.s32 %v1248, %v5344
        %v5346 = vrot.slane %v5199, %v5345
        %v5347 = vsel %vm1253, %v5346, %v5342
        %v5348 = vlaneseq
        %v5349 = vshrl.u32 %v5348, 7
        %v5350 = vsub.s32 %v1255, %v5349
        %v5351 = vrot.slane %v5202, %v5350
        %v5352 = vsel %vm1260, %v5351, %v5347
        %v5353 = vlaneseq
        %v5354 = vshrl.u32 %v5353, 7
        %v5355 = vsub.s32 %v1262, %v5354
        %v5356 = vrot.slane %v5205, %v5355
        %v5357 = vsel %vm1267, %v5356, %v5352
        %v5358 = vsel %vm1402, %v5243, %v5224
        %v5359 = vsel %vm1404, %v5262, %v5358
        %v5360 = vsel %vm1406, %v5281, %v5359
        %v5361 = vsel %vm1408, %v5300, %v5360
        %v5362 = vsel %vm1410, %v5319, %v5361
        %v5363 = vsel %vm1412, %v5338, %v5362
        %v5364 = vsel %vm1414, %v5357, %v5363
        %s5366 = scalar_lea.vmem [#allocation2], 40
        %5367 = vst.msk [vmem:[%s5366] sm:$0xff] %vm517, %v5364
        %s5368 = scalar_lea.vmem %s316, 48
        %v5369 = vld [vmem:[%s5368] sm:$0xff]
        %v5370 = vsel %vm1404, %v5224, %v5224
        %v5371 = vsel %vm1406, %v5224, %v5370
        %v5372 = vsel %vm1408, %v5224, %v5371
        %v5373 = vsel %vm1410, %v5224, %v5372
        %v5374 = vsel %vm1412, %v5224, %v5373
        %v5375 = vsel %vm1414, %v5224, %v5374
        %v5376 = vsel %vm1404, %v5243, %v5243
        %v5377 = vsel %vm1406, %v5243, %v5376
        %v5378 = vsel %vm1408, %v5243, %v5377
        %v5379 = vsel %vm1410, %v5243, %v5378
        %v5380 = vsel %vm1412, %v5243, %v5379
        %v5381 = vsel %vm1414, %v5243, %v5380
        %v5382 = vsel %vm1404, %v5262, %v5262
        %v5383 = vsel %vm1406, %v5262, %v5382
        %v5384 = vsel %vm1408, %v5262, %v5383
        %v5385 = vsel %vm1410, %v5262, %v5384
        %v5386 = vsel %vm1412, %v5262, %v5385
        %v5387 = vsel %vm1414, %v5262, %v5386
        %v5388 = vsel %vm1404, %v5281, %v5281
        %v5389 = vsel %vm1406, %v5281, %v5388
        %v5390 = vsel %vm1408, %v5281, %v5389
        %v5391 = vsel %vm1410, %v5281, %v5390
        %v5392 = vsel %vm1412, %v5281, %v5391
        %v5393 = vsel %vm1414, %v5281, %v5392
        %v5394 = vsel %vm1404, %v5300, %v5300
        %v5395 = vsel %vm1406, %v5300, %v5394
        %v5396 = vsel %vm1408, %v5300, %v5395
        %v5397 = vsel %vm1410, %v5300, %v5396
        %v5398 = vsel %vm1412, %v5300, %v5397
        %v5399 = vsel %vm1414, %v5300, %v5398
        %v5400 = vsel %vm1404, %v5319, %v5319
        %v5401 = vsel %vm1406, %v5319, %v5400
        %v5402 = vsel %vm1408, %v5319, %v5401
        %v5403 = vsel %vm1410, %v5319, %v5402
        %v5404 = vsel %vm1412, %v5319, %v5403
        %v5405 = vsel %vm1414, %v5319, %v5404
        %v5406 = vsel %vm1404, %v5338, %v5338
        %v5407 = vsel %vm1406, %v5338, %v5406
        %v5408 = vsel %vm1408, %v5338, %v5407
        %v5409 = vsel %vm1410, %v5338, %v5408
        %v5410 = vsel %vm1412, %v5338, %v5409
        %v5411 = vsel %vm1414, %v5338, %v5410
        %v5412 = vsel %vm1404, %v5357, %v5357
        %v5413 = vsel %vm1406, %v5357, %v5412
        %v5414 = vsel %vm1408, %v5357, %v5413
        %v5415 = vsel %vm1410, %v5357, %v5414
        %v5416 = vsel %vm1412, %v5357, %v5415
        %v5417 = vsel %vm1414, %v5357, %v5416
        %v5426 = vmul.f32 %v328, %v5375
        %v5427 = vmul.f32 %v329, %v5375
        %v5428 = vmul.f32 %v330, %v5375
        %v5429 = vmul.f32 %v331, %v5375
        %v5430 = vmul.f32 %v332, %v5381
        %v5431 = vmul.f32 %v333, %v5381
        %v5432 = vmul.f32 %v334, %v5381
        %v5433 = vmul.f32 %v335, %v5381
        %v5434 = vmul.f32 %v336, %v5387
        %v5435 = vmul.f32 %v337, %v5387
        %v5436 = vmul.f32 %v338, %v5387
        %v5437 = vmul.f32 %v339, %v5387
        %v5438 = vmul.f32 %v340, %v5393
        %v5439 = vmul.f32 %v341, %v5393
        %v5440 = vmul.f32 %v342, %v5393
        %v5441 = vmul.f32 %v343, %v5393
        %v5442 = vmul.f32 %v344, %v5399
        %v5443 = vmul.f32 %v345, %v5399
        %v5444 = vmul.f32 %v346, %v5399
        %v5445 = vmul.f32 %v347, %v5399
        %v5446 = vmul.f32 %v348, %v5405
        %v5447 = vmul.f32 %v349, %v5405
        %v5448 = vmul.f32 %v350, %v5405
        %v5449 = vmul.f32 %v351, %v5405
        %v5450 = vmul.f32 %v352, %v5411
        %v5451 = vmul.f32 %v353, %v5411
        %v5452 = vmul.f32 %v354, %v5411
        %v5453 = vmul.f32 %v355, %v5411
        %v5454 = vmul.f32 %v356, %v5417
        %v5455 = vmul.f32 %v357, %v5417
        %v5456 = vmul.f32 %v358, %v5417
        %v5457 = vmul.f32 %v359, %v5417
        %v5458 = vsel %vm517, %v5426, 0.0
        %5459 = vadd.xlane.f32.xlu0 %v5458
        %v5460 = vpop.xlane.xlu0 %5459
        %v5461 = vsel %vm517, %v5427, 0.0
        %5462 = vadd.xlane.f32.xlu0 %v5461
        %v5463 = vpop.xlane.xlu0 %5462
        %v5464 = vsel %vm517, %v5428, 0.0
        %5465 = vadd.xlane.f32.xlu0 %v5464
        %v5466 = vpop.xlane.xlu0 %5465
        %v5467 = vsel %vm517, %v5429, 0.0
        %5468 = vadd.xlane.f32.xlu0 %v5467
        %v5469 = vpop.xlane.xlu0 %5468
        %v5470 = vsel %vm517, %v5430, 0.0
        %5471 = vadd.xlane.f32.xlu0 %v5470
        %v5472 = vpop.xlane.xlu0 %5471
        %v5473 = vsel %vm517, %v5431, 0.0
        %5474 = vadd.xlane.f32.xlu0 %v5473
        %v5475 = vpop.xlane.xlu0 %5474
        %v5476 = vsel %vm517, %v5432, 0.0
        %5477 = vadd.xlane.f32.xlu0 %v5476
        %v5478 = vpop.xlane.xlu0 %5477
        %v5479 = vsel %vm517, %v5433, 0.0
        %5480 = vadd.xlane.f32.xlu0 %v5479
        %v5481 = vpop.xlane.xlu0 %5480
        %v5482 = vsel %vm517, %v5434, 0.0
        %5483 = vadd.xlane.f32.xlu0 %v5482
        %v5484 = vpop.xlane.xlu0 %5483
        %v5485 = vsel %vm517, %v5435, 0.0
        %5486 = vadd.xlane.f32.xlu0 %v5485
        %v5487 = vpop.xlane.xlu0 %5486
        %v5488 = vsel %vm517, %v5436, 0.0
        %5489 = vadd.xlane.f32.xlu0 %v5488
        %v5490 = vpop.xlane.xlu0 %5489
        %v5491 = vsel %vm517, %v5437, 0.0
        %5492 = vadd.xlane.f32.xlu0 %v5491
        %v5493 = vpop.xlane.xlu0 %5492
        %v5494 = vsel %vm517, %v5438, 0.0
        %5495 = vadd.xlane.f32.xlu0 %v5494
        %v5496 = vpop.xlane.xlu0 %5495
        %v5497 = vsel %vm517, %v5439, 0.0
        %5498 = vadd.xlane.f32.xlu0 %v5497
        %v5499 = vpop.xlane.xlu0 %5498
        %v5500 = vsel %vm517, %v5440, 0.0
        %5501 = vadd.xlane.f32.xlu0 %v5500
        %v5502 = vpop.xlane.xlu0 %5501
        %v5503 = vsel %vm517, %v5441, 0.0
        %5504 = vadd.xlane.f32.xlu0 %v5503
        %v5505 = vpop.xlane.xlu0 %5504
        %v5506 = vsel %vm517, %v5442, 0.0
        %5507 = vadd.xlane.f32.xlu0 %v5506
        %v5508 = vpop.xlane.xlu0 %5507
        %v5509 = vsel %vm517, %v5443, 0.0
        %5510 = vadd.xlane.f32.xlu0 %v5509
        %v5511 = vpop.xlane.xlu0 %5510
        %v5512 = vsel %vm517, %v5444, 0.0
        %5513 = vadd.xlane.f32.xlu0 %v5512
        %v5514 = vpop.xlane.xlu0 %5513
        %v5515 = vsel %vm517, %v5445, 0.0
        %5516 = vadd.xlane.f32.xlu0 %v5515
        %v5517 = vpop.xlane.xlu0 %5516
        %v5518 = vsel %vm517, %v5446, 0.0
        %5519 = vadd.xlane.f32.xlu0 %v5518
        %v5520 = vpop.xlane.xlu0 %5519
        %v5521 = vsel %vm517, %v5447, 0.0
        %5522 = vadd.xlane.f32.xlu0 %v5521
        %v5523 = vpop.xlane.xlu0 %5522
        %v5524 = vsel %vm517, %v5448, 0.0
        %5525 = vadd.xlane.f32.xlu0 %v5524
        %v5526 = vpop.xlane.xlu0 %5525
        %v5527 = vsel %vm517, %v5449, 0.0
        %5528 = vadd.xlane.f32.xlu0 %v5527
        %v5529 = vpop.xlane.xlu0 %5528
        %v5530 = vsel %vm517, %v5450, 0.0
        %5531 = vadd.xlane.f32.xlu0 %v5530
        %v5532 = vpop.xlane.xlu0 %5531
        %v5533 = vsel %vm517, %v5451, 0.0
        %5534 = vadd.xlane.f32.xlu0 %v5533
        %v5535 = vpop.xlane.xlu0 %5534
        %v5536 = vsel %vm517, %v5452, 0.0
        %5537 = vadd.xlane.f32.xlu0 %v5536
        %v5538 = vpop.xlane.xlu0 %5537
        %v5539 = vsel %vm517, %v5453, 0.0
        %5540 = vadd.xlane.f32.xlu0 %v5539
        %v5541 = vpop.xlane.xlu0 %5540
        %v5542 = vsel %vm517, %v5454, 0.0
        %5543 = vadd.xlane.f32.xlu0 %v5542
        %v5544 = vpop.xlane.xlu0 %5543
        %v5545 = vsel %vm517, %v5455, 0.0
        %5546 = vadd.xlane.f32.xlu0 %v5545
        %v5547 = vpop.xlane.xlu0 %5546
        %v5548 = vsel %vm517, %v5456, 0.0
        %5549 = vadd.xlane.f32.xlu0 %v5548
        %v5550 = vpop.xlane.xlu0 %5549
        %v5551 = vsel %vm517, %v5457, 0.0
        %5552 = vadd.xlane.f32.xlu0 %v5551
        %v5553 = vpop.xlane.xlu0 %5552
        %v5555 = vcombine.high %v5369, %v5369
        %v5557 = vunpack.c.l.s4 1966171168
        %v5558 = vunpack.c.0.s8 %v5557
        %v5559 = vlaneseq
        %v5560 = vshrl.u32 %v5559, 7
        %v5561 = vsub.s32 %v5558, %v5560
        %v5562 = vrot.slane %v5369, %v5561
        %v5564 = vunpack.c.l.s4 1966171168
        %v5565 = vunpack.c.0.s8 %v5564
        %v5566 = vlaneseq
        %v5567 = vshrl.u32 %v5566, 7
        %v5568 = vsub.s32 %v5565, %v5567
        %v5569 = vrot.slane %v5555, %v5568
        %v5570 = vcombine.high %v5562, %v5562
        %v5571 = vcombine.high %v5569, %v5569
        %v5573 = vunpack.c.l.s4 1966171168
        %v5574 = vunpack.c.0.s8 %v5573
        %v5575 = vlaneseq
        %v5576 = vshrl.u32 %v5575, 7
        %v5577 = vsub.s32 %v5574, %v5576
        %v5578 = vrot.slane %v5562, %v5577
        %v5580 = vunpack.c.l.s4 1966171168
        %v5581 = vunpack.c.0.s8 %v5580
        %v5582 = vlaneseq
        %v5583 = vshrl.u32 %v5582, 7
        %v5584 = vsub.s32 %v5581, %v5583
        %v5585 = vrot.slane %v5569, %v5584
        %v5587 = vunpack.c.l.s4 1966171168
        %v5588 = vunpack.c.0.s8 %v5587
        %v5589 = vlaneseq
        %v5590 = vshrl.u32 %v5589, 7
        %v5591 = vsub.s32 %v5588, %v5590
        %v5592 = vrot.slane %v5570, %v5591
        %v5594 = vunpack.c.l.s4 1966171168
        %v5595 = vunpack.c.0.s8 %v5594
        %v5596 = vlaneseq
        %v5597 = vshrl.u32 %v5596, 7
        %v5598 = vsub.s32 %v5595, %v5597
        %v5599 = vrot.slane %v5571, %v5598
        %v5600 = vcombine.high %v5578, %v5578
        %v5601 = vcombine.high %v5585, %v5585
        %v5602 = vcombine.high %v5592, %v5592
        %v5603 = vcombine.high %v5599, %v5599
        %v5604 = vlaneseq
        %v5605 = vshrl.u32 %v5604, 7
        %v5606 = vsub.s32 0, %v5605
        %v5607 = vrot.slane %v5578, %v5606
        %v5608 = vlaneseq
        %v5609 = vshrl.u32 %v5608, 7
        %v5610 = vsub.s32 0, %v5609
        %v5611 = vrot.slane %v5592, %v5610
        %v5612 = vlaneseq
        %v5613 = vshrl.u32 %v5612, 7
        %v5614 = vsub.s32 0, %v5613
        %v5615 = vrot.slane %v5600, %v5614
        %v5616 = vlaneseq
        %v5617 = vshrl.u32 %v5616, 7
        %v5618 = vsub.s32 0, %v5617
        %v5619 = vrot.slane %v5602, %v5618
        %v5620 = vlaneseq
        %v5621 = vshrl.u32 %v5620, 7
        %v5622 = vsub.s32 0, %v5621
        %v5623 = vrot.slane %v5585, %v5622
        %v5624 = vlaneseq
        %v5625 = vshrl.u32 %v5624, 7
        %v5626 = vsub.s32 0, %v5625
        %v5627 = vrot.slane %v5599, %v5626
        %v5628 = vlaneseq
        %v5629 = vshrl.u32 %v5628, 7
        %v5630 = vsub.s32 0, %v5629
        %v5631 = vrot.slane %v5601, %v5630
        %v5632 = vlaneseq
        %v5633 = vshrl.u32 %v5632, 7
        %v5634 = vsub.s32 0, %v5633
        %v5635 = vrot.slane %v5603, %v5634
        %v5644 = vmul.f32 %v360, %v5607
        %v5645 = vmul.f32 %v361, %v5607
        %v5646 = vmul.f32 %v362, %v5607
        %v5647 = vmul.f32 %v363, %v5607
        %v5648 = vmul.f32 %v364, %v5611
        %v5649 = vmul.f32 %v365, %v5611
        %v5650 = vmul.f32 %v366, %v5611
        %v5651 = vmul.f32 %v367, %v5611
        %v5652 = vmul.f32 %v368, %v5615
        %v5653 = vmul.f32 %v369, %v5615
        %v5654 = vmul.f32 %v370, %v5615
        %v5655 = vmul.f32 %v371, %v5615
        %v5656 = vmul.f32 %v372, %v5619
        %v5657 = vmul.f32 %v373, %v5619
        %v5658 = vmul.f32 %v374, %v5619
        %v5659 = vmul.f32 %v375, %v5619
        %v5660 = vmul.f32 %v376, %v5623
        %v5661 = vmul.f32 %v377, %v5623
        %v5662 = vmul.f32 %v378, %v5623
        %v5663 = vmul.f32 %v379, %v5623
        %v5664 = vmul.f32 %v380, %v5627
        %v5665 = vmul.f32 %v381, %v5627
        %v5666 = vmul.f32 %v382, %v5627
        %v5667 = vmul.f32 %v383, %v5627
        %v5668 = vmul.f32 %v384, %v5631
        %v5669 = vmul.f32 %v385, %v5631
        %v5670 = vmul.f32 %v386, %v5631
        %v5671 = vmul.f32 %v387, %v5631
        %v5672 = vmul.f32 %v388, %v5635
        %v5673 = vmul.f32 %v389, %v5635
        %v5674 = vmul.f32 %v390, %v5635
        %v5675 = vmul.f32 %v391, %v5635
        %v5676 = vsel %vm736, %v5644, 0.0
        %5677 = vadd.xlane.f32.xlu0 %v5676
        %v5678 = vpop.xlane.xlu0 %5677
        %v5679 = vsel %vm736, %v5645, 0.0
        %5680 = vadd.xlane.f32.xlu0 %v5679
        %v5681 = vpop.xlane.xlu0 %5680
        %v5682 = vsel %vm736, %v5646, 0.0
        %5683 = vadd.xlane.f32.xlu0 %v5682
        %v5684 = vpop.xlane.xlu0 %5683
        %v5685 = vsel %vm736, %v5647, 0.0
        %5686 = vadd.xlane.f32.xlu0 %v5685
        %v5687 = vpop.xlane.xlu0 %5686
        %v5688 = vsel %vm736, %v5648, 0.0
        %5689 = vadd.xlane.f32.xlu0 %v5688
        %v5690 = vpop.xlane.xlu0 %5689
        %v5691 = vsel %vm736, %v5649, 0.0
        %5692 = vadd.xlane.f32.xlu0 %v5691
        %v5693 = vpop.xlane.xlu0 %5692
        %v5694 = vsel %vm736, %v5650, 0.0
        %5695 = vadd.xlane.f32.xlu0 %v5694
        %v5696 = vpop.xlane.xlu0 %5695
        %v5697 = vsel %vm736, %v5651, 0.0
        %5698 = vadd.xlane.f32.xlu0 %v5697
        %v5699 = vpop.xlane.xlu0 %5698
        %v5700 = vsel %vm736, %v5652, 0.0
        %5701 = vadd.xlane.f32.xlu0 %v5700
        %v5702 = vpop.xlane.xlu0 %5701
        %v5703 = vsel %vm736, %v5653, 0.0
        %5704 = vadd.xlane.f32.xlu0 %v5703
        %v5705 = vpop.xlane.xlu0 %5704
        %v5706 = vsel %vm736, %v5654, 0.0
        %5707 = vadd.xlane.f32.xlu0 %v5706
        %v5708 = vpop.xlane.xlu0 %5707
        %v5709 = vsel %vm736, %v5655, 0.0
        %5710 = vadd.xlane.f32.xlu0 %v5709
        %v5711 = vpop.xlane.xlu0 %5710
        %v5712 = vsel %vm736, %v5656, 0.0
        %5713 = vadd.xlane.f32.xlu0 %v5712
        %v5714 = vpop.xlane.xlu0 %5713
        %v5715 = vsel %vm736, %v5657, 0.0
        %5716 = vadd.xlane.f32.xlu0 %v5715
        %v5717 = vpop.xlane.xlu0 %5716
        %v5718 = vsel %vm736, %v5658, 0.0
        %5719 = vadd.xlane.f32.xlu0 %v5718
        %v5720 = vpop.xlane.xlu0 %5719
        %v5721 = vsel %vm736, %v5659, 0.0
        %5722 = vadd.xlane.f32.xlu0 %v5721
        %v5723 = vpop.xlane.xlu0 %5722
        %v5724 = vsel %vm736, %v5660, 0.0
        %5725 = vadd.xlane.f32.xlu0 %v5724
        %v5726 = vpop.xlane.xlu0 %5725
        %v5727 = vsel %vm736, %v5661, 0.0
        %5728 = vadd.xlane.f32.xlu0 %v5727
        %v5729 = vpop.xlane.xlu0 %5728
        %v5730 = vsel %vm736, %v5662, 0.0
        %5731 = vadd.xlane.f32.xlu0 %v5730
        %v5732 = vpop.xlane.xlu0 %5731
        %v5733 = vsel %vm736, %v5663, 0.0
        %5734 = vadd.xlane.f32.xlu0 %v5733
        %v5735 = vpop.xlane.xlu0 %5734
        %v5736 = vsel %vm736, %v5664, 0.0
        %5737 = vadd.xlane.f32.xlu0 %v5736
        %v5738 = vpop.xlane.xlu0 %5737
        %v5739 = vsel %vm736, %v5665, 0.0
        %5740 = vadd.xlane.f32.xlu0 %v5739
        %v5741 = vpop.xlane.xlu0 %5740
        %v5742 = vsel %vm736, %v5666, 0.0
        %5743 = vadd.xlane.f32.xlu0 %v5742
        %v5744 = vpop.xlane.xlu0 %5743
        %v5745 = vsel %vm736, %v5667, 0.0
        %5746 = vadd.xlane.f32.xlu0 %v5745
        %v5747 = vpop.xlane.xlu0 %5746
        %v5748 = vsel %vm736, %v5668, 0.0
        %5749 = vadd.xlane.f32.xlu0 %v5748
        %v5750 = vpop.xlane.xlu0 %5749
        %v5751 = vsel %vm736, %v5669, 0.0
        %5752 = vadd.xlane.f32.xlu0 %v5751
        %v5753 = vpop.xlane.xlu0 %5752
        %v5754 = vsel %vm736, %v5670, 0.0
        %5755 = vadd.xlane.f32.xlu0 %v5754
        %v5756 = vpop.xlane.xlu0 %5755
        %v5757 = vsel %vm736, %v5671, 0.0
        %5758 = vadd.xlane.f32.xlu0 %v5757
        %v5759 = vpop.xlane.xlu0 %5758
        %v5760 = vsel %vm736, %v5672, 0.0
        %5761 = vadd.xlane.f32.xlu0 %v5760
        %v5762 = vpop.xlane.xlu0 %5761
        %v5763 = vsel %vm736, %v5673, 0.0
        %5764 = vadd.xlane.f32.xlu0 %v5763
        %v5765 = vpop.xlane.xlu0 %5764
        %v5766 = vsel %vm736, %v5674, 0.0
        %5767 = vadd.xlane.f32.xlu0 %v5766
        %v5768 = vpop.xlane.xlu0 %5767
        %v5769 = vsel %vm736, %v5675, 0.0
        %5770 = vadd.xlane.f32.xlu0 %v5769
        %v5771 = vpop.xlane.xlu0 %5770
        %v5772 = vadd.f32 %v5460, %v5678
        %v5773 = vadd.f32 %v5463, %v5681
        %v5774 = vadd.f32 %v5466, %v5684
        %v5775 = vadd.f32 %v5469, %v5687
        %v5776 = vadd.f32 %v5472, %v5690
        %v5777 = vadd.f32 %v5475, %v5693
        %v5778 = vadd.f32 %v5478, %v5696
        %v5779 = vadd.f32 %v5481, %v5699
        %v5780 = vadd.f32 %v5484, %v5702
        %v5781 = vadd.f32 %v5487, %v5705
        %v5782 = vadd.f32 %v5490, %v5708
        %v5783 = vadd.f32 %v5493, %v5711
        %v5784 = vadd.f32 %v5496, %v5714
        %v5785 = vadd.f32 %v5499, %v5717
        %v5786 = vadd.f32 %v5502, %v5720
        %v5787 = vadd.f32 %v5505, %v5723
        %v5788 = vadd.f32 %v5508, %v5726
        %v5789 = vadd.f32 %v5511, %v5729
        %v5790 = vadd.f32 %v5514, %v5732
        %v5791 = vadd.f32 %v5517, %v5735
        %v5792 = vadd.f32 %v5520, %v5738
        %v5793 = vadd.f32 %v5523, %v5741
        %v5794 = vadd.f32 %v5526, %v5744
        %v5795 = vadd.f32 %v5529, %v5747
        %v5796 = vadd.f32 %v5532, %v5750
        %v5797 = vadd.f32 %v5535, %v5753
        %v5798 = vadd.f32 %v5538, %v5756
        %v5799 = vadd.f32 %v5541, %v5759
        %v5800 = vadd.f32 %v5544, %v5762
        %v5801 = vadd.f32 %v5547, %v5765
        %v5802 = vadd.f32 %v5550, %v5768
        %v5803 = vadd.f32 %v5553, %v5771
        %v5804 = vadd.f32 %v5772, %v872
        %v5805 = vadd.f32 %v5773, %v876
        %v5806 = vadd.f32 %v5774, %v880
        %v5807 = vadd.f32 %v5775, %v884
        %v5808 = vadd.f32 %v5776, %v891
        %v5809 = vadd.f32 %v5777, %v895
        %v5810 = vadd.f32 %v5778, %v899
        %v5811 = vadd.f32 %v5779, %v903
        %v5812 = vadd.f32 %v5780, %v910
        %v5813 = vadd.f32 %v5781, %v914
        %v5814 = vadd.f32 %v5782, %v918
        %v5815 = vadd.f32 %v5783, %v922
        %v5816 = vadd.f32 %v5784, %v929
        %v5817 = vadd.f32 %v5785, %v933
        %v5818 = vadd.f32 %v5786, %v937
        %v5819 = vadd.f32 %v5787, %v941
        %v5820 = vadd.f32 %v5788, %v948
        %v5821 = vadd.f32 %v5789, %v952
        %v5822 = vadd.f32 %v5790, %v956
        %v5823 = vadd.f32 %v5791, %v960
        %v5824 = vadd.f32 %v5792, %v967
        %v5825 = vadd.f32 %v5793, %v971
        %v5826 = vadd.f32 %v5794, %v975
        %v5827 = vadd.f32 %v5795, %v979
        %v5828 = vadd.f32 %v5796, %v986
        %v5829 = vadd.f32 %v5797, %v990
        %v5830 = vadd.f32 %v5798, %v994
        %v5831 = vadd.f32 %v5799, %v998
        %v5832 = vadd.f32 %v5800, %v1005
        %v5833 = vadd.f32 %v5801, %v1009
        %v5834 = vadd.f32 %v5802, %v1013
        %v5835 = vadd.f32 %v5803, %v1017
        %v5836 = vtanh.pop %v5804
        %v5837 = vtanh.pop %v5805
        %v5838 = vtanh.pop %v5806
        %v5839 = vtanh.pop %v5807
        %v5840 = vtanh.pop %v5808
        %v5841 = vtanh.pop %v5809
        %v5842 = vtanh.pop %v5810
        %v5843 = vtanh.pop %v5811
        %v5844 = vtanh.pop %v5812
        %v5845 = vtanh.pop %v5813
        %v5846 = vtanh.pop %v5814
        %v5847 = vtanh.pop %v5815
        %v5848 = vtanh.pop %v5816
        %v5849 = vtanh.pop %v5817
        %v5850 = vtanh.pop %v5818
        %v5851 = vtanh.pop %v5819
        %v5852 = vtanh.pop %v5820
        %v5853 = vtanh.pop %v5821
        %v5854 = vtanh.pop %v5822
        %v5855 = vtanh.pop %v5823
        %v5856 = vtanh.pop %v5824
        %v5857 = vtanh.pop %v5825
        %v5858 = vtanh.pop %v5826
        %v5859 = vtanh.pop %v5827
        %v5860 = vtanh.pop %v5828
        %v5861 = vtanh.pop %v5829
        %v5862 = vtanh.pop %v5830
        %v5863 = vtanh.pop %v5831
        %v5864 = vtanh.pop %v5832
        %v5865 = vtanh.pop %v5833
        %v5866 = vtanh.pop %v5834
        %v5867 = vtanh.pop %v5835
        %5900 = vset.pattern.permute.xlu0 0
        %5901 = vperm.xlu0 %5900, %v5836
        %v5902 = vpop.permute.xlu0 %5901
        %5903 = vset.pattern.permute.xlu0 0
        %5904 = vperm.xlu0 %5903, %v5837
        %v5905 = vpop.permute.xlu0 %5904
        %5906 = vset.pattern.permute.xlu0 0
        %5907 = vperm.xlu0 %5906, %v5838
        %v5908 = vpop.permute.xlu0 %5907
        %5909 = vset.pattern.permute.xlu0 0
        %5910 = vperm.xlu0 %5909, %v5839
        %v5911 = vpop.permute.xlu0 %5910
        %5912 = vset.pattern.permute.xlu0 0
        %5913 = vperm.xlu0 %5912, %v5840
        %v5914 = vpop.permute.xlu0 %5913
        %5915 = vset.pattern.permute.xlu0 0
        %5916 = vperm.xlu0 %5915, %v5841
        %v5917 = vpop.permute.xlu0 %5916
        %5918 = vset.pattern.permute.xlu0 0
        %5919 = vperm.xlu0 %5918, %v5842
        %v5920 = vpop.permute.xlu0 %5919
        %5921 = vset.pattern.permute.xlu0 0
        %5922 = vperm.xlu0 %5921, %v5843
        %v5923 = vpop.permute.xlu0 %5922
        %5924 = vset.pattern.permute.xlu0 0
        %5925 = vperm.xlu0 %5924, %v5844
        %v5926 = vpop.permute.xlu0 %5925
        %5927 = vset.pattern.permute.xlu0 0
        %5928 = vperm.xlu0 %5927, %v5845
        %v5929 = vpop.permute.xlu0 %5928
        %5930 = vset.pattern.permute.xlu0 0
        %5931 = vperm.xlu0 %5930, %v5846
        %v5932 = vpop.permute.xlu0 %5931
        %5933 = vset.pattern.permute.xlu0 0
        %5934 = vperm.xlu0 %5933, %v5847
        %v5935 = vpop.permute.xlu0 %5934
        %5936 = vset.pattern.permute.xlu0 0
        %5937 = vperm.xlu0 %5936, %v5848
        %v5938 = vpop.permute.xlu0 %5937
        %5939 = vset.pattern.permute.xlu0 0
        %5940 = vperm.xlu0 %5939, %v5849
        %v5941 = vpop.permute.xlu0 %5940
        %5942 = vset.pattern.permute.xlu0 0
        %5943 = vperm.xlu0 %5942, %v5850
        %v5944 = vpop.permute.xlu0 %5943
        %5945 = vset.pattern.permute.xlu0 0
        %5946 = vperm.xlu0 %5945, %v5851
        %v5947 = vpop.permute.xlu0 %5946
        %5948 = vset.pattern.permute.xlu0 0
        %5949 = vperm.xlu0 %5948, %v5852
        %v5950 = vpop.permute.xlu0 %5949
        %5951 = vset.pattern.permute.xlu0 0
        %5952 = vperm.xlu0 %5951, %v5853
        %v5953 = vpop.permute.xlu0 %5952
        %5954 = vset.pattern.permute.xlu0 0
        %5955 = vperm.xlu0 %5954, %v5854
        %v5956 = vpop.permute.xlu0 %5955
        %5957 = vset.pattern.permute.xlu0 0
        %5958 = vperm.xlu0 %5957, %v5855
        %v5959 = vpop.permute.xlu0 %5958
        %5960 = vset.pattern.permute.xlu0 0
        %5961 = vperm.xlu0 %5960, %v5856
        %v5962 = vpop.permute.xlu0 %5961
        %5963 = vset.pattern.permute.xlu0 0
        %5964 = vperm.xlu0 %5963, %v5857
        %v5965 = vpop.permute.xlu0 %5964
        %5966 = vset.pattern.permute.xlu0 0
        %5967 = vperm.xlu0 %5966, %v5858
        %v5968 = vpop.permute.xlu0 %5967
        %5969 = vset.pattern.permute.xlu0 0
        %5970 = vperm.xlu0 %5969, %v5859
        %v5971 = vpop.permute.xlu0 %5970
        %5972 = vset.pattern.permute.xlu0 0
        %5973 = vperm.xlu0 %5972, %v5860
        %v5974 = vpop.permute.xlu0 %5973
        %5975 = vset.pattern.permute.xlu0 0
        %5976 = vperm.xlu0 %5975, %v5861
        %v5977 = vpop.permute.xlu0 %5976
        %5978 = vset.pattern.permute.xlu0 0
        %5979 = vperm.xlu0 %5978, %v5862
        %v5980 = vpop.permute.xlu0 %5979
        %5981 = vset.pattern.permute.xlu0 0
        %5982 = vperm.xlu0 %5981, %v5863
        %v5983 = vpop.permute.xlu0 %5982
        %5984 = vset.pattern.permute.xlu0 0
        %5985 = vperm.xlu0 %5984, %v5864
        %v5986 = vpop.permute.xlu0 %5985
        %5987 = vset.pattern.permute.xlu0 0
        %5988 = vperm.xlu0 %5987, %v5865
        %v5989 = vpop.permute.xlu0 %5988
        %5990 = vset.pattern.permute.xlu0 0
        %5991 = vperm.xlu0 %5990, %v5866
        %v5992 = vpop.permute.xlu0 %5991
        %5993 = vset.pattern.permute.xlu0 0
        %5994 = vperm.xlu0 %5993, %v5867
        %v5995 = vpop.permute.xlu0 %5994
        %v5996 = vlaneseq
        %v5997 = vshrl.u32 %v5996, 7
        %v5998 = vsub.s32 %v1243, %v5997
        %v5999 = vrot.slane %v5902, %v5998
        %v6000 = vlaneseq
        %v6001 = vshrl.u32 %v6000, 7
        %v6002 = vsub.s32 %v1248, %v6001
        %v6003 = vrot.slane %v5905, %v6002
        %v6004 = vsel %vm1253, %v6003, %v5999
        %v6005 = vlaneseq
        %v6006 = vshrl.u32 %v6005, 7
        %v6007 = vsub.s32 %v1255, %v6006
        %v6008 = vrot.slane %v5908, %v6007
        %v6009 = vsel %vm1260, %v6008, %v6004
        %v6010 = vlaneseq
        %v6011 = vshrl.u32 %v6010, 7
        %v6012 = vsub.s32 %v1262, %v6011
        %v6013 = vrot.slane %v5911, %v6012
        %v6014 = vsel %vm1267, %v6013, %v6009
        %v6015 = vlaneseq
        %v6016 = vshrl.u32 %v6015, 7
        %v6017 = vsub.s32 %v1243, %v6016
        %v6018 = vrot.slane %v5914, %v6017
        %v6019 = vlaneseq
        %v6020 = vshrl.u32 %v6019, 7
        %v6021 = vsub.s32 %v1248, %v6020
        %v6022 = vrot.slane %v5917, %v6021
        %v6023 = vsel %vm1253, %v6022, %v6018
        %v6024 = vlaneseq
        %v6025 = vshrl.u32 %v6024, 7
        %v6026 = vsub.s32 %v1255, %v6025
        %v6027 = vrot.slane %v5920, %v6026
        %v6028 = vsel %vm1260, %v6027, %v6023
        %v6029 = vlaneseq
        %v6030 = vshrl.u32 %v6029, 7
        %v6031 = vsub.s32 %v1262, %v6030
        %v6032 = vrot.slane %v5923, %v6031
        %v6033 = vsel %vm1267, %v6032, %v6028
        %v6034 = vlaneseq
        %v6035 = vshrl.u32 %v6034, 7
        %v6036 = vsub.s32 %v1243, %v6035
        %v6037 = vrot.slane %v5926, %v6036
        %v6038 = vlaneseq
        %v6039 = vshrl.u32 %v6038, 7
        %v6040 = vsub.s32 %v1248, %v6039
        %v6041 = vrot.slane %v5929, %v6040
        %v6042 = vsel %vm1253, %v6041, %v6037
        %v6043 = vlaneseq
        %v6044 = vshrl.u32 %v6043, 7
        %v6045 = vsub.s32 %v1255, %v6044
        %v6046 = vrot.slane %v5932, %v6045
        %v6047 = vsel %vm1260, %v6046, %v6042
        %v6048 = vlaneseq
        %v6049 = vshrl.u32 %v6048, 7
        %v6050 = vsub.s32 %v1262, %v6049
        %v6051 = vrot.slane %v5935, %v6050
        %v6052 = vsel %vm1267, %v6051, %v6047
        %v6053 = vlaneseq
        %v6054 = vshrl.u32 %v6053, 7
        %v6055 = vsub.s32 %v1243, %v6054
        %v6056 = vrot.slane %v5938, %v6055
        %v6057 = vlaneseq
        %v6058 = vshrl.u32 %v6057, 7
        %v6059 = vsub.s32 %v1248, %v6058
        %v6060 = vrot.slane %v5941, %v6059
        %v6061 = vsel %vm1253, %v6060, %v6056
        %v6062 = vlaneseq
        %v6063 = vshrl.u32 %v6062, 7
        %v6064 = vsub.s32 %v1255, %v6063
        %v6065 = vrot.slane %v5944, %v6064
        %v6066 = vsel %vm1260, %v6065, %v6061
        %v6067 = vlaneseq
        %v6068 = vshrl.u32 %v6067, 7
        %v6069 = vsub.s32 %v1262, %v6068
        %v6070 = vrot.slane %v5947, %v6069
        %v6071 = vsel %vm1267, %v6070, %v6066
        %v6072 = vlaneseq
        %v6073 = vshrl.u32 %v6072, 7
        %v6074 = vsub.s32 %v1243, %v6073
        %v6075 = vrot.slane %v5950, %v6074
        %v6076 = vlaneseq
        %v6077 = vshrl.u32 %v6076, 7
        %v6078 = vsub.s32 %v1248, %v6077
        %v6079 = vrot.slane %v5953, %v6078
        %v6080 = vsel %vm1253, %v6079, %v6075
        %v6081 = vlaneseq
        %v6082 = vshrl.u32 %v6081, 7
        %v6083 = vsub.s32 %v1255, %v6082
        %v6084 = vrot.slane %v5956, %v6083
        %v6085 = vsel %vm1260, %v6084, %v6080
        %v6086 = vlaneseq
        %v6087 = vshrl.u32 %v6086, 7
        %v6088 = vsub.s32 %v1262, %v6087
        %v6089 = vrot.slane %v5959, %v6088
        %v6090 = vsel %vm1267, %v6089, %v6085
        %v6091 = vlaneseq
        %v6092 = vshrl.u32 %v6091, 7
        %v6093 = vsub.s32 %v1243, %v6092
        %v6094 = vrot.slane %v5962, %v6093
        %v6095 = vlaneseq
        %v6096 = vshrl.u32 %v6095, 7
        %v6097 = vsub.s32 %v1248, %v6096
        %v6098 = vrot.slane %v5965, %v6097
        %v6099 = vsel %vm1253, %v6098, %v6094
        %v6100 = vlaneseq
        %v6101 = vshrl.u32 %v6100, 7
        %v6102 = vsub.s32 %v1255, %v6101
        %v6103 = vrot.slane %v5968, %v6102
        %v6104 = vsel %vm1260, %v6103, %v6099
        %v6105 = vlaneseq
        %v6106 = vshrl.u32 %v6105, 7
        %v6107 = vsub.s32 %v1262, %v6106
        %v6108 = vrot.slane %v5971, %v6107
        %v6109 = vsel %vm1267, %v6108, %v6104
        %v6110 = vlaneseq
        %v6111 = vshrl.u32 %v6110, 7
        %v6112 = vsub.s32 %v1243, %v6111
        %v6113 = vrot.slane %v5974, %v6112
        %v6114 = vlaneseq
        %v6115 = vshrl.u32 %v6114, 7
        %v6116 = vsub.s32 %v1248, %v6115
        %v6117 = vrot.slane %v5977, %v6116
        %v6118 = vsel %vm1253, %v6117, %v6113
        %v6119 = vlaneseq
        %v6120 = vshrl.u32 %v6119, 7
        %v6121 = vsub.s32 %v1255, %v6120
        %v6122 = vrot.slane %v5980, %v6121
        %v6123 = vsel %vm1260, %v6122, %v6118
        %v6124 = vlaneseq
        %v6125 = vshrl.u32 %v6124, 7
        %v6126 = vsub.s32 %v1262, %v6125
        %v6127 = vrot.slane %v5983, %v6126
        %v6128 = vsel %vm1267, %v6127, %v6123
        %v6129 = vlaneseq
        %v6130 = vshrl.u32 %v6129, 7
        %v6131 = vsub.s32 %v1243, %v6130
        %v6132 = vrot.slane %v5986, %v6131
        %v6133 = vlaneseq
        %v6134 = vshrl.u32 %v6133, 7
        %v6135 = vsub.s32 %v1248, %v6134
        %v6136 = vrot.slane %v5989, %v6135
        %v6137 = vsel %vm1253, %v6136, %v6132
        %v6138 = vlaneseq
        %v6139 = vshrl.u32 %v6138, 7
        %v6140 = vsub.s32 %v1255, %v6139
        %v6141 = vrot.slane %v5992, %v6140
        %v6142 = vsel %vm1260, %v6141, %v6137
        %v6143 = vlaneseq
        %v6144 = vshrl.u32 %v6143, 7
        %v6145 = vsub.s32 %v1262, %v6144
        %v6146 = vrot.slane %v5995, %v6145
        %v6147 = vsel %vm1267, %v6146, %v6142
        %v6148 = vsel %vm1402, %v6033, %v6014
        %v6149 = vsel %vm1404, %v6052, %v6148
        %v6150 = vsel %vm1406, %v6071, %v6149
        %v6151 = vsel %vm1408, %v6090, %v6150
        %v6152 = vsel %vm1410, %v6109, %v6151
        %v6153 = vsel %vm1412, %v6128, %v6152
        %v6154 = vsel %vm1414, %v6147, %v6153
        %s6156 = scalar_lea.vmem [#allocation2], 48
        %6157 = vst.msk [vmem:[%s6156] sm:$0xff] %vm517, %v6154
        %s6158 = scalar_lea.vmem %s316, 56
        %v6159 = vld [vmem:[%s6158] sm:$0xff]
        %v6160 = vsel %vm1404, %v6014, %v6014
        %v6161 = vsel %vm1406, %v6014, %v6160
        %v6162 = vsel %vm1408, %v6014, %v6161
        %v6163 = vsel %vm1410, %v6014, %v6162
        %v6164 = vsel %vm1412, %v6014, %v6163
        %v6165 = vsel %vm1414, %v6014, %v6164
        %v6166 = vsel %vm1404, %v6033, %v6033
        %v6167 = vsel %vm1406, %v6033, %v6166
        %v6168 = vsel %vm1408, %v6033, %v6167
        %v6169 = vsel %vm1410, %v6033, %v6168
        %v6170 = vsel %vm1412, %v6033, %v6169
        %v6171 = vsel %vm1414, %v6033, %v6170
        %v6172 = vsel %vm1404, %v6052, %v6052
        %v6173 = vsel %vm1406, %v6052, %v6172
        %v6174 = vsel %vm1408, %v6052, %v6173
        %v6175 = vsel %vm1410, %v6052, %v6174
        %v6176 = vsel %vm1412, %v6052, %v6175
        %v6177 = vsel %vm1414, %v6052, %v6176
        %v6178 = vsel %vm1404, %v6071, %v6071
        %v6179 = vsel %vm1406, %v6071, %v6178
        %v6180 = vsel %vm1408, %v6071, %v6179
        %v6181 = vsel %vm1410, %v6071, %v6180
        %v6182 = vsel %vm1412, %v6071, %v6181
        %v6183 = vsel %vm1414, %v6071, %v6182
        %v6184 = vsel %vm1404, %v6090, %v6090
        %v6185 = vsel %vm1406, %v6090, %v6184
        %v6186 = vsel %vm1408, %v6090, %v6185
        %v6187 = vsel %vm1410, %v6090, %v6186
        %v6188 = vsel %vm1412, %v6090, %v6187
        %v6189 = vsel %vm1414, %v6090, %v6188
        %v6190 = vsel %vm1404, %v6109, %v6109
        %v6191 = vsel %vm1406, %v6109, %v6190
        %v6192 = vsel %vm1408, %v6109, %v6191
        %v6193 = vsel %vm1410, %v6109, %v6192
        %v6194 = vsel %vm1412, %v6109, %v6193
        %v6195 = vsel %vm1414, %v6109, %v6194
        %v6196 = vsel %vm1404, %v6128, %v6128
        %v6197 = vsel %vm1406, %v6128, %v6196
        %v6198 = vsel %vm1408, %v6128, %v6197
        %v6199 = vsel %vm1410, %v6128, %v6198
        %v6200 = vsel %vm1412, %v6128, %v6199
        %v6201 = vsel %vm1414, %v6128, %v6200
        %v6202 = vsel %vm1404, %v6147, %v6147
        %v6203 = vsel %vm1406, %v6147, %v6202
        %v6204 = vsel %vm1408, %v6147, %v6203
        %v6205 = vsel %vm1410, %v6147, %v6204
        %v6206 = vsel %vm1412, %v6147, %v6205
        %v6207 = vsel %vm1414, %v6147, %v6206
        %v6216 = vmul.f32 %v328, %v6165
        %v6217 = vmul.f32 %v329, %v6165
        %v6218 = vmul.f32 %v330, %v6165
        %v6219 = vmul.f32 %v331, %v6165
        %v6220 = vmul.f32 %v332, %v6171
        %v6221 = vmul.f32 %v333, %v6171
        %v6222 = vmul.f32 %v334, %v6171
        %v6223 = vmul.f32 %v335, %v6171
        %v6224 = vmul.f32 %v336, %v6177
        %v6225 = vmul.f32 %v337, %v6177
        %v6226 = vmul.f32 %v338, %v6177
        %v6227 = vmul.f32 %v339, %v6177
        %v6228 = vmul.f32 %v340, %v6183
        %v6229 = vmul.f32 %v341, %v6183
        %v6230 = vmul.f32 %v342, %v6183
        %v6231 = vmul.f32 %v343, %v6183
        %v6232 = vmul.f32 %v344, %v6189
        %v6233 = vmul.f32 %v345, %v6189
        %v6234 = vmul.f32 %v346, %v6189
        %v6235 = vmul.f32 %v347, %v6189
        %v6236 = vmul.f32 %v348, %v6195
        %v6237 = vmul.f32 %v349, %v6195
        %v6238 = vmul.f32 %v350, %v6195
        %v6239 = vmul.f32 %v351, %v6195
        %v6240 = vmul.f32 %v352, %v6201
        %v6241 = vmul.f32 %v353, %v6201
        %v6242 = vmul.f32 %v354, %v6201
        %v6243 = vmul.f32 %v355, %v6201
        %v6244 = vmul.f32 %v356, %v6207
        %v6245 = vmul.f32 %v357, %v6207
        %v6246 = vmul.f32 %v358, %v6207
        %v6247 = vmul.f32 %v359, %v6207
        %v6248 = vsel %vm517, %v6216, 0.0
        %6249 = vadd.xlane.f32.xlu0 %v6248
        %v6250 = vpop.xlane.xlu0 %6249
        %v6251 = vsel %vm517, %v6217, 0.0
        %6252 = vadd.xlane.f32.xlu0 %v6251
        %v6253 = vpop.xlane.xlu0 %6252
        %v6254 = vsel %vm517, %v6218, 0.0
        %6255 = vadd.xlane.f32.xlu0 %v6254
        %v6256 = vpop.xlane.xlu0 %6255
        %v6257 = vsel %vm517, %v6219, 0.0
        %6258 = vadd.xlane.f32.xlu0 %v6257
        %v6259 = vpop.xlane.xlu0 %6258
        %v6260 = vsel %vm517, %v6220, 0.0
        %6261 = vadd.xlane.f32.xlu0 %v6260
        %v6262 = vpop.xlane.xlu0 %6261
        %v6263 = vsel %vm517, %v6221, 0.0
        %6264 = vadd.xlane.f32.xlu0 %v6263
        %v6265 = vpop.xlane.xlu0 %6264
        %v6266 = vsel %vm517, %v6222, 0.0
        %6267 = vadd.xlane.f32.xlu0 %v6266
        %v6268 = vpop.xlane.xlu0 %6267
        %v6269 = vsel %vm517, %v6223, 0.0
        %6270 = vadd.xlane.f32.xlu0 %v6269
        %v6271 = vpop.xlane.xlu0 %6270
        %v6272 = vsel %vm517, %v6224, 0.0
        %6273 = vadd.xlane.f32.xlu0 %v6272
        %v6274 = vpop.xlane.xlu0 %6273
        %v6275 = vsel %vm517, %v6225, 0.0
        %6276 = vadd.xlane.f32.xlu0 %v6275
        %v6277 = vpop.xlane.xlu0 %6276
        %v6278 = vsel %vm517, %v6226, 0.0
        %6279 = vadd.xlane.f32.xlu0 %v6278
        %v6280 = vpop.xlane.xlu0 %6279
        %v6281 = vsel %vm517, %v6227, 0.0
        %6282 = vadd.xlane.f32.xlu0 %v6281
        %v6283 = vpop.xlane.xlu0 %6282
        %v6284 = vsel %vm517, %v6228, 0.0
        %6285 = vadd.xlane.f32.xlu0 %v6284
        %v6286 = vpop.xlane.xlu0 %6285
        %v6287 = vsel %vm517, %v6229, 0.0
        %6288 = vadd.xlane.f32.xlu0 %v6287
        %v6289 = vpop.xlane.xlu0 %6288
        %v6290 = vsel %vm517, %v6230, 0.0
        %6291 = vadd.xlane.f32.xlu0 %v6290
        %v6292 = vpop.xlane.xlu0 %6291
        %v6293 = vsel %vm517, %v6231, 0.0
        %6294 = vadd.xlane.f32.xlu0 %v6293
        %v6295 = vpop.xlane.xlu0 %6294
        %v6296 = vsel %vm517, %v6232, 0.0
        %6297 = vadd.xlane.f32.xlu0 %v6296
        %v6298 = vpop.xlane.xlu0 %6297
        %v6299 = vsel %vm517, %v6233, 0.0
        %6300 = vadd.xlane.f32.xlu0 %v6299
        %v6301 = vpop.xlane.xlu0 %6300
        %v6302 = vsel %vm517, %v6234, 0.0
        %6303 = vadd.xlane.f32.xlu0 %v6302
        %v6304 = vpop.xlane.xlu0 %6303
        %v6305 = vsel %vm517, %v6235, 0.0
        %6306 = vadd.xlane.f32.xlu0 %v6305
        %v6307 = vpop.xlane.xlu0 %6306
        %v6308 = vsel %vm517, %v6236, 0.0
        %6309 = vadd.xlane.f32.xlu0 %v6308
        %v6310 = vpop.xlane.xlu0 %6309
        %v6311 = vsel %vm517, %v6237, 0.0
        %6312 = vadd.xlane.f32.xlu0 %v6311
        %v6313 = vpop.xlane.xlu0 %6312
        %v6314 = vsel %vm517, %v6238, 0.0
        %6315 = vadd.xlane.f32.xlu0 %v6314
        %v6316 = vpop.xlane.xlu0 %6315
        %v6317 = vsel %vm517, %v6239, 0.0
        %6318 = vadd.xlane.f32.xlu0 %v6317
        %v6319 = vpop.xlane.xlu0 %6318
        %v6320 = vsel %vm517, %v6240, 0.0
        %6321 = vadd.xlane.f32.xlu0 %v6320
        %v6322 = vpop.xlane.xlu0 %6321
        %v6323 = vsel %vm517, %v6241, 0.0
        %6324 = vadd.xlane.f32.xlu0 %v6323
        %v6325 = vpop.xlane.xlu0 %6324
        %v6326 = vsel %vm517, %v6242, 0.0
        %6327 = vadd.xlane.f32.xlu0 %v6326
        %v6328 = vpop.xlane.xlu0 %6327
        %v6329 = vsel %vm517, %v6243, 0.0
        %6330 = vadd.xlane.f32.xlu0 %v6329
        %v6331 = vpop.xlane.xlu0 %6330
        %v6332 = vsel %vm517, %v6244, 0.0
        %6333 = vadd.xlane.f32.xlu0 %v6332
        %v6334 = vpop.xlane.xlu0 %6333
        %v6335 = vsel %vm517, %v6245, 0.0
        %6336 = vadd.xlane.f32.xlu0 %v6335
        %v6337 = vpop.xlane.xlu0 %6336
        %v6338 = vsel %vm517, %v6246, 0.0
        %6339 = vadd.xlane.f32.xlu0 %v6338
        %v6340 = vpop.xlane.xlu0 %6339
        %v6341 = vsel %vm517, %v6247, 0.0
        %6342 = vadd.xlane.f32.xlu0 %v6341
        %v6343 = vpop.xlane.xlu0 %6342
        %v6345 = vcombine.high %v6159, %v6159
        %v6347 = vunpack.c.l.s4 1966171168
        %v6348 = vunpack.c.0.s8 %v6347
        %v6349 = vlaneseq
        %v6350 = vshrl.u32 %v6349, 7
        %v6351 = vsub.s32 %v6348, %v6350
        %v6352 = vrot.slane %v6159, %v6351
        %v6354 = vunpack.c.l.s4 1966171168
        %v6355 = vunpack.c.0.s8 %v6354
        %v6356 = vlaneseq
        %v6357 = vshrl.u32 %v6356, 7
        %v6358 = vsub.s32 %v6355, %v6357
        %v6359 = vrot.slane %v6345, %v6358
        %v6360 = vcombine.high %v6352, %v6352
        %v6361 = vcombine.high %v6359, %v6359
        %v6363 = vunpack.c.l.s4 1966171168
        %v6364 = vunpack.c.0.s8 %v6363
        %v6365 = vlaneseq
        %v6366 = vshrl.u32 %v6365, 7
        %v6367 = vsub.s32 %v6364, %v6366
        %v6368 = vrot.slane %v6352, %v6367
        %v6370 = vunpack.c.l.s4 1966171168
        %v6371 = vunpack.c.0.s8 %v6370
        %v6372 = vlaneseq
        %v6373 = vshrl.u32 %v6372, 7
        %v6374 = vsub.s32 %v6371, %v6373
        %v6375 = vrot.slane %v6359, %v6374
        %v6377 = vunpack.c.l.s4 1966171168
        %v6378 = vunpack.c.0.s8 %v6377
        %v6379 = vlaneseq
        %v6380 = vshrl.u32 %v6379, 7
        %v6381 = vsub.s32 %v6378, %v6380
        %v6382 = vrot.slane %v6360, %v6381
        %v6384 = vunpack.c.l.s4 1966171168
        %v6385 = vunpack.c.0.s8 %v6384
        %v6386 = vlaneseq
        %v6387 = vshrl.u32 %v6386, 7
        %v6388 = vsub.s32 %v6385, %v6387
        %v6389 = vrot.slane %v6361, %v6388
        %v6390 = vcombine.high %v6368, %v6368
        %v6391 = vcombine.high %v6375, %v6375
        %v6392 = vcombine.high %v6382, %v6382
        %v6393 = vcombine.high %v6389, %v6389
        %v6394 = vlaneseq
        %v6395 = vshrl.u32 %v6394, 7
        %v6396 = vsub.s32 0, %v6395
        %v6397 = vrot.slane %v6368, %v6396
        %v6398 = vlaneseq
        %v6399 = vshrl.u32 %v6398, 7
        %v6400 = vsub.s32 0, %v6399
        %v6401 = vrot.slane %v6382, %v6400
        %v6402 = vlaneseq
        %v6403 = vshrl.u32 %v6402, 7
        %v6404 = vsub.s32 0, %v6403
        %v6405 = vrot.slane %v6390, %v6404
        %v6406 = vlaneseq
        %v6407 = vshrl.u32 %v6406, 7
        %v6408 = vsub.s32 0, %v6407
        %v6409 = vrot.slane %v6392, %v6408
        %v6410 = vlaneseq
        %v6411 = vshrl.u32 %v6410, 7
        %v6412 = vsub.s32 0, %v6411
        %v6413 = vrot.slane %v6375, %v6412
        %v6414 = vlaneseq
        %v6415 = vshrl.u32 %v6414, 7
        %v6416 = vsub.s32 0, %v6415
        %v6417 = vrot.slane %v6389, %v6416
        %v6418 = vlaneseq
        %v6419 = vshrl.u32 %v6418, 7
        %v6420 = vsub.s32 0, %v6419
        %v6421 = vrot.slane %v6391, %v6420
        %v6422 = vlaneseq
        %v6423 = vshrl.u32 %v6422, 7
        %v6424 = vsub.s32 0, %v6423
        %v6425 = vrot.slane %v6393, %v6424
        %v6434 = vmul.f32 %v360, %v6397
        %v6435 = vmul.f32 %v361, %v6397
        %v6436 = vmul.f32 %v362, %v6397
        %v6437 = vmul.f32 %v363, %v6397
        %v6438 = vmul.f32 %v364, %v6401
        %v6439 = vmul.f32 %v365, %v6401
        %v6440 = vmul.f32 %v366, %v6401
        %v6441 = vmul.f32 %v367, %v6401
        %v6442 = vmul.f32 %v368, %v6405
        %v6443 = vmul.f32 %v369, %v6405
        %v6444 = vmul.f32 %v370, %v6405
        %v6445 = vmul.f32 %v371, %v6405
        %v6446 = vmul.f32 %v372, %v6409
        %v6447 = vmul.f32 %v373, %v6409
        %v6448 = vmul.f32 %v374, %v6409
        %v6449 = vmul.f32 %v375, %v6409
        %v6450 = vmul.f32 %v376, %v6413
        %v6451 = vmul.f32 %v377, %v6413
        %v6452 = vmul.f32 %v378, %v6413
        %v6453 = vmul.f32 %v379, %v6413
        %v6454 = vmul.f32 %v380, %v6417
        %v6455 = vmul.f32 %v381, %v6417
        %v6456 = vmul.f32 %v382, %v6417
        %v6457 = vmul.f32 %v383, %v6417
        %v6458 = vmul.f32 %v384, %v6421
        %v6459 = vmul.f32 %v385, %v6421
        %v6460 = vmul.f32 %v386, %v6421
        %v6461 = vmul.f32 %v387, %v6421
        %v6462 = vmul.f32 %v388, %v6425
        %v6463 = vmul.f32 %v389, %v6425
        %v6464 = vmul.f32 %v390, %v6425
        %v6465 = vmul.f32 %v391, %v6425
        %v6466 = vsel %vm736, %v6434, 0.0
        %6467 = vadd.xlane.f32.xlu0 %v6466
        %v6468 = vpop.xlane.xlu0 %6467
        %v6469 = vsel %vm736, %v6435, 0.0
        %6470 = vadd.xlane.f32.xlu0 %v6469
        %v6471 = vpop.xlane.xlu0 %6470
        %v6472 = vsel %vm736, %v6436, 0.0
        %6473 = vadd.xlane.f32.xlu0 %v6472
        %v6474 = vpop.xlane.xlu0 %6473
        %v6475 = vsel %vm736, %v6437, 0.0
        %6476 = vadd.xlane.f32.xlu0 %v6475
        %v6477 = vpop.xlane.xlu0 %6476
        %v6478 = vsel %vm736, %v6438, 0.0
        %6479 = vadd.xlane.f32.xlu0 %v6478
        %v6480 = vpop.xlane.xlu0 %6479
        %v6481 = vsel %vm736, %v6439, 0.0
        %6482 = vadd.xlane.f32.xlu0 %v6481
        %v6483 = vpop.xlane.xlu0 %6482
        %v6484 = vsel %vm736, %v6440, 0.0
        %6485 = vadd.xlane.f32.xlu0 %v6484
        %v6486 = vpop.xlane.xlu0 %6485
        %v6487 = vsel %vm736, %v6441, 0.0
        %6488 = vadd.xlane.f32.xlu0 %v6487
        %v6489 = vpop.xlane.xlu0 %6488
        %v6490 = vsel %vm736, %v6442, 0.0
        %6491 = vadd.xlane.f32.xlu0 %v6490
        %v6492 = vpop.xlane.xlu0 %6491
        %v6493 = vsel %vm736, %v6443, 0.0
        %6494 = vadd.xlane.f32.xlu0 %v6493
        %v6495 = vpop.xlane.xlu0 %6494
        %v6496 = vsel %vm736, %v6444, 0.0
        %6497 = vadd.xlane.f32.xlu0 %v6496
        %v6498 = vpop.xlane.xlu0 %6497
        %v6499 = vsel %vm736, %v6445, 0.0
        %6500 = vadd.xlane.f32.xlu0 %v6499
        %v6501 = vpop.xlane.xlu0 %6500
        %v6502 = vsel %vm736, %v6446, 0.0
        %6503 = vadd.xlane.f32.xlu0 %v6502
        %v6504 = vpop.xlane.xlu0 %6503
        %v6505 = vsel %vm736, %v6447, 0.0
        %6506 = vadd.xlane.f32.xlu0 %v6505
        %v6507 = vpop.xlane.xlu0 %6506
        %v6508 = vsel %vm736, %v6448, 0.0
        %6509 = vadd.xlane.f32.xlu0 %v6508
        %v6510 = vpop.xlane.xlu0 %6509
        %v6511 = vsel %vm736, %v6449, 0.0
        %6512 = vadd.xlane.f32.xlu0 %v6511
        %v6513 = vpop.xlane.xlu0 %6512
        %v6514 = vsel %vm736, %v6450, 0.0
        %6515 = vadd.xlane.f32.xlu0 %v6514
        %v6516 = vpop.xlane.xlu0 %6515
        %v6517 = vsel %vm736, %v6451, 0.0
        %6518 = vadd.xlane.f32.xlu0 %v6517
        %v6519 = vpop.xlane.xlu0 %6518
        %v6520 = vsel %vm736, %v6452, 0.0
        %6521 = vadd.xlane.f32.xlu0 %v6520
        %v6522 = vpop.xlane.xlu0 %6521
        %v6523 = vsel %vm736, %v6453, 0.0
        %6524 = vadd.xlane.f32.xlu0 %v6523
        %v6525 = vpop.xlane.xlu0 %6524
        %v6526 = vsel %vm736, %v6454, 0.0
        %6527 = vadd.xlane.f32.xlu0 %v6526
        %v6528 = vpop.xlane.xlu0 %6527
        %v6529 = vsel %vm736, %v6455, 0.0
        %6530 = vadd.xlane.f32.xlu0 %v6529
        %v6531 = vpop.xlane.xlu0 %6530
        %v6532 = vsel %vm736, %v6456, 0.0
        %6533 = vadd.xlane.f32.xlu0 %v6532
        %v6534 = vpop.xlane.xlu0 %6533
        %v6535 = vsel %vm736, %v6457, 0.0
        %6536 = vadd.xlane.f32.xlu0 %v6535
        %v6537 = vpop.xlane.xlu0 %6536
        %v6538 = vsel %vm736, %v6458, 0.0
        %6539 = vadd.xlane.f32.xlu0 %v6538
        %v6540 = vpop.xlane.xlu0 %6539
        %v6541 = vsel %vm736, %v6459, 0.0
        %6542 = vadd.xlane.f32.xlu0 %v6541
        %v6543 = vpop.xlane.xlu0 %6542
        %v6544 = vsel %vm736, %v6460, 0.0
        %6545 = vadd.xlane.f32.xlu0 %v6544
        %v6546 = vpop.xlane.xlu0 %6545
        %v6547 = vsel %vm736, %v6461, 0.0
        %6548 = vadd.xlane.f32.xlu0 %v6547
        %v6549 = vpop.xlane.xlu0 %6548
        %v6550 = vsel %vm736, %v6462, 0.0
        %6551 = vadd.xlane.f32.xlu0 %v6550
        %v6552 = vpop.xlane.xlu0 %6551
        %v6553 = vsel %vm736, %v6463, 0.0
        %6554 = vadd.xlane.f32.xlu0 %v6553
        %v6555 = vpop.xlane.xlu0 %6554
        %v6556 = vsel %vm736, %v6464, 0.0
        %6557 = vadd.xlane.f32.xlu0 %v6556
        %v6558 = vpop.xlane.xlu0 %6557
        %v6559 = vsel %vm736, %v6465, 0.0
        %6560 = vadd.xlane.f32.xlu0 %v6559
        %v6561 = vpop.xlane.xlu0 %6560
        %v6562 = vadd.f32 %v6250, %v6468
        %v6563 = vadd.f32 %v6253, %v6471
        %v6564 = vadd.f32 %v6256, %v6474
        %v6565 = vadd.f32 %v6259, %v6477
        %v6566 = vadd.f32 %v6262, %v6480
        %v6567 = vadd.f32 %v6265, %v6483
        %v6568 = vadd.f32 %v6268, %v6486
        %v6569 = vadd.f32 %v6271, %v6489
        %v6570 = vadd.f32 %v6274, %v6492
        %v6571 = vadd.f32 %v6277, %v6495
        %v6572 = vadd.f32 %v6280, %v6498
        %v6573 = vadd.f32 %v6283, %v6501
        %v6574 = vadd.f32 %v6286, %v6504
        %v6575 = vadd.f32 %v6289, %v6507
        %v6576 = vadd.f32 %v6292, %v6510
        %v6577 = vadd.f32 %v6295, %v6513
        %v6578 = vadd.f32 %v6298, %v6516
        %v6579 = vadd.f32 %v6301, %v6519
        %v6580 = vadd.f32 %v6304, %v6522
        %v6581 = vadd.f32 %v6307, %v6525
        %v6582 = vadd.f32 %v6310, %v6528
        %v6583 = vadd.f32 %v6313, %v6531
        %v6584 = vadd.f32 %v6316, %v6534
        %v6585 = vadd.f32 %v6319, %v6537
        %v6586 = vadd.f32 %v6322, %v6540
        %v6587 = vadd.f32 %v6325, %v6543
        %v6588 = vadd.f32 %v6328, %v6546
        %v6589 = vadd.f32 %v6331, %v6549
        %v6590 = vadd.f32 %v6334, %v6552
        %v6591 = vadd.f32 %v6337, %v6555
        %v6592 = vadd.f32 %v6340, %v6558
        %v6593 = vadd.f32 %v6343, %v6561
        %v6594 = vadd.f32 %v6562, %v872
        %v6595 = vadd.f32 %v6563, %v876
        %v6596 = vadd.f32 %v6564, %v880
        %v6597 = vadd.f32 %v6565, %v884
        %v6598 = vadd.f32 %v6566, %v891
        %v6599 = vadd.f32 %v6567, %v895
        %v6600 = vadd.f32 %v6568, %v899
        %v6601 = vadd.f32 %v6569, %v903
        %v6602 = vadd.f32 %v6570, %v910
        %v6603 = vadd.f32 %v6571, %v914
        %v6604 = vadd.f32 %v6572, %v918
        %v6605 = vadd.f32 %v6573, %v922
        %v6606 = vadd.f32 %v6574, %v929
        %v6607 = vadd.f32 %v6575, %v933
        %v6608 = vadd.f32 %v6576, %v937
        %v6609 = vadd.f32 %v6577, %v941
        %v6610 = vadd.f32 %v6578, %v948
        %v6611 = vadd.f32 %v6579, %v952
        %v6612 = vadd.f32 %v6580, %v956
        %v6613 = vadd.f32 %v6581, %v960
        %v6614 = vadd.f32 %v6582, %v967
        %v6615 = vadd.f32 %v6583, %v971
        %v6616 = vadd.f32 %v6584, %v975
        %v6617 = vadd.f32 %v6585, %v979
        %v6618 = vadd.f32 %v6586, %v986
        %v6619 = vadd.f32 %v6587, %v990
        %v6620 = vadd.f32 %v6588, %v994
        %v6621 = vadd.f32 %v6589, %v998
        %v6622 = vadd.f32 %v6590, %v1005
        %v6623 = vadd.f32 %v6591, %v1009
        %v6624 = vadd.f32 %v6592, %v1013
        %v6625 = vadd.f32 %v6593, %v1017
        %v6626 = vtanh.pop %v6594
        %v6627 = vtanh.pop %v6595
        %v6628 = vtanh.pop %v6596
        %v6629 = vtanh.pop %v6597
        %v6630 = vtanh.pop %v6598
        %v6631 = vtanh.pop %v6599
        %v6632 = vtanh.pop %v6600
        %v6633 = vtanh.pop %v6601
        %v6634 = vtanh.pop %v6602
        %v6635 = vtanh.pop %v6603
        %v6636 = vtanh.pop %v6604
        %v6637 = vtanh.pop %v6605
        %v6638 = vtanh.pop %v6606
        %v6639 = vtanh.pop %v6607
        %v6640 = vtanh.pop %v6608
        %v6641 = vtanh.pop %v6609
        %v6642 = vtanh.pop %v6610
        %v6643 = vtanh.pop %v6611
        %v6644 = vtanh.pop %v6612
        %v6645 = vtanh.pop %v6613
        %v6646 = vtanh.pop %v6614
        %v6647 = vtanh.pop %v6615
        %v6648 = vtanh.pop %v6616
        %v6649 = vtanh.pop %v6617
        %v6650 = vtanh.pop %v6618
        %v6651 = vtanh.pop %v6619
        %v6652 = vtanh.pop %v6620
        %v6653 = vtanh.pop %v6621
        %v6654 = vtanh.pop %v6622
        %v6655 = vtanh.pop %v6623
        %v6656 = vtanh.pop %v6624
        %v6657 = vtanh.pop %v6625
        %6690 = vset.pattern.permute.xlu0 0
        %6691 = vperm.xlu0 %6690, %v6626
        %v6692 = vpop.permute.xlu0 %6691
        %6693 = vset.pattern.permute.xlu0 0
        %6694 = vperm.xlu0 %6693, %v6627
        %v6695 = vpop.permute.xlu0 %6694
        %6696 = vset.pattern.permute.xlu0 0
        %6697 = vperm.xlu0 %6696, %v6628
        %v6698 = vpop.permute.xlu0 %6697
        %6699 = vset.pattern.permute.xlu0 0
        %6700 = vperm.xlu0 %6699, %v6629
        %v6701 = vpop.permute.xlu0 %6700
        %6702 = vset.pattern.permute.xlu0 0
        %6703 = vperm.xlu0 %6702, %v6630
        %v6704 = vpop.permute.xlu0 %6703
        %6705 = vset.pattern.permute.xlu0 0
        %6706 = vperm.xlu0 %6705, %v6631
        %v6707 = vpop.permute.xlu0 %6706
        %6708 = vset.pattern.permute.xlu0 0
        %6709 = vperm.xlu0 %6708, %v6632
        %v6710 = vpop.permute.xlu0 %6709
        %6711 = vset.pattern.permute.xlu0 0
        %6712 = vperm.xlu0 %6711, %v6633
        %v6713 = vpop.permute.xlu0 %6712
        %6714 = vset.pattern.permute.xlu0 0
        %6715 = vperm.xlu0 %6714, %v6634
        %v6716 = vpop.permute.xlu0 %6715
        %6717 = vset.pattern.permute.xlu0 0
        %6718 = vperm.xlu0 %6717, %v6635
        %v6719 = vpop.permute.xlu0 %6718
        %6720 = vset.pattern.permute.xlu0 0
        %6721 = vperm.xlu0 %6720, %v6636
        %v6722 = vpop.permute.xlu0 %6721
        %6723 = vset.pattern.permute.xlu0 0
        %6724 = vperm.xlu0 %6723, %v6637
        %v6725 = vpop.permute.xlu0 %6724
        %6726 = vset.pattern.permute.xlu0 0
        %6727 = vperm.xlu0 %6726, %v6638
        %v6728 = vpop.permute.xlu0 %6727
        %6729 = vset.pattern.permute.xlu0 0
        %6730 = vperm.xlu0 %6729, %v6639
        %v6731 = vpop.permute.xlu0 %6730
        %6732 = vset.pattern.permute.xlu0 0
        %6733 = vperm.xlu0 %6732, %v6640
        %v6734 = vpop.permute.xlu0 %6733
        %6735 = vset.pattern.permute.xlu0 0
        %6736 = vperm.xlu0 %6735, %v6641
        %v6737 = vpop.permute.xlu0 %6736
        %6738 = vset.pattern.permute.xlu0 0
        %6739 = vperm.xlu0 %6738, %v6642
        %v6740 = vpop.permute.xlu0 %6739
        %6741 = vset.pattern.permute.xlu0 0
        %6742 = vperm.xlu0 %6741, %v6643
        %v6743 = vpop.permute.xlu0 %6742
        %6744 = vset.pattern.permute.xlu0 0
        %6745 = vperm.xlu0 %6744, %v6644
        %v6746 = vpop.permute.xlu0 %6745
        %6747 = vset.pattern.permute.xlu0 0
        %6748 = vperm.xlu0 %6747, %v6645
        %v6749 = vpop.permute.xlu0 %6748
        %6750 = vset.pattern.permute.xlu0 0
        %6751 = vperm.xlu0 %6750, %v6646
        %v6752 = vpop.permute.xlu0 %6751
        %6753 = vset.pattern.permute.xlu0 0
        %6754 = vperm.xlu0 %6753, %v6647
        %v6755 = vpop.permute.xlu0 %6754
        %6756 = vset.pattern.permute.xlu0 0
        %6757 = vperm.xlu0 %6756, %v6648
        %v6758 = vpop.permute.xlu0 %6757
        %6759 = vset.pattern.permute.xlu0 0
        %6760 = vperm.xlu0 %6759, %v6649
        %v6761 = vpop.permute.xlu0 %6760
        %6762 = vset.pattern.permute.xlu0 0
        %6763 = vperm.xlu0 %6762, %v6650
        %v6764 = vpop.permute.xlu0 %6763
        %6765 = vset.pattern.permute.xlu0 0
        %6766 = vperm.xlu0 %6765, %v6651
        %v6767 = vpop.permute.xlu0 %6766
        %6768 = vset.pattern.permute.xlu0 0
        %6769 = vperm.xlu0 %6768, %v6652
        %v6770 = vpop.permute.xlu0 %6769
        %6771 = vset.pattern.permute.xlu0 0
        %6772 = vperm.xlu0 %6771, %v6653
        %v6773 = vpop.permute.xlu0 %6772
        %6774 = vset.pattern.permute.xlu0 0
        %6775 = vperm.xlu0 %6774, %v6654
        %v6776 = vpop.permute.xlu0 %6775
        %6777 = vset.pattern.permute.xlu0 0
        %6778 = vperm.xlu0 %6777, %v6655
        %v6779 = vpop.permute.xlu0 %6778
        %6780 = vset.pattern.permute.xlu0 0
        %6781 = vperm.xlu0 %6780, %v6656
        %v6782 = vpop.permute.xlu0 %6781
        %6783 = vset.pattern.permute.xlu0 0
        %6784 = vperm.xlu0 %6783, %v6657
        %v6785 = vpop.permute.xlu0 %6784
        %v6786 = vlaneseq
        %v6787 = vshrl.u32 %v6786, 7
        %v6788 = vsub.s32 %v1243, %v6787
        %v6789 = vrot.slane %v6692, %v6788
        %v6790 = vlaneseq
        %v6791 = vshrl.u32 %v6790, 7
        %v6792 = vsub.s32 %v1248, %v6791
        %v6793 = vrot.slane %v6695, %v6792
        %v6794 = vsel %vm1253, %v6793, %v6789
        %v6795 = vlaneseq
        %v6796 = vshrl.u32 %v6795, 7
        %v6797 = vsub.s32 %v1255, %v6796
        %v6798 = vrot.slane %v6698, %v6797
        %v6799 = vsel %vm1260, %v6798, %v6794
        %v6800 = vlaneseq
        %v6801 = vshrl.u32 %v6800, 7
        %v6802 = vsub.s32 %v1262, %v6801
        %v6803 = vrot.slane %v6701, %v6802
        %v6804 = vsel %vm1267, %v6803, %v6799
        %v6805 = vlaneseq
        %v6806 = vshrl.u32 %v6805, 7
        %v6807 = vsub.s32 %v1243, %v6806
        %v6808 = vrot.slane %v6704, %v6807
        %v6809 = vlaneseq
        %v6810 = vshrl.u32 %v6809, 7
        %v6811 = vsub.s32 %v1248, %v6810
        %v6812 = vrot.slane %v6707, %v6811
        %v6813 = vsel %vm1253, %v6812, %v6808
        %v6814 = vlaneseq
        %v6815 = vshrl.u32 %v6814, 7
        %v6816 = vsub.s32 %v1255, %v6815
        %v6817 = vrot.slane %v6710, %v6816
        %v6818 = vsel %vm1260, %v6817, %v6813
        %v6819 = vlaneseq
        %v6820 = vshrl.u32 %v6819, 7
        %v6821 = vsub.s32 %v1262, %v6820
        %v6822 = vrot.slane %v6713, %v6821
        %v6823 = vsel %vm1267, %v6822, %v6818
        %v6824 = vlaneseq
        %v6825 = vshrl.u32 %v6824, 7
        %v6826 = vsub.s32 %v1243, %v6825
        %v6827 = vrot.slane %v6716, %v6826
        %v6828 = vlaneseq
        %v6829 = vshrl.u32 %v6828, 7
        %v6830 = vsub.s32 %v1248, %v6829
        %v6831 = vrot.slane %v6719, %v6830
        %v6832 = vsel %vm1253, %v6831, %v6827
        %v6833 = vlaneseq
        %v6834 = vshrl.u32 %v6833, 7
        %v6835 = vsub.s32 %v1255, %v6834
        %v6836 = vrot.slane %v6722, %v6835
        %v6837 = vsel %vm1260, %v6836, %v6832
        %v6838 = vlaneseq
        %v6839 = vshrl.u32 %v6838, 7
        %v6840 = vsub.s32 %v1262, %v6839
        %v6841 = vrot.slane %v6725, %v6840
        %v6842 = vsel %vm1267, %v6841, %v6837
        %v6843 = vlaneseq
        %v6844 = vshrl.u32 %v6843, 7
        %v6845 = vsub.s32 %v1243, %v6844
        %v6846 = vrot.slane %v6728, %v6845
        %v6847 = vlaneseq
        %v6848 = vshrl.u32 %v6847, 7
        %v6849 = vsub.s32 %v1248, %v6848
        %v6850 = vrot.slane %v6731, %v6849
        %v6851 = vsel %vm1253, %v6850, %v6846
        %v6852 = vlaneseq
        %v6853 = vshrl.u32 %v6852, 7
        %v6854 = vsub.s32 %v1255, %v6853
        %v6855 = vrot.slane %v6734, %v6854
        %v6856 = vsel %vm1260, %v6855, %v6851
        %v6857 = vlaneseq
        %v6858 = vshrl.u32 %v6857, 7
        %v6859 = vsub.s32 %v1262, %v6858
        %v6860 = vrot.slane %v6737, %v6859
        %v6861 = vsel %vm1267, %v6860, %v6856
        %v6862 = vlaneseq
        %v6863 = vshrl.u32 %v6862, 7
        %v6864 = vsub.s32 %v1243, %v6863
        %v6865 = vrot.slane %v6740, %v6864
        %v6866 = vlaneseq
        %v6867 = vshrl.u32 %v6866, 7
        %v6868 = vsub.s32 %v1248, %v6867
        %v6869 = vrot.slane %v6743, %v6868
        %v6870 = vsel %vm1253, %v6869, %v6865
        %v6871 = vlaneseq
        %v6872 = vshrl.u32 %v6871, 7
        %v6873 = vsub.s32 %v1255, %v6872
        %v6874 = vrot.slane %v6746, %v6873
        %v6875 = vsel %vm1260, %v6874, %v6870
        %v6876 = vlaneseq
        %v6877 = vshrl.u32 %v6876, 7
        %v6878 = vsub.s32 %v1262, %v6877
        %v6879 = vrot.slane %v6749, %v6878
        %v6880 = vsel %vm1267, %v6879, %v6875
        %v6881 = vlaneseq
        %v6882 = vshrl.u32 %v6881, 7
        %v6883 = vsub.s32 %v1243, %v6882
        %v6884 = vrot.slane %v6752, %v6883
        %v6885 = vlaneseq
        %v6886 = vshrl.u32 %v6885, 7
        %v6887 = vsub.s32 %v1248, %v6886
        %v6888 = vrot.slane %v6755, %v6887
        %v6889 = vsel %vm1253, %v6888, %v6884
        %v6890 = vlaneseq
        %v6891 = vshrl.u32 %v6890, 7
        %v6892 = vsub.s32 %v1255, %v6891
        %v6893 = vrot.slane %v6758, %v6892
        %v6894 = vsel %vm1260, %v6893, %v6889
        %v6895 = vlaneseq
        %v6896 = vshrl.u32 %v6895, 7
        %v6897 = vsub.s32 %v1262, %v6896
        %v6898 = vrot.slane %v6761, %v6897
        %v6899 = vsel %vm1267, %v6898, %v6894
        %v6900 = vlaneseq
        %v6901 = vshrl.u32 %v6900, 7
        %v6902 = vsub.s32 %v1243, %v6901
        %v6903 = vrot.slane %v6764, %v6902
        %v6904 = vlaneseq
        %v6905 = vshrl.u32 %v6904, 7
        %v6906 = vsub.s32 %v1248, %v6905
        %v6907 = vrot.slane %v6767, %v6906
        %v6908 = vsel %vm1253, %v6907, %v6903
        %v6909 = vlaneseq
        %v6910 = vshrl.u32 %v6909, 7
        %v6911 = vsub.s32 %v1255, %v6910
        %v6912 = vrot.slane %v6770, %v6911
        %v6913 = vsel %vm1260, %v6912, %v6908
        %v6914 = vlaneseq
        %v6915 = vshrl.u32 %v6914, 7
        %v6916 = vsub.s32 %v1262, %v6915
        %v6917 = vrot.slane %v6773, %v6916
        %v6918 = vsel %vm1267, %v6917, %v6913
        %v6919 = vlaneseq
        %v6920 = vshrl.u32 %v6919, 7
        %v6921 = vsub.s32 %v1243, %v6920
        %v6922 = vrot.slane %v6776, %v6921
        %v6923 = vlaneseq
        %v6924 = vshrl.u32 %v6923, 7
        %v6925 = vsub.s32 %v1248, %v6924
        %v6926 = vrot.slane %v6779, %v6925
        %v6927 = vsel %vm1253, %v6926, %v6922
        %v6928 = vlaneseq
        %v6929 = vshrl.u32 %v6928, 7
        %v6930 = vsub.s32 %v1255, %v6929
        %v6931 = vrot.slane %v6782, %v6930
        %v6932 = vsel %vm1260, %v6931, %v6927
        %v6933 = vlaneseq
        %v6934 = vshrl.u32 %v6933, 7
        %v6935 = vsub.s32 %v1262, %v6934
        %v6936 = vrot.slane %v6785, %v6935
        %v6937 = vsel %vm1267, %v6936, %v6932
        %v6938 = vsel %vm1402, %v6823, %v6804
        %v6939 = vsel %vm1404, %v6842, %v6938
        %v6940 = vsel %vm1406, %v6861, %v6939
        %v6941 = vsel %vm1408, %v6880, %v6940
        %v6942 = vsel %vm1410, %v6899, %v6941
        %v6943 = vsel %vm1412, %v6918, %v6942
        %v6944 = vsel %vm1414, %v6937, %v6943
        %s6946 = scalar_lea.vmem [#allocation2], 56
        %6947 = vst.msk [vmem:[%s6946] sm:$0xff] %vm517, %v6944
        %6948 = vst.msk [vmem:[#allocation5] sm:$0xff] %vm517, %v6944
        %v6949 = vld [vmem:[#allocation2] sm:$0xff]
        %v6950 = vld [vmem:[#allocation2 + $0x8] sm:$0xff]
        %v6951 = vld [vmem:[#allocation2 + $0x10] sm:$0xff]
        %v6952 = vld [vmem:[#allocation2 + $0x18] sm:$0xff]
        %v6953 = vld [vmem:[#allocation2 + $0x20] sm:$0xff]
        %v6954 = vld [vmem:[#allocation2 + $0x28] sm:$0xff]
        %v6955 = vld [vmem:[#allocation2 + $0x30] sm:$0xff]
        %v6956 = vld [vmem:[#allocation2 + $0x38] sm:$0xff]
        %v6957 = vld [vmem:[%s4] sm:$0xf]
        %v6958 = vld [vmem:[%s4 + $0x4] sm:$0xf]
        %v6959 = vld [vmem:[%s4 + $0x8] sm:$0xf]
        %v6960 = vld [vmem:[%s4 + $0xc] sm:$0xf]
        %v6961 = vld [vmem:[%s4 + $0x10] sm:$0xf]
        %v6962 = vld [vmem:[%s4 + $0x14] sm:$0xf]
        %v6963 = vld [vmem:[%s4 + $0x18] sm:$0xf]
        %v6964 = vld [vmem:[%s4 + $0x1c] sm:$0xf]
        %v6973 = vcombine.high %v6949, %v6949
        %v6975 = vunpack.c.l.s4 1966171168
        %v6976 = vunpack.c.0.s8 %v6975
        %v6977 = vlaneseq
        %v6978 = vshrl.u32 %v6977, 7
        %v6979 = vsub.s32 %v6976, %v6978
        %v6980 = vrot.slane %v6949, %v6979
        %v6982 = vunpack.c.l.s4 1966171168
        %v6983 = vunpack.c.0.s8 %v6982
        %v6984 = vlaneseq
        %v6985 = vshrl.u32 %v6984, 7
        %v6986 = vsub.s32 %v6983, %v6985
        %v6987 = vrot.slane %v6973, %v6986
        %v6988 = vcombine.high %v6980, %v6980
        %v6989 = vcombine.high %v6987, %v6987
        %v6991 = vunpack.c.l.s4 1966171168
        %v6992 = vunpack.c.0.s8 %v6991
        %v6993 = vlaneseq
        %v6994 = vshrl.u32 %v6993, 7
        %v6995 = vsub.s32 %v6992, %v6994
        %v6996 = vrot.slane %v6980, %v6995
        %v6998 = vunpack.c.l.s4 1966171168
        %v6999 = vunpack.c.0.s8 %v6998
        %v7000 = vlaneseq
        %v7001 = vshrl.u32 %v7000, 7
        %v7002 = vsub.s32 %v6999, %v7001
        %v7003 = vrot.slane %v6987, %v7002
        %v7005 = vunpack.c.l.s4 1966171168
        %v7006 = vunpack.c.0.s8 %v7005
        %v7007 = vlaneseq
        %v7008 = vshrl.u32 %v7007, 7
        %v7009 = vsub.s32 %v7006, %v7008
        %v7010 = vrot.slane %v6988, %v7009
        %v7012 = vunpack.c.l.s4 1966171168
        %v7013 = vunpack.c.0.s8 %v7012
        %v7014 = vlaneseq
        %v7015 = vshrl.u32 %v7014, 7
        %v7016 = vsub.s32 %v7013, %v7015
        %v7017 = vrot.slane %v6989, %v7016
        %v7018 = vcombine.high %v6996, %v6996
        %v7019 = vcombine.high %v7003, %v7003
        %v7020 = vcombine.high %v7010, %v7010
        %v7021 = vcombine.high %v7017, %v7017
        %v7022 = vcombine.high %v6950, %v6950
        %v7024 = vunpack.c.l.s4 1966171168
        %v7025 = vunpack.c.0.s8 %v7024
        %v7026 = vlaneseq
        %v7027 = vshrl.u32 %v7026, 7
        %v7028 = vsub.s32 %v7025, %v7027
        %v7029 = vrot.slane %v6950, %v7028
        %v7031 = vunpack.c.l.s4 1966171168
        %v7032 = vunpack.c.0.s8 %v7031
        %v7033 = vlaneseq
        %v7034 = vshrl.u32 %v7033, 7
        %v7035 = vsub.s32 %v7032, %v7034
        %v7036 = vrot.slane %v7022, %v7035
        %v7037 = vcombine.high %v7029, %v7029
        %v7038 = vcombine.high %v7036, %v7036
        %v7040 = vunpack.c.l.s4 1966171168
        %v7041 = vunpack.c.0.s8 %v7040
        %v7042 = vlaneseq
        %v7043 = vshrl.u32 %v7042, 7
        %v7044 = vsub.s32 %v7041, %v7043
        %v7045 = vrot.slane %v7029, %v7044
        %v7047 = vunpack.c.l.s4 1966171168
        %v7048 = vunpack.c.0.s8 %v7047
        %v7049 = vlaneseq
        %v7050 = vshrl.u32 %v7049, 7
        %v7051 = vsub.s32 %v7048, %v7050
        %v7052 = vrot.slane %v7036, %v7051
        %v7054 = vunpack.c.l.s4 1966171168
        %v7055 = vunpack.c.0.s8 %v7054
        %v7056 = vlaneseq
        %v7057 = vshrl.u32 %v7056, 7
        %v7058 = vsub.s32 %v7055, %v7057
        %v7059 = vrot.slane %v7037, %v7058
        %v7061 = vunpack.c.l.s4 1966171168
        %v7062 = vunpack.c.0.s8 %v7061
        %v7063 = vlaneseq
        %v7064 = vshrl.u32 %v7063, 7
        %v7065 = vsub.s32 %v7062, %v7064
        %v7066 = vrot.slane %v7038, %v7065
        %v7067 = vcombine.high %v7045, %v7045
        %v7068 = vcombine.high %v7052, %v7052
        %v7069 = vcombine.high %v7059, %v7059
        %v7070 = vcombine.high %v7066, %v7066
        %v7071 = vcombine.high %v6951, %v6951
        %v7073 = vunpack.c.l.s4 1966171168
        %v7074 = vunpack.c.0.s8 %v7073
        %v7075 = vlaneseq
        %v7076 = vshrl.u32 %v7075, 7
        %v7077 = vsub.s32 %v7074, %v7076
        %v7078 = vrot.slane %v6951, %v7077
        %v7080 = vunpack.c.l.s4 1966171168
        %v7081 = vunpack.c.0.s8 %v7080
        %v7082 = vlaneseq
        %v7083 = vshrl.u32 %v7082, 7
        %v7084 = vsub.s32 %v7081, %v7083
        %v7085 = vrot.slane %v7071, %v7084
        %v7086 = vcombine.high %v7078, %v7078
        %v7087 = vcombine.high %v7085, %v7085
        %v7089 = vunpack.c.l.s4 1966171168
        %v7090 = vunpack.c.0.s8 %v7089
        %v7091 = vlaneseq
        %v7092 = vshrl.u32 %v7091, 7
        %v7093 = vsub.s32 %v7090, %v7092
        %v7094 = vrot.slane %v7078, %v7093
        %v7096 = vunpack.c.l.s4 1966171168
        %v7097 = vunpack.c.0.s8 %v7096
        %v7098 = vlaneseq
        %v7099 = vshrl.u32 %v7098, 7
        %v7100 = vsub.s32 %v7097, %v7099
        %v7101 = vrot.slane %v7085, %v7100
        %v7103 = vunpack.c.l.s4 1966171168
        %v7104 = vunpack.c.0.s8 %v7103
        %v7105 = vlaneseq
        %v7106 = vshrl.u32 %v7105, 7
        %v7107 = vsub.s32 %v7104, %v7106
        %v7108 = vrot.slane %v7086, %v7107
        %v7110 = vunpack.c.l.s4 1966171168
        %v7111 = vunpack.c.0.s8 %v7110
        %v7112 = vlaneseq
        %v7113 = vshrl.u32 %v7112, 7
        %v7114 = vsub.s32 %v7111, %v7113
        %v7115 = vrot.slane %v7087, %v7114
        %v7116 = vcombine.high %v7094, %v7094
        %v7117 = vcombine.high %v7101, %v7101
        %v7118 = vcombine.high %v7108, %v7108
        %v7119 = vcombine.high %v7115, %v7115
        %v7120 = vcombine.high %v6952, %v6952
        %v7122 = vunpack.c.l.s4 1966171168
        %v7123 = vunpack.c.0.s8 %v7122
        %v7124 = vlaneseq
        %v7125 = vshrl.u32 %v7124, 7
        %v7126 = vsub.s32 %v7123, %v7125
        %v7127 = vrot.slane %v6952, %v7126
        %v7129 = vunpack.c.l.s4 1966171168
        %v7130 = vunpack.c.0.s8 %v7129
        %v7131 = vlaneseq
        %v7132 = vshrl.u32 %v7131, 7
        %v7133 = vsub.s32 %v7130, %v7132
        %v7134 = vrot.slane %v7120, %v7133
        %v7135 = vcombine.high %v7127, %v7127
        %v7136 = vcombine.high %v7134, %v7134
        %v7138 = vunpack.c.l.s4 1966171168
        %v7139 = vunpack.c.0.s8 %v7138
        %v7140 = vlaneseq
        %v7141 = vshrl.u32 %v7140, 7
        %v7142 = vsub.s32 %v7139, %v7141
        %v7143 = vrot.slane %v7127, %v7142
        %v7145 = vunpack.c.l.s4 1966171168
        %v7146 = vunpack.c.0.s8 %v7145
        %v7147 = vlaneseq
        %v7148 = vshrl.u32 %v7147, 7
        %v7149 = vsub.s32 %v7146, %v7148
        %v7150 = vrot.slane %v7134, %v7149
        %v7152 = vunpack.c.l.s4 1966171168
        %v7153 = vunpack.c.0.s8 %v7152
        %v7154 = vlaneseq
        %v7155 = vshrl.u32 %v7154, 7
        %v7156 = vsub.s32 %v7153, %v7155
        %v7157 = vrot.slane %v7135, %v7156
        %v7159 = vunpack.c.l.s4 1966171168
        %v7160 = vunpack.c.0.s8 %v7159
        %v7161 = vlaneseq
        %v7162 = vshrl.u32 %v7161, 7
        %v7163 = vsub.s32 %v7160, %v7162
        %v7164 = vrot.slane %v7136, %v7163
        %v7165 = vcombine.high %v7143, %v7143
        %v7166 = vcombine.high %v7150, %v7150
        %v7167 = vcombine.high %v7157, %v7157
        %v7168 = vcombine.high %v7164, %v7164
        %v7169 = vcombine.high %v6953, %v6953
        %v7171 = vunpack.c.l.s4 1966171168
        %v7172 = vunpack.c.0.s8 %v7171
        %v7173 = vlaneseq
        %v7174 = vshrl.u32 %v7173, 7
        %v7175 = vsub.s32 %v7172, %v7174
        %v7176 = vrot.slane %v6953, %v7175
        %v7178 = vunpack.c.l.s4 1966171168
        %v7179 = vunpack.c.0.s8 %v7178
        %v7180 = vlaneseq
        %v7181 = vshrl.u32 %v7180, 7
        %v7182 = vsub.s32 %v7179, %v7181
        %v7183 = vrot.slane %v7169, %v7182
        %v7184 = vcombine.high %v7176, %v7176
        %v7185 = vcombine.high %v7183, %v7183
        %v7187 = vunpack.c.l.s4 1966171168
        %v7188 = vunpack.c.0.s8 %v7187
        %v7189 = vlaneseq
        %v7190 = vshrl.u32 %v7189, 7
        %v7191 = vsub.s32 %v7188, %v7190
        %v7192 = vrot.slane %v7176, %v7191
        %v7194 = vunpack.c.l.s4 1966171168
        %v7195 = vunpack.c.0.s8 %v7194
        %v7196 = vlaneseq
        %v7197 = vshrl.u32 %v7196, 7
        %v7198 = vsub.s32 %v7195, %v7197
        %v7199 = vrot.slane %v7183, %v7198
        %v7201 = vunpack.c.l.s4 1966171168
        %v7202 = vunpack.c.0.s8 %v7201
        %v7203 = vlaneseq
        %v7204 = vshrl.u32 %v7203, 7
        %v7205 = vsub.s32 %v7202, %v7204
        %v7206 = vrot.slane %v7184, %v7205
        %v7208 = vunpack.c.l.s4 1966171168
        %v7209 = vunpack.c.0.s8 %v7208
        %v7210 = vlaneseq
        %v7211 = vshrl.u32 %v7210, 7
        %v7212 = vsub.s32 %v7209, %v7211
        %v7213 = vrot.slane %v7185, %v7212
        %v7214 = vcombine.high %v7192, %v7192
        %v7215 = vcombine.high %v7199, %v7199
        %v7216 = vcombine.high %v7206, %v7206
        %v7217 = vcombine.high %v7213, %v7213
        %v7218 = vcombine.high %v6954, %v6954
        %v7220 = vunpack.c.l.s4 1966171168
        %v7221 = vunpack.c.0.s8 %v7220
        %v7222 = vlaneseq
        %v7223 = vshrl.u32 %v7222, 7
        %v7224 = vsub.s32 %v7221, %v7223
        %v7225 = vrot.slane %v6954, %v7224
        %v7227 = vunpack.c.l.s4 1966171168
        %v7228 = vunpack.c.0.s8 %v7227
        %v7229 = vlaneseq
        %v7230 = vshrl.u32 %v7229, 7
        %v7231 = vsub.s32 %v7228, %v7230
        %v7232 = vrot.slane %v7218, %v7231
        %v7233 = vcombine.high %v7225, %v7225
        %v7234 = vcombine.high %v7232, %v7232
        %v7236 = vunpack.c.l.s4 1966171168
        %v7237 = vunpack.c.0.s8 %v7236
        %v7238 = vlaneseq
        %v7239 = vshrl.u32 %v7238, 7
        %v7240 = vsub.s32 %v7237, %v7239
        %v7241 = vrot.slane %v7225, %v7240
        %v7243 = vunpack.c.l.s4 1966171168
        %v7244 = vunpack.c.0.s8 %v7243
        %v7245 = vlaneseq
        %v7246 = vshrl.u32 %v7245, 7
        %v7247 = vsub.s32 %v7244, %v7246
        %v7248 = vrot.slane %v7232, %v7247
        %v7250 = vunpack.c.l.s4 1966171168
        %v7251 = vunpack.c.0.s8 %v7250
        %v7252 = vlaneseq
        %v7253 = vshrl.u32 %v7252, 7
        %v7254 = vsub.s32 %v7251, %v7253
        %v7255 = vrot.slane %v7233, %v7254
        %v7257 = vunpack.c.l.s4 1966171168
        %v7258 = vunpack.c.0.s8 %v7257
        %v7259 = vlaneseq
        %v7260 = vshrl.u32 %v7259, 7
        %v7261 = vsub.s32 %v7258, %v7260
        %v7262 = vrot.slane %v7234, %v7261
        %v7263 = vcombine.high %v7241, %v7241
        %v7264 = vcombine.high %v7248, %v7248
        %v7265 = vcombine.high %v7255, %v7255
        %v7266 = vcombine.high %v7262, %v7262
        %v7267 = vcombine.high %v6955, %v6955
        %v7269 = vunpack.c.l.s4 1966171168
        %v7270 = vunpack.c.0.s8 %v7269
        %v7271 = vlaneseq
        %v7272 = vshrl.u32 %v7271, 7
        %v7273 = vsub.s32 %v7270, %v7272
        %v7274 = vrot.slane %v6955, %v7273
        %v7276 = vunpack.c.l.s4 1966171168
        %v7277 = vunpack.c.0.s8 %v7276
        %v7278 = vlaneseq
        %v7279 = vshrl.u32 %v7278, 7
        %v7280 = vsub.s32 %v7277, %v7279
        %v7281 = vrot.slane %v7267, %v7280
        %v7282 = vcombine.high %v7274, %v7274
        %v7283 = vcombine.high %v7281, %v7281
        %v7285 = vunpack.c.l.s4 1966171168
        %v7286 = vunpack.c.0.s8 %v7285
        %v7287 = vlaneseq
        %v7288 = vshrl.u32 %v7287, 7
        %v7289 = vsub.s32 %v7286, %v7288
        %v7290 = vrot.slane %v7274, %v7289
        %v7292 = vunpack.c.l.s4 1966171168
        %v7293 = vunpack.c.0.s8 %v7292
        %v7294 = vlaneseq
        %v7295 = vshrl.u32 %v7294, 7
        %v7296 = vsub.s32 %v7293, %v7295
        %v7297 = vrot.slane %v7281, %v7296
        %v7299 = vunpack.c.l.s4 1966171168
        %v7300 = vunpack.c.0.s8 %v7299
        %v7301 = vlaneseq
        %v7302 = vshrl.u32 %v7301, 7
        %v7303 = vsub.s32 %v7300, %v7302
        %v7304 = vrot.slane %v7282, %v7303
        %v7306 = vunpack.c.l.s4 1966171168
        %v7307 = vunpack.c.0.s8 %v7306
        %v7308 = vlaneseq
        %v7309 = vshrl.u32 %v7308, 7
        %v7310 = vsub.s32 %v7307, %v7309
        %v7311 = vrot.slane %v7283, %v7310
        %v7312 = vcombine.high %v7290, %v7290
        %v7313 = vcombine.high %v7297, %v7297
        %v7314 = vcombine.high %v7304, %v7304
        %v7315 = vcombine.high %v7311, %v7311
        %v7316 = vcombine.high %v6956, %v6956
        %v7318 = vunpack.c.l.s4 1966171168
        %v7319 = vunpack.c.0.s8 %v7318
        %v7320 = vlaneseq
        %v7321 = vshrl.u32 %v7320, 7
        %v7322 = vsub.s32 %v7319, %v7321
        %v7323 = vrot.slane %v6956, %v7322
        %v7325 = vunpack.c.l.s4 1966171168
        %v7326 = vunpack.c.0.s8 %v7325
        %v7327 = vlaneseq
        %v7328 = vshrl.u32 %v7327, 7
        %v7329 = vsub.s32 %v7326, %v7328
        %v7330 = vrot.slane %v7316, %v7329
        %v7331 = vcombine.high %v7323, %v7323
        %v7332 = vcombine.high %v7330, %v7330
        %v7334 = vunpack.c.l.s4 1966171168
        %v7335 = vunpack.c.0.s8 %v7334
        %v7336 = vlaneseq
        %v7337 = vshrl.u32 %v7336, 7
        %v7338 = vsub.s32 %v7335, %v7337
        %v7339 = vrot.slane %v7323, %v7338
        %v7341 = vunpack.c.l.s4 1966171168
        %v7342 = vunpack.c.0.s8 %v7341
        %v7343 = vlaneseq
        %v7344 = vshrl.u32 %v7343, 7
        %v7345 = vsub.s32 %v7342, %v7344
        %v7346 = vrot.slane %v7330, %v7345
        %v7348 = vunpack.c.l.s4 1966171168
        %v7349 = vunpack.c.0.s8 %v7348
        %v7350 = vlaneseq
        %v7351 = vshrl.u32 %v7350, 7
        %v7352 = vsub.s32 %v7349, %v7351
        %v7353 = vrot.slane %v7331, %v7352
        %v7355 = vunpack.c.l.s4 1966171168
        %v7356 = vunpack.c.0.s8 %v7355
        %v7357 = vlaneseq
        %v7358 = vshrl.u32 %v7357, 7
        %v7359 = vsub.s32 %v7356, %v7358
        %v7360 = vrot.slane %v7332, %v7359
        %v7361 = vcombine.high %v7339, %v7339
        %v7362 = vcombine.high %v7346, %v7346
        %v7363 = vcombine.high %v7353, %v7353
        %v7364 = vcombine.high %v7360, %v7360
        %v7365 = vlaneseq
        %v7366 = vshrl.u32 %v7365, 7
        %v7367 = vsub.s32 0, %v7366
        %v7368 = vrot.slane %v6996, %v7367
        %v7369 = vlaneseq
        %v7370 = vshrl.u32 %v7369, 7
        %v7371 = vsub.s32 0, %v7370
        %v7372 = vrot.slane %v7010, %v7371
        %v7373 = vlaneseq
        %v7374 = vshrl.u32 %v7373, 7
        %v7375 = vsub.s32 0, %v7374
        %v7376 = vrot.slane %v7018, %v7375
        %v7377 = vlaneseq
        %v7378 = vshrl.u32 %v7377, 7
        %v7379 = vsub.s32 0, %v7378
        %v7380 = vrot.slane %v7020, %v7379
        %v7381 = vlaneseq
        %v7382 = vshrl.u32 %v7381, 7
        %v7383 = vsub.s32 0, %v7382
        %v7384 = vrot.slane %v7003, %v7383
        %v7385 = vlaneseq
        %v7386 = vshrl.u32 %v7385, 7
        %v7387 = vsub.s32 0, %v7386
        %v7388 = vrot.slane %v7017, %v7387
        %v7389 = vlaneseq
        %v7390 = vshrl.u32 %v7389, 7
        %v7391 = vsub.s32 0, %v7390
        %v7392 = vrot.slane %v7019, %v7391
        %v7393 = vlaneseq
        %v7394 = vshrl.u32 %v7393, 7
        %v7395 = vsub.s32 0, %v7394
        %v7396 = vrot.slane %v7021, %v7395
        %v7397 = vlaneseq
        %v7398 = vshrl.u32 %v7397, 7
        %v7399 = vsub.s32 0, %v7398
        %v7400 = vrot.slane %v7045, %v7399
        %v7401 = vlaneseq
        %v7402 = vshrl.u32 %v7401, 7
        %v7403 = vsub.s32 0, %v7402
        %v7404 = vrot.slane %v7059, %v7403
        %v7405 = vlaneseq
        %v7406 = vshrl.u32 %v7405, 7
        %v7407 = vsub.s32 0, %v7406
        %v7408 = vrot.slane %v7067, %v7407
        %v7409 = vlaneseq
        %v7410 = vshrl.u32 %v7409, 7
        %v7411 = vsub.s32 0, %v7410
        %v7412 = vrot.slane %v7069, %v7411
        %v7413 = vlaneseq
        %v7414 = vshrl.u32 %v7413, 7
        %v7415 = vsub.s32 0, %v7414
        %v7416 = vrot.slane %v7052, %v7415
        %v7417 = vlaneseq
        %v7418 = vshrl.u32 %v7417, 7
        %v7419 = vsub.s32 0, %v7418
        %v7420 = vrot.slane %v7066, %v7419
        %v7421 = vlaneseq
        %v7422 = vshrl.u32 %v7421, 7
        %v7423 = vsub.s32 0, %v7422
        %v7424 = vrot.slane %v7068, %v7423
        %v7425 = vlaneseq
        %v7426 = vshrl.u32 %v7425, 7
        %v7427 = vsub.s32 0, %v7426
        %v7428 = vrot.slane %v7070, %v7427
        %v7429 = vlaneseq
        %v7430 = vshrl.u32 %v7429, 7
        %v7431 = vsub.s32 0, %v7430
        %v7432 = vrot.slane %v7094, %v7431
        %v7433 = vlaneseq
        %v7434 = vshrl.u32 %v7433, 7
        %v7435 = vsub.s32 0, %v7434
        %v7436 = vrot.slane %v7108, %v7435
        %v7437 = vlaneseq
        %v7438 = vshrl.u32 %v7437, 7
        %v7439 = vsub.s32 0, %v7438
        %v7440 = vrot.slane %v7116, %v7439
        %v7441 = vlaneseq
        %v7442 = vshrl.u32 %v7441, 7
        %v7443 = vsub.s32 0, %v7442
        %v7444 = vrot.slane %v7118, %v7443
        %v7445 = vlaneseq
        %v7446 = vshrl.u32 %v7445, 7
        %v7447 = vsub.s32 0, %v7446
        %v7448 = vrot.slane %v7101, %v7447
        %v7449 = vlaneseq
        %v7450 = vshrl.u32 %v7449, 7
        %v7451 = vsub.s32 0, %v7450
        %v7452 = vrot.slane %v7115, %v7451
        %v7453 = vlaneseq
        %v7454 = vshrl.u32 %v7453, 7
        %v7455 = vsub.s32 0, %v7454
        %v7456 = vrot.slane %v7117, %v7455
        %v7457 = vlaneseq
        %v7458 = vshrl.u32 %v7457, 7
        %v7459 = vsub.s32 0, %v7458
        %v7460 = vrot.slane %v7119, %v7459
        %v7461 = vlaneseq
        %v7462 = vshrl.u32 %v7461, 7
        %v7463 = vsub.s32 0, %v7462
        %v7464 = vrot.slane %v7143, %v7463
        %v7465 = vlaneseq
        %v7466 = vshrl.u32 %v7465, 7
        %v7467 = vsub.s32 0, %v7466
        %v7468 = vrot.slane %v7157, %v7467
        %v7469 = vlaneseq
        %v7470 = vshrl.u32 %v7469, 7
        %v7471 = vsub.s32 0, %v7470
        %v7472 = vrot.slane %v7165, %v7471
        %v7473 = vlaneseq
        %v7474 = vshrl.u32 %v7473, 7
        %v7475 = vsub.s32 0, %v7474
        %v7476 = vrot.slane %v7167, %v7475
        %v7477 = vlaneseq
        %v7478 = vshrl.u32 %v7477, 7
        %v7479 = vsub.s32 0, %v7478
        %v7480 = vrot.slane %v7150, %v7479
        %v7481 = vlaneseq
        %v7482 = vshrl.u32 %v7481, 7
        %v7483 = vsub.s32 0, %v7482
        %v7484 = vrot.slane %v7164, %v7483
        %v7485 = vlaneseq
        %v7486 = vshrl.u32 %v7485, 7
        %v7487 = vsub.s32 0, %v7486
        %v7488 = vrot.slane %v7166, %v7487
        %v7489 = vlaneseq
        %v7490 = vshrl.u32 %v7489, 7
        %v7491 = vsub.s32 0, %v7490
        %v7492 = vrot.slane %v7168, %v7491
        %v7493 = vlaneseq
        %v7494 = vshrl.u32 %v7493, 7
        %v7495 = vsub.s32 0, %v7494
        %v7496 = vrot.slane %v7192, %v7495
        %v7497 = vlaneseq
        %v7498 = vshrl.u32 %v7497, 7
        %v7499 = vsub.s32 0, %v7498
        %v7500 = vrot.slane %v7206, %v7499
        %v7501 = vlaneseq
        %v7502 = vshrl.u32 %v7501, 7
        %v7503 = vsub.s32 0, %v7502
        %v7504 = vrot.slane %v7214, %v7503
        %v7505 = vlaneseq
        %v7506 = vshrl.u32 %v7505, 7
        %v7507 = vsub.s32 0, %v7506
        %v7508 = vrot.slane %v7216, %v7507
        %v7509 = vlaneseq
        %v7510 = vshrl.u32 %v7509, 7
        %v7511 = vsub.s32 0, %v7510
        %v7512 = vrot.slane %v7199, %v7511
        %v7513 = vlaneseq
        %v7514 = vshrl.u32 %v7513, 7
        %v7515 = vsub.s32 0, %v7514
        %v7516 = vrot.slane %v7213, %v7515
        %v7517 = vlaneseq
        %v7518 = vshrl.u32 %v7517, 7
        %v7519 = vsub.s32 0, %v7518
        %v7520 = vrot.slane %v7215, %v7519
        %v7521 = vlaneseq
        %v7522 = vshrl.u32 %v7521, 7
        %v7523 = vsub.s32 0, %v7522
        %v7524 = vrot.slane %v7217, %v7523
        %v7525 = vlaneseq
        %v7526 = vshrl.u32 %v7525, 7
        %v7527 = vsub.s32 0, %v7526
        %v7528 = vrot.slane %v7241, %v7527
        %v7529 = vlaneseq
        %v7530 = vshrl.u32 %v7529, 7
        %v7531 = vsub.s32 0, %v7530
        %v7532 = vrot.slane %v7255, %v7531
        %v7533 = vlaneseq
        %v7534 = vshrl.u32 %v7533, 7
        %v7535 = vsub.s32 0, %v7534
        %v7536 = vrot.slane %v7263, %v7535
        %v7537 = vlaneseq
        %v7538 = vshrl.u32 %v7537, 7
        %v7539 = vsub.s32 0, %v7538
        %v7540 = vrot.slane %v7265, %v7539
        %v7541 = vlaneseq
        %v7542 = vshrl.u32 %v7541, 7
        %v7543 = vsub.s32 0, %v7542
        %v7544 = vrot.slane %v7248, %v7543
        %v7545 = vlaneseq
        %v7546 = vshrl.u32 %v7545, 7
        %v7547 = vsub.s32 0, %v7546
        %v7548 = vrot.slane %v7262, %v7547
        %v7549 = vlaneseq
        %v7550 = vshrl.u32 %v7549, 7
        %v7551 = vsub.s32 0, %v7550
        %v7552 = vrot.slane %v7264, %v7551
        %v7553 = vlaneseq
        %v7554 = vshrl.u32 %v7553, 7
        %v7555 = vsub.s32 0, %v7554
        %v7556 = vrot.slane %v7266, %v7555
        %v7557 = vlaneseq
        %v7558 = vshrl.u32 %v7557, 7
        %v7559 = vsub.s32 0, %v7558
        %v7560 = vrot.slane %v7290, %v7559
        %v7561 = vlaneseq
        %v7562 = vshrl.u32 %v7561, 7
        %v7563 = vsub.s32 0, %v7562
        %v7564 = vrot.slane %v7304, %v7563
        %v7565 = vlaneseq
        %v7566 = vshrl.u32 %v7565, 7
        %v7567 = vsub.s32 0, %v7566
        %v7568 = vrot.slane %v7312, %v7567
        %v7569 = vlaneseq
        %v7570 = vshrl.u32 %v7569, 7
        %v7571 = vsub.s32 0, %v7570
        %v7572 = vrot.slane %v7314, %v7571
        %v7573 = vlaneseq
        %v7574 = vshrl.u32 %v7573, 7
        %v7575 = vsub.s32 0, %v7574
        %v7576 = vrot.slane %v7297, %v7575
        %v7577 = vlaneseq
        %v7578 = vshrl.u32 %v7577, 7
        %v7579 = vsub.s32 0, %v7578
        %v7580 = vrot.slane %v7311, %v7579
        %v7581 = vlaneseq
        %v7582 = vshrl.u32 %v7581, 7
        %v7583 = vsub.s32 0, %v7582
        %v7584 = vrot.slane %v7313, %v7583
        %v7585 = vlaneseq
        %v7586 = vshrl.u32 %v7585, 7
        %v7587 = vsub.s32 0, %v7586
        %v7588 = vrot.slane %v7315, %v7587
        %v7589 = vlaneseq
        %v7590 = vshrl.u32 %v7589, 7
        %v7591 = vsub.s32 0, %v7590
        %v7592 = vrot.slane %v7339, %v7591
        %v7593 = vlaneseq
        %v7594 = vshrl.u32 %v7593, 7
        %v7595 = vsub.s32 0, %v7594
        %v7596 = vrot.slane %v7353, %v7595
        %v7597 = vlaneseq
        %v7598 = vshrl.u32 %v7597, 7
        %v7599 = vsub.s32 0, %v7598
        %v7600 = vrot.slane %v7361, %v7599
        %v7601 = vlaneseq
        %v7602 = vshrl.u32 %v7601, 7
        %v7603 = vsub.s32 0, %v7602
        %v7604 = vrot.slane %v7363, %v7603
        %v7605 = vlaneseq
        %v7606 = vshrl.u32 %v7605, 7
        %v7607 = vsub.s32 0, %v7606
        %v7608 = vrot.slane %v7346, %v7607
        %v7609 = vlaneseq
        %v7610 = vshrl.u32 %v7609, 7
        %v7611 = vsub.s32 0, %v7610
        %v7612 = vrot.slane %v7360, %v7611
        %v7613 = vlaneseq
        %v7614 = vshrl.u32 %v7613, 7
        %v7615 = vsub.s32 0, %v7614
        %v7616 = vrot.slane %v7362, %v7615
        %v7617 = vlaneseq
        %v7618 = vshrl.u32 %v7617, 7
        %v7619 = vsub.s32 0, %v7618
        %v7620 = vrot.slane %v7364, %v7619
        %v7685 = vmul.f32 %v6957, %v7368
        %v7686 = vmul.f32 %v6958, %v7372
        %v7687 = vmul.f32 %v6959, %v7376
        %v7688 = vmul.f32 %v6960, %v7380
        %v7689 = vmul.f32 %v6961, %v7384
        %v7690 = vmul.f32 %v6962, %v7388
        %v7691 = vmul.f32 %v6963, %v7392
        %v7692 = vmul.f32 %v6964, %v7396
        %v7693 = vmul.f32 %v6957, %v7400
        %v7694 = vmul.f32 %v6958, %v7404
        %v7695 = vmul.f32 %v6959, %v7408
        %v7696 = vmul.f32 %v6960, %v7412
        %v7697 = vmul.f32 %v6961, %v7416
        %v7698 = vmul.f32 %v6962, %v7420
        %v7699 = vmul.f32 %v6963, %v7424
        %v7700 = vmul.f32 %v6964, %v7428
        %v7701 = vmul.f32 %v6957, %v7432
        %v7702 = vmul.f32 %v6958, %v7436
        %v7703 = vmul.f32 %v6959, %v7440
        %v7704 = vmul.f32 %v6960, %v7444
        %v7705 = vmul.f32 %v6961, %v7448
        %v7706 = vmul.f32 %v6962, %v7452
        %v7707 = vmul.f32 %v6963, %v7456
        %v7708 = vmul.f32 %v6964, %v7460
        %v7709 = vmul.f32 %v6957, %v7464
        %v7710 = vmul.f32 %v6958, %v7468
        %v7711 = vmul.f32 %v6959, %v7472
        %v7712 = vmul.f32 %v6960, %v7476
        %v7713 = vmul.f32 %v6961, %v7480
        %v7714 = vmul.f32 %v6962, %v7484
        %v7715 = vmul.f32 %v6963, %v7488
        %v7716 = vmul.f32 %v6964, %v7492
        %v7717 = vmul.f32 %v6957, %v7496
        %v7718 = vmul.f32 %v6958, %v7500
        %v7719 = vmul.f32 %v6959, %v7504
        %v7720 = vmul.f32 %v6960, %v7508
        %v7721 = vmul.f32 %v6961, %v7512
        %v7722 = vmul.f32 %v6962, %v7516
        %v7723 = vmul.f32 %v6963, %v7520
        %v7724 = vmul.f32 %v6964, %v7524
        %v7725 = vmul.f32 %v6957, %v7528
        %v7726 = vmul.f32 %v6958, %v7532
        %v7727 = vmul.f32 %v6959, %v7536
        %v7728 = vmul.f32 %v6960, %v7540
        %v7729 = vmul.f32 %v6961, %v7544
        %v7730 = vmul.f32 %v6962, %v7548
        %v7731 = vmul.f32 %v6963, %v7552
        %v7732 = vmul.f32 %v6964, %v7556
        %v7733 = vmul.f32 %v6957, %v7560
        %v7734 = vmul.f32 %v6958, %v7564
        %v7735 = vmul.f32 %v6959, %v7568
        %v7736 = vmul.f32 %v6960, %v7572
        %v7737 = vmul.f32 %v6961, %v7576
        %v7738 = vmul.f32 %v6962, %v7580
        %v7739 = vmul.f32 %v6963, %v7584
        %v7740 = vmul.f32 %v6964, %v7588
        %v7741 = vmul.f32 %v6957, %v7592
        %v7742 = vmul.f32 %v6958, %v7596
        %v7743 = vmul.f32 %v6959, %v7600
        %v7744 = vmul.f32 %v6960, %v7604
        %v7745 = vmul.f32 %v6961, %v7608
        %v7746 = vmul.f32 %v6962, %v7612
        %v7747 = vmul.f32 %v6963, %v7616
        %v7748 = vmul.f32 %v6964, %v7620
        %vm7749 = vcmask 257024
        %v7750 = vsel %vm7749, %v7685, 0.0
        %7751 = vadd.xlane.f32.xlu0 %v7750
        %v7752 = vpop.xlane.xlu0 %7751
        %v7753 = vsel %vm7749, %v7686, 0.0
        %7754 = vadd.xlane.f32.xlu0 %v7753
        %v7755 = vpop.xlane.xlu0 %7754
        %v7756 = vsel %vm7749, %v7687, 0.0
        %7757 = vadd.xlane.f32.xlu0 %v7756
        %v7758 = vpop.xlane.xlu0 %7757
        %v7759 = vsel %vm7749, %v7688, 0.0
        %7760 = vadd.xlane.f32.xlu0 %v7759
        %v7761 = vpop.xlane.xlu0 %7760
        %v7762 = vsel %vm7749, %v7689, 0.0
        %7763 = vadd.xlane.f32.xlu0 %v7762
        %v7764 = vpop.xlane.xlu0 %7763
        %v7765 = vsel %vm7749, %v7690, 0.0
        %7766 = vadd.xlane.f32.xlu0 %v7765
        %v7767 = vpop.xlane.xlu0 %7766
        %v7768 = vsel %vm7749, %v7691, 0.0
        %7769 = vadd.xlane.f32.xlu0 %v7768
        %v7770 = vpop.xlane.xlu0 %7769
        %v7771 = vsel %vm7749, %v7692, 0.0
        %7772 = vadd.xlane.f32.xlu0 %v7771
        %v7773 = vpop.xlane.xlu0 %7772
        %v7774 = vsel %vm7749, %v7693, 0.0
        %7775 = vadd.xlane.f32.xlu0 %v7774
        %v7776 = vpop.xlane.xlu0 %7775
        %v7777 = vsel %vm7749, %v7694, 0.0
        %7778 = vadd.xlane.f32.xlu0 %v7777
        %v7779 = vpop.xlane.xlu0 %7778
        %v7780 = vsel %vm7749, %v7695, 0.0
        %7781 = vadd.xlane.f32.xlu0 %v7780
        %v7782 = vpop.xlane.xlu0 %7781
        %v7783 = vsel %vm7749, %v7696, 0.0
        %7784 = vadd.xlane.f32.xlu0 %v7783
        %v7785 = vpop.xlane.xlu0 %7784
        %v7786 = vsel %vm7749, %v7697, 0.0
        %7787 = vadd.xlane.f32.xlu0 %v7786
        %v7788 = vpop.xlane.xlu0 %7787
        %v7789 = vsel %vm7749, %v7698, 0.0
        %7790 = vadd.xlane.f32.xlu0 %v7789
        %v7791 = vpop.xlane.xlu0 %7790
        %v7792 = vsel %vm7749, %v7699, 0.0
        %7793 = vadd.xlane.f32.xlu0 %v7792
        %v7794 = vpop.xlane.xlu0 %7793
        %v7795 = vsel %vm7749, %v7700, 0.0
        %7796 = vadd.xlane.f32.xlu0 %v7795
        %v7797 = vpop.xlane.xlu0 %7796
        %v7798 = vsel %vm7749, %v7701, 0.0
        %7799 = vadd.xlane.f32.xlu0 %v7798
        %v7800 = vpop.xlane.xlu0 %7799
        %v7801 = vsel %vm7749, %v7702, 0.0
        %7802 = vadd.xlane.f32.xlu0 %v7801
        %v7803 = vpop.xlane.xlu0 %7802
        %v7804 = vsel %vm7749, %v7703, 0.0
        %7805 = vadd.xlane.f32.xlu0 %v7804
        %v7806 = vpop.xlane.xlu0 %7805
        %v7807 = vsel %vm7749, %v7704, 0.0
        %7808 = vadd.xlane.f32.xlu0 %v7807
        %v7809 = vpop.xlane.xlu0 %7808
        %v7810 = vsel %vm7749, %v7705, 0.0
        %7811 = vadd.xlane.f32.xlu0 %v7810
        %v7812 = vpop.xlane.xlu0 %7811
        %v7813 = vsel %vm7749, %v7706, 0.0
        %7814 = vadd.xlane.f32.xlu0 %v7813
        %v7815 = vpop.xlane.xlu0 %7814
        %v7816 = vsel %vm7749, %v7707, 0.0
        %7817 = vadd.xlane.f32.xlu0 %v7816
        %v7818 = vpop.xlane.xlu0 %7817
        %v7819 = vsel %vm7749, %v7708, 0.0
        %7820 = vadd.xlane.f32.xlu0 %v7819
        %v7821 = vpop.xlane.xlu0 %7820
        %v7822 = vsel %vm7749, %v7709, 0.0
        %7823 = vadd.xlane.f32.xlu0 %v7822
        %v7824 = vpop.xlane.xlu0 %7823
        %v7825 = vsel %vm7749, %v7710, 0.0
        %7826 = vadd.xlane.f32.xlu0 %v7825
        %v7827 = vpop.xlane.xlu0 %7826
        %v7828 = vsel %vm7749, %v7711, 0.0
        %7829 = vadd.xlane.f32.xlu0 %v7828
        %v7830 = vpop.xlane.xlu0 %7829
        %v7831 = vsel %vm7749, %v7712, 0.0
        %7832 = vadd.xlane.f32.xlu0 %v7831
        %v7833 = vpop.xlane.xlu0 %7832
        %v7834 = vsel %vm7749, %v7713, 0.0
        %7835 = vadd.xlane.f32.xlu0 %v7834
        %v7836 = vpop.xlane.xlu0 %7835
        %v7837 = vsel %vm7749, %v7714, 0.0
        %7838 = vadd.xlane.f32.xlu0 %v7837
        %v7839 = vpop.xlane.xlu0 %7838
        %v7840 = vsel %vm7749, %v7715, 0.0
        %7841 = vadd.xlane.f32.xlu0 %v7840
        %v7842 = vpop.xlane.xlu0 %7841
        %v7843 = vsel %vm7749, %v7716, 0.0
        %7844 = vadd.xlane.f32.xlu0 %v7843
        %v7845 = vpop.xlane.xlu0 %7844
        %v7846 = vsel %vm7749, %v7717, 0.0
        %7847 = vadd.xlane.f32.xlu0 %v7846
        %v7848 = vpop.xlane.xlu0 %7847
        %v7849 = vsel %vm7749, %v7718, 0.0
        %7850 = vadd.xlane.f32.xlu0 %v7849
        %v7851 = vpop.xlane.xlu0 %7850
        %v7852 = vsel %vm7749, %v7719, 0.0
        %7853 = vadd.xlane.f32.xlu0 %v7852
        %v7854 = vpop.xlane.xlu0 %7853
        %v7855 = vsel %vm7749, %v7720, 0.0
        %7856 = vadd.xlane.f32.xlu0 %v7855
        %v7857 = vpop.xlane.xlu0 %7856
        %v7858 = vsel %vm7749, %v7721, 0.0
        %7859 = vadd.xlane.f32.xlu0 %v7858
        %v7860 = vpop.xlane.xlu0 %7859
        %v7861 = vsel %vm7749, %v7722, 0.0
        %7862 = vadd.xlane.f32.xlu0 %v7861
        %v7863 = vpop.xlane.xlu0 %7862
        %v7864 = vsel %vm7749, %v7723, 0.0
        %7865 = vadd.xlane.f32.xlu0 %v7864
        %v7866 = vpop.xlane.xlu0 %7865
        %v7867 = vsel %vm7749, %v7724, 0.0
        %7868 = vadd.xlane.f32.xlu0 %v7867
        %v7869 = vpop.xlane.xlu0 %7868
        %v7870 = vsel %vm7749, %v7725, 0.0
        %7871 = vadd.xlane.f32.xlu0 %v7870
        %v7872 = vpop.xlane.xlu0 %7871
        %v7873 = vsel %vm7749, %v7726, 0.0
        %7874 = vadd.xlane.f32.xlu0 %v7873
        %v7875 = vpop.xlane.xlu0 %7874
        %v7876 = vsel %vm7749, %v7727, 0.0
        %7877 = vadd.xlane.f32.xlu0 %v7876
        %v7878 = vpop.xlane.xlu0 %7877
        %v7879 = vsel %vm7749, %v7728, 0.0
        %7880 = vadd.xlane.f32.xlu0 %v7879
        %v7881 = vpop.xlane.xlu0 %7880
        %v7882 = vsel %vm7749, %v7729, 0.0
        %7883 = vadd.xlane.f32.xlu0 %v7882
        %v7884 = vpop.xlane.xlu0 %7883
        %v7885 = vsel %vm7749, %v7730, 0.0
        %7886 = vadd.xlane.f32.xlu0 %v7885
        %v7887 = vpop.xlane.xlu0 %7886
        %v7888 = vsel %vm7749, %v7731, 0.0
        %7889 = vadd.xlane.f32.xlu0 %v7888
        %v7890 = vpop.xlane.xlu0 %7889
        %v7891 = vsel %vm7749, %v7732, 0.0
        %7892 = vadd.xlane.f32.xlu0 %v7891
        %v7893 = vpop.xlane.xlu0 %7892
        %v7894 = vsel %vm7749, %v7733, 0.0
        %7895 = vadd.xlane.f32.xlu0 %v7894
        %v7896 = vpop.xlane.xlu0 %7895
        %v7897 = vsel %vm7749, %v7734, 0.0
        %7898 = vadd.xlane.f32.xlu0 %v7897
        %v7899 = vpop.xlane.xlu0 %7898
        %v7900 = vsel %vm7749, %v7735, 0.0
        %7901 = vadd.xlane.f32.xlu0 %v7900
        %v7902 = vpop.xlane.xlu0 %7901
        %v7903 = vsel %vm7749, %v7736, 0.0
        %7904 = vadd.xlane.f32.xlu0 %v7903
        %v7905 = vpop.xlane.xlu0 %7904
        %v7906 = vsel %vm7749, %v7737, 0.0
        %7907 = vadd.xlane.f32.xlu0 %v7906
        %v7908 = vpop.xlane.xlu0 %7907
        %v7909 = vsel %vm7749, %v7738, 0.0
        %7910 = vadd.xlane.f32.xlu0 %v7909
        %v7911 = vpop.xlane.xlu0 %7910
        %v7912 = vsel %vm7749, %v7739, 0.0
        %7913 = vadd.xlane.f32.xlu0 %v7912
        %v7914 = vpop.xlane.xlu0 %7913
        %v7915 = vsel %vm7749, %v7740, 0.0
        %7916 = vadd.xlane.f32.xlu0 %v7915
        %v7917 = vpop.xlane.xlu0 %7916
        %v7918 = vsel %vm7749, %v7741, 0.0
        %7919 = vadd.xlane.f32.xlu0 %v7918
        %v7920 = vpop.xlane.xlu0 %7919
        %v7921 = vsel %vm7749, %v7742, 0.0
        %7922 = vadd.xlane.f32.xlu0 %v7921
        %v7923 = vpop.xlane.xlu0 %7922
        %v7924 = vsel %vm7749, %v7743, 0.0
        %7925 = vadd.xlane.f32.xlu0 %v7924
        %v7926 = vpop.xlane.xlu0 %7925
        %v7927 = vsel %vm7749, %v7744, 0.0
        %7928 = vadd.xlane.f32.xlu0 %v7927
        %v7929 = vpop.xlane.xlu0 %7928
        %v7930 = vsel %vm7749, %v7745, 0.0
        %7931 = vadd.xlane.f32.xlu0 %v7930
        %v7932 = vpop.xlane.xlu0 %7931
        %v7933 = vsel %vm7749, %v7746, 0.0
        %7934 = vadd.xlane.f32.xlu0 %v7933
        %v7935 = vpop.xlane.xlu0 %7934
        %v7936 = vsel %vm7749, %v7747, 0.0
        %7937 = vadd.xlane.f32.xlu0 %v7936
        %v7938 = vpop.xlane.xlu0 %7937
        %v7939 = vsel %vm7749, %v7748, 0.0
        %7940 = vadd.xlane.f32.xlu0 %v7939
        %v7941 = vpop.xlane.xlu0 %7940
        %v7942 = vld [vmem:[%s5] sm:$0xff]
        %v7944 = vlaneseq
        %v7945 = vshrl.u32 %v7944, 7
        %v7946 = vsub.s32 0, %v7945
        %v7947 = vrot.slane %v7942, %v7946
        %7949 = vbcast.lane.b32.xlu0 %v7947, 256
        %v7950 = vpop.permute.xlu0 %7949
        %v7951 = vlaneseq
        %v7952 = vshrl.u32 %v7951, 7
        %v7953 = vsub.s32 1, %v7952
        %v7954 = vrot.slane %v7942, %v7953
        %7956 = vbcast.lane.b32.xlu0 %v7954, 256
        %v7957 = vpop.permute.xlu0 %7956
        %v7958 = vlaneseq
        %v7959 = vshrl.u32 %v7958, 7
        %v7960 = vsub.s32 2, %v7959
        %v7961 = vrot.slane %v7942, %v7960
        %7963 = vbcast.lane.b32.xlu0 %v7961, 256
        %v7964 = vpop.permute.xlu0 %7963
        %v7965 = vlaneseq
        %v7966 = vshrl.u32 %v7965, 7
        %v7967 = vsub.s32 3, %v7966
        %v7968 = vrot.slane %v7942, %v7967
        %7970 = vbcast.lane.b32.xlu0 %v7968, 256
        %v7971 = vpop.permute.xlu0 %7970
        %v7972 = vlaneseq
        %v7973 = vshrl.u32 %v7972, 7
        %v7974 = vsub.s32 4, %v7973
        %v7975 = vrot.slane %v7942, %v7974
        %7977 = vbcast.lane.b32.xlu0 %v7975, 256
        %v7978 = vpop.permute.xlu0 %7977
        %v7979 = vlaneseq
        %v7980 = vshrl.u32 %v7979, 7
        %v7981 = vsub.s32 5, %v7980
        %v7982 = vrot.slane %v7942, %v7981
        %7984 = vbcast.lane.b32.xlu0 %v7982, 256
        %v7985 = vpop.permute.xlu0 %7984
        %v7986 = vlaneseq
        %v7987 = vshrl.u32 %v7986, 7
        %v7988 = vsub.s32 6, %v7987
        %v7989 = vrot.slane %v7942, %v7988
        %7991 = vbcast.lane.b32.xlu0 %v7989, 256
        %v7992 = vpop.permute.xlu0 %7991
        %v7993 = vlaneseq
        %v7994 = vshrl.u32 %v7993, 7
        %v7995 = vsub.s32 7, %v7994
        %v7996 = vrot.slane %v7942, %v7995
        %7998 = vbcast.lane.b32.xlu0 %v7996, 256
        %v7999 = vpop.permute.xlu0 %7998
        %v8008 = vadd.f32 %v7752, %v7950
        %v8009 = vadd.f32 %v7755, %v7957
        %v8010 = vadd.f32 %v7758, %v7964
        %v8011 = vadd.f32 %v7761, %v7971
        %v8012 = vadd.f32 %v7764, %v7978
        %v8013 = vadd.f32 %v7767, %v7985
        %v8014 = vadd.f32 %v7770, %v7992
        %v8015 = vadd.f32 %v7773, %v7999
        %v8016 = vadd.f32 %v7776, %v7950
        %v8017 = vadd.f32 %v7779, %v7957
        %v8018 = vadd.f32 %v7782, %v7964
        %v8019 = vadd.f32 %v7785, %v7971
        %v8020 = vadd.f32 %v7788, %v7978
        %v8021 = vadd.f32 %v7791, %v7985
        %v8022 = vadd.f32 %v7794, %v7992
        %v8023 = vadd.f32 %v7797, %v7999
        %v8024 = vadd.f32 %v7800, %v7950
        %v8025 = vadd.f32 %v7803, %v7957
        %v8026 = vadd.f32 %v7806, %v7964
        %v8027 = vadd.f32 %v7809, %v7971
        %v8028 = vadd.f32 %v7812, %v7978
        %v8029 = vadd.f32 %v7815, %v7985
        %v8030 = vadd.f32 %v7818, %v7992
        %v8031 = vadd.f32 %v7821, %v7999
        %v8032 = vadd.f32 %v7824, %v7950
        %v8033 = vadd.f32 %v7827, %v7957
        %v8034 = vadd.f32 %v7830, %v7964
        %v8035 = vadd.f32 %v7833, %v7971
        %v8036 = vadd.f32 %v7836, %v7978
        %v8037 = vadd.f32 %v7839, %v7985
        %v8038 = vadd.f32 %v7842, %v7992
        %v8039 = vadd.f32 %v7845, %v7999
        %v8040 = vadd.f32 %v7848, %v7950
        %v8041 = vadd.f32 %v7851, %v7957
        %v8042 = vadd.f32 %v7854, %v7964
        %v8043 = vadd.f32 %v7857, %v7971
        %v8044 = vadd.f32 %v7860, %v7978
        %v8045 = vadd.f32 %v7863, %v7985
        %v8046 = vadd.f32 %v7866, %v7992
        %v8047 = vadd.f32 %v7869, %v7999
        %v8048 = vadd.f32 %v7872, %v7950
        %v8049 = vadd.f32 %v7875, %v7957
        %v8050 = vadd.f32 %v7878, %v7964
        %v8051 = vadd.f32 %v7881, %v7971
        %v8052 = vadd.f32 %v7884, %v7978
        %v8053 = vadd.f32 %v7887, %v7985
        %v8054 = vadd.f32 %v7890, %v7992
        %v8055 = vadd.f32 %v7893, %v7999
        %v8056 = vadd.f32 %v7896, %v7950
        %v8057 = vadd.f32 %v7899, %v7957
        %v8058 = vadd.f32 %v7902, %v7964
        %v8059 = vadd.f32 %v7905, %v7971
        %v8060 = vadd.f32 %v7908, %v7978
        %v8061 = vadd.f32 %v7911, %v7985
        %v8062 = vadd.f32 %v7914, %v7992
        %v8063 = vadd.f32 %v7917, %v7999
        %v8064 = vadd.f32 %v7920, %v7950
        %v8065 = vadd.f32 %v7923, %v7957
        %v8066 = vadd.f32 %v7926, %v7964
        %v8067 = vadd.f32 %v7929, %v7971
        %v8068 = vadd.f32 %v7932, %v7978
        %v8069 = vadd.f32 %v7935, %v7985
        %v8070 = vadd.f32 %v7938, %v7992
        %v8071 = vadd.f32 %v7941, %v7999
        %8136 = vset.pattern.permute.xlu0 0
        %8137 = vperm.xlu0 %8136, %v8008
        %v8138 = vpop.permute.xlu0 %8137
        %8139 = vset.pattern.permute.xlu0 0
        %8140 = vperm.xlu0 %8139, %v8009
        %v8141 = vpop.permute.xlu0 %8140
        %8142 = vset.pattern.permute.xlu0 0
        %8143 = vperm.xlu0 %8142, %v8010
        %v8144 = vpop.permute.xlu0 %8143
        %8145 = vset.pattern.permute.xlu0 0
        %8146 = vperm.xlu0 %8145, %v8011
        %v8147 = vpop.permute.xlu0 %8146
        %8148 = vset.pattern.permute.xlu0 0
        %8149 = vperm.xlu0 %8148, %v8012
        %v8150 = vpop.permute.xlu0 %8149
        %8151 = vset.pattern.permute.xlu0 0
        %8152 = vperm.xlu0 %8151, %v8013
        %v8153 = vpop.permute.xlu0 %8152
        %8154 = vset.pattern.permute.xlu0 0
        %8155 = vperm.xlu0 %8154, %v8014
        %v8156 = vpop.permute.xlu0 %8155
        %8157 = vset.pattern.permute.xlu0 0
        %8158 = vperm.xlu0 %8157, %v8015
        %v8159 = vpop.permute.xlu0 %8158
        %8160 = vset.pattern.permute.xlu0 0
        %8161 = vperm.xlu0 %8160, %v8016
        %v8162 = vpop.permute.xlu0 %8161
        %8163 = vset.pattern.permute.xlu0 0
        %8164 = vperm.xlu0 %8163, %v8017
        %v8165 = vpop.permute.xlu0 %8164
        %8166 = vset.pattern.permute.xlu0 0
        %8167 = vperm.xlu0 %8166, %v8018
        %v8168 = vpop.permute.xlu0 %8167
        %8169 = vset.pattern.permute.xlu0 0
        %8170 = vperm.xlu0 %8169, %v8019
        %v8171 = vpop.permute.xlu0 %8170
        %8172 = vset.pattern.permute.xlu0 0
        %8173 = vperm.xlu0 %8172, %v8020
        %v8174 = vpop.permute.xlu0 %8173
        %8175 = vset.pattern.permute.xlu0 0
        %8176 = vperm.xlu0 %8175, %v8021
        %v8177 = vpop.permute.xlu0 %8176
        %8178 = vset.pattern.permute.xlu0 0
        %8179 = vperm.xlu0 %8178, %v8022
        %v8180 = vpop.permute.xlu0 %8179
        %8181 = vset.pattern.permute.xlu0 0
        %8182 = vperm.xlu0 %8181, %v8023
        %v8183 = vpop.permute.xlu0 %8182
        %8184 = vset.pattern.permute.xlu0 0
        %8185 = vperm.xlu0 %8184, %v8024
        %v8186 = vpop.permute.xlu0 %8185
        %8187 = vset.pattern.permute.xlu0 0
        %8188 = vperm.xlu0 %8187, %v8025
        %v8189 = vpop.permute.xlu0 %8188
        %8190 = vset.pattern.permute.xlu0 0
        %8191 = vperm.xlu0 %8190, %v8026
        %v8192 = vpop.permute.xlu0 %8191
        %8193 = vset.pattern.permute.xlu0 0
        %8194 = vperm.xlu0 %8193, %v8027
        %v8195 = vpop.permute.xlu0 %8194
        %8196 = vset.pattern.permute.xlu0 0
        %8197 = vperm.xlu0 %8196, %v8028
        %v8198 = vpop.permute.xlu0 %8197
        %8199 = vset.pattern.permute.xlu0 0
        %8200 = vperm.xlu0 %8199, %v8029
        %v8201 = vpop.permute.xlu0 %8200
        %8202 = vset.pattern.permute.xlu0 0
        %8203 = vperm.xlu0 %8202, %v8030
        %v8204 = vpop.permute.xlu0 %8203
        %8205 = vset.pattern.permute.xlu0 0
        %8206 = vperm.xlu0 %8205, %v8031
        %v8207 = vpop.permute.xlu0 %8206
        %8208 = vset.pattern.permute.xlu0 0
        %8209 = vperm.xlu0 %8208, %v8032
        %v8210 = vpop.permute.xlu0 %8209
        %8211 = vset.pattern.permute.xlu0 0
        %8212 = vperm.xlu0 %8211, %v8033
        %v8213 = vpop.permute.xlu0 %8212
        %8214 = vset.pattern.permute.xlu0 0
        %8215 = vperm.xlu0 %8214, %v8034
        %v8216 = vpop.permute.xlu0 %8215
        %8217 = vset.pattern.permute.xlu0 0
        %8218 = vperm.xlu0 %8217, %v8035
        %v8219 = vpop.permute.xlu0 %8218
        %8220 = vset.pattern.permute.xlu0 0
        %8221 = vperm.xlu0 %8220, %v8036
        %v8222 = vpop.permute.xlu0 %8221
        %8223 = vset.pattern.permute.xlu0 0
        %8224 = vperm.xlu0 %8223, %v8037
        %v8225 = vpop.permute.xlu0 %8224
        %8226 = vset.pattern.permute.xlu0 0
        %8227 = vperm.xlu0 %8226, %v8038
        %v8228 = vpop.permute.xlu0 %8227
        %8229 = vset.pattern.permute.xlu0 0
        %8230 = vperm.xlu0 %8229, %v8039
        %v8231 = vpop.permute.xlu0 %8230
        %8232 = vset.pattern.permute.xlu0 0
        %8233 = vperm.xlu0 %8232, %v8040
        %v8234 = vpop.permute.xlu0 %8233
        %8235 = vset.pattern.permute.xlu0 0
        %8236 = vperm.xlu0 %8235, %v8041
        %v8237 = vpop.permute.xlu0 %8236
        %8238 = vset.pattern.permute.xlu0 0
        %8239 = vperm.xlu0 %8238, %v8042
        %v8240 = vpop.permute.xlu0 %8239
        %8241 = vset.pattern.permute.xlu0 0
        %8242 = vperm.xlu0 %8241, %v8043
        %v8243 = vpop.permute.xlu0 %8242
        %8244 = vset.pattern.permute.xlu0 0
        %8245 = vperm.xlu0 %8244, %v8044
        %v8246 = vpop.permute.xlu0 %8245
        %8247 = vset.pattern.permute.xlu0 0
        %8248 = vperm.xlu0 %8247, %v8045
        %v8249 = vpop.permute.xlu0 %8248
        %8250 = vset.pattern.permute.xlu0 0
        %8251 = vperm.xlu0 %8250, %v8046
        %v8252 = vpop.permute.xlu0 %8251
        %8253 = vset.pattern.permute.xlu0 0
        %8254 = vperm.xlu0 %8253, %v8047
        %v8255 = vpop.permute.xlu0 %8254
        %8256 = vset.pattern.permute.xlu0 0
        %8257 = vperm.xlu0 %8256, %v8048
        %v8258 = vpop.permute.xlu0 %8257
        %8259 = vset.pattern.permute.xlu0 0
        %8260 = vperm.xlu0 %8259, %v8049
        %v8261 = vpop.permute.xlu0 %8260
        %8262 = vset.pattern.permute.xlu0 0
        %8263 = vperm.xlu0 %8262, %v8050
        %v8264 = vpop.permute.xlu0 %8263
        %8265 = vset.pattern.permute.xlu0 0
        %8266 = vperm.xlu0 %8265, %v8051
        %v8267 = vpop.permute.xlu0 %8266
        %8268 = vset.pattern.permute.xlu0 0
        %8269 = vperm.xlu0 %8268, %v8052
        %v8270 = vpop.permute.xlu0 %8269
        %8271 = vset.pattern.permute.xlu0 0
        %8272 = vperm.xlu0 %8271, %v8053
        %v8273 = vpop.permute.xlu0 %8272
        %8274 = vset.pattern.permute.xlu0 0
        %8275 = vperm.xlu0 %8274, %v8054
        %v8276 = vpop.permute.xlu0 %8275
        %8277 = vset.pattern.permute.xlu0 0
        %8278 = vperm.xlu0 %8277, %v8055
        %v8279 = vpop.permute.xlu0 %8278
        %8280 = vset.pattern.permute.xlu0 0
        %8281 = vperm.xlu0 %8280, %v8056
        %v8282 = vpop.permute.xlu0 %8281
        %8283 = vset.pattern.permute.xlu0 0
        %8284 = vperm.xlu0 %8283, %v8057
        %v8285 = vpop.permute.xlu0 %8284
        %8286 = vset.pattern.permute.xlu0 0
        %8287 = vperm.xlu0 %8286, %v8058
        %v8288 = vpop.permute.xlu0 %8287
        %8289 = vset.pattern.permute.xlu0 0
        %8290 = vperm.xlu0 %8289, %v8059
        %v8291 = vpop.permute.xlu0 %8290
        %8292 = vset.pattern.permute.xlu0 0
        %8293 = vperm.xlu0 %8292, %v8060
        %v8294 = vpop.permute.xlu0 %8293
        %8295 = vset.pattern.permute.xlu0 0
        %8296 = vperm.xlu0 %8295, %v8061
        %v8297 = vpop.permute.xlu0 %8296
        %8298 = vset.pattern.permute.xlu0 0
        %8299 = vperm.xlu0 %8298, %v8062
        %v8300 = vpop.permute.xlu0 %8299
        %8301 = vset.pattern.permute.xlu0 0
        %8302 = vperm.xlu0 %8301, %v8063
        %v8303 = vpop.permute.xlu0 %8302
        %8304 = vset.pattern.permute.xlu0 0
        %8305 = vperm.xlu0 %8304, %v8064
        %v8306 = vpop.permute.xlu0 %8305
        %8307 = vset.pattern.permute.xlu0 0
        %8308 = vperm.xlu0 %8307, %v8065
        %v8309 = vpop.permute.xlu0 %8308
        %8310 = vset.pattern.permute.xlu0 0
        %8311 = vperm.xlu0 %8310, %v8066
        %v8312 = vpop.permute.xlu0 %8311
        %8313 = vset.pattern.permute.xlu0 0
        %8314 = vperm.xlu0 %8313, %v8067
        %v8315 = vpop.permute.xlu0 %8314
        %8316 = vset.pattern.permute.xlu0 0
        %8317 = vperm.xlu0 %8316, %v8068
        %v8318 = vpop.permute.xlu0 %8317
        %8319 = vset.pattern.permute.xlu0 0
        %8320 = vperm.xlu0 %8319, %v8069
        %v8321 = vpop.permute.xlu0 %8320
        %8322 = vset.pattern.permute.xlu0 0
        %8323 = vperm.xlu0 %8322, %v8070
        %v8324 = vpop.permute.xlu0 %8323
        %8325 = vset.pattern.permute.xlu0 0
        %8326 = vperm.xlu0 %8325, %v8071
        %v8327 = vpop.permute.xlu0 %8326
        %v8328 = vlaneseq
        %v8329 = vshrl.u32 %v8328, 7
        %v8330 = vsub.s32 %v1243, %v8329
        %v8331 = vrot.slane %v8138, %v8330
        %v8332 = vlaneseq
        %v8333 = vshrl.u32 %v8332, 7
        %v8334 = vsub.s32 %v1243, %v8333
        %v8335 = vrot.slane %v8141, %v8334
        %v8336 = vlaneseq
        %v8337 = vshrl.u32 %v8336, 7
        %v8338 = vsub.s32 %v1243, %v8337
        %v8339 = vrot.slane %v8144, %v8338
        %v8340 = vlaneseq
        %v8341 = vshrl.u32 %v8340, 7
        %v8342 = vsub.s32 %v1243, %v8341
        %v8343 = vrot.slane %v8147, %v8342
        %v8344 = vlaneseq
        %v8345 = vshrl.u32 %v8344, 7
        %v8346 = vsub.s32 %v1243, %v8345
        %v8347 = vrot.slane %v8150, %v8346
        %v8348 = vlaneseq
        %v8349 = vshrl.u32 %v8348, 7
        %v8350 = vsub.s32 %v1243, %v8349
        %v8351 = vrot.slane %v8153, %v8350
        %v8352 = vlaneseq
        %v8353 = vshrl.u32 %v8352, 7
        %v8354 = vsub.s32 %v1243, %v8353
        %v8355 = vrot.slane %v8156, %v8354
        %v8356 = vlaneseq
        %v8357 = vshrl.u32 %v8356, 7
        %v8358 = vsub.s32 %v1243, %v8357
        %v8359 = vrot.slane %v8159, %v8358
        %v8360 = vlaneseq
        %v8361 = vshrl.u32 %v8360, 7
        %v8362 = vsub.s32 %v1243, %v8361
        %v8363 = vrot.slane %v8162, %v8362
        %v8364 = vlaneseq
        %v8365 = vshrl.u32 %v8364, 7
        %v8366 = vsub.s32 %v1243, %v8365
        %v8367 = vrot.slane %v8165, %v8366
        %v8368 = vlaneseq
        %v8369 = vshrl.u32 %v8368, 7
        %v8370 = vsub.s32 %v1243, %v8369
        %v8371 = vrot.slane %v8168, %v8370
        %v8372 = vlaneseq
        %v8373 = vshrl.u32 %v8372, 7
        %v8374 = vsub.s32 %v1243, %v8373
        %v8375 = vrot.slane %v8171, %v8374
        %v8376 = vlaneseq
        %v8377 = vshrl.u32 %v8376, 7
        %v8378 = vsub.s32 %v1243, %v8377
        %v8379 = vrot.slane %v8174, %v8378
        %v8380 = vlaneseq
        %v8381 = vshrl.u32 %v8380, 7
        %v8382 = vsub.s32 %v1243, %v8381
        %v8383 = vrot.slane %v8177, %v8382
        %v8384 = vlaneseq
        %v8385 = vshrl.u32 %v8384, 7
        %v8386 = vsub.s32 %v1243, %v8385
        %v8387 = vrot.slane %v8180, %v8386
        %v8388 = vlaneseq
        %v8389 = vshrl.u32 %v8388, 7
        %v8390 = vsub.s32 %v1243, %v8389
        %v8391 = vrot.slane %v8183, %v8390
        %v8392 = vlaneseq
        %v8393 = vshrl.u32 %v8392, 7
        %v8394 = vsub.s32 %v1243, %v8393
        %v8395 = vrot.slane %v8186, %v8394
        %v8396 = vlaneseq
        %v8397 = vshrl.u32 %v8396, 7
        %v8398 = vsub.s32 %v1243, %v8397
        %v8399 = vrot.slane %v8189, %v8398
        %v8400 = vlaneseq
        %v8401 = vshrl.u32 %v8400, 7
        %v8402 = vsub.s32 %v1243, %v8401
        %v8403 = vrot.slane %v8192, %v8402
        %v8404 = vlaneseq
        %v8405 = vshrl.u32 %v8404, 7
        %v8406 = vsub.s32 %v1243, %v8405
        %v8407 = vrot.slane %v8195, %v8406
        %v8408 = vlaneseq
        %v8409 = vshrl.u32 %v8408, 7
        %v8410 = vsub.s32 %v1243, %v8409
        %v8411 = vrot.slane %v8198, %v8410
        %v8412 = vlaneseq
        %v8413 = vshrl.u32 %v8412, 7
        %v8414 = vsub.s32 %v1243, %v8413
        %v8415 = vrot.slane %v8201, %v8414
        %v8416 = vlaneseq
        %v8417 = vshrl.u32 %v8416, 7
        %v8418 = vsub.s32 %v1243, %v8417
        %v8419 = vrot.slane %v8204, %v8418
        %v8420 = vlaneseq
        %v8421 = vshrl.u32 %v8420, 7
        %v8422 = vsub.s32 %v1243, %v8421
        %v8423 = vrot.slane %v8207, %v8422
        %v8424 = vlaneseq
        %v8425 = vshrl.u32 %v8424, 7
        %v8426 = vsub.s32 %v1243, %v8425
        %v8427 = vrot.slane %v8210, %v8426
        %v8428 = vlaneseq
        %v8429 = vshrl.u32 %v8428, 7
        %v8430 = vsub.s32 %v1243, %v8429
        %v8431 = vrot.slane %v8213, %v8430
        %v8432 = vlaneseq
        %v8433 = vshrl.u32 %v8432, 7
        %v8434 = vsub.s32 %v1243, %v8433
        %v8435 = vrot.slane %v8216, %v8434
        %v8436 = vlaneseq
        %v8437 = vshrl.u32 %v8436, 7
        %v8438 = vsub.s32 %v1243, %v8437
        %v8439 = vrot.slane %v8219, %v8438
        %v8440 = vlaneseq
        %v8441 = vshrl.u32 %v8440, 7
        %v8442 = vsub.s32 %v1243, %v8441
        %v8443 = vrot.slane %v8222, %v8442
        %v8444 = vlaneseq
        %v8445 = vshrl.u32 %v8444, 7
        %v8446 = vsub.s32 %v1243, %v8445
        %v8447 = vrot.slane %v8225, %v8446
        %v8448 = vlaneseq
        %v8449 = vshrl.u32 %v8448, 7
        %v8450 = vsub.s32 %v1243, %v8449
        %v8451 = vrot.slane %v8228, %v8450
        %v8452 = vlaneseq
        %v8453 = vshrl.u32 %v8452, 7
        %v8454 = vsub.s32 %v1243, %v8453
        %v8455 = vrot.slane %v8231, %v8454
        %v8456 = vlaneseq
        %v8457 = vshrl.u32 %v8456, 7
        %v8458 = vsub.s32 %v1243, %v8457
        %v8459 = vrot.slane %v8234, %v8458
        %v8460 = vlaneseq
        %v8461 = vshrl.u32 %v8460, 7
        %v8462 = vsub.s32 %v1243, %v8461
        %v8463 = vrot.slane %v8237, %v8462
        %v8464 = vlaneseq
        %v8465 = vshrl.u32 %v8464, 7
        %v8466 = vsub.s32 %v1243, %v8465
        %v8467 = vrot.slane %v8240, %v8466
        %v8468 = vlaneseq
        %v8469 = vshrl.u32 %v8468, 7
        %v8470 = vsub.s32 %v1243, %v8469
        %v8471 = vrot.slane %v8243, %v8470
        %v8472 = vlaneseq
        %v8473 = vshrl.u32 %v8472, 7
        %v8474 = vsub.s32 %v1243, %v8473
        %v8475 = vrot.slane %v8246, %v8474
        %v8476 = vlaneseq
        %v8477 = vshrl.u32 %v8476, 7
        %v8478 = vsub.s32 %v1243, %v8477
        %v8479 = vrot.slane %v8249, %v8478
        %v8480 = vlaneseq
        %v8481 = vshrl.u32 %v8480, 7
        %v8482 = vsub.s32 %v1243, %v8481
        %v8483 = vrot.slane %v8252, %v8482
        %v8484 = vlaneseq
        %v8485 = vshrl.u32 %v8484, 7
        %v8486 = vsub.s32 %v1243, %v8485
        %v8487 = vrot.slane %v8255, %v8486
        %v8488 = vlaneseq
        %v8489 = vshrl.u32 %v8488, 7
        %v8490 = vsub.s32 %v1243, %v8489
        %v8491 = vrot.slane %v8258, %v8490
        %v8492 = vlaneseq
        %v8493 = vshrl.u32 %v8492, 7
        %v8494 = vsub.s32 %v1243, %v8493
        %v8495 = vrot.slane %v8261, %v8494
        %v8496 = vlaneseq
        %v8497 = vshrl.u32 %v8496, 7
        %v8498 = vsub.s32 %v1243, %v8497
        %v8499 = vrot.slane %v8264, %v8498
        %v8500 = vlaneseq
        %v8501 = vshrl.u32 %v8500, 7
        %v8502 = vsub.s32 %v1243, %v8501
        %v8503 = vrot.slane %v8267, %v8502
        %v8504 = vlaneseq
        %v8505 = vshrl.u32 %v8504, 7
        %v8506 = vsub.s32 %v1243, %v8505
        %v8507 = vrot.slane %v8270, %v8506
        %v8508 = vlaneseq
        %v8509 = vshrl.u32 %v8508, 7
        %v8510 = vsub.s32 %v1243, %v8509
        %v8511 = vrot.slane %v8273, %v8510
        %v8512 = vlaneseq
        %v8513 = vshrl.u32 %v8512, 7
        %v8514 = vsub.s32 %v1243, %v8513
        %v8515 = vrot.slane %v8276, %v8514
        %v8516 = vlaneseq
        %v8517 = vshrl.u32 %v8516, 7
        %v8518 = vsub.s32 %v1243, %v8517
        %v8519 = vrot.slane %v8279, %v8518
        %v8520 = vlaneseq
        %v8521 = vshrl.u32 %v8520, 7
        %v8522 = vsub.s32 %v1243, %v8521
        %v8523 = vrot.slane %v8282, %v8522
        %v8524 = vlaneseq
        %v8525 = vshrl.u32 %v8524, 7
        %v8526 = vsub.s32 %v1243, %v8525
        %v8527 = vrot.slane %v8285, %v8526
        %v8528 = vlaneseq
        %v8529 = vshrl.u32 %v8528, 7
        %v8530 = vsub.s32 %v1243, %v8529
        %v8531 = vrot.slane %v8288, %v8530
        %v8532 = vlaneseq
        %v8533 = vshrl.u32 %v8532, 7
        %v8534 = vsub.s32 %v1243, %v8533
        %v8535 = vrot.slane %v8291, %v8534
        %v8536 = vlaneseq
        %v8537 = vshrl.u32 %v8536, 7
        %v8538 = vsub.s32 %v1243, %v8537
        %v8539 = vrot.slane %v8294, %v8538
        %v8540 = vlaneseq
        %v8541 = vshrl.u32 %v8540, 7
        %v8542 = vsub.s32 %v1243, %v8541
        %v8543 = vrot.slane %v8297, %v8542
        %v8544 = vlaneseq
        %v8545 = vshrl.u32 %v8544, 7
        %v8546 = vsub.s32 %v1243, %v8545
        %v8547 = vrot.slane %v8300, %v8546
        %v8548 = vlaneseq
        %v8549 = vshrl.u32 %v8548, 7
        %v8550 = vsub.s32 %v1243, %v8549
        %v8551 = vrot.slane %v8303, %v8550
        %v8552 = vlaneseq
        %v8553 = vshrl.u32 %v8552, 7
        %v8554 = vsub.s32 %v1243, %v8553
        %v8555 = vrot.slane %v8306, %v8554
        %v8556 = vlaneseq
        %v8557 = vshrl.u32 %v8556, 7
        %v8558 = vsub.s32 %v1243, %v8557
        %v8559 = vrot.slane %v8309, %v8558
        %v8560 = vlaneseq
        %v8561 = vshrl.u32 %v8560, 7
        %v8562 = vsub.s32 %v1243, %v8561
        %v8563 = vrot.slane %v8312, %v8562
        %v8564 = vlaneseq
        %v8565 = vshrl.u32 %v8564, 7
        %v8566 = vsub.s32 %v1243, %v8565
        %v8567 = vrot.slane %v8315, %v8566
        %v8568 = vlaneseq
        %v8569 = vshrl.u32 %v8568, 7
        %v8570 = vsub.s32 %v1243, %v8569
        %v8571 = vrot.slane %v8318, %v8570
        %v8572 = vlaneseq
        %v8573 = vshrl.u32 %v8572, 7
        %v8574 = vsub.s32 %v1243, %v8573
        %v8575 = vrot.slane %v8321, %v8574
        %v8576 = vlaneseq
        %v8577 = vshrl.u32 %v8576, 7
        %v8578 = vsub.s32 %v1243, %v8577
        %v8579 = vrot.slane %v8324, %v8578
        %v8580 = vlaneseq
        %v8581 = vshrl.u32 %v8580, 7
        %v8582 = vsub.s32 %v1243, %v8581
        %v8583 = vrot.slane %v8327, %v8582
        %v8584 = vsel %vm1402, %v8335, %v8331
        %v8585 = vsel %vm1404, %v8339, %v8584
        %v8586 = vsel %vm1406, %v8343, %v8585
        %v8587 = vsel %vm1408, %v8347, %v8586
        %v8588 = vsel %vm1410, %v8351, %v8587
        %v8589 = vsel %vm1412, %v8355, %v8588
        %v8590 = vsel %vm1414, %v8359, %v8589
        %v8591 = vsel %vm1402, %v8367, %v8363
        %v8592 = vsel %vm1404, %v8371, %v8591
        %v8593 = vsel %vm1406, %v8375, %v8592
        %v8594 = vsel %vm1408, %v8379, %v8593
        %v8595 = vsel %vm1410, %v8383, %v8594
        %v8596 = vsel %vm1412, %v8387, %v8595
        %v8597 = vsel %vm1414, %v8391, %v8596
        %v8598 = vsel %vm1402, %v8399, %v8395
        %v8599 = vsel %vm1404, %v8403, %v8598
        %v8600 = vsel %vm1406, %v8407, %v8599
        %v8601 = vsel %vm1408, %v8411, %v8600
        %v8602 = vsel %vm1410, %v8415, %v8601
        %v8603 = vsel %vm1412, %v8419, %v8602
        %v8604 = vsel %vm1414, %v8423, %v8603
        %v8605 = vsel %vm1402, %v8431, %v8427
        %v8606 = vsel %vm1404, %v8435, %v8605
        %v8607 = vsel %vm1406, %v8439, %v8606
        %v8608 = vsel %vm1408, %v8443, %v8607
        %v8609 = vsel %vm1410, %v8447, %v8608
        %v8610 = vsel %vm1412, %v8451, %v8609
        %v8611 = vsel %vm1414, %v8455, %v8610
        %v8612 = vsel %vm1402, %v8463, %v8459
        %v8613 = vsel %vm1404, %v8467, %v8612
        %v8614 = vsel %vm1406, %v8471, %v8613
        %v8615 = vsel %vm1408, %v8475, %v8614
        %v8616 = vsel %vm1410, %v8479, %v8615
        %v8617 = vsel %vm1412, %v8483, %v8616
        %v8618 = vsel %vm1414, %v8487, %v8617
        %v8619 = vsel %vm1402, %v8495, %v8491
        %v8620 = vsel %vm1404, %v8499, %v8619
        %v8621 = vsel %vm1406, %v8503, %v8620
        %v8622 = vsel %vm1408, %v8507, %v8621
        %v8623 = vsel %vm1410, %v8511, %v8622
        %v8624 = vsel %vm1412, %v8515, %v8623
        %v8625 = vsel %vm1414, %v8519, %v8624
        %v8626 = vsel %vm1402, %v8527, %v8523
        %v8627 = vsel %vm1404, %v8531, %v8626
        %v8628 = vsel %vm1406, %v8535, %v8627
        %v8629 = vsel %vm1408, %v8539, %v8628
        %v8630 = vsel %vm1410, %v8543, %v8629
        %v8631 = vsel %vm1412, %v8547, %v8630
        %v8632 = vsel %vm1414, %v8551, %v8631
        %v8633 = vsel %vm1402, %v8559, %v8555
        %v8634 = vsel %vm1404, %v8563, %v8633
        %v8635 = vsel %vm1406, %v8567, %v8634
        %v8636 = vsel %vm1408, %v8571, %v8635
        %v8637 = vsel %vm1410, %v8575, %v8636
        %v8638 = vsel %vm1412, %v8579, %v8637
        %v8639 = vsel %vm1414, %v8583, %v8638
        %v8648 = vcombine.low %v8590, %v8604
        %v8649 = vcombine.high %v8590, %v8604
        %v8651 = vunpack.c.l.s4 1983009808
        %v8652 = vunpack.c.0.s8 %v8651
        %v8653 = vlaneseq
        %v8654 = vshrl.u32 %v8653, 7
        %v8655 = vsub.s32 %v8652, %v8654
        %v8656 = vrot.slane %v8648, %v8655
        %v8658 = vunpack.c.l.s4 1983009808
        %v8659 = vunpack.c.0.s8 %v8658
        %v8660 = vlaneseq
        %v8661 = vshrl.u32 %v8660, 7
        %v8662 = vsub.s32 %v8659, %v8661
        %v8663 = vrot.slane %v8649, %v8662
        %v8664 = vcombine.low %v8597, %v8611
        %v8665 = vcombine.high %v8597, %v8611
        %v8667 = vunpack.c.l.s4 1983009808
        %v8668 = vunpack.c.0.s8 %v8667
        %v8669 = vlaneseq
        %v8670 = vshrl.u32 %v8669, 7
        %v8671 = vsub.s32 %v8668, %v8670
        %v8672 = vrot.slane %v8664, %v8671
        %v8674 = vunpack.c.l.s4 1983009808
        %v8675 = vunpack.c.0.s8 %v8674
        %v8676 = vlaneseq
        %v8677 = vshrl.u32 %v8676, 7
        %v8678 = vsub.s32 %v8675, %v8677
        %v8679 = vrot.slane %v8665, %v8678
        %v8680 = vcombine.low %v8618, %v8632
        %v8681 = vcombine.high %v8618, %v8632
        %v8683 = vunpack.c.l.s4 1983009808
        %v8684 = vunpack.c.0.s8 %v8683
        %v8685 = vlaneseq
        %v8686 = vshrl.u32 %v8685, 7
        %v8687 = vsub.s32 %v8684, %v8686
        %v8688 = vrot.slane %v8680, %v8687
        %v8690 = vunpack.c.l.s4 1983009808
        %v8691 = vunpack.c.0.s8 %v8690
        %v8692 = vlaneseq
        %v8693 = vshrl.u32 %v8692, 7
        %v8694 = vsub.s32 %v8691, %v8693
        %v8695 = vrot.slane %v8681, %v8694
        %v8696 = vcombine.low %v8625, %v8639
        %v8697 = vcombine.high %v8625, %v8639
        %v8699 = vunpack.c.l.s4 1983009808
        %v8700 = vunpack.c.0.s8 %v8699
        %v8701 = vlaneseq
        %v8702 = vshrl.u32 %v8701, 7
        %v8703 = vsub.s32 %v8700, %v8702
        %v8704 = vrot.slane %v8696, %v8703
        %v8706 = vunpack.c.l.s4 1983009808
        %v8707 = vunpack.c.0.s8 %v8706
        %v8708 = vlaneseq
        %v8709 = vshrl.u32 %v8708, 7
        %v8710 = vsub.s32 %v8707, %v8709
        %v8711 = vrot.slane %v8697, %v8710
        %v8712 = vcombine.low %v8656, %v8672
        %v8713 = vcombine.high %v8656, %v8672
        %v8715 = vunpack.c.l.s4 1934713408
        %v8716 = vunpack.c.0.s8 %v8715
        %v8717 = vlaneseq
        %v8718 = vshrl.u32 %v8717, 7
        %v8719 = vsub.s32 %v8716, %v8718
        %v8720 = vrot.slane %v8712, %v8719
        %v8722 = vunpack.c.l.s4 1934713408
        %v8723 = vunpack.c.0.s8 %v8722
        %v8724 = vlaneseq
        %v8725 = vshrl.u32 %v8724, 7
        %v8726 = vsub.s32 %v8723, %v8725
        %v8727 = vrot.slane %v8713, %v8726
        %v8728 = vcombine.low %v8663, %v8679
        %v8729 = vcombine.high %v8663, %v8679
        %v8731 = vunpack.c.l.s4 1934713408
        %v8732 = vunpack.c.0.s8 %v8731
        %v8733 = vlaneseq
        %v8734 = vshrl.u32 %v8733, 7
        %v8735 = vsub.s32 %v8732, %v8734
        %v8736 = vrot.slane %v8728, %v8735
        %v8738 = vunpack.c.l.s4 1934713408
        %v8739 = vunpack.c.0.s8 %v8738
        %v8740 = vlaneseq
        %v8741 = vshrl.u32 %v8740, 7
        %v8742 = vsub.s32 %v8739, %v8741
        %v8743 = vrot.slane %v8729, %v8742
        %v8744 = vcombine.low %v8688, %v8704
        %v8745 = vcombine.high %v8688, %v8704
        %v8747 = vunpack.c.l.s4 1934713408
        %v8748 = vunpack.c.0.s8 %v8747
        %v8749 = vlaneseq
        %v8750 = vshrl.u32 %v8749, 7
        %v8751 = vsub.s32 %v8748, %v8750
        %v8752 = vrot.slane %v8744, %v8751
        %v8754 = vunpack.c.l.s4 1934713408
        %v8755 = vunpack.c.0.s8 %v8754
        %v8756 = vlaneseq
        %v8757 = vshrl.u32 %v8756, 7
        %v8758 = vsub.s32 %v8755, %v8757
        %v8759 = vrot.slane %v8745, %v8758
        %v8760 = vcombine.low %v8695, %v8711
        %v8761 = vcombine.high %v8695, %v8711
        %v8763 = vunpack.c.l.s4 1934713408
        %v8764 = vunpack.c.0.s8 %v8763
        %v8765 = vlaneseq
        %v8766 = vshrl.u32 %v8765, 7
        %v8767 = vsub.s32 %v8764, %v8766
        %v8768 = vrot.slane %v8760, %v8767
        %v8770 = vunpack.c.l.s4 1934713408
        %v8771 = vunpack.c.0.s8 %v8770
        %v8772 = vlaneseq
        %v8773 = vshrl.u32 %v8772, 7
        %v8774 = vsub.s32 %v8771, %v8773
        %v8775 = vrot.slane %v8761, %v8774
        %v8776 = vcombine.low %v8720, %v8752
        %v8777 = vcombine.high %v8720, %v8752
        %v8778 = vcombine.low %v8727, %v8759
        %v8779 = vcombine.high %v8727, %v8759
        %v8780 = vcombine.low %v8736, %v8768
        %v8781 = vcombine.high %v8736, %v8768
        %v8782 = vcombine.low %v8743, %v8775
        %v8783 = vcombine.high %v8743, %v8775
        %8785 = vrot.lane.b32.xlu0 %v8777, 4
        %v8786 = vpop.permute.xlu0 %8785
        %8789 = vrot.lane.b32.xlu0 %v8778, 8
        %v8790 = vpop.permute.xlu0 %8789
        %8793 = vrot.lane.b32.xlu0 %v8779, 12
        %v8794 = vpop.permute.xlu0 %8793
        %8797 = vrot.lane.b32.xlu0 %v8780, 16
        %v8798 = vpop.permute.xlu0 %8797
        %8801 = vrot.lane.b32.xlu0 %v8781, 20
        %v8802 = vpop.permute.xlu0 %8801
        %8805 = vrot.lane.b32.xlu0 %v8782, 24
        %v8806 = vpop.permute.xlu0 %8805
        %8809 = vrot.lane.b32.xlu0 %v8783, 28
        %v8810 = vpop.permute.xlu0 %8809
        %v8812 = vsel %vm736, %v8776, %v8786
        %vm8813 = vcmask 64512
        %v8814 = vsel %vm8813, %v8812, %v8790
        %vm8815 = vcmask 97280
        %v8816 = vsel %vm8815, %v8814, %v8794
        %vm8817 = vcmask 130048
        %v8818 = vsel %vm8817, %v8816, %v8798
        %vm8819 = vcmask 162816
        %v8820 = vsel %vm8819, %v8818, %v8802
        %vm8821 = vcmask 195584
        %v8822 = vsel %vm8821, %v8820, %v8806
        %vm8823 = vcmask 228352
        %v8824 = vsel %vm8823, %v8822, %v8810
        %vm8825 = vcmp.lt.s32.totalorder %v1243, 4
        %v8826 = vld [vmem:[%s321] sm:$0xff]
        %v8827 = vsel %vm8825, %v8826, %v8824
        %8828 = vst.msk [vmem:[%s309] sm:$0xff] %vm517, %v8827
        %s8829 = sand.u32 %s189, 1
        %s8830 = scalar_lea.sflag [#allocation4], %s8829
        %s8831 = sand.u32 %s189, 1
        %s8832 = smul.addr %s8831, 8
        %s8833 = scalar_lea.vmem [#allocation3], %s8832
        // Predicated region
        $region53: #{tpu_custom_call.1} parent=47 // pred_check
          %p8834 = pneg %p199
        $region54: #{tpu_custom_call.1} parent=47 // pred_check_branch
          %8836 = sbr.rel (%p8834) target = $region56
        $region55: #{tpu_custom_call.1} parent=47 // pred_region
          %s8838 = ssub.s32 128, 128
          %8839 = vsyncadd %s8830, %s8838
          %s8840 = smul.addr %s24, 128
          %s8841 = scalar_lea.hbm %s7, %s8840
          %s8843 = sshll.u32 %s8833, 4
          %s8844 = int_to_ptr.vmem [resolvable:$true] %s8843
          %8846 = dma.vmem_to_hbm [thread:$0]  %s8844, 128, %s8841, %s8830
        $region56: #{tpu_custom_call.1} parent=47 // pred_fallthru
          _
        // Predicated region
        $region57: #{tpu_custom_call.1} parent=47 // pred_check
          %p8847 = pneg %p220
        $region58: #{tpu_custom_call.1} parent=47 // pred_check_branch
          %8849 = sbr.rel (%p8847) target = $region60
        $region59: #{tpu_custom_call.1} parent=47 // pred_region
          %s8851 = ssub.s32 128, 128
          %8852 = vsyncadd [#allocation6], %s8851
          %s8854 = sshll.u32 [#allocation5], 4
          %s8855 = int_to_ptr.vmem [resolvable:$true] %s8854
          %8857 = dma.vmem_to_hbm [thread:$0]  %s8855, 128, %s8, [#allocation6]
        $region60: #{tpu_custom_call.1} parent=47 // pred_fallthru
          _
        // Predicated region
        $region61: #{tpu_custom_call.1} parent=47 // pred_check
          %p8858 = pneg %p220
        $region62: #{tpu_custom_call.1} parent=47 // pred_check_branch
          %8860 = sbr.rel (%p8858) target = $region64
        $region63: #{tpu_custom_call.1} parent=47 // pred_region
          %8861 = dma.done [#allocation6], 128
        $region64: #{tpu_custom_call.1} parent=47 // pred_fallthru
          _
      $region48: #{tpu_custom_call.1} parent=5 // pred_fallthru
        _
      %p8862 = scmp.le.s32.totalorder 2, %s19
      // Predicated region
      $region65: #{tpu_custom_call.1} parent=5 // pred_check
        %p8863 = pneg %p8862
      $region66: #{tpu_custom_call.1} parent=5 // pred_check_branch
        %8865 = sbr.rel (%p8863) target = $region68
      $region67: #{tpu_custom_call.1} parent=5 // pred_region
        %s8866 = ssub.s32 %s19, 2
        // Predicated region
        $region69: #{tpu_custom_call.1} parent=67 // pred_check
          %p8867 = pneg %p205
        $region70: #{tpu_custom_call.1} parent=67 // pred_check_branch
          %8869 = sbr.rel (%p8867) target = $region72
        $region71: #{tpu_custom_call.1} parent=67 // pred_region
          %s8870 = sand.u32 %s190, 1
          %s8871 = scalar_lea.sflag [#allocation4], %s8870
          %s8872 = sand.u32 %s190, 1
          %s8873 = smul.addr %s8872, 8
          %s8874 = scalar_lea.vmem [#allocation3], %s8873
          %8875 = dma.done %s8871, 128
        $region72: #{tpu_custom_call.1} parent=67 // pred_fallthru
          _
      $region68: #{tpu_custom_call.1} parent=5 // pred_fallthru
        _
    $region6: #{tpu_custom_call.1} parent=1 // loop_footer
      %s23 = sadd.s32 1, %s19
    $region7: #{tpu_custom_call.1} parent=1 // loop_footer_branch
      %18 = sbr.rel target = $region3
    $region8: #{tpu_custom_call.1} parent=1 // loop_exit
      _
    %8876 = vsyncpa [#allocation4], 1
    %s8877 = scalar_lea.sflag [#allocation4], 1
    %8878 = vsyncpa %s8877, 1
    %8879 = vsyncpa [#allocation6], 1

</llo_original>
